<compile_context>
chip_gen: v5e
topology: v5e:2x2
jax: 0.10.0
libtpu: 0.0.40
codegen_flags: <defaults>
</compile_context>

<pallas_src>
import numpy as np
import jax
import jax.numpy as jnp
from jax.experimental import pallas as pl
from jax.experimental.pallas import tpu as pltpu


# ----------------------------- config (small) -----------------------------
CFG = dict(
    num_layers=4,          # hidden layers of the geo MLP
    hidden_dim=128,
    octaves_pe_points=4,   # PE octaves for points
    skips=(2,),            # skip-concat before layer 2
    rescale=2.0,
    feat_size=8,
    local_latent_dim=16,
    global_latent_dim=16,
)
DIM = 3
DIM_EMBED = DIM + DIM * CFG["octaves_pe_points"] * 2             # 3 + 24 = 27
LATENT_DIM = CFG["local_latent_dim"] + CFG["global_latent_dim"]  # 32
D0 = DIM_EMBED + LATENT_DIM                                      # 59
HID = CFG["hidden_dim"]
FEAT = CFG["feat_size"]
# dims_geo = [59, 128, 128, 128, 128, 1 + 8]
DIMS_GEO = [D0] + [HID] * CFG["num_layers"] + [1 + FEAT]
SKIP = CFG["skips"][0]
# layer output dims (layer SKIP-1 output is reduced so that skip-concat fits)
OUT_DIMS = []
for l in range(len(DIMS_GEO) - 1):
    if (l + 1) in CFG["skips"]:
        OUT_DIMS.append(DIMS_GEO[l + 1] - DIMS_GEO[0])
    else:
        OUT_DIMS.append(DIMS_GEO[l + 1])
# OUT_DIMS = [128, 69, 128, 128, 9]

# padded, lane-friendly dims used inside the kernel
D0_PAD = 64        # x0 columns / w0t, w2b rows: 59 -> 64
H1_PAD = HID       # layer-1 output: 69 -> 128
OUT_STORE = 16     # final stored columns: 9 -> 16 (== full array last dim)


def _softplus100(z):
    # PyTorch Softplus(beta=100, threshold=20): linear when beta*x > 20.
    # Kept entirely in f32 (no bf16 EUP path on v5e; activation is steep).
    bz = 100.0 * z
    return jnp.where(bz > 20.0, z, jnp.log1p(jnp.exp(jnp.minimum(bz, 20.0))) / 100.0)


def _occ_sigmoid(x):
    # sigmoid(-10*x), written explicitly so kernel and reference match exactly.
    return 1.0 / (1.0 + jnp.exp(10.0 * x))


# ----------------------------- Pallas kernel ------------------------------
def _occ_mlp_kernel(x0_ref,
                    w0_ref, b0_ref,
                    w1_ref, b1_ref,
                    w2a_ref, w2b_ref, b2_ref,
                    w3_ref, b3_ref,
                    w4_ref, b4_ref,
                    out_ref):
    f32 = jnp.float32
    bf16 = jnp.bfloat16
    x0 = x0_ref[...]                                            # (TN, 64) bf16

    # layer 0
    h = jnp.dot(x0, w0_ref[...], preferred_element_type=f32) + b0_ref[...]
    h = _softplus100(h)
    # layer 1 (logical width 69, zero-padded to 128).
    # CORRECTNESS NOTE: padded lanes 69..127 come out of softplus as
    # softplus(0) = ln(2)/100 != 0; they are killed by the ZERO rows 69..127 of
    # w2a below.  Keep those rows zero if the padding scheme ever changes.
    h = jnp.dot(h.astype(bf16), w1_ref[...], preferred_element_type=f32) + b1_ref[...]
    h = _softplus100(h)
    # layer 2 (skip): lin(cat([h, x0]) / sqrt(2)) == (h @ W2a + x0 @ W2b)/sqrt(2) + b2
    inv_sqrt2 = np.float32(1.0 / np.sqrt(2.0))
    z = (jnp.dot(h.astype(bf16), w2a_ref[...], preferred_element_type=f32)
         + jnp.dot(x0, w2b_ref[...], preferred_element_type=f32)) * inv_sqrt2
    h = _softplus100(z + b2_ref[...])
    # layer 3
    h = jnp.dot(h.astype(bf16), w3_ref[...], preferred_element_type=f32) + b3_ref[...]
    h = _softplus100(h)
    # layer 4 (final, no activation): raw (TN, 16) f32; col 0 = occupancy logit,
    # cols 1..8 = feature vec, cols 9..15 exactly zero (zero-padded W/b).
    raw = (jnp.dot(h.astype(bf16), w4_ref[...], preferred_element_type=f32)
           + b4_ref[...])
    # fold the occupancy sigmoid(-10*x) in-kernel (col 0 only); features raw.
    lane = jax.lax.broadcasted_iota(jnp.int32, raw.shape, 1)
    out_ref[...] = jnp.where(lane == 0, _occ_sigmoid(raw), raw)


def _round_up(x, m):
    return (x + m - 1) // m * m


def _pad_to(a, shape):
    return jnp.pad(a, [(0, t - s) for s, t in zip(a.shape, shape)])


def occ_mlp_pallas(x0, params, *, tile_n=2048):
    """x0: (N, D0) float32.  Returns (N, OUT_STORE) f32:
    column 0 = occupancy (post-sigmoid), columns 1..FEAT = feature vec."""
    N = x0.shape[0]
    # large default tile amortizes per-step overhead; clamp so tiny inputs
    # don't pad up to a huge tile.
    tile_n = max(512, min(tile_n, _round_up(N, 512)))
    n_pad = (-N) % tile_n
    n_total = N + n_pad

    (w0, b0), (w1, b1), (w2, b2), (w3, b3), (w4, b4) = params
    bf = lambda a: a.astype(jnp.bfloat16)

    # transpose weights to (in, out) for x @ W; zero-pad awkward dims; bf16 operands.
    w0t = bf(_pad_to(w0.T, (D0_PAD, HID)))                    # (64, 128)
    w1t = bf(_pad_to(w1.T, (HID, H1_PAD)))                    # (128, 128)
    w2t = w2.T                                                # rows = [h(69), x0(59)]
    w2a = bf(_pad_to(w2t[:OUT_DIMS[1], :], (H1_PAD, HID)))    # (128, 128) zero rows 69..127
    w2b = bf(_pad_to(w2t[OUT_DIMS[1]:, :], (D0_PAD, HID)))    # (64, 128)
    w3t = bf(w3.T)                                            # (128, 128)
    w4t = bf(_pad_to(w4.T, (HID, OUT_STORE)))                 # (128, 16)
    # biases stay f32, as (1, out) lane rows
    b0r = b0.astype(jnp.float32)[None, :]
    b1r = _pad_to(b1.astype(jnp.float32), (H1_PAD,))[None, :]
    b2r = b2.astype(jnp.float32)[None, :]
    b3r = b3.astype(jnp.float32)[None, :]
    b4r = _pad_to(b4.astype(jnp.float32), (OUT_STORE,))[None, :]

    # rows padded to a tile multiple; feature columns padded 59 -> 64; bf16 DMA.
    x0p = jnp.pad(x0, ((0, n_pad), (0, D0_PAD - D0))).astype(jnp.bfloat16)

    weight_args = (w0t, b0r, w1t, b1r, w2a, w2b, b2r, w3t, b3r, w4t, b4r)
    # constant block index -> weights fetched once, VMEM-resident across steps
    const_spec = lambda a: pl.BlockSpec(a.shape, lambda i: (0, 0))

    grid = (n_total // tile_n,)
    out = pl.pallas_call(
        _occ_mlp_kernel,
        out_shape=jax.ShapeDtypeStruct((n_total, OUT_STORE), jnp.float32),
        grid_spec=pltpu.PrefetchScalarGridSpec(
            num_scalar_prefetch=0,
            grid=grid,
            in_specs=[pl.BlockSpec((tile_n, D0_PAD), lambda i: (i, 0))]
                     + [const_spec(a) for a in weight_args],
            out_specs=pl.BlockSpec((tile_n, OUT_STORE), lambda i: (i, 0)),
        ),
        compiler_params=pltpu.CompilerParams(
            dimension_semantics=("parallel",)),   # shards rows across TCs on v7x
    )(x0p, *weight_args)
    return out[:N]


# ----------------------------- JAX glue ------------------------------------
def positional_encoding(p, L):
    # matches PositionalEncoding: cat([p] + [sin(2^i p), cos(2^i p) for i in range(L)], -1)
    feats = [p]
    for i in range(L):
        feats.append(jnp.sin((2.0 ** i) * p))
        feats.append(jnp.cos((2.0 ** i) * p))
    return jnp.concatenate(feats, axis=-1)


def occupancy_network_forward(points, local_latent, global_latent, params, *, tile_n=2048):
    """
    points:        (n_rays, n_points, 3)
    local_latent:  (local_latent_dim, n_rays, n_points)
    global_latent: (global_latent_dim,)
    Returns (occupancy (n_rays, n_points, 1), feature_vec (n_rays, n_points, FEAT), rgb=0.0)
    """
    n_rays, n_points, _ = points.shape
    g = jnp.broadcast_to(global_latent[:, None, None],
                         (global_latent.shape[0], n_rays, n_points))
    latent = jnp.concatenate([local_latent, g], axis=0)        # (LAT, R, P)
    latent = jnp.transpose(latent, (1, 2, 0))                  # (R, P, LAT)
    pe = positional_encoding(points / CFG["rescale"], CFG["octaves_pe_points"])
    x0 = jnp.concatenate([pe, latent], axis=-1)                # (R, P, D0)

    N = n_rays * n_points
    out = occ_mlp_pallas(x0.reshape(N, D0).astype(jnp.float32), params, tile_n=tile_n)
    # sigmoid already applied in-kernel to column 0; narrow (N, 16) readback.
    occupancy = out[:, :1].reshape(n_rays, n_points, 1)
    feature_vec = out[:, 1:1 + FEAT].reshape(n_rays, n_points, FEAT)
    rgb = 0.0  # return_rgb=False path (appearance MLP not invoked)
    # TODO(synk): gradient()/infer_app() (return_rgb=True path) need autograd-through-the-MLP;
    # not part of the default forward path, so not implemented here.
    return occupancy, feature_vec, rgb


def init_params(key):
    params = []
    in_dims = DIMS_GEO[:-1]
    for l, (din, dout) in enumerate(zip(in_dims, OUT_DIMS)):
        key, kw, kb = jax.random.split(key, 3)
        w = jax.random.normal(kw, (dout, din), jnp.float32) * (1.0 / np.sqrt(din))
        b = jax.random.normal(kb, (dout,), jnp.float32) * 0.01
        params.append((w, b))
    return params


def _reference_forward(points, local_latent, global_latent, params):
    """Pure-JAX reference mirroring the kernel numerics (bf16 matmul operands,
    f32 accumulation and f32 elementwise math), using the straightforward
    concat-skip formulation (independent of the kernel's split-W2 trick)."""
    n_rays, n_points, _ = points.shape
    g = jnp.broadcast_to(global_latent[:, None, None],
                         (global_latent.shape[0], n_rays, n_points))
    latent = jnp.transpose(jnp.concatenate([local_latent, g], 0), (1, 2, 0))
    pe = positional_encoding(points / CFG["rescale"], CFG["octaves_pe_points"])
    x0 = jnp.concatenate([pe, latent], -1).astype(jnp.bfloat16)
    inv_sqrt2 = np.float32(1.0 / np.sqrt(2.0))
    x = x0
    z = None
    for l, (w, b) in enumerate(params):
        wt = w.T.astype(jnp.bfloat16)
        if l == SKIP:
            xin = jnp.concatenate([x, x0], -1)
            z = jnp.dot(xin, wt, preferred_element_type=jnp.float32) * inv_sqrt2 + b
        else:
            z = jnp.dot(x, wt, preferred_element_type=jnp.float32) + b
        if l < len(params) - 1:
            x = _softplus100(z).astype(jnp.bfloat16)
    occ = _occ_sigmoid(z[..., :1])
    return occ, z[..., 1:]


if __name__ == "__main__":
    key = jax.random.PRNGKey(0)
    k_pts, k_loc, k_glob, k_par = jax.random.split(key, 4)

    n_rays, n_points = 64, 16                      # N = 1024 rows
    points = jax.random.normal(k_pts, (n_rays, n_points, 3), jnp.float32)
    local_latent = jax.random.normal(
        k_loc, (CFG["local_latent_dim"], n_rays, n_points), jnp.float32)
    global_latent = jax.random.normal(
        k_glob, (CFG["global_latent_dim"],), jnp.float32)
    params = init_params(k_par)

    # use tile_n=512 for the small test so the grid has 2 steps (exercises the
    # pipelined multi-tile path); default tile_n=2048 is for production N.
    fwd = jax.jit(lambda p, ll, gl, pr:
                  occupancy_network_forward(p, ll, gl, pr, tile_n=512))
    occupancy, feature_vec, rgb = fwd(points, local_latent, global_latent, params)
    jax.block_until_ready((occupancy, feature_vec))

    # correctness check against a pure-JAX reference with matched precision
    ref_occ, ref_feat = _reference_forward(points, local_latent, global_latent, params)
    assert occupancy.shape == (n_rays, n_points, 1)
    assert feature_vec.shape == (n_rays, n_points, FEAT)
    np.testing.assert_allclose(np.asarray(occupancy), np.asarray(ref_occ),
                               rtol=2e-3, atol=2e-3)
    np.testing.assert_allclose(np.asarray(feature_vec), np.asarray(ref_feat),
                               rtol=2e-3, atol=2e-3)

    print("KERNEL_OK")
</pallas_src>

<mosaic_0001>
module attributes {stable_mosaic.version = 11 : i64} {
  func.func @_occ_mlp_kernel(%arg0: i32, %arg1: memref<512x64xbf16, #tpu.memory_space<vmem>>, %arg2: memref<64x128xbf16, #tpu.memory_space<vmem>>, %arg3: memref<1x128xf32, #tpu.memory_space<vmem>>, %arg4: memref<128x128xbf16, #tpu.memory_space<vmem>>, %arg5: memref<1x128xf32, #tpu.memory_space<vmem>>, %arg6: memref<128x128xbf16, #tpu.memory_space<vmem>>, %arg7: memref<64x128xbf16, #tpu.memory_space<vmem>>, %arg8: memref<1x128xf32, #tpu.memory_space<vmem>>, %arg9: memref<128x128xbf16, #tpu.memory_space<vmem>>, %arg10: memref<1x128xf32, #tpu.memory_space<vmem>>, %arg11: memref<128x16xbf16, #tpu.memory_space<vmem>>, %arg12: memref<1x16xf32, #tpu.memory_space<vmem>>, %arg13: memref<512x16xf32, #tpu.memory_space<vmem>>) attributes {dimension_semantics = [#tpu.dimension_semantics<parallel>], iteration_bounds = array<i64: 2>, scalar_prefetch = 0 : i64, scratch_operands = 0 : i64, tpu.core_type = #tpu.core_type<tc>, window_params = [{transform_indices = @transform_0, window_bounds = array<i64: 512, 64>}, {pipeline_mode = #tpu.pipeline_mode<synchronous>, transform_indices = @transform_1, window_bounds = array<i64: 64, 128>}, {pipeline_mode = #tpu.pipeline_mode<synchronous>, transform_indices = @transform_2, window_bounds = array<i64: 1, 128>}, {pipeline_mode = #tpu.pipeline_mode<synchronous>, transform_indices = @transform_3, window_bounds = array<i64: 128, 128>}, {pipeline_mode = #tpu.pipeline_mode<synchronous>, transform_indices = @transform_4, window_bounds = array<i64: 1, 128>}, {pipeline_mode = #tpu.pipeline_mode<synchronous>, transform_indices = @transform_5, window_bounds = array<i64: 128, 128>}, {pipeline_mode = #tpu.pipeline_mode<synchronous>, transform_indices = @transform_6, window_bounds = array<i64: 64, 128>}, {pipeline_mode = #tpu.pipeline_mode<synchronous>, transform_indices = @transform_7, window_bounds = array<i64: 1, 128>}, {pipeline_mode = #tpu.pipeline_mode<synchronous>, transform_indices = @transform_8, window_bounds = array<i64: 128, 128>}, {pipeline_mode = #tpu.pipeline_mode<synchronous>, transform_indices = @transform_9, window_bounds = array<i64: 1, 128>}, {pipeline_mode = #tpu.pipeline_mode<synchronous>, transform_indices = @transform_10, window_bounds = array<i64: 128, 16>}, {pipeline_mode = #tpu.pipeline_mode<synchronous>, transform_indices = @transform_11, window_bounds = array<i64: 1, 16>}, {transform_indices = @transform_12, window_bounds = array<i64: 512, 16>}]} {
    %c0 = arith.constant 0 : index
    %c0_0 = arith.constant 0 : index
    %0 = vector.load %arg1[%c0, %c0_0] : memref<512x64xbf16, #tpu.memory_space<vmem>>, vector<512x64xbf16>
    %c0_1 = arith.constant 0 : index
    %c0_2 = arith.constant 0 : index
    %1 = vector.load %arg2[%c0_1, %c0_2] : memref<64x128xbf16, #tpu.memory_space<vmem>>, vector<64x128xbf16>
    %cst = arith.constant dense<0.000000e+00> : vector<512x128xf32>
    %2 = tpu.matmul %0, %1, %cst {dimension_numbers = #tpu.dot_dimension_numbers<[1], [0], [0], [1], [0, 0, 1, 1], [], []>} : vector<512x64xbf16>, vector<64x128xbf16>, vector<512x128xf32> -> vector<512x128xf32>
    %c0_3 = arith.constant 0 : index
    %c0_4 = arith.constant 0 : index
    %3 = vector.load %arg3[%c0_3, %c0_4] : memref<1x128xf32, #tpu.memory_space<vmem>>, vector<1x128xf32>
    %4 = vector.broadcast %3 : vector<1x128xf32> to vector<512x128xf32>
    %5 = arith.addf %2, %4 : vector<512x128xf32>
    %cst_5 = arith.constant 1.000000e+02 : f32
    %6 = vector.broadcast %cst_5 : f32 to vector<512x128xf32>
    %7 = arith.mulf %6, %5 : vector<512x128xf32>
    %cst_6 = arith.constant 2.000000e+01 : f32
    %8 = vector.broadcast %cst_6 : f32 to vector<512x128xf32>
    %9 = arith.cmpf ogt, %7, %8 : vector<512x128xf32>
    %cst_7 = arith.constant 2.000000e+01 : f32
    %10 = vector.broadcast %cst_7 : f32 to vector<512x128xf32>
    %11 = arith.minimumf %7, %10 : vector<512x128xf32>
    %12 = math.exp %11 : vector<512x128xf32>
    %13 = math.log1p %12 : vector<512x128xf32>
    %cst_8 = arith.constant 1.000000e+02 : f32
    %14 = vector.broadcast %cst_8 : f32 to vector<512x128xf32>
    %15 = arith.divf %13, %14 : vector<512x128xf32>
    %16 = arith.select %9, %5, %15 : vector<512x128xi1>, vector<512x128xf32>
    %17 = arith.truncf %16 : vector<512x128xf32> to vector<512x128xbf16>
    %c0_9 = arith.constant 0 : index
    %c0_10 = arith.constant 0 : index
    %18 = vector.load %arg4[%c0_9, %c0_10] : memref<128x128xbf16, #tpu.memory_space<vmem>>, vector<128x128xbf16>
    %cst_11 = arith.constant dense<0.000000e+00> : vector<512x128xf32>
    %19 = tpu.matmul %17, %18, %cst_11 {dimension_numbers = #tpu.dot_dimension_numbers<[1], [0], [0], [1], [0, 0, 1, 1], [], []>} : vector<512x128xbf16>, vector<128x128xbf16>, vector<512x128xf32> -> vector<512x128xf32>
    %c0_12 = arith.constant 0 : index
    %c0_13 = arith.constant 0 : index
    %20 = vector.load %arg5[%c0_12, %c0_13] : memref<1x128xf32, #tpu.memory_space<vmem>>, vector<1x128xf32>
    %21 = vector.broadcast %20 : vector<1x128xf32> to vector<512x128xf32>
    %22 = arith.addf %19, %21 : vector<512x128xf32>
    %cst_14 = arith.constant 1.000000e+02 : f32
    %23 = vector.broadcast %cst_14 : f32 to vector<512x128xf32>
    %24 = arith.mulf %23, %22 : vector<512x128xf32>
    %cst_15 = arith.constant 2.000000e+01 : f32
    %25 = vector.broadcast %cst_15 : f32 to vector<512x128xf32>
    %26 = arith.cmpf ogt, %24, %25 : vector<512x128xf32>
    %cst_16 = arith.constant 2.000000e+01 : f32
    %27 = vector.broadcast %cst_16 : f32 to vector<512x128xf32>
    %28 = arith.minimumf %24, %27 : vector<512x128xf32>
    %29 = math.exp %28 : vector<512x128xf32>
    %30 = math.log1p %29 : vector<512x128xf32>
    %cst_17 = arith.constant 1.000000e+02 : f32
    %31 = vector.broadcast %cst_17 : f32 to vector<512x128xf32>
    %32 = arith.divf %30, %31 : vector<512x128xf32>
    %33 = arith.select %26, %22, %32 : vector<512x128xi1>, vector<512x128xf32>
    %34 = arith.truncf %33 : vector<512x128xf32> to vector<512x128xbf16>
    %c0_18 = arith.constant 0 : index
    %c0_19 = arith.constant 0 : index
    %35 = vector.load %arg6[%c0_18, %c0_19] : memref<128x128xbf16, #tpu.memory_space<vmem>>, vector<128x128xbf16>
    %cst_20 = arith.constant dense<0.000000e+00> : vector<512x128xf32>
    %36 = tpu.matmul %34, %35, %cst_20 {dimension_numbers = #tpu.dot_dimension_numbers<[1], [0], [0], [1], [0, 0, 1, 1], [], []>} : vector<512x128xbf16>, vector<128x128xbf16>, vector<512x128xf32> -> vector<512x128xf32>
    %c0_21 = arith.constant 0 : index
    %c0_22 = arith.constant 0 : index
    %37 = vector.load %arg7[%c0_21, %c0_22] : memref<64x128xbf16, #tpu.memory_space<vmem>>, vector<64x128xbf16>
    %cst_23 = arith.constant dense<0.000000e+00> : vector<512x128xf32>
    %38 = tpu.matmul %0, %37, %cst_23 {dimension_numbers = #tpu.dot_dimension_numbers<[1], [0], [0], [1], [0, 0, 1, 1], [], []>} : vector<512x64xbf16>, vector<64x128xbf16>, vector<512x128xf32> -> vector<512x128xf32>
    %39 = arith.addf %36, %38 : vector<512x128xf32>
    %cst_24 = arith.constant 0.707106769 : f32
    %40 = vector.broadcast %cst_24 : f32 to vector<512x128xf32>
    %41 = arith.mulf %39, %40 : vector<512x128xf32>
    %c0_25 = arith.constant 0 : index
    %c0_26 = arith.constant 0 : index
    %42 = vector.load %arg8[%c0_25, %c0_26] : memref<1x128xf32, #tpu.memory_space<vmem>>, vector<1x128xf32>
    %43 = vector.broadcast %42 : vector<1x128xf32> to vector<512x128xf32>
    %44 = arith.addf %41, %43 : vector<512x128xf32>
    %cst_27 = arith.constant 1.000000e+02 : f32
    %45 = vector.broadcast %cst_27 : f32 to vector<512x128xf32>
    %46 = arith.mulf %45, %44 : vector<512x128xf32>
    %cst_28 = arith.constant 2.000000e+01 : f32
    %47 = vector.broadcast %cst_28 : f32 to vector<512x128xf32>
    %48 = arith.cmpf ogt, %46, %47 : vector<512x128xf32>
    %cst_29 = arith.constant 2.000000e+01 : f32
    %49 = vector.broadcast %cst_29 : f32 to vector<512x128xf32>
    %50 = arith.minimumf %46, %49 : vector<512x128xf32>
    %51 = math.exp %50 : vector<512x128xf32>
    %52 = math.log1p %51 : vector<512x128xf32>
    %cst_30 = arith.constant 1.000000e+02 : f32
    %53 = vector.broadcast %cst_30 : f32 to vector<512x128xf32>
    %54 = arith.divf %52, %53 : vector<512x128xf32>
    %55 = arith.select %48, %44, %54 : vector<512x128xi1>, vector<512x128xf32>
    %56 = arith.truncf %55 : vector<512x128xf32> to vector<512x128xbf16>
    %c0_31 = arith.constant 0 : index
    %c0_32 = arith.constant 0 : index
    %57 = vector.load %arg9[%c0_31, %c0_32] : memref<128x128xbf16, #tpu.memory_space<vmem>>, vector<128x128xbf16>
    %cst_33 = arith.constant dense<0.000000e+00> : vector<512x128xf32>
    %58 = tpu.matmul %56, %57, %cst_33 {dimension_numbers = #tpu.dot_dimension_numbers<[1], [0], [0], [1], [0, 0, 1, 1], [], []>} : vector<512x128xbf16>, vector<128x128xbf16>, vector<512x128xf32> -> vector<512x128xf32>
    %c0_34 = arith.constant 0 : index
    %c0_35 = arith.constant 0 : index
    %59 = vector.load %arg10[%c0_34, %c0_35] : memref<1x128xf32, #tpu.memory_space<vmem>>, vector<1x128xf32>
    %60 = vector.broadcast %59 : vector<1x128xf32> to vector<512x128xf32>
    %61 = arith.addf %58, %60 : vector<512x128xf32>
    %cst_36 = arith.constant 1.000000e+02 : f32
    %62 = vector.broadcast %cst_36 : f32 to vector<512x128xf32>
    %63 = arith.mulf %62, %61 : vector<512x128xf32>
    %cst_37 = arith.constant 2.000000e+01 : f32
    %64 = vector.broadcast %cst_37 : f32 to vector<512x128xf32>
    %65 = arith.cmpf ogt, %63, %64 : vector<512x128xf32>
    %cst_38 = arith.constant 2.000000e+01 : f32
    %66 = vector.broadcast %cst_38 : f32 to vector<512x128xf32>
    %67 = arith.minimumf %63, %66 : vector<512x128xf32>
    %68 = math.exp %67 : vector<512x128xf32>
    %69 = math.log1p %68 : vector<512x128xf32>
    %cst_39 = arith.constant 1.000000e+02 : f32
    %70 = vector.broadcast %cst_39 : f32 to vector<512x128xf32>
    %71 = arith.divf %69, %70 : vector<512x128xf32>
    %72 = arith.select %65, %61, %71 : vector<512x128xi1>, vector<512x128xf32>
    %73 = arith.truncf %72 : vector<512x128xf32> to vector<512x128xbf16>
    %c0_40 = arith.constant 0 : index
    %c0_41 = arith.constant 0 : index
    %74 = vector.load %arg11[%c0_40, %c0_41] : memref<128x16xbf16, #tpu.memory_space<vmem>>, vector<128x16xbf16>
    %cst_42 = arith.constant dense<0.000000e+00> : vector<512x16xf32>
    %75 = tpu.matmul %73, %74, %cst_42 {dimension_numbers = #tpu.dot_dimension_numbers<[1], [0], [0], [1], [0, 0, 1, 1], [], []>} : vector<512x128xbf16>, vector<128x16xbf16>, vector<512x16xf32> -> vector<512x16xf32>
    %c0_43 = arith.constant 0 : index
    %c0_44 = arith.constant 0 : index
    %76 = vector.load %arg12[%c0_43, %c0_44] : memref<1x16xf32, #tpu.memory_space<vmem>>, vector<1x16xf32>
    %77 = vector.broadcast %76 : vector<1x16xf32> to vector<512x16xf32>
    %78 = arith.addf %75, %77 : vector<512x16xf32>
    %79 = tpu.iota {dimensions = array<i32: 1>} : vector<512x16xi32>
    %c0_i32 = arith.constant 0 : i32
    %80 = vector.broadcast %c0_i32 : i32 to vector<512x16xi32>
    %81 = arith.cmpi eq, %79, %80 : vector<512x16xi32>
    %cst_45 = arith.constant 1.000000e+01 : f32
    %82 = vector.broadcast %cst_45 : f32 to vector<512x16xf32>
    %83 = arith.mulf %82, %78 : vector<512x16xf32>
    %84 = math.exp %83 : vector<512x16xf32>
    %cst_46 = arith.constant 1.000000e+00 : f32
    %85 = vector.broadcast %cst_46 : f32 to vector<512x16xf32>
    %86 = arith.addf %85, %84 : vector<512x16xf32>
    %cst_47 = arith.constant 1.000000e+00 : f32
    %87 = vector.broadcast %cst_47 : f32 to vector<512x16xf32>
    %88 = arith.divf %87, %86 : vector<512x16xf32>
    %89 = arith.select %81, %88, %78 : vector<512x16xi1>, vector<512x16xf32>
    %c0_48 = arith.constant 0 : index
    %c0_49 = arith.constant 0 : index
    %90 = vector.load %arg13[%c0_48, %c0_49] : memref<512x16xf32, #tpu.memory_space<vmem>>, vector<512x16xf32>
    tpu.vector_store %arg13[%c0_48, %c0_49], %89 {strides = array<i32>} : memref<512x16xf32, #tpu.memory_space<vmem>>, vector<512x16xf32>,
    return
  }
  func.func @transform_0(%arg0: i32) -> (i32, i32) {
    %c0_i32 = arith.constant 0 : i32
    %c0_i32_0 = arith.constant 0 : i32
    return %arg0, %c0_i32 : i32, i32
  }
  func.func @transform_1(%arg0: i32) -> (i32, i32) {
    %c0_i32 = arith.constant 0 : i32
    %c0_i32_0 = arith.constant 0 : i32
    %c0_i32_1 = arith.constant 0 : i32
    return %c0_i32, %c0_i32_0 : i32, i32
  }
  func.func @transform_2(%arg0: i32) -> (i32, i32) {
    %c0_i32 = arith.constant 0 : i32
    %c0_i32_0 = arith.constant 0 : i32
    %c0_i32_1 = arith.constant 0 : i32
    return %c0_i32, %c0_i32_0 : i32, i32
  }
  func.func @transform_3(%arg0: i32) -> (i32, i32) {
    %c0_i32 = arith.constant 0 : i32
    %c0_i32_0 = arith.constant 0 : i32
    %c0_i32_1 = arith.constant 0 : i32
    return %c0_i32, %c0_i32_0 : i32, i32
  }
  func.func @transform_4(%arg0: i32) -> (i32, i32) {
    %c0_i32 = arith.constant 0 : i32
    %c0_i32_0 = arith.constant 0 : i32
    %c0_i32_1 = arith.constant 0 : i32
    return %c0_i32, %c0_i32_0 : i32, i32
  }
  func.func @transform_5(%arg0: i32) -> (i32, i32) {
    %c0_i32 = arith.constant 0 : i32
    %c0_i32_0 = arith.constant 0 : i32
    %c0_i32_1 = arith.constant 0 : i32
    return %c0_i32, %c0_i32_0 : i32, i32
  }
  func.func @transform_6(%arg0: i32) -> (i32, i32) {
    %c0_i32 = arith.constant 0 : i32
    %c0_i32_0 = arith.constant 0 : i32
    %c0_i32_1 = arith.constant 0 : i32
    return %c0_i32, %c0_i32_0 : i32, i32
  }
  func.func @transform_7(%arg0: i32) -> (i32, i32) {
    %c0_i32 = arith.constant 0 : i32
    %c0_i32_0 = arith.constant 0 : i32
    %c0_i32_1 = arith.constant 0 : i32
    return %c0_i32, %c0_i32_0 : i32, i32
  }
  func.func @transform_8(%arg0: i32) -> (i32, i32) {
    %c0_i32 = arith.constant 0 : i32
    %c0_i32_0 = arith.constant 0 : i32
    %c0_i32_1 = arith.constant 0 : i32
    return %c0_i32, %c0_i32_0 : i32, i32
  }
  func.func @transform_9(%arg0: i32) -> (i32, i32) {
    %c0_i32 = arith.constant 0 : i32
    %c0_i32_0 = arith.constant 0 : i32
    %c0_i32_1 = arith.constant 0 : i32
    return %c0_i32, %c0_i32_0 : i32, i32
  }
  func.func @transform_10(%arg0: i32) -> (i32, i32) {
    %c0_i32 = arith.constant 0 : i32
    %c0_i32_0 = arith.constant 0 : i32
    %c0_i32_1 = arith.constant 0 : i32
    return %c0_i32, %c0_i32_0 : i32, i32
  }
  func.func @transform_11(%arg0: i32) -> (i32, i32) {
    %c0_i32 = arith.constant 0 : i32
    %c0_i32_0 = arith.constant 0 : i32
    %c0_i32_1 = arith.constant 0 : i32
    return %c0_i32, %c0_i32_0 : i32, i32
  }
  func.func @transform_12(%arg0: i32) -> (i32, i32) {
    %c0_i32 = arith.constant 0 : i32
    %c0_i32_0 = arith.constant 0 : i32
    return %arg0, %c0_i32 : i32, i32
  }
}

</mosaic_0001>

<llo_original>
// kernel: _lambda_.1
$region0: #{_lambda_.1}
  #allocation0 [shape = 'u32[]', space=smem, size = 0x4, offset = 0x4, fixed_abs, tag = 'smem constant byte address 0x4 - core index']
  #allocation1 [shape = 'u32[72,128]{1,0:T(1,128)}', space=vmem, size = 0x9000, scoped, tag = 'internal scratch']
  %s0 = inlined_call_operand.vmem [shape: bf16[1024,64], index: 0, kind: input, shape index: {}]
  %s1 = inlined_call_operand.vmem [shape: bf16[64,128], index: 1, kind: input, shape index: {}]
  %s2 = inlined_call_operand.vmem [shape: f32[1,128], index: 2, kind: input, shape index: {}]
  %s3 = inlined_call_operand.vmem [shape: bf16[128,128], index: 3, kind: input, shape index: {}]
  %s4 = inlined_call_operand.vmem [shape: f32[1,128], index: 4, kind: input, shape index: {}]
  %s5 = inlined_call_operand.vmem [shape: bf16[128,128], index: 5, kind: input, shape index: {}]
  %s6 = inlined_call_operand.vmem [shape: bf16[64,128], index: 6, kind: input, shape index: {}]
  %s7 = inlined_call_operand.vmem [shape: f32[1,128], index: 7, kind: input, shape index: {}]
  %s8 = inlined_call_operand.vmem [shape: bf16[128,128], index: 8, kind: input, shape index: {}]
  %s9 = inlined_call_operand.vmem [shape: f32[1,128], index: 9, kind: input, shape index: {}]
  %s10 = inlined_call_operand.vmem [shape: bf16[128,16], index: 10, kind: input, shape index: {}]
  %s11 = inlined_call_operand.vmem [shape: f32[1,16], index: 11, kind: input, shape index: {}]
  %s12 = inlined_call_operand.vmem [shape: f32[1024,16], index: 12, kind: output, shape index: {}]
  %s13 = sld [smem:[#allocation0]]
  $region81: #{_lambda_.1} parent=0
    _
  %s15 = ssub.s32 1, %s13
  %s16 = scalar_select 0, %s15, %s13
  loop: start=0, step=1, limit=4
  $region2: #{_lambda_.1} parent=0 // loop_pre_header
    _
  $region3: #{_lambda_.1} parent=0 // loop_header
    %s18 = sphi 0, %s22
    %p19 = scmp.ge.s32.totalorder %s18, 4
    %s28 = sphi 0, %s30
    %s31 = sphi 0, %s28
    %s32 = sphi 0, %s31
    %s48 = sphi 0, %s32
    %s52 = sphi 0, %s52
    %s54 = sphi 0, %s52
    %s55 = sphi 0, %s54
    %s69 = sphi 0, %s55
    %s73 = sphi 0, %s73
    %s75 = sphi 0, %s73
    %s76 = sphi 0, %s75
    %s90 = sphi 0, %s76
    %s94 = sphi 0, %s94
    %s96 = sphi 0, %s94
    %s97 = sphi 0, %s96
    %s111 = sphi 0, %s97
    %s115 = sphi 0, %s115
    %s117 = sphi 0, %s115
    %s118 = sphi 0, %s117
    %s132 = sphi 0, %s118
    %s136 = sphi 0, %s136
    %s138 = sphi 0, %s136
    %s139 = sphi 0, %s138
    %s153 = sphi 0, %s139
    %s157 = sphi 0, %s157
    %s159 = sphi 0, %s157
    %s160 = sphi 0, %s159
    %s174 = sphi 0, %s160
    %s178 = sphi 0, %s178
    %s180 = sphi 0, %s178
    %s181 = sphi 0, %s180
    %s195 = sphi 0, %s181
    %s199 = sphi 0, %s199
    %s201 = sphi 0, %s199
    %s202 = sphi 0, %s201
    %s216 = sphi 0, %s202
    %s220 = sphi 0, %s220
    %s222 = sphi 0, %s220
    %s223 = sphi 0, %s222
    %s237 = sphi 0, %s223
    %s241 = sphi 0, %s241
    %s243 = sphi 0, %s241
    %s244 = sphi 0, %s243
    %s258 = sphi 0, %s244
    %s262 = sphi 0, %s262
    %s264 = sphi 0, %s262
    %s265 = sphi 0, %s264
    %s279 = sphi 0, %s265
    %s285 = sphi 0, %s287
    %s288 = sphi 0, %s285
    %s289 = sphi 0, %s288
    %s305 = sphi 0, %s289
  $region4: #{_lambda_.1} parent=0 // loop_header_branch
    %21 = sbr.rel (%p19) target = $region8
  $region5: #{_lambda_.1} parent=0 // loop_body
    %s23 = ssub.s32 %s18, 1
    %s24 = ssub.s32 %s18, 2
    %s25 = sadd.s32 %s18, 1
    %s26 = ssub.s32 %s18, %s25
    %p27 = scmp.eq.s32.totalorder %s26, 0
    %s29 = sadd.s32 %s28, 1
    %s30 = scalar_select %p27, %s28, %s29
    %p33 = pneg %p27
    %p34 = scmp.eq.s32.totalorder %s18, 1
    %p35 = por %p33, %p34
    %p36 = scmp.ne.s32.totalorder %s28, %s31
    %p37 = scmp.eq.s32.totalorder %s18, 0
    %p38 = por %p36, %p37
    %p39 = scmp.ne.s32.totalorder %s28, %s31
    %p40 = scmp.eq.s32.totalorder %s23, 1
    %p41 = por %p39, %p40
    %p42 = scmp.ne.s32.totalorder %s31, %s32
    %p43 = scmp.eq.s32.totalorder %s23, 0
    %p44 = por %p42, %p43
    %p45 = scmp.ne.s32.totalorder %s31, %s32
    %p46 = scmp.eq.s32.totalorder %s24, 1
    %p47 = por %p45, %p46
    %p49 = scmp.ne.s32.totalorder %s32, %s48
    %p50 = scmp.eq.s32.totalorder %s24, 0
    %p51 = por %p49, %p50
    %s53 = sadd.s32 %s52, 1
    %p56 = scmp.eq.s32.totalorder %s18, 1
    %p57 = scmp.ne.s32.totalorder %s52, %s54
    %p58 = scmp.eq.s32.totalorder %s18, 0
    %p59 = por %p57, %p58
    %p60 = scmp.ne.s32.totalorder %s52, %s54
    %p61 = scmp.eq.s32.totalorder %s23, 1
    %p62 = por %p60, %p61
    %p63 = scmp.ne.s32.totalorder %s54, %s55
    %p64 = scmp.eq.s32.totalorder %s23, 0
    %p65 = por %p63, %p64
    %p66 = scmp.ne.s32.totalorder %s54, %s55
    %p67 = scmp.eq.s32.totalorder %s24, 1
    %p68 = por %p66, %p67
    %p70 = scmp.ne.s32.totalorder %s55, %s69
    %p71 = scmp.eq.s32.totalorder %s24, 0
    %p72 = por %p70, %p71
    %s74 = sadd.s32 %s73, 1
    %p77 = scmp.eq.s32.totalorder %s18, 1
    %p78 = scmp.ne.s32.totalorder %s73, %s75
    %p79 = scmp.eq.s32.totalorder %s18, 0
    %p80 = por %p78, %p79
    %p81 = scmp.ne.s32.totalorder %s73, %s75
    %p82 = scmp.eq.s32.totalorder %s23, 1
    %p83 = por %p81, %p82
    %p84 = scmp.ne.s32.totalorder %s75, %s76
    %p85 = scmp.eq.s32.totalorder %s23, 0
    %p86 = por %p84, %p85
    %p87 = scmp.ne.s32.totalorder %s75, %s76
    %p88 = scmp.eq.s32.totalorder %s24, 1
    %p89 = por %p87, %p88
    %p91 = scmp.ne.s32.totalorder %s76, %s90
    %p92 = scmp.eq.s32.totalorder %s24, 0
    %p93 = por %p91, %p92
    %s95 = sadd.s32 %s94, 1
    %p98 = scmp.eq.s32.totalorder %s18, 1
    %p99 = scmp.ne.s32.totalorder %s94, %s96
    %p100 = scmp.eq.s32.totalorder %s18, 0
    %p101 = por %p99, %p100
    %p102 = scmp.ne.s32.totalorder %s94, %s96
    %p103 = scmp.eq.s32.totalorder %s23, 1
    %p104 = por %p102, %p103
    %p105 = scmp.ne.s32.totalorder %s96, %s97
    %p106 = scmp.eq.s32.totalorder %s23, 0
    %p107 = por %p105, %p106
    %p108 = scmp.ne.s32.totalorder %s96, %s97
    %p109 = scmp.eq.s32.totalorder %s24, 1
    %p110 = por %p108, %p109
    %p112 = scmp.ne.s32.totalorder %s97, %s111
    %p113 = scmp.eq.s32.totalorder %s24, 0
    %p114 = por %p112, %p113
    %s116 = sadd.s32 %s115, 1
    %p119 = scmp.eq.s32.totalorder %s18, 1
    %p120 = scmp.ne.s32.totalorder %s115, %s117
    %p121 = scmp.eq.s32.totalorder %s18, 0
    %p122 = por %p120, %p121
    %p123 = scmp.ne.s32.totalorder %s115, %s117
    %p124 = scmp.eq.s32.totalorder %s23, 1
    %p125 = por %p123, %p124
    %p126 = scmp.ne.s32.totalorder %s117, %s118
    %p127 = scmp.eq.s32.totalorder %s23, 0
    %p128 = por %p126, %p127
    %p129 = scmp.ne.s32.totalorder %s117, %s118
    %p130 = scmp.eq.s32.totalorder %s24, 1
    %p131 = por %p129, %p130
    %p133 = scmp.ne.s32.totalorder %s118, %s132
    %p134 = scmp.eq.s32.totalorder %s24, 0
    %p135 = por %p133, %p134
    %s137 = sadd.s32 %s136, 1
    %p140 = scmp.eq.s32.totalorder %s18, 1
    %p141 = scmp.ne.s32.totalorder %s136, %s138
    %p142 = scmp.eq.s32.totalorder %s18, 0
    %p143 = por %p141, %p142
    %p144 = scmp.ne.s32.totalorder %s136, %s138
    %p145 = scmp.eq.s32.totalorder %s23, 1
    %p146 = por %p144, %p145
    %p147 = scmp.ne.s32.totalorder %s138, %s139
    %p148 = scmp.eq.s32.totalorder %s23, 0
    %p149 = por %p147, %p148
    %p150 = scmp.ne.s32.totalorder %s138, %s139
    %p151 = scmp.eq.s32.totalorder %s24, 1
    %p152 = por %p150, %p151
    %p154 = scmp.ne.s32.totalorder %s139, %s153
    %p155 = scmp.eq.s32.totalorder %s24, 0
    %p156 = por %p154, %p155
    %s158 = sadd.s32 %s157, 1
    %p161 = scmp.eq.s32.totalorder %s18, 1
    %p162 = scmp.ne.s32.totalorder %s157, %s159
    %p163 = scmp.eq.s32.totalorder %s18, 0
    %p164 = por %p162, %p163
    %p165 = scmp.ne.s32.totalorder %s157, %s159
    %p166 = scmp.eq.s32.totalorder %s23, 1
    %p167 = por %p165, %p166
    %p168 = scmp.ne.s32.totalorder %s159, %s160
    %p169 = scmp.eq.s32.totalorder %s23, 0
    %p170 = por %p168, %p169
    %p171 = scmp.ne.s32.totalorder %s159, %s160
    %p172 = scmp.eq.s32.totalorder %s24, 1
    %p173 = por %p171, %p172
    %p175 = scmp.ne.s32.totalorder %s160, %s174
    %p176 = scmp.eq.s32.totalorder %s24, 0
    %p177 = por %p175, %p176
    %s179 = sadd.s32 %s178, 1
    %p182 = scmp.eq.s32.totalorder %s18, 1
    %p183 = scmp.ne.s32.totalorder %s178, %s180
    %p184 = scmp.eq.s32.totalorder %s18, 0
    %p185 = por %p183, %p184
    %p186 = scmp.ne.s32.totalorder %s178, %s180
    %p187 = scmp.eq.s32.totalorder %s23, 1
    %p188 = por %p186, %p187
    %p189 = scmp.ne.s32.totalorder %s180, %s181
    %p190 = scmp.eq.s32.totalorder %s23, 0
    %p191 = por %p189, %p190
    %p192 = scmp.ne.s32.totalorder %s180, %s181
    %p193 = scmp.eq.s32.totalorder %s24, 1
    %p194 = por %p192, %p193
    %p196 = scmp.ne.s32.totalorder %s181, %s195
    %p197 = scmp.eq.s32.totalorder %s24, 0
    %p198 = por %p196, %p197
    %s200 = sadd.s32 %s199, 1
    %p203 = scmp.eq.s32.totalorder %s18, 1
    %p204 = scmp.ne.s32.totalorder %s199, %s201
    %p205 = scmp.eq.s32.totalorder %s18, 0
    %p206 = por %p204, %p205
    %p207 = scmp.ne.s32.totalorder %s199, %s201
    %p208 = scmp.eq.s32.totalorder %s23, 1
    %p209 = por %p207, %p208
    %p210 = scmp.ne.s32.totalorder %s201, %s202
    %p211 = scmp.eq.s32.totalorder %s23, 0
    %p212 = por %p210, %p211
    %p213 = scmp.ne.s32.totalorder %s201, %s202
    %p214 = scmp.eq.s32.totalorder %s24, 1
    %p215 = por %p213, %p214
    %p217 = scmp.ne.s32.totalorder %s202, %s216
    %p218 = scmp.eq.s32.totalorder %s24, 0
    %p219 = por %p217, %p218
    %s221 = sadd.s32 %s220, 1
    %p224 = scmp.eq.s32.totalorder %s18, 1
    %p225 = scmp.ne.s32.totalorder %s220, %s222
    %p226 = scmp.eq.s32.totalorder %s18, 0
    %p227 = por %p225, %p226
    %p228 = scmp.ne.s32.totalorder %s220, %s222
    %p229 = scmp.eq.s32.totalorder %s23, 1
    %p230 = por %p228, %p229
    %p231 = scmp.ne.s32.totalorder %s222, %s223
    %p232 = scmp.eq.s32.totalorder %s23, 0
    %p233 = por %p231, %p232
    %p234 = scmp.ne.s32.totalorder %s222, %s223
    %p235 = scmp.eq.s32.totalorder %s24, 1
    %p236 = por %p234, %p235
    %p238 = scmp.ne.s32.totalorder %s223, %s237
    %p239 = scmp.eq.s32.totalorder %s24, 0
    %p240 = por %p238, %p239
    %s242 = sadd.s32 %s241, 1
    %p245 = scmp.eq.s32.totalorder %s18, 1
    %p246 = scmp.ne.s32.totalorder %s241, %s243
    %p247 = scmp.eq.s32.totalorder %s18, 0
    %p248 = por %p246, %p247
    %p249 = scmp.ne.s32.totalorder %s241, %s243
    %p250 = scmp.eq.s32.totalorder %s23, 1
    %p251 = por %p249, %p250
    %p252 = scmp.ne.s32.totalorder %s243, %s244
    %p253 = scmp.eq.s32.totalorder %s23, 0
    %p254 = por %p252, %p253
    %p255 = scmp.ne.s32.totalorder %s243, %s244
    %p256 = scmp.eq.s32.totalorder %s24, 1
    %p257 = por %p255, %p256
    %p259 = scmp.ne.s32.totalorder %s244, %s258
    %p260 = scmp.eq.s32.totalorder %s24, 0
    %p261 = por %p259, %p260
    %s263 = sadd.s32 %s262, 1
    %p266 = scmp.eq.s32.totalorder %s18, 1
    %p267 = scmp.ne.s32.totalorder %s262, %s264
    %p268 = scmp.eq.s32.totalorder %s18, 0
    %p269 = por %p267, %p268
    %p270 = scmp.ne.s32.totalorder %s262, %s264
    %p271 = scmp.eq.s32.totalorder %s23, 1
    %p272 = por %p270, %p271
    %p273 = scmp.ne.s32.totalorder %s264, %s265
    %p274 = scmp.eq.s32.totalorder %s23, 0
    %p275 = por %p273, %p274
    %p276 = scmp.ne.s32.totalorder %s264, %s265
    %p277 = scmp.eq.s32.totalorder %s24, 1
    %p278 = por %p276, %p277
    %p280 = scmp.ne.s32.totalorder %s265, %s279
    %p281 = scmp.eq.s32.totalorder %s24, 0
    %p282 = por %p280, %p281
    %s283 = ssub.s32 %s18, %s25
    %p284 = scmp.eq.s32.totalorder %s283, 0
    %s286 = sadd.s32 %s285, 1
    %s287 = scalar_select %p284, %s285, %s286
    %p290 = pneg %p284
    %p291 = scmp.eq.s32.totalorder %s18, 1
    %p292 = por %p290, %p291
    %p293 = scmp.ne.s32.totalorder %s285, %s288
    %p294 = scmp.eq.s32.totalorder %s18, 0
    %p295 = por %p293, %p294
    %p296 = scmp.ne.s32.totalorder %s285, %s288
    %p297 = scmp.eq.s32.totalorder %s23, 1
    %p298 = por %p296, %p297
    %p299 = scmp.ne.s32.totalorder %s288, %s289
    %p300 = scmp.eq.s32.totalorder %s23, 0
    %p301 = por %p299, %p300
    %p302 = scmp.ne.s32.totalorder %s288, %s289
    %p303 = scmp.eq.s32.totalorder %s24, 1
    %p304 = por %p302, %p303
    %p306 = scmp.ne.s32.totalorder %s289, %s305
    %p307 = scmp.eq.s32.totalorder %s24, 0
    %p308 = por %p306, %p307
    %p309 = scmp.le.s32.totalorder 1, %s18
    %p310 = scmp.lt.s32.totalorder %s18, 3
    %p311 = pnand %p309, %p310
    %p312 = pneg %p311
    // Predicated region
    $region9: #{_lambda_.1} parent=5 // pred_check
      _
    $region10: #{_lambda_.1} parent=5 // pred_check_branch
      %314 = sbr.rel (%p311) target = $region12
    $region11: #{_lambda_.1} parent=5 // pred_region
      %s315 = ssub.s32 %s18, 1
      // Predicated region
      $region13: #{_lambda_.1} parent=11 // pred_check
        %p316 = pneg %p65
      $region14: #{_lambda_.1} parent=11 // pred_check_branch
        %318 = sbr.rel (%p316) target = $region16
      $region15: #{_lambda_.1} parent=11 // pred_region
        _
      $region16: #{_lambda_.1} parent=11 // pred_fallthru
        _
      // Predicated region
      $region17: #{_lambda_.1} parent=11 // pred_check
        %p319 = pneg %p86
      $region18: #{_lambda_.1} parent=11 // pred_check_branch
        %321 = sbr.rel (%p319) target = $region20
      $region19: #{_lambda_.1} parent=11 // pred_region
        _
      $region20: #{_lambda_.1} parent=11 // pred_fallthru
        _
      // Predicated region
      $region21: #{_lambda_.1} parent=11 // pred_check
        %p322 = pneg %p107
      $region22: #{_lambda_.1} parent=11 // pred_check_branch
        %324 = sbr.rel (%p322) target = $region24
      $region23: #{_lambda_.1} parent=11 // pred_region
        _
      $region24: #{_lambda_.1} parent=11 // pred_fallthru
        _
      // Predicated region
      $region25: #{_lambda_.1} parent=11 // pred_check
        %p325 = pneg %p128
      $region26: #{_lambda_.1} parent=11 // pred_check_branch
        %327 = sbr.rel (%p325) target = $region28
      $region27: #{_lambda_.1} parent=11 // pred_region
        _
      $region28: #{_lambda_.1} parent=11 // pred_fallthru
        _
      // Predicated region
      $region29: #{_lambda_.1} parent=11 // pred_check
        %p328 = pneg %p149
      $region30: #{_lambda_.1} parent=11 // pred_check_branch
        %330 = sbr.rel (%p328) target = $region32
      $region31: #{_lambda_.1} parent=11 // pred_region
        _
      $region32: #{_lambda_.1} parent=11 // pred_fallthru
        _
      // Predicated region
      $region33: #{_lambda_.1} parent=11 // pred_check
        %p331 = pneg %p170
      $region34: #{_lambda_.1} parent=11 // pred_check_branch
        %333 = sbr.rel (%p331) target = $region36
      $region35: #{_lambda_.1} parent=11 // pred_region
        _
      $region36: #{_lambda_.1} parent=11 // pred_fallthru
        _
      // Predicated region
      $region37: #{_lambda_.1} parent=11 // pred_check
        %p334 = pneg %p191
      $region38: #{_lambda_.1} parent=11 // pred_check_branch
        %336 = sbr.rel (%p334) target = $region40
      $region39: #{_lambda_.1} parent=11 // pred_region
        _
      $region40: #{_lambda_.1} parent=11 // pred_fallthru
        _
      // Predicated region
      $region41: #{_lambda_.1} parent=11 // pred_check
        %p337 = pneg %p212
      $region42: #{_lambda_.1} parent=11 // pred_check_branch
        %339 = sbr.rel (%p337) target = $region44
      $region43: #{_lambda_.1} parent=11 // pred_region
        _
      $region44: #{_lambda_.1} parent=11 // pred_fallthru
        _
      // Predicated region
      $region45: #{_lambda_.1} parent=11 // pred_check
        %p340 = pneg %p233
      $region46: #{_lambda_.1} parent=11 // pred_check_branch
        %342 = sbr.rel (%p340) target = $region48
      $region47: #{_lambda_.1} parent=11 // pred_region
        _
      $region48: #{_lambda_.1} parent=11 // pred_fallthru
        _
      // Predicated region
      $region49: #{_lambda_.1} parent=11 // pred_check
        %p343 = pneg %p254
      $region50: #{_lambda_.1} parent=11 // pred_check_branch
        %345 = sbr.rel (%p343) target = $region52
      $region51: #{_lambda_.1} parent=11 // pred_region
        _
      $region52: #{_lambda_.1} parent=11 // pred_fallthru
        _
      // Predicated region
      $region53: #{_lambda_.1} parent=11 // pred_check
        %p346 = pneg %p275
      $region54: #{_lambda_.1} parent=11 // pred_check_branch
        %348 = sbr.rel (%p346) target = $region56
      $region55: #{_lambda_.1} parent=11 // pred_region
        _
      $region56: #{_lambda_.1} parent=11 // pred_fallthru
        _
    $region12: #{_lambda_.1} parent=5 // pred_fallthru
      _
    %p349 = scmp.lt.s32.totalorder %s18, 2
    // Predicated region
    $region57: #{_lambda_.1} parent=5 // pred_check
      %p350 = pneg %p349
    $region58: #{_lambda_.1} parent=5 // pred_check_branch
      %352 = sbr.rel (%p350) target = $region60
    $region59: #{_lambda_.1} parent=5 // pred_region
      // Predicated region
      $region61: #{_lambda_.1} parent=59 // pred_check
        %p353 = pneg %p38
      $region62: #{_lambda_.1} parent=59 // pred_check_branch
        %355 = sbr.rel (%p353) target = $region64
      $region63: #{_lambda_.1} parent=59 // pred_region
        %s356 = smul.u32 64, %s18
        %p357 = scmp.lt.s32.totalorder %s356, 127
        %s358 = scalar_select %p357, %s356, 127
        %s359 = smul.addr %s358, 4
        %s360 = scalar_lea.vmem %s0, %s359
        %s361 = smul.u32 64, %s18
      $region64: #{_lambda_.1} parent=59 // pred_fallthru
        _
    $region60: #{_lambda_.1} parent=5 // pred_fallthru
      _
    %p362 = scmp.le.s32.totalorder 1, %s18
    %p363 = scmp.lt.s32.totalorder %s18, 3
    %p364 = pnand %p362, %p363
    %p365 = pneg %p364
    // Predicated region
    $region65: #{_lambda_.1} parent=5 // pred_check
      _
    $region66: #{_lambda_.1} parent=5 // pred_check_branch
      %367 = sbr.rel (%p364) target = $region68
    $region67: #{_lambda_.1} parent=5 // pred_region
      %s368 = ssub.s32 %s18, 1
      %s369 = smul.u32 64, %s23
      %p370 = scmp.lt.s32.totalorder %s369, 127
      %s371 = scalar_select %p370, %s369, 127
      %s372 = smul.addr %s371, 4
      %s373 = scalar_lea.vmem %s0, %s372
      %p374 = pneg %p44
      %p375 = pneg %p41
      %p376 = pneg %p65
      %p377 = pneg %p62
      %p378 = pneg %p86
      %p379 = pneg %p83
      %p380 = pneg %p107
      %p381 = pneg %p104
      %p382 = pneg %p128
      %p383 = pneg %p125
      %p384 = pneg %p149
      %p385 = pneg %p146
      %p386 = pneg %p170
      %p387 = pneg %p167
      %p388 = pneg %p191
      %p389 = pneg %p188
      %p390 = pneg %p212
      %p391 = pneg %p209
      %p392 = pneg %p233
      %p393 = pneg %p230
      %p394 = pneg %p254
      %p395 = pneg %p251
      %p396 = pneg %p275
      %p397 = pneg %p272
      %p398 = pneg %p301
      %p399 = pneg %p298
      %s400 = smul.u32 64, %s23
      %p401 = scmp.lt.s32.totalorder %s400, 127
      %s402 = scalar_select %p401, %s400, 127
      %s403 = smul.addr %s402, 8
      %s404 = scalar_lea.vmem %s12, %s403
      %s405 = smul.u32 64, %s23
      %p406 = scmp.lt.s32.totalorder %s405, 127
      %s407 = scalar_select %p406, %s405, 127
      %s408 = smul.addr %s407, 4
      %s409 = scalar_lea.vmem %s0, %s408
      %s410 = smul.u32 64, %s23
      %s411 = smul.u32 64, %s23
      %p412 = scmp.lt.s32.totalorder %s411, 127
      %s413 = scalar_select %p412, %s411, 127
      %s414 = smul.addr %s413, 8
      %s415 = scalar_lea.vmem %s12, %s414
      %s416 = smul.u32 64, %s23
      %v418 = vld [vmem:[%s409] sm:$0xf]
      %v419 = vld [vmem:[%s409 + $0x4] sm:$0xf]
      %v420 = vld [vmem:[%s409 + $0x8] sm:$0xf]
      %v421 = vld [vmem:[%s409 + $0xc] sm:$0xf]
      %v422 = vld [vmem:[%s409 + $0x10] sm:$0xf]
      %v423 = vld [vmem:[%s409 + $0x14] sm:$0xf]
      %v424 = vld [vmem:[%s409 + $0x18] sm:$0xf]
      %v425 = vld [vmem:[%s409 + $0x1c] sm:$0xf]
      %v426 = vld [vmem:[%s409 + $0x20] sm:$0xf]
      %v427 = vld [vmem:[%s409 + $0x24] sm:$0xf]
      %v428 = vld [vmem:[%s409 + $0x28] sm:$0xf]
      %v429 = vld [vmem:[%s409 + $0x2c] sm:$0xf]
      %v430 = vld [vmem:[%s409 + $0x30] sm:$0xf]
      %v431 = vld [vmem:[%s409 + $0x34] sm:$0xf]
      %v432 = vld [vmem:[%s409 + $0x38] sm:$0xf]
      %v433 = vld [vmem:[%s409 + $0x3c] sm:$0xf]
      %v434 = vld [vmem:[%s409 + $0x40] sm:$0xf]
      %v435 = vld [vmem:[%s409 + $0x44] sm:$0xf]
      %v436 = vld [vmem:[%s409 + $0x48] sm:$0xf]
      %v437 = vld [vmem:[%s409 + $0x4c] sm:$0xf]
      %v438 = vld [vmem:[%s409 + $0x50] sm:$0xf]
      %v439 = vld [vmem:[%s409 + $0x54] sm:$0xf]
      %v440 = vld [vmem:[%s409 + $0x58] sm:$0xf]
      %v441 = vld [vmem:[%s409 + $0x5c] sm:$0xf]
      %v442 = vld [vmem:[%s409 + $0x60] sm:$0xf]
      %v443 = vld [vmem:[%s409 + $0x64] sm:$0xf]
      %v444 = vld [vmem:[%s409 + $0x68] sm:$0xf]
      %v445 = vld [vmem:[%s409 + $0x6c] sm:$0xf]
      %v446 = vld [vmem:[%s409 + $0x70] sm:$0xf]
      %v447 = vld [vmem:[%s409 + $0x74] sm:$0xf]
      %v448 = vld [vmem:[%s409 + $0x78] sm:$0xf]
      %v449 = vld [vmem:[%s409 + $0x7c] sm:$0xf]
      %v450 = vld [vmem:[%s409 + $0x80] sm:$0xf]
      %v451 = vld [vmem:[%s409 + $0x84] sm:$0xf]
      %v452 = vld [vmem:[%s409 + $0x88] sm:$0xf]
      %v453 = vld [vmem:[%s409 + $0x8c] sm:$0xf]
      %v454 = vld [vmem:[%s409 + $0x90] sm:$0xf]
      %v455 = vld [vmem:[%s409 + $0x94] sm:$0xf]
      %v456 = vld [vmem:[%s409 + $0x98] sm:$0xf]
      %v457 = vld [vmem:[%s409 + $0x9c] sm:$0xf]
      %v458 = vld [vmem:[%s409 + $0xa0] sm:$0xf]
      %v459 = vld [vmem:[%s409 + $0xa4] sm:$0xf]
      %v460 = vld [vmem:[%s409 + $0xa8] sm:$0xf]
      %v461 = vld [vmem:[%s409 + $0xac] sm:$0xf]
      %v462 = vld [vmem:[%s409 + $0xb0] sm:$0xf]
      %v463 = vld [vmem:[%s409 + $0xb4] sm:$0xf]
      %v464 = vld [vmem:[%s409 + $0xb8] sm:$0xf]
      %v465 = vld [vmem:[%s409 + $0xbc] sm:$0xf]
      %v466 = vld [vmem:[%s409 + $0xc0] sm:$0xf]
      %v467 = vld [vmem:[%s409 + $0xc4] sm:$0xf]
      %v468 = vld [vmem:[%s409 + $0xc8] sm:$0xf]
      %v469 = vld [vmem:[%s409 + $0xcc] sm:$0xf]
      %v470 = vld [vmem:[%s409 + $0xd0] sm:$0xf]
      %v471 = vld [vmem:[%s409 + $0xd4] sm:$0xf]
      %v472 = vld [vmem:[%s409 + $0xd8] sm:$0xf]
      %v473 = vld [vmem:[%s409 + $0xdc] sm:$0xf]
      %v474 = vld [vmem:[%s409 + $0xe0] sm:$0xf]
      %v475 = vld [vmem:[%s409 + $0xe4] sm:$0xf]
      %v476 = vld [vmem:[%s409 + $0xe8] sm:$0xf]
      %v477 = vld [vmem:[%s409 + $0xec] sm:$0xf]
      %v478 = vld [vmem:[%s409 + $0xf0] sm:$0xf]
      %v479 = vld [vmem:[%s409 + $0xf4] sm:$0xf]
      %v480 = vld [vmem:[%s409 + $0xf8] sm:$0xf]
      %v481 = vld [vmem:[%s409 + $0xfc] sm:$0xf]
      %v482 = vld [vmem:[%s1] sm:$0xf]
      %v483 = vld [vmem:[%s1 + $0x4] sm:$0xf]
      %v484 = vld [vmem:[%s1 + $0x8] sm:$0xf]
      %v485 = vld [vmem:[%s1 + $0xc] sm:$0xf]
      %v486 = vld [vmem:[%s1 + $0x10] sm:$0xf]
      %v487 = vld [vmem:[%s1 + $0x14] sm:$0xf]
      %v488 = vld [vmem:[%s1 + $0x18] sm:$0xf]
      %v489 = vld [vmem:[%s1 + $0x1c] sm:$0xf]
      %v490 = vld [vmem:[%s2] sm:$0x1]
      %v492 = vperm.slane %v490, 0
      %v558 = vunpack.c.l.b16 %v418
      %v559 = vunpack.c.l.b16 %v419
      %v560 = vunpack.c.l.b16 %v420
      %v561 = vunpack.c.l.b16 %v421
      %v562 = vunpack.c.l.b16 %v422
      %v563 = vunpack.c.l.b16 %v423
      %v564 = vunpack.c.l.b16 %v424
      %v565 = vunpack.c.l.b16 %v425
      %v566 = vunpack.c.l.b16 %v426
      %v567 = vunpack.c.l.b16 %v427
      %v568 = vunpack.c.l.b16 %v428
      %v569 = vunpack.c.l.b16 %v429
      %v570 = vunpack.c.l.b16 %v430
      %v571 = vunpack.c.l.b16 %v431
      %v572 = vunpack.c.l.b16 %v432
      %v573 = vunpack.c.l.b16 %v433
      %v574 = vunpack.c.l.b16 %v434
      %v575 = vunpack.c.l.b16 %v435
      %v576 = vunpack.c.l.b16 %v436
      %v577 = vunpack.c.l.b16 %v437
      %v578 = vunpack.c.l.b16 %v438
      %v579 = vunpack.c.l.b16 %v439
      %v580 = vunpack.c.l.b16 %v440
      %v581 = vunpack.c.l.b16 %v441
      %v582 = vunpack.c.l.b16 %v442
      %v583 = vunpack.c.l.b16 %v443
      %v584 = vunpack.c.l.b16 %v444
      %v585 = vunpack.c.l.b16 %v445
      %v586 = vunpack.c.l.b16 %v446
      %v587 = vunpack.c.l.b16 %v447
      %v588 = vunpack.c.l.b16 %v448
      %v589 = vunpack.c.l.b16 %v449
      %v590 = vunpack.c.l.b16 %v450
      %v591 = vunpack.c.l.b16 %v451
      %v592 = vunpack.c.l.b16 %v452
      %v593 = vunpack.c.l.b16 %v453
      %v594 = vunpack.c.l.b16 %v454
      %v595 = vunpack.c.l.b16 %v455
      %v596 = vunpack.c.l.b16 %v456
      %v597 = vunpack.c.l.b16 %v457
      %v598 = vunpack.c.l.b16 %v458
      %v599 = vunpack.c.l.b16 %v459
      %v600 = vunpack.c.l.b16 %v460
      %v601 = vunpack.c.l.b16 %v461
      %v602 = vunpack.c.l.b16 %v462
      %v603 = vunpack.c.l.b16 %v463
      %v604 = vunpack.c.l.b16 %v464
      %v605 = vunpack.c.l.b16 %v465
      %v606 = vunpack.c.l.b16 %v466
      %v607 = vunpack.c.l.b16 %v467
      %v608 = vunpack.c.l.b16 %v468
      %v609 = vunpack.c.l.b16 %v469
      %v610 = vunpack.c.l.b16 %v470
      %v611 = vunpack.c.l.b16 %v471
      %v612 = vunpack.c.l.b16 %v472
      %v613 = vunpack.c.l.b16 %v473
      %v614 = vunpack.c.l.b16 %v474
      %v615 = vunpack.c.l.b16 %v475
      %v616 = vunpack.c.l.b16 %v476
      %v617 = vunpack.c.l.b16 %v477
      %v618 = vunpack.c.l.b16 %v478
      %v619 = vunpack.c.l.b16 %v479
      %v620 = vunpack.c.l.b16 %v480
      %v621 = vunpack.c.l.b16 %v481
      %v622 = vpack.c.b16 %v559, %v558
      %v623 = vpack.c.b16 %v561, %v560
      %v624 = vpack.c.b16 %v563, %v562
      %v625 = vpack.c.b16 %v565, %v564
      %v626 = vpack.c.b16 %v567, %v566
      %v627 = vpack.c.b16 %v569, %v568
      %v628 = vpack.c.b16 %v571, %v570
      %v629 = vpack.c.b16 %v573, %v572
      %v630 = vpack.c.b16 %v575, %v574
      %v631 = vpack.c.b16 %v577, %v576
      %v632 = vpack.c.b16 %v579, %v578
      %v633 = vpack.c.b16 %v581, %v580
      %v634 = vpack.c.b16 %v583, %v582
      %v635 = vpack.c.b16 %v585, %v584
      %v636 = vpack.c.b16 %v587, %v586
      %v637 = vpack.c.b16 %v589, %v588
      %v638 = vpack.c.b16 %v591, %v590
      %v639 = vpack.c.b16 %v593, %v592
      %v640 = vpack.c.b16 %v595, %v594
      %v641 = vpack.c.b16 %v597, %v596
      %v642 = vpack.c.b16 %v599, %v598
      %v643 = vpack.c.b16 %v601, %v600
      %v644 = vpack.c.b16 %v603, %v602
      %v645 = vpack.c.b16 %v605, %v604
      %v646 = vpack.c.b16 %v607, %v606
      %v647 = vpack.c.b16 %v609, %v608
      %v648 = vpack.c.b16 %v611, %v610
      %v649 = vpack.c.b16 %v613, %v612
      %v650 = vpack.c.b16 %v615, %v614
      %v651 = vpack.c.b16 %v617, %v616
      %v652 = vpack.c.b16 %v619, %v618
      %v653 = vpack.c.b16 %v621, %v620
      %v662 = vunpack.c.l.b16 %v482
      %v663 = vunpack.c.l.b16 %v483
      %v664 = vunpack.c.l.b16 %v484
      %v665 = vunpack.c.l.b16 %v485
      %v666 = vunpack.c.l.b16 %v486
      %v667 = vunpack.c.l.b16 %v487
      %v668 = vunpack.c.l.b16 %v488
      %v669 = vunpack.c.l.b16 %v489
      %v670 = vpack.c.b16 %v663, %v662
      %v671 = vpack.c.b16 %v665, %v664
      %v672 = vpack.c.b16 %v667, %v666
      %v673 = vpack.c.b16 %v669, %v668
      %vm678 = vcmask 523264
      %v680 = vsel %vm678, %v622, 0
      %v683 = vsel %vm678, %v623, 0
      %v686 = vsel %vm678, %v624, 0
      %v689 = vsel %vm678, %v625, 0
      %v692 = vsel %vm678, %v626, 0
      %v695 = vsel %vm678, %v627, 0
      %v698 = vsel %vm678, %v628, 0
      %v701 = vsel %vm678, %v629, 0
      %v704 = vsel %vm678, %v630, 0
      %v707 = vsel %vm678, %v631, 0
      %v710 = vsel %vm678, %v632, 0
      %v713 = vsel %vm678, %v633, 0
      %v716 = vsel %vm678, %v634, 0
      %v719 = vsel %vm678, %v635, 0
      %v722 = vsel %vm678, %v636, 0
      %v725 = vsel %vm678, %v637, 0
      %v728 = vsel %vm678, %v638, 0
      %v731 = vsel %vm678, %v639, 0
      %v734 = vsel %vm678, %v640, 0
      %v737 = vsel %vm678, %v641, 0
      %v740 = vsel %vm678, %v642, 0
      %v743 = vsel %vm678, %v643, 0
      %v746 = vsel %vm678, %v644, 0
      %v749 = vsel %vm678, %v645, 0
      %v752 = vsel %vm678, %v646, 0
      %v755 = vsel %vm678, %v647, 0
      %v758 = vsel %vm678, %v648, 0
      %v761 = vsel %vm678, %v649, 0
      %v764 = vsel %vm678, %v650, 0
      %v767 = vsel %vm678, %v651, 0
      %v770 = vsel %vm678, %v652, 0
      %v773 = vsel %vm678, %v653, 0
      %775 = vmatpush.bf16.msra.mxu0 0
      %776 = vmatpush.bf16.msra.mxu0 0
      %777 = vmatpush.bf16.msra.mxu0 0
      %778 = vmatpush.bf16.msra.mxu0 0
      %779 = vmatpush.bf16.msra.mxu0 %v673
      %780 = vmatpush.bf16.msra.mxu0 %v672
      %781 = vmatpush.bf16.msra.mxu0 %v671
      %782 = vmatpush.bf16.msra.mxu0 %v670
      %783 = vmatmul.bf16.gmra.mxu0 %v680
      %v784 = vpop.f32.mrf.mxu0
      %v785 = vadd.f32 %v492, %v784
      %v786 = vpop.f32.mrf.mxu0
      %v787 = vadd.f32 %v492, %v786
      %788 = vmatmul.bf16.gmra.mxu0 %v683
      %v789 = vpop.f32.mrf.mxu0
      %v790 = vadd.f32 %v492, %v789
      %v791 = vpop.f32.mrf.mxu0
      %v792 = vadd.f32 %v492, %v791
      %793 = vmatmul.bf16.gmra.mxu0 %v686
      %v794 = vpop.f32.mrf.mxu0
      %v795 = vadd.f32 %v492, %v794
      %v796 = vpop.f32.mrf.mxu0
      %v797 = vadd.f32 %v492, %v796
      %798 = vmatmul.bf16.gmra.mxu0 %v689
      %v799 = vpop.f32.mrf.mxu0
      %v800 = vadd.f32 %v492, %v799
      %v801 = vpop.f32.mrf.mxu0
      %v802 = vadd.f32 %v492, %v801
      %803 = vmatmul.bf16.gmra.mxu0 %v692
      %v804 = vpop.f32.mrf.mxu0
      %v805 = vadd.f32 %v492, %v804
      %v806 = vpop.f32.mrf.mxu0
      %v807 = vadd.f32 %v492, %v806
      %808 = vmatmul.bf16.gmra.mxu0 %v695
      %v809 = vpop.f32.mrf.mxu0
      %v810 = vadd.f32 %v492, %v809
      %v811 = vpop.f32.mrf.mxu0
      %v812 = vadd.f32 %v492, %v811
      %813 = vmatmul.bf16.gmra.mxu0 %v698
      %v814 = vpop.f32.mrf.mxu0
      %v815 = vadd.f32 %v492, %v814
      %v816 = vpop.f32.mrf.mxu0
      %v817 = vadd.f32 %v492, %v816
      %818 = vmatmul.bf16.gmra.mxu0 %v701
      %v819 = vpop.f32.mrf.mxu0
      %v820 = vadd.f32 %v492, %v819
      %v821 = vpop.f32.mrf.mxu0
      %v822 = vadd.f32 %v492, %v821
      %823 = vmatmul.bf16.gmra.mxu0 %v704
      %v824 = vpop.f32.mrf.mxu0
      %v825 = vadd.f32 %v492, %v824
      %v826 = vpop.f32.mrf.mxu0
      %v827 = vadd.f32 %v492, %v826
      %828 = vmatmul.bf16.gmra.mxu0 %v707
      %v829 = vpop.f32.mrf.mxu0
      %v830 = vadd.f32 %v492, %v829
      %v831 = vpop.f32.mrf.mxu0
      %v832 = vadd.f32 %v492, %v831
      %833 = vmatmul.bf16.gmra.mxu0 %v710
      %v834 = vpop.f32.mrf.mxu0
      %v835 = vadd.f32 %v492, %v834
      %v836 = vpop.f32.mrf.mxu0
      %v837 = vadd.f32 %v492, %v836
      %838 = vmatmul.bf16.gmra.mxu0 %v713
      %v839 = vpop.f32.mrf.mxu0
      %v840 = vadd.f32 %v492, %v839
      %v841 = vpop.f32.mrf.mxu0
      %v842 = vadd.f32 %v492, %v841
      %843 = vmatmul.bf16.gmra.mxu0 %v716
      %v844 = vpop.f32.mrf.mxu0
      %v845 = vadd.f32 %v492, %v844
      %v846 = vpop.f32.mrf.mxu0
      %v847 = vadd.f32 %v492, %v846
      %848 = vmatmul.bf16.gmra.mxu0 %v719
      %v849 = vpop.f32.mrf.mxu0
      %v850 = vadd.f32 %v492, %v849
      %v851 = vpop.f32.mrf.mxu0
      %v852 = vadd.f32 %v492, %v851
      %853 = vmatmul.bf16.gmra.mxu0 %v722
      %v854 = vpop.f32.mrf.mxu0
      %v855 = vadd.f32 %v492, %v854
      %v856 = vpop.f32.mrf.mxu0
      %v857 = vadd.f32 %v492, %v856
      %858 = vmatmul.bf16.gmra.mxu0 %v725
      %v859 = vpop.f32.mrf.mxu0
      %v860 = vadd.f32 %v492, %v859
      %v861 = vpop.f32.mrf.mxu0
      %v862 = vadd.f32 %v492, %v861
      %863 = vmatmul.bf16.gmra.mxu0 %v728
      %v864 = vpop.f32.mrf.mxu0
      %v865 = vadd.f32 %v492, %v864
      %v866 = vpop.f32.mrf.mxu0
      %v867 = vadd.f32 %v492, %v866
      %868 = vmatmul.bf16.gmra.mxu0 %v731
      %v869 = vpop.f32.mrf.mxu0
      %v870 = vadd.f32 %v492, %v869
      %v871 = vpop.f32.mrf.mxu0
      %v872 = vadd.f32 %v492, %v871
      %873 = vmatmul.bf16.gmra.mxu0 %v734
      %v874 = vpop.f32.mrf.mxu0
      %v875 = vadd.f32 %v492, %v874
      %v876 = vpop.f32.mrf.mxu0
      %v877 = vadd.f32 %v492, %v876
      %878 = vmatmul.bf16.gmra.mxu0 %v737
      %v879 = vpop.f32.mrf.mxu0
      %v880 = vadd.f32 %v492, %v879
      %v881 = vpop.f32.mrf.mxu0
      %v882 = vadd.f32 %v492, %v881
      %883 = vmatmul.bf16.gmra.mxu0 %v740
      %v884 = vpop.f32.mrf.mxu0
      %v885 = vadd.f32 %v492, %v884
      %v886 = vpop.f32.mrf.mxu0
      %v887 = vadd.f32 %v492, %v886
      %888 = vmatmul.bf16.gmra.mxu0 %v743
      %v889 = vpop.f32.mrf.mxu0
      %v890 = vadd.f32 %v492, %v889
      %v891 = vpop.f32.mrf.mxu0
      %v892 = vadd.f32 %v492, %v891
      %893 = vmatmul.bf16.gmra.mxu0 %v746
      %v894 = vpop.f32.mrf.mxu0
      %v895 = vadd.f32 %v492, %v894
      %v896 = vpop.f32.mrf.mxu0
      %v897 = vadd.f32 %v492, %v896
      %898 = vmatmul.bf16.gmra.mxu0 %v749
      %v899 = vpop.f32.mrf.mxu0
      %v900 = vadd.f32 %v492, %v899
      %v901 = vpop.f32.mrf.mxu0
      %v902 = vadd.f32 %v492, %v901
      %903 = vmatmul.bf16.gmra.mxu0 %v752
      %v904 = vpop.f32.mrf.mxu0
      %v905 = vadd.f32 %v492, %v904
      %v906 = vpop.f32.mrf.mxu0
      %v907 = vadd.f32 %v492, %v906
      %908 = vmatmul.bf16.gmra.mxu0 %v755
      %v909 = vpop.f32.mrf.mxu0
      %v910 = vadd.f32 %v492, %v909
      %v911 = vpop.f32.mrf.mxu0
      %v912 = vadd.f32 %v492, %v911
      %913 = vmatmul.bf16.gmra.mxu0 %v758
      %v914 = vpop.f32.mrf.mxu0
      %v915 = vadd.f32 %v492, %v914
      %v916 = vpop.f32.mrf.mxu0
      %v917 = vadd.f32 %v492, %v916
      %918 = vmatmul.bf16.gmra.mxu0 %v761
      %v919 = vpop.f32.mrf.mxu0
      %v920 = vadd.f32 %v492, %v919
      %v921 = vpop.f32.mrf.mxu0
      %v922 = vadd.f32 %v492, %v921
      %923 = vmatmul.bf16.gmra.mxu0 %v764
      %v924 = vpop.f32.mrf.mxu0
      %v925 = vadd.f32 %v492, %v924
      %v926 = vpop.f32.mrf.mxu0
      %v927 = vadd.f32 %v492, %v926
      %928 = vmatmul.bf16.gmra.mxu0 %v767
      %v929 = vpop.f32.mrf.mxu0
      %v930 = vadd.f32 %v492, %v929
      %v931 = vpop.f32.mrf.mxu0
      %v932 = vadd.f32 %v492, %v931
      %933 = vmatmul.bf16.gmra.mxu0 %v770
      %v934 = vpop.f32.mrf.mxu0
      %v935 = vadd.f32 %v492, %v934
      %v936 = vpop.f32.mrf.mxu0
      %v937 = vadd.f32 %v492, %v936
      %938 = vmatmul.bf16.gmra.mxu0 %v773
      %v939 = vpop.f32.mrf.mxu0
      %v940 = vadd.f32 %v492, %v939
      %v941 = vpop.f32.mrf.mxu0
      %v942 = vadd.f32 %v492, %v941
      %943 = vdwg.mxu0
      %v944 = vmul.f32 %v785, 100.0
      %v945 = vmul.f32 %v787, 100.0
      %v946 = vmul.f32 %v790, 100.0
      %v947 = vmul.f32 %v792, 100.0
      %v948 = vmul.f32 %v795, 100.0
      %v949 = vmul.f32 %v797, 100.0
      %v950 = vmul.f32 %v800, 100.0
      %v951 = vmul.f32 %v802, 100.0
      %v952 = vmul.f32 %v805, 100.0
      %v953 = vmul.f32 %v807, 100.0
      %v954 = vmul.f32 %v810, 100.0
      %v955 = vmul.f32 %v812, 100.0
      %v956 = vmul.f32 %v815, 100.0
      %v957 = vmul.f32 %v817, 100.0
      %v958 = vmul.f32 %v820, 100.0
      %v959 = vmul.f32 %v822, 100.0
      %v960 = vmul.f32 %v825, 100.0
      %v961 = vmul.f32 %v827, 100.0
      %v962 = vmul.f32 %v830, 100.0
      %v963 = vmul.f32 %v832, 100.0
      %v964 = vmul.f32 %v835, 100.0
      %v965 = vmul.f32 %v837, 100.0
      %v966 = vmul.f32 %v840, 100.0
      %v967 = vmul.f32 %v842, 100.0
      %v968 = vmul.f32 %v845, 100.0
      %v969 = vmul.f32 %v847, 100.0
      %v970 = vmul.f32 %v850, 100.0
      %v971 = vmul.f32 %v852, 100.0
      %v972 = vmul.f32 %v855, 100.0
      %v973 = vmul.f32 %v857, 100.0
      %v974 = vmul.f32 %v860, 100.0
      %v975 = vmul.f32 %v862, 100.0
      %v976 = vmul.f32 %v865, 100.0
      %v977 = vmul.f32 %v867, 100.0
      %v978 = vmul.f32 %v870, 100.0
      %v979 = vmul.f32 %v872, 100.0
      %v980 = vmul.f32 %v875, 100.0
      %v981 = vmul.f32 %v877, 100.0
      %v982 = vmul.f32 %v880, 100.0
      %v983 = vmul.f32 %v882, 100.0
      %v984 = vmul.f32 %v885, 100.0
      %v985 = vmul.f32 %v887, 100.0
      %v986 = vmul.f32 %v890, 100.0
      %v987 = vmul.f32 %v892, 100.0
      %v988 = vmul.f32 %v895, 100.0
      %v989 = vmul.f32 %v897, 100.0
      %v990 = vmul.f32 %v900, 100.0
      %v991 = vmul.f32 %v902, 100.0
      %v992 = vmul.f32 %v905, 100.0
      %v993 = vmul.f32 %v907, 100.0
      %v994 = vmul.f32 %v910, 100.0
      %v995 = vmul.f32 %v912, 100.0
      %v996 = vmul.f32 %v915, 100.0
      %v997 = vmul.f32 %v917, 100.0
      %v998 = vmul.f32 %v920, 100.0
      %v999 = vmul.f32 %v922, 100.0
      %v1000 = vmul.f32 %v925, 100.0
      %v1001 = vmul.f32 %v927, 100.0
      %v1002 = vmul.f32 %v930, 100.0
      %v1003 = vmul.f32 %v932, 100.0
      %v1004 = vmul.f32 %v935, 100.0
      %v1005 = vmul.f32 %v937, 100.0
      %v1006 = vmul.f32 %v940, 100.0
      %v1007 = vmul.f32 %v942, 100.0
      %vm1008 = vcmp.gt.f32.partialorder %v944, 20.0
      %vm1009 = vcmp.gt.f32.partialorder %v945, 20.0
      %vm1010 = vcmp.gt.f32.partialorder %v946, 20.0
      %vm1011 = vcmp.gt.f32.partialorder %v947, 20.0
      %vm1012 = vcmp.gt.f32.partialorder %v948, 20.0
      %vm1013 = vcmp.gt.f32.partialorder %v949, 20.0
      %vm1014 = vcmp.gt.f32.partialorder %v950, 20.0
      %vm1015 = vcmp.gt.f32.partialorder %v951, 20.0
      %vm1016 = vcmp.gt.f32.partialorder %v952, 20.0
      %vm1017 = vcmp.gt.f32.partialorder %v953, 20.0
      %vm1018 = vcmp.gt.f32.partialorder %v954, 20.0
      %vm1019 = vcmp.gt.f32.partialorder %v955, 20.0
      %vm1020 = vcmp.gt.f32.partialorder %v956, 20.0
      %vm1021 = vcmp.gt.f32.partialorder %v957, 20.0
      %vm1022 = vcmp.gt.f32.partialorder %v958, 20.0
      %vm1023 = vcmp.gt.f32.partialorder %v959, 20.0
      %vm1024 = vcmp.gt.f32.partialorder %v960, 20.0
      %vm1025 = vcmp.gt.f32.partialorder %v961, 20.0
      %vm1026 = vcmp.gt.f32.partialorder %v962, 20.0
      %vm1027 = vcmp.gt.f32.partialorder %v963, 20.0
      %vm1028 = vcmp.gt.f32.partialorder %v964, 20.0
      %vm1029 = vcmp.gt.f32.partialorder %v965, 20.0
      %vm1030 = vcmp.gt.f32.partialorder %v966, 20.0
      %vm1031 = vcmp.gt.f32.partialorder %v967, 20.0
      %vm1032 = vcmp.gt.f32.partialorder %v968, 20.0
      %vm1033 = vcmp.gt.f32.partialorder %v969, 20.0
      %vm1034 = vcmp.gt.f32.partialorder %v970, 20.0
      %vm1035 = vcmp.gt.f32.partialorder %v971, 20.0
      %vm1036 = vcmp.gt.f32.partialorder %v972, 20.0
      %vm1037 = vcmp.gt.f32.partialorder %v973, 20.0
      %vm1038 = vcmp.gt.f32.partialorder %v974, 20.0
      %vm1039 = vcmp.gt.f32.partialorder %v975, 20.0
      %vm1040 = vcmp.gt.f32.partialorder %v976, 20.0
      %vm1041 = vcmp.gt.f32.partialorder %v977, 20.0
      %vm1042 = vcmp.gt.f32.partialorder %v978, 20.0
      %vm1043 = vcmp.gt.f32.partialorder %v979, 20.0
      %vm1044 = vcmp.gt.f32.partialorder %v980, 20.0
      %vm1045 = vcmp.gt.f32.partialorder %v981, 20.0
      %vm1046 = vcmp.gt.f32.partialorder %v982, 20.0
      %vm1047 = vcmp.gt.f32.partialorder %v983, 20.0
      %vm1048 = vcmp.gt.f32.partialorder %v984, 20.0
      %vm1049 = vcmp.gt.f32.partialorder %v985, 20.0
      %vm1050 = vcmp.gt.f32.partialorder %v986, 20.0
      %vm1051 = vcmp.gt.f32.partialorder %v987, 20.0
      %vm1052 = vcmp.gt.f32.partialorder %v988, 20.0
      %vm1053 = vcmp.gt.f32.partialorder %v989, 20.0
      %vm1054 = vcmp.gt.f32.partialorder %v990, 20.0
      %vm1055 = vcmp.gt.f32.partialorder %v991, 20.0
      %vm1056 = vcmp.gt.f32.partialorder %v992, 20.0
      %vm1057 = vcmp.gt.f32.partialorder %v993, 20.0
      %vm1058 = vcmp.gt.f32.partialorder %v994, 20.0
      %vm1059 = vcmp.gt.f32.partialorder %v995, 20.0
      %vm1060 = vcmp.gt.f32.partialorder %v996, 20.0
      %vm1061 = vcmp.gt.f32.partialorder %v997, 20.0
      %vm1062 = vcmp.gt.f32.partialorder %v998, 20.0
      %vm1063 = vcmp.gt.f32.partialorder %v999, 20.0
      %vm1064 = vcmp.gt.f32.partialorder %v1000, 20.0
      %vm1065 = vcmp.gt.f32.partialorder %v1001, 20.0
      %vm1066 = vcmp.gt.f32.partialorder %v1002, 20.0
      %vm1067 = vcmp.gt.f32.partialorder %v1003, 20.0
      %vm1068 = vcmp.gt.f32.partialorder %v1004, 20.0
      %vm1069 = vcmp.gt.f32.partialorder %v1005, 20.0
      %vm1070 = vcmp.gt.f32.partialorder %v1006, 20.0
      %vm1071 = vcmp.gt.f32.partialorder %v1007, 20.0
      %v1072 = vmin.f32 %v944, 20.0
      %v1073 = vmin.f32 %v945, 20.0
      %v1074 = vmin.f32 %v946, 20.0
      %v1075 = vmin.f32 %v947, 20.0
      %v1076 = vmin.f32 %v948, 20.0
      %v1077 = vmin.f32 %v949, 20.0
      %v1078 = vmin.f32 %v950, 20.0
      %v1079 = vmin.f32 %v951, 20.0
      %v1080 = vmin.f32 %v952, 20.0
      %v1081 = vmin.f32 %v953, 20.0
      %v1082 = vmin.f32 %v954, 20.0
      %v1083 = vmin.f32 %v955, 20.0
      %v1084 = vmin.f32 %v956, 20.0
      %v1085 = vmin.f32 %v957, 20.0
      %v1086 = vmin.f32 %v958, 20.0
      %v1087 = vmin.f32 %v959, 20.0
      %v1088 = vmin.f32 %v960, 20.0
      %v1089 = vmin.f32 %v961, 20.0
      %v1090 = vmin.f32 %v962, 20.0
      %v1091 = vmin.f32 %v963, 20.0
      %v1092 = vmin.f32 %v964, 20.0
      %v1093 = vmin.f32 %v965, 20.0
      %v1094 = vmin.f32 %v966, 20.0
      %v1095 = vmin.f32 %v967, 20.0
      %v1096 = vmin.f32 %v968, 20.0
      %v1097 = vmin.f32 %v969, 20.0
      %v1098 = vmin.f32 %v970, 20.0
      %v1099 = vmin.f32 %v971, 20.0
      %v1100 = vmin.f32 %v972, 20.0
      %v1101 = vmin.f32 %v973, 20.0
      %v1102 = vmin.f32 %v974, 20.0
      %v1103 = vmin.f32 %v975, 20.0
      %v1104 = vmin.f32 %v976, 20.0
      %v1105 = vmin.f32 %v977, 20.0
      %v1106 = vmin.f32 %v978, 20.0
      %v1107 = vmin.f32 %v979, 20.0
      %v1108 = vmin.f32 %v980, 20.0
      %v1109 = vmin.f32 %v981, 20.0
      %v1110 = vmin.f32 %v982, 20.0
      %v1111 = vmin.f32 %v983, 20.0
      %v1112 = vmin.f32 %v984, 20.0
      %v1113 = vmin.f32 %v985, 20.0
      %v1114 = vmin.f32 %v986, 20.0
      %v1115 = vmin.f32 %v987, 20.0
      %v1116 = vmin.f32 %v988, 20.0
      %v1117 = vmin.f32 %v989, 20.0
      %v1118 = vmin.f32 %v990, 20.0
      %v1119 = vmin.f32 %v991, 20.0
      %v1120 = vmin.f32 %v992, 20.0
      %v1121 = vmin.f32 %v993, 20.0
      %v1122 = vmin.f32 %v994, 20.0
      %v1123 = vmin.f32 %v995, 20.0
      %v1124 = vmin.f32 %v996, 20.0
      %v1125 = vmin.f32 %v997, 20.0
      %v1126 = vmin.f32 %v998, 20.0
      %v1127 = vmin.f32 %v999, 20.0
      %v1128 = vmin.f32 %v1000, 20.0
      %v1129 = vmin.f32 %v1001, 20.0
      %v1130 = vmin.f32 %v1002, 20.0
      %v1131 = vmin.f32 %v1003, 20.0
      %v1132 = vmin.f32 %v1004, 20.0
      %v1133 = vmin.f32 %v1005, 20.0
      %v1134 = vmin.f32 %v1006, 20.0
      %v1135 = vmin.f32 %v1007, 20.0
      %v1136 = vmul.f32 %v1072, 1.442695
      %v1137 = vpow.pop %v1136
      %v1138 = vmul.f32 %v1073, 1.442695
      %v1139 = vpow.pop %v1138
      %v1140 = vmul.f32 %v1074, 1.442695
      %v1141 = vpow.pop %v1140
      %v1142 = vmul.f32 %v1075, 1.442695
      %v1143 = vpow.pop %v1142
      %v1144 = vmul.f32 %v1076, 1.442695
      %v1145 = vpow.pop %v1144
      %v1146 = vmul.f32 %v1077, 1.442695
      %v1147 = vpow.pop %v1146
      %v1148 = vmul.f32 %v1078, 1.442695
      %v1149 = vpow.pop %v1148
      %v1150 = vmul.f32 %v1079, 1.442695
      %v1151 = vpow.pop %v1150
      %v1152 = vmul.f32 %v1080, 1.442695
      %v1153 = vpow.pop %v1152
      %v1154 = vmul.f32 %v1081, 1.442695
      %v1155 = vpow.pop %v1154
      %v1156 = vmul.f32 %v1082, 1.442695
      %v1157 = vpow.pop %v1156
      %v1158 = vmul.f32 %v1083, 1.442695
      %v1159 = vpow.pop %v1158
      %v1160 = vmul.f32 %v1084, 1.442695
      %v1161 = vpow.pop %v1160
      %v1162 = vmul.f32 %v1085, 1.442695
      %v1163 = vpow.pop %v1162
      %v1164 = vmul.f32 %v1086, 1.442695
      %v1165 = vpow.pop %v1164
      %v1166 = vmul.f32 %v1087, 1.442695
      %v1167 = vpow.pop %v1166
      %v1168 = vmul.f32 %v1088, 1.442695
      %v1169 = vpow.pop %v1168
      %v1170 = vmul.f32 %v1089, 1.442695
      %v1171 = vpow.pop %v1170
      %v1172 = vmul.f32 %v1090, 1.442695
      %v1173 = vpow.pop %v1172
      %v1174 = vmul.f32 %v1091, 1.442695
      %v1175 = vpow.pop %v1174
      %v1176 = vmul.f32 %v1092, 1.442695
      %v1177 = vpow.pop %v1176
      %v1178 = vmul.f32 %v1093, 1.442695
      %v1179 = vpow.pop %v1178
      %v1180 = vmul.f32 %v1094, 1.442695
      %v1181 = vpow.pop %v1180
      %v1182 = vmul.f32 %v1095, 1.442695
      %v1183 = vpow.pop %v1182
      %v1184 = vmul.f32 %v1096, 1.442695
      %v1185 = vpow.pop %v1184
      %v1186 = vmul.f32 %v1097, 1.442695
      %v1187 = vpow.pop %v1186
      %v1188 = vmul.f32 %v1098, 1.442695
      %v1189 = vpow.pop %v1188
      %v1190 = vmul.f32 %v1099, 1.442695
      %v1191 = vpow.pop %v1190
      %v1192 = vmul.f32 %v1100, 1.442695
      %v1193 = vpow.pop %v1192
      %v1194 = vmul.f32 %v1101, 1.442695
      %v1195 = vpow.pop %v1194
      %v1196 = vmul.f32 %v1102, 1.442695
      %v1197 = vpow.pop %v1196
      %v1198 = vmul.f32 %v1103, 1.442695
      %v1199 = vpow.pop %v1198
      %v1200 = vmul.f32 %v1104, 1.442695
      %v1201 = vpow.pop %v1200
      %v1202 = vmul.f32 %v1105, 1.442695
      %v1203 = vpow.pop %v1202
      %v1204 = vmul.f32 %v1106, 1.442695
      %v1205 = vpow.pop %v1204
      %v1206 = vmul.f32 %v1107, 1.442695
      %v1207 = vpow.pop %v1206
      %v1208 = vmul.f32 %v1108, 1.442695
      %v1209 = vpow.pop %v1208
      %v1210 = vmul.f32 %v1109, 1.442695
      %v1211 = vpow.pop %v1210
      %v1212 = vmul.f32 %v1110, 1.442695
      %v1213 = vpow.pop %v1212
      %v1214 = vmul.f32 %v1111, 1.442695
      %v1215 = vpow.pop %v1214
      %v1216 = vmul.f32 %v1112, 1.442695
      %v1217 = vpow.pop %v1216
      %v1218 = vmul.f32 %v1113, 1.442695
      %v1219 = vpow.pop %v1218
      %v1220 = vmul.f32 %v1114, 1.442695
      %v1221 = vpow.pop %v1220
      %v1222 = vmul.f32 %v1115, 1.442695
      %v1223 = vpow.pop %v1222
      %v1224 = vmul.f32 %v1116, 1.442695
      %v1225 = vpow.pop %v1224
      %v1226 = vmul.f32 %v1117, 1.442695
      %v1227 = vpow.pop %v1226
      %v1228 = vmul.f32 %v1118, 1.442695
      %v1229 = vpow.pop %v1228
      %v1230 = vmul.f32 %v1119, 1.442695
      %v1231 = vpow.pop %v1230
      %v1232 = vmul.f32 %v1120, 1.442695
      %v1233 = vpow.pop %v1232
      %v1234 = vmul.f32 %v1121, 1.442695
      %v1235 = vpow.pop %v1234
      %v1236 = vmul.f32 %v1122, 1.442695
      %v1237 = vpow.pop %v1236
      %v1238 = vmul.f32 %v1123, 1.442695
      %v1239 = vpow.pop %v1238
      %v1240 = vmul.f32 %v1124, 1.442695
      %v1241 = vpow.pop %v1240
      %v1242 = vmul.f32 %v1125, 1.442695
      %v1243 = vpow.pop %v1242
      %v1244 = vmul.f32 %v1126, 1.442695
      %v1245 = vpow.pop %v1244
      %v1246 = vmul.f32 %v1127, 1.442695
      %v1247 = vpow.pop %v1246
      %v1248 = vmul.f32 %v1128, 1.442695
      %v1249 = vpow.pop %v1248
      %v1250 = vmul.f32 %v1129, 1.442695
      %v1251 = vpow.pop %v1250
      %v1252 = vmul.f32 %v1130, 1.442695
      %v1253 = vpow.pop %v1252
      %v1254 = vmul.f32 %v1131, 1.442695
      %v1255 = vpow.pop %v1254
      %v1256 = vmul.f32 %v1132, 1.442695
      %v1257 = vpow.pop %v1256
      %v1258 = vmul.f32 %v1133, 1.442695
      %v1259 = vpow.pop %v1258
      %v1260 = vmul.f32 %v1134, 1.442695
      %v1261 = vpow.pop %v1260
      %v1262 = vmul.f32 %v1135, 1.442695
      %v1263 = vpow.pop %v1262
      %v1264 = vadd.f32 %v1137, 1.0
      %v1265 = vlog2.pop %v1264
      %v1266 = vmul.f32 %v1265, 0.6931472
      %v1267 = vmul.f32 -0.5, %v1137
      %v1268 = vadd.f32 %v1267, 1.0
      %v1269 = vmul.f32 %v1268, %v1137
      %v1270 = vand.u32 2147483647, %v1137
      %vm1271 = vcmp.lt.f32.partialorder %v1270, 0.0004427343
      %v1272 = vsel %vm1271, %v1269, %v1266
      %v1273 = vadd.f32 %v1139, 1.0
      %v1274 = vlog2.pop %v1273
      %v1275 = vmul.f32 %v1274, 0.6931472
      %v1276 = vmul.f32 -0.5, %v1139
      %v1277 = vadd.f32 %v1276, 1.0
      %v1278 = vmul.f32 %v1277, %v1139
      %v1279 = vand.u32 2147483647, %v1139
      %vm1280 = vcmp.lt.f32.partialorder %v1279, 0.0004427343
      %v1281 = vsel %vm1280, %v1278, %v1275
      %v1282 = vadd.f32 %v1141, 1.0
      %v1283 = vlog2.pop %v1282
      %v1284 = vmul.f32 %v1283, 0.6931472
      %v1285 = vmul.f32 -0.5, %v1141
      %v1286 = vadd.f32 %v1285, 1.0
      %v1287 = vmul.f32 %v1286, %v1141
      %v1288 = vand.u32 2147483647, %v1141
      %vm1289 = vcmp.lt.f32.partialorder %v1288, 0.0004427343
      %v1290 = vsel %vm1289, %v1287, %v1284
      %v1291 = vadd.f32 %v1143, 1.0
      %v1292 = vlog2.pop %v1291
      %v1293 = vmul.f32 %v1292, 0.6931472
      %v1294 = vmul.f32 -0.5, %v1143
      %v1295 = vadd.f32 %v1294, 1.0
      %v1296 = vmul.f32 %v1295, %v1143
      %v1297 = vand.u32 2147483647, %v1143
      %vm1298 = vcmp.lt.f32.partialorder %v1297, 0.0004427343
      %v1299 = vsel %vm1298, %v1296, %v1293
      %v1300 = vadd.f32 %v1145, 1.0
      %v1301 = vlog2.pop %v1300
      %v1302 = vmul.f32 %v1301, 0.6931472
      %v1303 = vmul.f32 -0.5, %v1145
      %v1304 = vadd.f32 %v1303, 1.0
      %v1305 = vmul.f32 %v1304, %v1145
      %v1306 = vand.u32 2147483647, %v1145
      %vm1307 = vcmp.lt.f32.partialorder %v1306, 0.0004427343
      %v1308 = vsel %vm1307, %v1305, %v1302
      %v1309 = vadd.f32 %v1147, 1.0
      %v1310 = vlog2.pop %v1309
      %v1311 = vmul.f32 %v1310, 0.6931472
      %v1312 = vmul.f32 -0.5, %v1147
      %v1313 = vadd.f32 %v1312, 1.0
      %v1314 = vmul.f32 %v1313, %v1147
      %v1315 = vand.u32 2147483647, %v1147
      %vm1316 = vcmp.lt.f32.partialorder %v1315, 0.0004427343
      %v1317 = vsel %vm1316, %v1314, %v1311
      %v1318 = vadd.f32 %v1149, 1.0
      %v1319 = vlog2.pop %v1318
      %v1320 = vmul.f32 %v1319, 0.6931472
      %v1321 = vmul.f32 -0.5, %v1149
      %v1322 = vadd.f32 %v1321, 1.0
      %v1323 = vmul.f32 %v1322, %v1149
      %v1324 = vand.u32 2147483647, %v1149
      %vm1325 = vcmp.lt.f32.partialorder %v1324, 0.0004427343
      %v1326 = vsel %vm1325, %v1323, %v1320
      %v1327 = vadd.f32 %v1151, 1.0
      %v1328 = vlog2.pop %v1327
      %v1329 = vmul.f32 %v1328, 0.6931472
      %v1330 = vmul.f32 -0.5, %v1151
      %v1331 = vadd.f32 %v1330, 1.0
      %v1332 = vmul.f32 %v1331, %v1151
      %v1333 = vand.u32 2147483647, %v1151
      %vm1334 = vcmp.lt.f32.partialorder %v1333, 0.0004427343
      %v1335 = vsel %vm1334, %v1332, %v1329
      %v1336 = vadd.f32 %v1153, 1.0
      %v1337 = vlog2.pop %v1336
      %v1338 = vmul.f32 %v1337, 0.6931472
      %v1339 = vmul.f32 -0.5, %v1153
      %v1340 = vadd.f32 %v1339, 1.0
      %v1341 = vmul.f32 %v1340, %v1153
      %v1342 = vand.u32 2147483647, %v1153
      %vm1343 = vcmp.lt.f32.partialorder %v1342, 0.0004427343
      %v1344 = vsel %vm1343, %v1341, %v1338
      %v1345 = vadd.f32 %v1155, 1.0
      %v1346 = vlog2.pop %v1345
      %v1347 = vmul.f32 %v1346, 0.6931472
      %v1348 = vmul.f32 -0.5, %v1155
      %v1349 = vadd.f32 %v1348, 1.0
      %v1350 = vmul.f32 %v1349, %v1155
      %v1351 = vand.u32 2147483647, %v1155
      %vm1352 = vcmp.lt.f32.partialorder %v1351, 0.0004427343
      %v1353 = vsel %vm1352, %v1350, %v1347
      %v1354 = vadd.f32 %v1157, 1.0
      %v1355 = vlog2.pop %v1354
      %v1356 = vmul.f32 %v1355, 0.6931472
      %v1357 = vmul.f32 -0.5, %v1157
      %v1358 = vadd.f32 %v1357, 1.0
      %v1359 = vmul.f32 %v1358, %v1157
      %v1360 = vand.u32 2147483647, %v1157
      %vm1361 = vcmp.lt.f32.partialorder %v1360, 0.0004427343
      %v1362 = vsel %vm1361, %v1359, %v1356
      %v1363 = vadd.f32 %v1159, 1.0
      %v1364 = vlog2.pop %v1363
      %v1365 = vmul.f32 %v1364, 0.6931472
      %v1366 = vmul.f32 -0.5, %v1159
      %v1367 = vadd.f32 %v1366, 1.0
      %v1368 = vmul.f32 %v1367, %v1159
      %v1369 = vand.u32 2147483647, %v1159
      %vm1370 = vcmp.lt.f32.partialorder %v1369, 0.0004427343
      %v1371 = vsel %vm1370, %v1368, %v1365
      %v1372 = vadd.f32 %v1161, 1.0
      %v1373 = vlog2.pop %v1372
      %v1374 = vmul.f32 %v1373, 0.6931472
      %v1375 = vmul.f32 -0.5, %v1161
      %v1376 = vadd.f32 %v1375, 1.0
      %v1377 = vmul.f32 %v1376, %v1161
      %v1378 = vand.u32 2147483647, %v1161
      %vm1379 = vcmp.lt.f32.partialorder %v1378, 0.0004427343
      %v1380 = vsel %vm1379, %v1377, %v1374
      %v1381 = vadd.f32 %v1163, 1.0
      %v1382 = vlog2.pop %v1381
      %v1383 = vmul.f32 %v1382, 0.6931472
      %v1384 = vmul.f32 -0.5, %v1163
      %v1385 = vadd.f32 %v1384, 1.0
      %v1386 = vmul.f32 %v1385, %v1163
      %v1387 = vand.u32 2147483647, %v1163
      %vm1388 = vcmp.lt.f32.partialorder %v1387, 0.0004427343
      %v1389 = vsel %vm1388, %v1386, %v1383
      %v1390 = vadd.f32 %v1165, 1.0
      %v1391 = vlog2.pop %v1390
      %v1392 = vmul.f32 %v1391, 0.6931472
      %v1393 = vmul.f32 -0.5, %v1165
      %v1394 = vadd.f32 %v1393, 1.0
      %v1395 = vmul.f32 %v1394, %v1165
      %v1396 = vand.u32 2147483647, %v1165
      %vm1397 = vcmp.lt.f32.partialorder %v1396, 0.0004427343
      %v1398 = vsel %vm1397, %v1395, %v1392
      %v1399 = vadd.f32 %v1167, 1.0
      %v1400 = vlog2.pop %v1399
      %v1401 = vmul.f32 %v1400, 0.6931472
      %v1402 = vmul.f32 -0.5, %v1167
      %v1403 = vadd.f32 %v1402, 1.0
      %v1404 = vmul.f32 %v1403, %v1167
      %v1405 = vand.u32 2147483647, %v1167
      %vm1406 = vcmp.lt.f32.partialorder %v1405, 0.0004427343
      %v1407 = vsel %vm1406, %v1404, %v1401
      %v1408 = vadd.f32 %v1169, 1.0
      %v1409 = vlog2.pop %v1408
      %v1410 = vmul.f32 %v1409, 0.6931472
      %v1411 = vmul.f32 -0.5, %v1169
      %v1412 = vadd.f32 %v1411, 1.0
      %v1413 = vmul.f32 %v1412, %v1169
      %v1414 = vand.u32 2147483647, %v1169
      %vm1415 = vcmp.lt.f32.partialorder %v1414, 0.0004427343
      %v1416 = vsel %vm1415, %v1413, %v1410
      %v1417 = vadd.f32 %v1171, 1.0
      %v1418 = vlog2.pop %v1417
      %v1419 = vmul.f32 %v1418, 0.6931472
      %v1420 = vmul.f32 -0.5, %v1171
      %v1421 = vadd.f32 %v1420, 1.0
      %v1422 = vmul.f32 %v1421, %v1171
      %v1423 = vand.u32 2147483647, %v1171
      %vm1424 = vcmp.lt.f32.partialorder %v1423, 0.0004427343
      %v1425 = vsel %vm1424, %v1422, %v1419
      %v1426 = vadd.f32 %v1173, 1.0
      %v1427 = vlog2.pop %v1426
      %v1428 = vmul.f32 %v1427, 0.6931472
      %v1429 = vmul.f32 -0.5, %v1173
      %v1430 = vadd.f32 %v1429, 1.0
      %v1431 = vmul.f32 %v1430, %v1173
      %v1432 = vand.u32 2147483647, %v1173
      %vm1433 = vcmp.lt.f32.partialorder %v1432, 0.0004427343
      %v1434 = vsel %vm1433, %v1431, %v1428
      %v1435 = vadd.f32 %v1175, 1.0
      %v1436 = vlog2.pop %v1435
      %v1437 = vmul.f32 %v1436, 0.6931472
      %v1438 = vmul.f32 -0.5, %v1175
      %v1439 = vadd.f32 %v1438, 1.0
      %v1440 = vmul.f32 %v1439, %v1175
      %v1441 = vand.u32 2147483647, %v1175
      %vm1442 = vcmp.lt.f32.partialorder %v1441, 0.0004427343
      %v1443 = vsel %vm1442, %v1440, %v1437
      %v1444 = vadd.f32 %v1177, 1.0
      %v1445 = vlog2.pop %v1444
      %v1446 = vmul.f32 %v1445, 0.6931472
      %v1447 = vmul.f32 -0.5, %v1177
      %v1448 = vadd.f32 %v1447, 1.0
      %v1449 = vmul.f32 %v1448, %v1177
      %v1450 = vand.u32 2147483647, %v1177
      %vm1451 = vcmp.lt.f32.partialorder %v1450, 0.0004427343
      %v1452 = vsel %vm1451, %v1449, %v1446
      %v1453 = vadd.f32 %v1179, 1.0
      %v1454 = vlog2.pop %v1453
      %v1455 = vmul.f32 %v1454, 0.6931472
      %v1456 = vmul.f32 -0.5, %v1179
      %v1457 = vadd.f32 %v1456, 1.0
      %v1458 = vmul.f32 %v1457, %v1179
      %v1459 = vand.u32 2147483647, %v1179
      %vm1460 = vcmp.lt.f32.partialorder %v1459, 0.0004427343
      %v1461 = vsel %vm1460, %v1458, %v1455
      %v1462 = vadd.f32 %v1181, 1.0
      %v1463 = vlog2.pop %v1462
      %v1464 = vmul.f32 %v1463, 0.6931472
      %v1465 = vmul.f32 -0.5, %v1181
      %v1466 = vadd.f32 %v1465, 1.0
      %v1467 = vmul.f32 %v1466, %v1181
      %v1468 = vand.u32 2147483647, %v1181
      %vm1469 = vcmp.lt.f32.partialorder %v1468, 0.0004427343
      %v1470 = vsel %vm1469, %v1467, %v1464
      %v1471 = vadd.f32 %v1183, 1.0
      %v1472 = vlog2.pop %v1471
      %v1473 = vmul.f32 %v1472, 0.6931472
      %v1474 = vmul.f32 -0.5, %v1183
      %v1475 = vadd.f32 %v1474, 1.0
      %v1476 = vmul.f32 %v1475, %v1183
      %v1477 = vand.u32 2147483647, %v1183
      %vm1478 = vcmp.lt.f32.partialorder %v1477, 0.0004427343
      %v1479 = vsel %vm1478, %v1476, %v1473
      %v1480 = vadd.f32 %v1185, 1.0
      %v1481 = vlog2.pop %v1480
      %v1482 = vmul.f32 %v1481, 0.6931472
      %v1483 = vmul.f32 -0.5, %v1185
      %v1484 = vadd.f32 %v1483, 1.0
      %v1485 = vmul.f32 %v1484, %v1185
      %v1486 = vand.u32 2147483647, %v1185
      %vm1487 = vcmp.lt.f32.partialorder %v1486, 0.0004427343
      %v1488 = vsel %vm1487, %v1485, %v1482
      %v1489 = vadd.f32 %v1187, 1.0
      %v1490 = vlog2.pop %v1489
      %v1491 = vmul.f32 %v1490, 0.6931472
      %v1492 = vmul.f32 -0.5, %v1187
      %v1493 = vadd.f32 %v1492, 1.0
      %v1494 = vmul.f32 %v1493, %v1187
      %v1495 = vand.u32 2147483647, %v1187
      %vm1496 = vcmp.lt.f32.partialorder %v1495, 0.0004427343
      %v1497 = vsel %vm1496, %v1494, %v1491
      %v1498 = vadd.f32 %v1189, 1.0
      %v1499 = vlog2.pop %v1498
      %v1500 = vmul.f32 %v1499, 0.6931472
      %v1501 = vmul.f32 -0.5, %v1189
      %v1502 = vadd.f32 %v1501, 1.0
      %v1503 = vmul.f32 %v1502, %v1189
      %v1504 = vand.u32 2147483647, %v1189
      %vm1505 = vcmp.lt.f32.partialorder %v1504, 0.0004427343
      %v1506 = vsel %vm1505, %v1503, %v1500
      %v1507 = vadd.f32 %v1191, 1.0
      %v1508 = vlog2.pop %v1507
      %v1509 = vmul.f32 %v1508, 0.6931472
      %v1510 = vmul.f32 -0.5, %v1191
      %v1511 = vadd.f32 %v1510, 1.0
      %v1512 = vmul.f32 %v1511, %v1191
      %v1513 = vand.u32 2147483647, %v1191
      %vm1514 = vcmp.lt.f32.partialorder %v1513, 0.0004427343
      %v1515 = vsel %vm1514, %v1512, %v1509
      %v1516 = vadd.f32 %v1193, 1.0
      %v1517 = vlog2.pop %v1516
      %v1518 = vmul.f32 %v1517, 0.6931472
      %v1519 = vmul.f32 -0.5, %v1193
      %v1520 = vadd.f32 %v1519, 1.0
      %v1521 = vmul.f32 %v1520, %v1193
      %v1522 = vand.u32 2147483647, %v1193
      %vm1523 = vcmp.lt.f32.partialorder %v1522, 0.0004427343
      %v1524 = vsel %vm1523, %v1521, %v1518
      %v1525 = vadd.f32 %v1195, 1.0
      %v1526 = vlog2.pop %v1525
      %v1527 = vmul.f32 %v1526, 0.6931472
      %v1528 = vmul.f32 -0.5, %v1195
      %v1529 = vadd.f32 %v1528, 1.0
      %v1530 = vmul.f32 %v1529, %v1195
      %v1531 = vand.u32 2147483647, %v1195
      %vm1532 = vcmp.lt.f32.partialorder %v1531, 0.0004427343
      %v1533 = vsel %vm1532, %v1530, %v1527
      %v1534 = vadd.f32 %v1197, 1.0
      %v1535 = vlog2.pop %v1534
      %v1536 = vmul.f32 %v1535, 0.6931472
      %v1537 = vmul.f32 -0.5, %v1197
      %v1538 = vadd.f32 %v1537, 1.0
      %v1539 = vmul.f32 %v1538, %v1197
      %v1540 = vand.u32 2147483647, %v1197
      %vm1541 = vcmp.lt.f32.partialorder %v1540, 0.0004427343
      %v1542 = vsel %vm1541, %v1539, %v1536
      %v1543 = vadd.f32 %v1199, 1.0
      %v1544 = vlog2.pop %v1543
      %v1545 = vmul.f32 %v1544, 0.6931472
      %v1546 = vmul.f32 -0.5, %v1199
      %v1547 = vadd.f32 %v1546, 1.0
      %v1548 = vmul.f32 %v1547, %v1199
      %v1549 = vand.u32 2147483647, %v1199
      %vm1550 = vcmp.lt.f32.partialorder %v1549, 0.0004427343
      %v1551 = vsel %vm1550, %v1548, %v1545
      %v1552 = vadd.f32 %v1201, 1.0
      %v1553 = vlog2.pop %v1552
      %v1554 = vmul.f32 %v1553, 0.6931472
      %v1555 = vmul.f32 -0.5, %v1201
      %v1556 = vadd.f32 %v1555, 1.0
      %v1557 = vmul.f32 %v1556, %v1201
      %v1558 = vand.u32 2147483647, %v1201
      %vm1559 = vcmp.lt.f32.partialorder %v1558, 0.0004427343
      %v1560 = vsel %vm1559, %v1557, %v1554
      %v1561 = vadd.f32 %v1203, 1.0
      %v1562 = vlog2.pop %v1561
      %v1563 = vmul.f32 %v1562, 0.6931472
      %v1564 = vmul.f32 -0.5, %v1203
      %v1565 = vadd.f32 %v1564, 1.0
      %v1566 = vmul.f32 %v1565, %v1203
      %v1567 = vand.u32 2147483647, %v1203
      %vm1568 = vcmp.lt.f32.partialorder %v1567, 0.0004427343
      %v1569 = vsel %vm1568, %v1566, %v1563
      %v1570 = vadd.f32 %v1205, 1.0
      %v1571 = vlog2.pop %v1570
      %v1572 = vmul.f32 %v1571, 0.6931472
      %v1573 = vmul.f32 -0.5, %v1205
      %v1574 = vadd.f32 %v1573, 1.0
      %v1575 = vmul.f32 %v1574, %v1205
      %v1576 = vand.u32 2147483647, %v1205
      %vm1577 = vcmp.lt.f32.partialorder %v1576, 0.0004427343
      %v1578 = vsel %vm1577, %v1575, %v1572
      %v1579 = vadd.f32 %v1207, 1.0
      %v1580 = vlog2.pop %v1579
      %v1581 = vmul.f32 %v1580, 0.6931472
      %v1582 = vmul.f32 -0.5, %v1207
      %v1583 = vadd.f32 %v1582, 1.0
      %v1584 = vmul.f32 %v1583, %v1207
      %v1585 = vand.u32 2147483647, %v1207
      %vm1586 = vcmp.lt.f32.partialorder %v1585, 0.0004427343
      %v1587 = vsel %vm1586, %v1584, %v1581
      %v1588 = vadd.f32 %v1209, 1.0
      %v1589 = vlog2.pop %v1588
      %v1590 = vmul.f32 %v1589, 0.6931472
      %v1591 = vmul.f32 -0.5, %v1209
      %v1592 = vadd.f32 %v1591, 1.0
      %v1593 = vmul.f32 %v1592, %v1209
      %v1594 = vand.u32 2147483647, %v1209
      %vm1595 = vcmp.lt.f32.partialorder %v1594, 0.0004427343
      %v1596 = vsel %vm1595, %v1593, %v1590
      %v1597 = vadd.f32 %v1211, 1.0
      %v1598 = vlog2.pop %v1597
      %v1599 = vmul.f32 %v1598, 0.6931472
      %v1600 = vmul.f32 -0.5, %v1211
      %v1601 = vadd.f32 %v1600, 1.0
      %v1602 = vmul.f32 %v1601, %v1211
      %v1603 = vand.u32 2147483647, %v1211
      %vm1604 = vcmp.lt.f32.partialorder %v1603, 0.0004427343
      %v1605 = vsel %vm1604, %v1602, %v1599
      %v1606 = vadd.f32 %v1213, 1.0
      %v1607 = vlog2.pop %v1606
      %v1608 = vmul.f32 %v1607, 0.6931472
      %v1609 = vmul.f32 -0.5, %v1213
      %v1610 = vadd.f32 %v1609, 1.0
      %v1611 = vmul.f32 %v1610, %v1213
      %v1612 = vand.u32 2147483647, %v1213
      %vm1613 = vcmp.lt.f32.partialorder %v1612, 0.0004427343
      %v1614 = vsel %vm1613, %v1611, %v1608
      %v1615 = vadd.f32 %v1215, 1.0
      %v1616 = vlog2.pop %v1615
      %v1617 = vmul.f32 %v1616, 0.6931472
      %v1618 = vmul.f32 -0.5, %v1215
      %v1619 = vadd.f32 %v1618, 1.0
      %v1620 = vmul.f32 %v1619, %v1215
      %v1621 = vand.u32 2147483647, %v1215
      %vm1622 = vcmp.lt.f32.partialorder %v1621, 0.0004427343
      %v1623 = vsel %vm1622, %v1620, %v1617
      %v1624 = vadd.f32 %v1217, 1.0
      %v1625 = vlog2.pop %v1624
      %v1626 = vmul.f32 %v1625, 0.6931472
      %v1627 = vmul.f32 -0.5, %v1217
      %v1628 = vadd.f32 %v1627, 1.0
      %v1629 = vmul.f32 %v1628, %v1217
      %v1630 = vand.u32 2147483647, %v1217
      %vm1631 = vcmp.lt.f32.partialorder %v1630, 0.0004427343
      %v1632 = vsel %vm1631, %v1629, %v1626
      %v1633 = vadd.f32 %v1219, 1.0
      %v1634 = vlog2.pop %v1633
      %v1635 = vmul.f32 %v1634, 0.6931472
      %v1636 = vmul.f32 -0.5, %v1219
      %v1637 = vadd.f32 %v1636, 1.0
      %v1638 = vmul.f32 %v1637, %v1219
      %v1639 = vand.u32 2147483647, %v1219
      %vm1640 = vcmp.lt.f32.partialorder %v1639, 0.0004427343
      %v1641 = vsel %vm1640, %v1638, %v1635
      %v1642 = vadd.f32 %v1221, 1.0
      %v1643 = vlog2.pop %v1642
      %v1644 = vmul.f32 %v1643, 0.6931472
      %v1645 = vmul.f32 -0.5, %v1221
      %v1646 = vadd.f32 %v1645, 1.0
      %v1647 = vmul.f32 %v1646, %v1221
      %v1648 = vand.u32 2147483647, %v1221
      %vm1649 = vcmp.lt.f32.partialorder %v1648, 0.0004427343
      %v1650 = vsel %vm1649, %v1647, %v1644
      %v1651 = vadd.f32 %v1223, 1.0
      %v1652 = vlog2.pop %v1651
      %v1653 = vmul.f32 %v1652, 0.6931472
      %v1654 = vmul.f32 -0.5, %v1223
      %v1655 = vadd.f32 %v1654, 1.0
      %v1656 = vmul.f32 %v1655, %v1223
      %v1657 = vand.u32 2147483647, %v1223
      %vm1658 = vcmp.lt.f32.partialorder %v1657, 0.0004427343
      %v1659 = vsel %vm1658, %v1656, %v1653
      %v1660 = vadd.f32 %v1225, 1.0
      %v1661 = vlog2.pop %v1660
      %v1662 = vmul.f32 %v1661, 0.6931472
      %v1663 = vmul.f32 -0.5, %v1225
      %v1664 = vadd.f32 %v1663, 1.0
      %v1665 = vmul.f32 %v1664, %v1225
      %v1666 = vand.u32 2147483647, %v1225
      %vm1667 = vcmp.lt.f32.partialorder %v1666, 0.0004427343
      %v1668 = vsel %vm1667, %v1665, %v1662
      %v1669 = vadd.f32 %v1227, 1.0
      %v1670 = vlog2.pop %v1669
      %v1671 = vmul.f32 %v1670, 0.6931472
      %v1672 = vmul.f32 -0.5, %v1227
      %v1673 = vadd.f32 %v1672, 1.0
      %v1674 = vmul.f32 %v1673, %v1227
      %v1675 = vand.u32 2147483647, %v1227
      %vm1676 = vcmp.lt.f32.partialorder %v1675, 0.0004427343
      %v1677 = vsel %vm1676, %v1674, %v1671
      %v1678 = vadd.f32 %v1229, 1.0
      %v1679 = vlog2.pop %v1678
      %v1680 = vmul.f32 %v1679, 0.6931472
      %v1681 = vmul.f32 -0.5, %v1229
      %v1682 = vadd.f32 %v1681, 1.0
      %v1683 = vmul.f32 %v1682, %v1229
      %v1684 = vand.u32 2147483647, %v1229
      %vm1685 = vcmp.lt.f32.partialorder %v1684, 0.0004427343
      %v1686 = vsel %vm1685, %v1683, %v1680
      %v1687 = vadd.f32 %v1231, 1.0
      %v1688 = vlog2.pop %v1687
      %v1689 = vmul.f32 %v1688, 0.6931472
      %v1690 = vmul.f32 -0.5, %v1231
      %v1691 = vadd.f32 %v1690, 1.0
      %v1692 = vmul.f32 %v1691, %v1231
      %v1693 = vand.u32 2147483647, %v1231
      %vm1694 = vcmp.lt.f32.partialorder %v1693, 0.0004427343
      %v1695 = vsel %vm1694, %v1692, %v1689
      %v1696 = vadd.f32 %v1233, 1.0
      %v1697 = vlog2.pop %v1696
      %v1698 = vmul.f32 %v1697, 0.6931472
      %v1699 = vmul.f32 -0.5, %v1233
      %v1700 = vadd.f32 %v1699, 1.0
      %v1701 = vmul.f32 %v1700, %v1233
      %v1702 = vand.u32 2147483647, %v1233
      %vm1703 = vcmp.lt.f32.partialorder %v1702, 0.0004427343
      %v1704 = vsel %vm1703, %v1701, %v1698
      %v1705 = vadd.f32 %v1235, 1.0
      %v1706 = vlog2.pop %v1705
      %v1707 = vmul.f32 %v1706, 0.6931472
      %v1708 = vmul.f32 -0.5, %v1235
      %v1709 = vadd.f32 %v1708, 1.0
      %v1710 = vmul.f32 %v1709, %v1235
      %v1711 = vand.u32 2147483647, %v1235
      %vm1712 = vcmp.lt.f32.partialorder %v1711, 0.0004427343
      %v1713 = vsel %vm1712, %v1710, %v1707
      %v1714 = vadd.f32 %v1237, 1.0
      %v1715 = vlog2.pop %v1714
      %v1716 = vmul.f32 %v1715, 0.6931472
      %v1717 = vmul.f32 -0.5, %v1237
      %v1718 = vadd.f32 %v1717, 1.0
      %v1719 = vmul.f32 %v1718, %v1237
      %v1720 = vand.u32 2147483647, %v1237
      %vm1721 = vcmp.lt.f32.partialorder %v1720, 0.0004427343
      %v1722 = vsel %vm1721, %v1719, %v1716
      %v1723 = vadd.f32 %v1239, 1.0
      %v1724 = vlog2.pop %v1723
      %v1725 = vmul.f32 %v1724, 0.6931472
      %v1726 = vmul.f32 -0.5, %v1239
      %v1727 = vadd.f32 %v1726, 1.0
      %v1728 = vmul.f32 %v1727, %v1239
      %v1729 = vand.u32 2147483647, %v1239
      %vm1730 = vcmp.lt.f32.partialorder %v1729, 0.0004427343
      %v1731 = vsel %vm1730, %v1728, %v1725
      %v1732 = vadd.f32 %v1241, 1.0
      %v1733 = vlog2.pop %v1732
      %v1734 = vmul.f32 %v1733, 0.6931472
      %v1735 = vmul.f32 -0.5, %v1241
      %v1736 = vadd.f32 %v1735, 1.0
      %v1737 = vmul.f32 %v1736, %v1241
      %v1738 = vand.u32 2147483647, %v1241
      %vm1739 = vcmp.lt.f32.partialorder %v1738, 0.0004427343
      %v1740 = vsel %vm1739, %v1737, %v1734
      %v1741 = vadd.f32 %v1243, 1.0
      %v1742 = vlog2.pop %v1741
      %v1743 = vmul.f32 %v1742, 0.6931472
      %v1744 = vmul.f32 -0.5, %v1243
      %v1745 = vadd.f32 %v1744, 1.0
      %v1746 = vmul.f32 %v1745, %v1243
      %v1747 = vand.u32 2147483647, %v1243
      %vm1748 = vcmp.lt.f32.partialorder %v1747, 0.0004427343
      %v1749 = vsel %vm1748, %v1746, %v1743
      %v1750 = vadd.f32 %v1245, 1.0
      %v1751 = vlog2.pop %v1750
      %v1752 = vmul.f32 %v1751, 0.6931472
      %v1753 = vmul.f32 -0.5, %v1245
      %v1754 = vadd.f32 %v1753, 1.0
      %v1755 = vmul.f32 %v1754, %v1245
      %v1756 = vand.u32 2147483647, %v1245
      %vm1757 = vcmp.lt.f32.partialorder %v1756, 0.0004427343
      %v1758 = vsel %vm1757, %v1755, %v1752
      %v1759 = vadd.f32 %v1247, 1.0
      %v1760 = vlog2.pop %v1759
      %v1761 = vmul.f32 %v1760, 0.6931472
      %v1762 = vmul.f32 -0.5, %v1247
      %v1763 = vadd.f32 %v1762, 1.0
      %v1764 = vmul.f32 %v1763, %v1247
      %v1765 = vand.u32 2147483647, %v1247
      %vm1766 = vcmp.lt.f32.partialorder %v1765, 0.0004427343
      %v1767 = vsel %vm1766, %v1764, %v1761
      %v1768 = vadd.f32 %v1249, 1.0
      %v1769 = vlog2.pop %v1768
      %v1770 = vmul.f32 %v1769, 0.6931472
      %v1771 = vmul.f32 -0.5, %v1249
      %v1772 = vadd.f32 %v1771, 1.0
      %v1773 = vmul.f32 %v1772, %v1249
      %v1774 = vand.u32 2147483647, %v1249
      %vm1775 = vcmp.lt.f32.partialorder %v1774, 0.0004427343
      %v1776 = vsel %vm1775, %v1773, %v1770
      %v1777 = vadd.f32 %v1251, 1.0
      %v1778 = vlog2.pop %v1777
      %v1779 = vmul.f32 %v1778, 0.6931472
      %v1780 = vmul.f32 -0.5, %v1251
      %v1781 = vadd.f32 %v1780, 1.0
      %v1782 = vmul.f32 %v1781, %v1251
      %v1783 = vand.u32 2147483647, %v1251
      %vm1784 = vcmp.lt.f32.partialorder %v1783, 0.0004427343
      %v1785 = vsel %vm1784, %v1782, %v1779
      %v1786 = vadd.f32 %v1253, 1.0
      %v1787 = vlog2.pop %v1786
      %v1788 = vmul.f32 %v1787, 0.6931472
      %v1789 = vmul.f32 -0.5, %v1253
      %v1790 = vadd.f32 %v1789, 1.0
      %v1791 = vmul.f32 %v1790, %v1253
      %v1792 = vand.u32 2147483647, %v1253
      %vm1793 = vcmp.lt.f32.partialorder %v1792, 0.0004427343
      %v1794 = vsel %vm1793, %v1791, %v1788
      %v1795 = vadd.f32 %v1255, 1.0
      %v1796 = vlog2.pop %v1795
      %v1797 = vmul.f32 %v1796, 0.6931472
      %v1798 = vmul.f32 -0.5, %v1255
      %v1799 = vadd.f32 %v1798, 1.0
      %v1800 = vmul.f32 %v1799, %v1255
      %v1801 = vand.u32 2147483647, %v1255
      %vm1802 = vcmp.lt.f32.partialorder %v1801, 0.0004427343
      %v1803 = vsel %vm1802, %v1800, %v1797
      %v1804 = vadd.f32 %v1257, 1.0
      %v1805 = vlog2.pop %v1804
      %v1806 = vmul.f32 %v1805, 0.6931472
      %v1807 = vmul.f32 -0.5, %v1257
      %v1808 = vadd.f32 %v1807, 1.0
      %v1809 = vmul.f32 %v1808, %v1257
      %v1810 = vand.u32 2147483647, %v1257
      %vm1811 = vcmp.lt.f32.partialorder %v1810, 0.0004427343
      %v1812 = vsel %vm1811, %v1809, %v1806
      %v1813 = vadd.f32 %v1259, 1.0
      %v1814 = vlog2.pop %v1813
      %v1815 = vmul.f32 %v1814, 0.6931472
      %v1816 = vmul.f32 -0.5, %v1259
      %v1817 = vadd.f32 %v1816, 1.0
      %v1818 = vmul.f32 %v1817, %v1259
      %v1819 = vand.u32 2147483647, %v1259
      %vm1820 = vcmp.lt.f32.partialorder %v1819, 0.0004427343
      %v1821 = vsel %vm1820, %v1818, %v1815
      %v1822 = vadd.f32 %v1261, 1.0
      %v1823 = vlog2.pop %v1822
      %v1824 = vmul.f32 %v1823, 0.6931472
      %v1825 = vmul.f32 -0.5, %v1261
      %v1826 = vadd.f32 %v1825, 1.0
      %v1827 = vmul.f32 %v1826, %v1261
      %v1828 = vand.u32 2147483647, %v1261
      %vm1829 = vcmp.lt.f32.partialorder %v1828, 0.0004427343
      %v1830 = vsel %vm1829, %v1827, %v1824
      %v1831 = vadd.f32 %v1263, 1.0
      %v1832 = vlog2.pop %v1831
      %v1833 = vmul.f32 %v1832, 0.6931472
      %v1834 = vmul.f32 -0.5, %v1263
      %v1835 = vadd.f32 %v1834, 1.0
      %v1836 = vmul.f32 %v1835, %v1263
      %v1837 = vand.u32 2147483647, %v1263
      %vm1838 = vcmp.lt.f32.partialorder %v1837, 0.0004427343
      %v1839 = vsel %vm1838, %v1836, %v1833
      %v1840 = vrcp.pop 100.0
      %v1841 = vmul.f32 100.0, %v1840
      %v1842 = vsub.f32 1.0, %v1841
      %v1843 = vmul.f32 %v1840, %v1842
      %v1844 = vadd.f32 %v1840, %v1843
      %vm1845 = vweird.f32 %v1840
      %v1846 = vsel %vm1845, %v1840, %v1844
      %v1847 = vmul.f32 %v1272, %v1846
      %v1848 = vmul.f32 %v1281, %v1846
      %v1849 = vmul.f32 %v1290, %v1846
      %v1850 = vmul.f32 %v1299, %v1846
      %v1851 = vmul.f32 %v1308, %v1846
      %v1852 = vmul.f32 %v1317, %v1846
      %v1853 = vmul.f32 %v1326, %v1846
      %v1854 = vmul.f32 %v1335, %v1846
      %v1855 = vmul.f32 %v1344, %v1846
      %v1856 = vmul.f32 %v1353, %v1846
      %v1857 = vmul.f32 %v1362, %v1846
      %v1858 = vmul.f32 %v1371, %v1846
      %v1859 = vmul.f32 %v1380, %v1846
      %v1860 = vmul.f32 %v1389, %v1846
      %v1861 = vmul.f32 %v1398, %v1846
      %v1862 = vmul.f32 %v1407, %v1846
      %v1863 = vmul.f32 %v1416, %v1846
      %v1864 = vmul.f32 %v1425, %v1846
      %v1865 = vmul.f32 %v1434, %v1846
      %v1866 = vmul.f32 %v1443, %v1846
      %v1867 = vmul.f32 %v1452, %v1846
      %v1868 = vmul.f32 %v1461, %v1846
      %v1869 = vmul.f32 %v1470, %v1846
      %v1870 = vmul.f32 %v1479, %v1846
      %v1871 = vmul.f32 %v1488, %v1846
      %v1872 = vmul.f32 %v1497, %v1846
      %v1873 = vmul.f32 %v1506, %v1846
      %v1874 = vmul.f32 %v1515, %v1846
      %v1875 = vmul.f32 %v1524, %v1846
      %v1876 = vmul.f32 %v1533, %v1846
      %v1877 = vmul.f32 %v1542, %v1846
      %v1878 = vmul.f32 %v1551, %v1846
      %v1879 = vmul.f32 %v1560, %v1846
      %v1880 = vmul.f32 %v1569, %v1846
      %v1881 = vmul.f32 %v1578, %v1846
      %v1882 = vmul.f32 %v1587, %v1846
      %v1883 = vmul.f32 %v1596, %v1846
      %v1884 = vmul.f32 %v1605, %v1846
      %v1885 = vmul.f32 %v1614, %v1846
      %v1886 = vmul.f32 %v1623, %v1846
      %v1887 = vmul.f32 %v1632, %v1846
      %v1888 = vmul.f32 %v1641, %v1846
      %v1889 = vmul.f32 %v1650, %v1846
      %v1890 = vmul.f32 %v1659, %v1846
      %v1891 = vmul.f32 %v1668, %v1846
      %v1892 = vmul.f32 %v1677, %v1846
      %v1893 = vmul.f32 %v1686, %v1846
      %v1894 = vmul.f32 %v1695, %v1846
      %v1895 = vmul.f32 %v1704, %v1846
      %v1896 = vmul.f32 %v1713, %v1846
      %v1897 = vmul.f32 %v1722, %v1846
      %v1898 = vmul.f32 %v1731, %v1846
      %v1899 = vmul.f32 %v1740, %v1846
      %v1900 = vmul.f32 %v1749, %v1846
      %v1901 = vmul.f32 %v1758, %v1846
      %v1902 = vmul.f32 %v1767, %v1846
      %v1903 = vmul.f32 %v1776, %v1846
      %v1904 = vmul.f32 %v1785, %v1846
      %v1905 = vmul.f32 %v1794, %v1846
      %v1906 = vmul.f32 %v1803, %v1846
      %v1907 = vmul.f32 %v1812, %v1846
      %v1908 = vmul.f32 %v1821, %v1846
      %v1909 = vmul.f32 %v1830, %v1846
      %v1910 = vmul.f32 %v1839, %v1846
      %v1911 = vsel %vm1008, %v785, %v1847
      %v1912 = vsel %vm1009, %v787, %v1848
      %v1913 = vsel %vm1010, %v790, %v1849
      %v1914 = vsel %vm1011, %v792, %v1850
      %v1915 = vsel %vm1012, %v795, %v1851
      %v1916 = vsel %vm1013, %v797, %v1852
      %v1917 = vsel %vm1014, %v800, %v1853
      %v1918 = vsel %vm1015, %v802, %v1854
      %v1919 = vsel %vm1016, %v805, %v1855
      %v1920 = vsel %vm1017, %v807, %v1856
      %v1921 = vsel %vm1018, %v810, %v1857
      %v1922 = vsel %vm1019, %v812, %v1858
      %v1923 = vsel %vm1020, %v815, %v1859
      %v1924 = vsel %vm1021, %v817, %v1860
      %v1925 = vsel %vm1022, %v820, %v1861
      %v1926 = vsel %vm1023, %v822, %v1862
      %v1927 = vsel %vm1024, %v825, %v1863
      %v1928 = vsel %vm1025, %v827, %v1864
      %v1929 = vsel %vm1026, %v830, %v1865
      %v1930 = vsel %vm1027, %v832, %v1866
      %v1931 = vsel %vm1028, %v835, %v1867
      %v1932 = vsel %vm1029, %v837, %v1868
      %v1933 = vsel %vm1030, %v840, %v1869
      %v1934 = vsel %vm1031, %v842, %v1870
      %v1935 = vsel %vm1032, %v845, %v1871
      %v1936 = vsel %vm1033, %v847, %v1872
      %v1937 = vsel %vm1034, %v850, %v1873
      %v1938 = vsel %vm1035, %v852, %v1874
      %v1939 = vsel %vm1036, %v855, %v1875
      %v1940 = vsel %vm1037, %v857, %v1876
      %v1941 = vsel %vm1038, %v860, %v1877
      %v1942 = vsel %vm1039, %v862, %v1878
      %v1943 = vsel %vm1040, %v865, %v1879
      %v1944 = vsel %vm1041, %v867, %v1880
      %v1945 = vsel %vm1042, %v870, %v1881
      %v1946 = vsel %vm1043, %v872, %v1882
      %v1947 = vsel %vm1044, %v875, %v1883
      %v1948 = vsel %vm1045, %v877, %v1884
      %v1949 = vsel %vm1046, %v880, %v1885
      %v1950 = vsel %vm1047, %v882, %v1886
      %v1951 = vsel %vm1048, %v885, %v1887
      %v1952 = vsel %vm1049, %v887, %v1888
      %v1953 = vsel %vm1050, %v890, %v1889
      %v1954 = vsel %vm1051, %v892, %v1890
      %v1955 = vsel %vm1052, %v895, %v1891
      %v1956 = vsel %vm1053, %v897, %v1892
      %v1957 = vsel %vm1054, %v900, %v1893
      %v1958 = vsel %vm1055, %v902, %v1894
      %v1959 = vsel %vm1056, %v905, %v1895
      %v1960 = vsel %vm1057, %v907, %v1896
      %v1961 = vsel %vm1058, %v910, %v1897
      %v1962 = vsel %vm1059, %v912, %v1898
      %v1963 = vsel %vm1060, %v915, %v1899
      %v1964 = vsel %vm1061, %v917, %v1900
      %v1965 = vsel %vm1062, %v920, %v1901
      %v1966 = vsel %vm1063, %v922, %v1902
      %v1967 = vsel %vm1064, %v925, %v1903
      %v1968 = vsel %vm1065, %v927, %v1904
      %v1969 = vsel %vm1066, %v930, %v1905
      %v1970 = vsel %vm1067, %v932, %v1906
      %v1971 = vsel %vm1068, %v935, %v1907
      %v1972 = vsel %vm1069, %v937, %v1908
      %v1973 = vsel %vm1070, %v940, %v1909
      %v1974 = vsel %vm1071, %v942, %v1910
      %v1975 = vpack.c.bf16 %v1912, %v1911
      %v1976 = vpack.c.bf16 %v1914, %v1913
      %v1977 = vpack.c.bf16 %v1916, %v1915
      %v1978 = vpack.c.bf16 %v1918, %v1917
      %v1979 = vpack.c.bf16 %v1920, %v1919
      %v1980 = vpack.c.bf16 %v1922, %v1921
      %v1981 = vpack.c.bf16 %v1924, %v1923
      %v1982 = vpack.c.bf16 %v1926, %v1925
      %v1983 = vpack.c.bf16 %v1928, %v1927
      %v1984 = vpack.c.bf16 %v1930, %v1929
      %v1985 = vpack.c.bf16 %v1932, %v1931
      %v1986 = vpack.c.bf16 %v1934, %v1933
      %v1987 = vpack.c.bf16 %v1936, %v1935
      %v1988 = vpack.c.bf16 %v1938, %v1937
      %v1989 = vpack.c.bf16 %v1940, %v1939
      %v1990 = vpack.c.bf16 %v1942, %v1941
      %v1991 = vpack.c.bf16 %v1944, %v1943
      %v1992 = vpack.c.bf16 %v1946, %v1945
      %v1993 = vpack.c.bf16 %v1948, %v1947
      %v1994 = vpack.c.bf16 %v1950, %v1949
      %v1995 = vpack.c.bf16 %v1952, %v1951
      %v1996 = vpack.c.bf16 %v1954, %v1953
      %v1997 = vpack.c.bf16 %v1956, %v1955
      %v1998 = vpack.c.bf16 %v1958, %v1957
      %v1999 = vpack.c.bf16 %v1960, %v1959
      %v2000 = vpack.c.bf16 %v1962, %v1961
      %v2001 = vpack.c.bf16 %v1964, %v1963
      %v2002 = vpack.c.bf16 %v1966, %v1965
      %v2003 = vpack.c.bf16 %v1968, %v1967
      %v2004 = vpack.c.bf16 %v1970, %v1969
      %v2005 = vpack.c.bf16 %v1972, %v1971
      %v2006 = vpack.c.bf16 %v1974, %v1973
      %v2007 = vld [vmem:[%s3] sm:$0xf]
      %v2008 = vld [vmem:[%s3 + $0x4] sm:$0xf]
      %v2009 = vld [vmem:[%s3 + $0x8] sm:$0xf]
      %v2010 = vld [vmem:[%s3 + $0xc] sm:$0xf]
      %v2011 = vld [vmem:[%s3 + $0x10] sm:$0xf]
      %v2012 = vld [vmem:[%s3 + $0x14] sm:$0xf]
      %v2013 = vld [vmem:[%s3 + $0x18] sm:$0xf]
      %v2014 = vld [vmem:[%s3 + $0x1c] sm:$0xf]
      %v2015 = vld [vmem:[%s3 + $0x20] sm:$0xf]
      %v2016 = vld [vmem:[%s3 + $0x24] sm:$0xf]
      %v2017 = vld [vmem:[%s3 + $0x28] sm:$0xf]
      %v2018 = vld [vmem:[%s3 + $0x2c] sm:$0xf]
      %v2019 = vld [vmem:[%s3 + $0x30] sm:$0xf]
      %v2020 = vld [vmem:[%s3 + $0x34] sm:$0xf]
      %v2021 = vld [vmem:[%s3 + $0x38] sm:$0xf]
      %v2022 = vld [vmem:[%s3 + $0x3c] sm:$0xf]
      %v2023 = vld [vmem:[%s4] sm:$0x1]
      %v2025 = vperm.slane %v2023, 0
      %v2043 = vunpack.c.l.b16 %v2007
      %v2044 = vunpack.c.l.b16 %v2008
      %v2045 = vunpack.c.l.b16 %v2009
      %v2046 = vunpack.c.l.b16 %v2010
      %v2047 = vunpack.c.l.b16 %v2011
      %v2048 = vunpack.c.l.b16 %v2012
      %v2049 = vunpack.c.l.b16 %v2013
      %v2050 = vunpack.c.l.b16 %v2014
      %v2051 = vunpack.c.l.b16 %v2015
      %v2052 = vunpack.c.l.b16 %v2016
      %v2053 = vunpack.c.l.b16 %v2017
      %v2054 = vunpack.c.l.b16 %v2018
      %v2055 = vunpack.c.l.b16 %v2019
      %v2056 = vunpack.c.l.b16 %v2020
      %v2057 = vunpack.c.l.b16 %v2021
      %v2058 = vunpack.c.l.b16 %v2022
      %v2059 = vpack.c.b16 %v2044, %v2043
      %v2060 = vpack.c.b16 %v2046, %v2045
      %v2061 = vpack.c.b16 %v2048, %v2047
      %v2062 = vpack.c.b16 %v2050, %v2049
      %v2063 = vpack.c.b16 %v2052, %v2051
      %v2064 = vpack.c.b16 %v2054, %v2053
      %v2065 = vpack.c.b16 %v2056, %v2055
      %v2066 = vpack.c.b16 %v2058, %v2057
      %2075 = vmatpush.bf16.msra.mxu0 %v2066
      %2076 = vmatpush.bf16.msra.mxu0 %v2065
      %2077 = vmatpush.bf16.msra.mxu0 %v2064
      %2078 = vmatpush.bf16.msra.mxu0 %v2063
      %2079 = vmatpush.bf16.msra.mxu0 %v2062
      %2080 = vmatpush.bf16.msra.mxu0 %v2061
      %2081 = vmatpush.bf16.msra.mxu0 %v2060
      %2082 = vmatpush.bf16.msra.mxu0 %v2059
      %2083 = vmatmul.bf16.gmra.mxu0 %v1975
      %v2084 = vpop.f32.mrf.mxu0
      %v2085 = vadd.f32 %v2025, %v2084
      %v2086 = vpop.f32.mrf.mxu0
      %v2087 = vadd.f32 %v2025, %v2086
      %2088 = vmatmul.bf16.gmra.mxu0 %v1976
      %v2089 = vpop.f32.mrf.mxu0
      %v2090 = vadd.f32 %v2025, %v2089
      %v2091 = vpop.f32.mrf.mxu0
      %v2092 = vadd.f32 %v2025, %v2091
      %2093 = vmatmul.bf16.gmra.mxu0 %v1977
      %v2094 = vpop.f32.mrf.mxu0
      %v2095 = vadd.f32 %v2025, %v2094
      %v2096 = vpop.f32.mrf.mxu0
      %v2097 = vadd.f32 %v2025, %v2096
      %2098 = vmatmul.bf16.gmra.mxu0 %v1978
      %v2099 = vpop.f32.mrf.mxu0
      %v2100 = vadd.f32 %v2025, %v2099
      %v2101 = vpop.f32.mrf.mxu0
      %v2102 = vadd.f32 %v2025, %v2101
      %2103 = vmatmul.bf16.gmra.mxu0 %v1979
      %v2104 = vpop.f32.mrf.mxu0
      %v2105 = vadd.f32 %v2025, %v2104
      %v2106 = vpop.f32.mrf.mxu0
      %v2107 = vadd.f32 %v2025, %v2106
      %2108 = vmatmul.bf16.gmra.mxu0 %v1980
      %v2109 = vpop.f32.mrf.mxu0
      %v2110 = vadd.f32 %v2025, %v2109
      %v2111 = vpop.f32.mrf.mxu0
      %v2112 = vadd.f32 %v2025, %v2111
      %2113 = vmatmul.bf16.gmra.mxu0 %v1981
      %v2114 = vpop.f32.mrf.mxu0
      %v2115 = vadd.f32 %v2025, %v2114
      %v2116 = vpop.f32.mrf.mxu0
      %v2117 = vadd.f32 %v2025, %v2116
      %2118 = vmatmul.bf16.gmra.mxu0 %v1982
      %v2119 = vpop.f32.mrf.mxu0
      %v2120 = vadd.f32 %v2025, %v2119
      %v2121 = vpop.f32.mrf.mxu0
      %v2122 = vadd.f32 %v2025, %v2121
      %2123 = vmatmul.bf16.gmra.mxu0 %v1983
      %v2124 = vpop.f32.mrf.mxu0
      %v2125 = vadd.f32 %v2025, %v2124
      %v2126 = vpop.f32.mrf.mxu0
      %v2127 = vadd.f32 %v2025, %v2126
      %2128 = vmatmul.bf16.gmra.mxu0 %v1984
      %v2129 = vpop.f32.mrf.mxu0
      %v2130 = vadd.f32 %v2025, %v2129
      %v2131 = vpop.f32.mrf.mxu0
      %v2132 = vadd.f32 %v2025, %v2131
      %2133 = vmatmul.bf16.gmra.mxu0 %v1985
      %v2134 = vpop.f32.mrf.mxu0
      %v2135 = vadd.f32 %v2025, %v2134
      %v2136 = vpop.f32.mrf.mxu0
      %v2137 = vadd.f32 %v2025, %v2136
      %2138 = vmatmul.bf16.gmra.mxu0 %v1986
      %v2139 = vpop.f32.mrf.mxu0
      %v2140 = vadd.f32 %v2025, %v2139
      %v2141 = vpop.f32.mrf.mxu0
      %v2142 = vadd.f32 %v2025, %v2141
      %2143 = vmatmul.bf16.gmra.mxu0 %v1987
      %v2144 = vpop.f32.mrf.mxu0
      %v2145 = vadd.f32 %v2025, %v2144
      %v2146 = vpop.f32.mrf.mxu0
      %v2147 = vadd.f32 %v2025, %v2146
      %2148 = vmatmul.bf16.gmra.mxu0 %v1988
      %v2149 = vpop.f32.mrf.mxu0
      %v2150 = vadd.f32 %v2025, %v2149
      %v2151 = vpop.f32.mrf.mxu0
      %v2152 = vadd.f32 %v2025, %v2151
      %2153 = vmatmul.bf16.gmra.mxu0 %v1989
      %v2154 = vpop.f32.mrf.mxu0
      %v2155 = vadd.f32 %v2025, %v2154
      %v2156 = vpop.f32.mrf.mxu0
      %v2157 = vadd.f32 %v2025, %v2156
      %2158 = vmatmul.bf16.gmra.mxu0 %v1990
      %v2159 = vpop.f32.mrf.mxu0
      %v2160 = vadd.f32 %v2025, %v2159
      %v2161 = vpop.f32.mrf.mxu0
      %v2162 = vadd.f32 %v2025, %v2161
      %2163 = vmatmul.bf16.gmra.mxu0 %v1991
      %v2164 = vpop.f32.mrf.mxu0
      %v2165 = vadd.f32 %v2025, %v2164
      %v2166 = vpop.f32.mrf.mxu0
      %v2167 = vadd.f32 %v2025, %v2166
      %2168 = vmatmul.bf16.gmra.mxu0 %v1992
      %v2169 = vpop.f32.mrf.mxu0
      %v2170 = vadd.f32 %v2025, %v2169
      %v2171 = vpop.f32.mrf.mxu0
      %v2172 = vadd.f32 %v2025, %v2171
      %2173 = vmatmul.bf16.gmra.mxu0 %v1993
      %v2174 = vpop.f32.mrf.mxu0
      %v2175 = vadd.f32 %v2025, %v2174
      %v2176 = vpop.f32.mrf.mxu0
      %v2177 = vadd.f32 %v2025, %v2176
      %2178 = vmatmul.bf16.gmra.mxu0 %v1994
      %v2179 = vpop.f32.mrf.mxu0
      %v2180 = vadd.f32 %v2025, %v2179
      %v2181 = vpop.f32.mrf.mxu0
      %v2182 = vadd.f32 %v2025, %v2181
      %2183 = vmatmul.bf16.gmra.mxu0 %v1995
      %v2184 = vpop.f32.mrf.mxu0
      %v2185 = vadd.f32 %v2025, %v2184
      %v2186 = vpop.f32.mrf.mxu0
      %v2187 = vadd.f32 %v2025, %v2186
      %2188 = vmatmul.bf16.gmra.mxu0 %v1996
      %v2189 = vpop.f32.mrf.mxu0
      %v2190 = vadd.f32 %v2025, %v2189
      %v2191 = vpop.f32.mrf.mxu0
      %v2192 = vadd.f32 %v2025, %v2191
      %2193 = vmatmul.bf16.gmra.mxu0 %v1997
      %v2194 = vpop.f32.mrf.mxu0
      %v2195 = vadd.f32 %v2025, %v2194
      %v2196 = vpop.f32.mrf.mxu0
      %v2197 = vadd.f32 %v2025, %v2196
      %2198 = vmatmul.bf16.gmra.mxu0 %v1998
      %v2199 = vpop.f32.mrf.mxu0
      %v2200 = vadd.f32 %v2025, %v2199
      %v2201 = vpop.f32.mrf.mxu0
      %v2202 = vadd.f32 %v2025, %v2201
      %2203 = vmatmul.bf16.gmra.mxu0 %v1999
      %v2204 = vpop.f32.mrf.mxu0
      %v2205 = vadd.f32 %v2025, %v2204
      %v2206 = vpop.f32.mrf.mxu0
      %v2207 = vadd.f32 %v2025, %v2206
      %2208 = vmatmul.bf16.gmra.mxu0 %v2000
      %v2209 = vpop.f32.mrf.mxu0
      %v2210 = vadd.f32 %v2025, %v2209
      %v2211 = vpop.f32.mrf.mxu0
      %v2212 = vadd.f32 %v2025, %v2211
      %2213 = vmatmul.bf16.gmra.mxu0 %v2001
      %v2214 = vpop.f32.mrf.mxu0
      %v2215 = vadd.f32 %v2025, %v2214
      %v2216 = vpop.f32.mrf.mxu0
      %v2217 = vadd.f32 %v2025, %v2216
      %2218 = vmatmul.bf16.gmra.mxu0 %v2002
      %v2219 = vpop.f32.mrf.mxu0
      %v2220 = vadd.f32 %v2025, %v2219
      %v2221 = vpop.f32.mrf.mxu0
      %v2222 = vadd.f32 %v2025, %v2221
      %2223 = vmatmul.bf16.gmra.mxu0 %v2003
      %v2224 = vpop.f32.mrf.mxu0
      %v2225 = vadd.f32 %v2025, %v2224
      %v2226 = vpop.f32.mrf.mxu0
      %v2227 = vadd.f32 %v2025, %v2226
      %2228 = vmatmul.bf16.gmra.mxu0 %v2004
      %v2229 = vpop.f32.mrf.mxu0
      %v2230 = vadd.f32 %v2025, %v2229
      %v2231 = vpop.f32.mrf.mxu0
      %v2232 = vadd.f32 %v2025, %v2231
      %2233 = vmatmul.bf16.gmra.mxu0 %v2005
      %v2234 = vpop.f32.mrf.mxu0
      %v2235 = vadd.f32 %v2025, %v2234
      %v2236 = vpop.f32.mrf.mxu0
      %v2237 = vadd.f32 %v2025, %v2236
      %2238 = vmatmul.bf16.gmra.mxu0 %v2006
      %v2239 = vpop.f32.mrf.mxu0
      %v2240 = vadd.f32 %v2025, %v2239
      %v2241 = vpop.f32.mrf.mxu0
      %v2242 = vadd.f32 %v2025, %v2241
      %2243 = vdwg.mxu0
      %v2244 = vmul.f32 %v2085, 100.0
      %v2245 = vmul.f32 %v2087, 100.0
      %v2246 = vmul.f32 %v2090, 100.0
      %v2247 = vmul.f32 %v2092, 100.0
      %v2248 = vmul.f32 %v2095, 100.0
      %v2249 = vmul.f32 %v2097, 100.0
      %v2250 = vmul.f32 %v2100, 100.0
      %v2251 = vmul.f32 %v2102, 100.0
      %v2252 = vmul.f32 %v2105, 100.0
      %v2253 = vmul.f32 %v2107, 100.0
      %v2254 = vmul.f32 %v2110, 100.0
      %v2255 = vmul.f32 %v2112, 100.0
      %v2256 = vmul.f32 %v2115, 100.0
      %v2257 = vmul.f32 %v2117, 100.0
      %v2258 = vmul.f32 %v2120, 100.0
      %v2259 = vmul.f32 %v2122, 100.0
      %v2260 = vmul.f32 %v2125, 100.0
      %v2261 = vmul.f32 %v2127, 100.0
      %v2262 = vmul.f32 %v2130, 100.0
      %v2263 = vmul.f32 %v2132, 100.0
      %v2264 = vmul.f32 %v2135, 100.0
      %v2265 = vmul.f32 %v2137, 100.0
      %v2266 = vmul.f32 %v2140, 100.0
      %v2267 = vmul.f32 %v2142, 100.0
      %v2268 = vmul.f32 %v2145, 100.0
      %v2269 = vmul.f32 %v2147, 100.0
      %v2270 = vmul.f32 %v2150, 100.0
      %v2271 = vmul.f32 %v2152, 100.0
      %v2272 = vmul.f32 %v2155, 100.0
      %v2273 = vmul.f32 %v2157, 100.0
      %v2274 = vmul.f32 %v2160, 100.0
      %v2275 = vmul.f32 %v2162, 100.0
      %v2276 = vmul.f32 %v2165, 100.0
      %v2277 = vmul.f32 %v2167, 100.0
      %v2278 = vmul.f32 %v2170, 100.0
      %v2279 = vmul.f32 %v2172, 100.0
      %v2280 = vmul.f32 %v2175, 100.0
      %v2281 = vmul.f32 %v2177, 100.0
      %v2282 = vmul.f32 %v2180, 100.0
      %v2283 = vmul.f32 %v2182, 100.0
      %v2284 = vmul.f32 %v2185, 100.0
      %v2285 = vmul.f32 %v2187, 100.0
      %v2286 = vmul.f32 %v2190, 100.0
      %v2287 = vmul.f32 %v2192, 100.0
      %v2288 = vmul.f32 %v2195, 100.0
      %v2289 = vmul.f32 %v2197, 100.0
      %v2290 = vmul.f32 %v2200, 100.0
      %v2291 = vmul.f32 %v2202, 100.0
      %v2292 = vmul.f32 %v2205, 100.0
      %v2293 = vmul.f32 %v2207, 100.0
      %v2294 = vmul.f32 %v2210, 100.0
      %v2295 = vmul.f32 %v2212, 100.0
      %v2296 = vmul.f32 %v2215, 100.0
      %v2297 = vmul.f32 %v2217, 100.0
      %v2298 = vmul.f32 %v2220, 100.0
      %v2299 = vmul.f32 %v2222, 100.0
      %v2300 = vmul.f32 %v2225, 100.0
      %v2301 = vmul.f32 %v2227, 100.0
      %v2302 = vmul.f32 %v2230, 100.0
      %v2303 = vmul.f32 %v2232, 100.0
      %v2304 = vmul.f32 %v2235, 100.0
      %v2305 = vmul.f32 %v2237, 100.0
      %v2306 = vmul.f32 %v2240, 100.0
      %v2307 = vmul.f32 %v2242, 100.0
      %vm2308 = vcmp.gt.f32.partialorder %v2244, 20.0
      %vm2309 = vcmp.gt.f32.partialorder %v2245, 20.0
      %vm2310 = vcmp.gt.f32.partialorder %v2246, 20.0
      %vm2311 = vcmp.gt.f32.partialorder %v2247, 20.0
      %vm2312 = vcmp.gt.f32.partialorder %v2248, 20.0
      %vm2313 = vcmp.gt.f32.partialorder %v2249, 20.0
      %vm2314 = vcmp.gt.f32.partialorder %v2250, 20.0
      %vm2315 = vcmp.gt.f32.partialorder %v2251, 20.0
      %vm2316 = vcmp.gt.f32.partialorder %v2252, 20.0
      %vm2317 = vcmp.gt.f32.partialorder %v2253, 20.0
      %vm2318 = vcmp.gt.f32.partialorder %v2254, 20.0
      %vm2319 = vcmp.gt.f32.partialorder %v2255, 20.0
      %vm2320 = vcmp.gt.f32.partialorder %v2256, 20.0
      %vm2321 = vcmp.gt.f32.partialorder %v2257, 20.0
      %vm2322 = vcmp.gt.f32.partialorder %v2258, 20.0
      %vm2323 = vcmp.gt.f32.partialorder %v2259, 20.0
      %vm2324 = vcmp.gt.f32.partialorder %v2260, 20.0
      %vm2325 = vcmp.gt.f32.partialorder %v2261, 20.0
      %vm2326 = vcmp.gt.f32.partialorder %v2262, 20.0
      %vm2327 = vcmp.gt.f32.partialorder %v2263, 20.0
      %vm2328 = vcmp.gt.f32.partialorder %v2264, 20.0
      %vm2329 = vcmp.gt.f32.partialorder %v2265, 20.0
      %vm2330 = vcmp.gt.f32.partialorder %v2266, 20.0
      %vm2331 = vcmp.gt.f32.partialorder %v2267, 20.0
      %vm2332 = vcmp.gt.f32.partialorder %v2268, 20.0
      %vm2333 = vcmp.gt.f32.partialorder %v2269, 20.0
      %vm2334 = vcmp.gt.f32.partialorder %v2270, 20.0
      %vm2335 = vcmp.gt.f32.partialorder %v2271, 20.0
      %vm2336 = vcmp.gt.f32.partialorder %v2272, 20.0
      %vm2337 = vcmp.gt.f32.partialorder %v2273, 20.0
      %vm2338 = vcmp.gt.f32.partialorder %v2274, 20.0
      %vm2339 = vcmp.gt.f32.partialorder %v2275, 20.0
      %vm2340 = vcmp.gt.f32.partialorder %v2276, 20.0
      %vm2341 = vcmp.gt.f32.partialorder %v2277, 20.0
      %vm2342 = vcmp.gt.f32.partialorder %v2278, 20.0
      %vm2343 = vcmp.gt.f32.partialorder %v2279, 20.0
      %vm2344 = vcmp.gt.f32.partialorder %v2280, 20.0
      %vm2345 = vcmp.gt.f32.partialorder %v2281, 20.0
      %vm2346 = vcmp.gt.f32.partialorder %v2282, 20.0
      %vm2347 = vcmp.gt.f32.partialorder %v2283, 20.0
      %vm2348 = vcmp.gt.f32.partialorder %v2284, 20.0
      %vm2349 = vcmp.gt.f32.partialorder %v2285, 20.0
      %vm2350 = vcmp.gt.f32.partialorder %v2286, 20.0
      %vm2351 = vcmp.gt.f32.partialorder %v2287, 20.0
      %vm2352 = vcmp.gt.f32.partialorder %v2288, 20.0
      %vm2353 = vcmp.gt.f32.partialorder %v2289, 20.0
      %vm2354 = vcmp.gt.f32.partialorder %v2290, 20.0
      %vm2355 = vcmp.gt.f32.partialorder %v2291, 20.0
      %vm2356 = vcmp.gt.f32.partialorder %v2292, 20.0
      %vm2357 = vcmp.gt.f32.partialorder %v2293, 20.0
      %vm2358 = vcmp.gt.f32.partialorder %v2294, 20.0
      %vm2359 = vcmp.gt.f32.partialorder %v2295, 20.0
      %vm2360 = vcmp.gt.f32.partialorder %v2296, 20.0
      %vm2361 = vcmp.gt.f32.partialorder %v2297, 20.0
      %vm2362 = vcmp.gt.f32.partialorder %v2298, 20.0
      %vm2363 = vcmp.gt.f32.partialorder %v2299, 20.0
      %vm2364 = vcmp.gt.f32.partialorder %v2300, 20.0
      %vm2365 = vcmp.gt.f32.partialorder %v2301, 20.0
      %vm2366 = vcmp.gt.f32.partialorder %v2302, 20.0
      %vm2367 = vcmp.gt.f32.partialorder %v2303, 20.0
      %vm2368 = vcmp.gt.f32.partialorder %v2304, 20.0
      %vm2369 = vcmp.gt.f32.partialorder %v2305, 20.0
      %vm2370 = vcmp.gt.f32.partialorder %v2306, 20.0
      %vm2371 = vcmp.gt.f32.partialorder %v2307, 20.0
      %v2372 = vmin.f32 %v2244, 20.0
      %v2373 = vmin.f32 %v2245, 20.0
      %v2374 = vmin.f32 %v2246, 20.0
      %v2375 = vmin.f32 %v2247, 20.0
      %v2376 = vmin.f32 %v2248, 20.0
      %v2377 = vmin.f32 %v2249, 20.0
      %v2378 = vmin.f32 %v2250, 20.0
      %v2379 = vmin.f32 %v2251, 20.0
      %v2380 = vmin.f32 %v2252, 20.0
      %v2381 = vmin.f32 %v2253, 20.0
      %v2382 = vmin.f32 %v2254, 20.0
      %v2383 = vmin.f32 %v2255, 20.0
      %v2384 = vmin.f32 %v2256, 20.0
      %v2385 = vmin.f32 %v2257, 20.0
      %v2386 = vmin.f32 %v2258, 20.0
      %v2387 = vmin.f32 %v2259, 20.0
      %v2388 = vmin.f32 %v2260, 20.0
      %v2389 = vmin.f32 %v2261, 20.0
      %v2390 = vmin.f32 %v2262, 20.0
      %v2391 = vmin.f32 %v2263, 20.0
      %v2392 = vmin.f32 %v2264, 20.0
      %v2393 = vmin.f32 %v2265, 20.0
      %v2394 = vmin.f32 %v2266, 20.0
      %v2395 = vmin.f32 %v2267, 20.0
      %v2396 = vmin.f32 %v2268, 20.0
      %v2397 = vmin.f32 %v2269, 20.0
      %v2398 = vmin.f32 %v2270, 20.0
      %v2399 = vmin.f32 %v2271, 20.0
      %v2400 = vmin.f32 %v2272, 20.0
      %v2401 = vmin.f32 %v2273, 20.0
      %v2402 = vmin.f32 %v2274, 20.0
      %v2403 = vmin.f32 %v2275, 20.0
      %v2404 = vmin.f32 %v2276, 20.0
      %v2405 = vmin.f32 %v2277, 20.0
      %v2406 = vmin.f32 %v2278, 20.0
      %v2407 = vmin.f32 %v2279, 20.0
      %v2408 = vmin.f32 %v2280, 20.0
      %v2409 = vmin.f32 %v2281, 20.0
      %v2410 = vmin.f32 %v2282, 20.0
      %v2411 = vmin.f32 %v2283, 20.0
      %v2412 = vmin.f32 %v2284, 20.0
      %v2413 = vmin.f32 %v2285, 20.0
      %v2414 = vmin.f32 %v2286, 20.0
      %v2415 = vmin.f32 %v2287, 20.0
      %v2416 = vmin.f32 %v2288, 20.0
      %v2417 = vmin.f32 %v2289, 20.0
      %v2418 = vmin.f32 %v2290, 20.0
      %v2419 = vmin.f32 %v2291, 20.0
      %v2420 = vmin.f32 %v2292, 20.0
      %v2421 = vmin.f32 %v2293, 20.0
      %v2422 = vmin.f32 %v2294, 20.0
      %v2423 = vmin.f32 %v2295, 20.0
      %v2424 = vmin.f32 %v2296, 20.0
      %v2425 = vmin.f32 %v2297, 20.0
      %v2426 = vmin.f32 %v2298, 20.0
      %v2427 = vmin.f32 %v2299, 20.0
      %v2428 = vmin.f32 %v2300, 20.0
      %v2429 = vmin.f32 %v2301, 20.0
      %v2430 = vmin.f32 %v2302, 20.0
      %v2431 = vmin.f32 %v2303, 20.0
      %v2432 = vmin.f32 %v2304, 20.0
      %v2433 = vmin.f32 %v2305, 20.0
      %v2434 = vmin.f32 %v2306, 20.0
      %v2435 = vmin.f32 %v2307, 20.0
      %v2436 = vmul.f32 %v2372, 1.442695
      %v2437 = vpow.pop %v2436
      %v2438 = vmul.f32 %v2373, 1.442695
      %v2439 = vpow.pop %v2438
      %v2440 = vmul.f32 %v2374, 1.442695
      %v2441 = vpow.pop %v2440
      %v2442 = vmul.f32 %v2375, 1.442695
      %v2443 = vpow.pop %v2442
      %v2444 = vmul.f32 %v2376, 1.442695
      %v2445 = vpow.pop %v2444
      %v2446 = vmul.f32 %v2377, 1.442695
      %v2447 = vpow.pop %v2446
      %v2448 = vmul.f32 %v2378, 1.442695
      %v2449 = vpow.pop %v2448
      %v2450 = vmul.f32 %v2379, 1.442695
      %v2451 = vpow.pop %v2450
      %v2452 = vmul.f32 %v2380, 1.442695
      %v2453 = vpow.pop %v2452
      %v2454 = vmul.f32 %v2381, 1.442695
      %v2455 = vpow.pop %v2454
      %v2456 = vmul.f32 %v2382, 1.442695
      %v2457 = vpow.pop %v2456
      %v2458 = vmul.f32 %v2383, 1.442695
      %v2459 = vpow.pop %v2458
      %v2460 = vmul.f32 %v2384, 1.442695
      %v2461 = vpow.pop %v2460
      %v2462 = vmul.f32 %v2385, 1.442695
      %v2463 = vpow.pop %v2462
      %v2464 = vmul.f32 %v2386, 1.442695
      %v2465 = vpow.pop %v2464
      %v2466 = vmul.f32 %v2387, 1.442695
      %v2467 = vpow.pop %v2466
      %v2468 = vmul.f32 %v2388, 1.442695
      %v2469 = vpow.pop %v2468
      %v2470 = vmul.f32 %v2389, 1.442695
      %v2471 = vpow.pop %v2470
      %v2472 = vmul.f32 %v2390, 1.442695
      %v2473 = vpow.pop %v2472
      %v2474 = vmul.f32 %v2391, 1.442695
      %v2475 = vpow.pop %v2474
      %v2476 = vmul.f32 %v2392, 1.442695
      %v2477 = vpow.pop %v2476
      %v2478 = vmul.f32 %v2393, 1.442695
      %v2479 = vpow.pop %v2478
      %v2480 = vmul.f32 %v2394, 1.442695
      %v2481 = vpow.pop %v2480
      %v2482 = vmul.f32 %v2395, 1.442695
      %v2483 = vpow.pop %v2482
      %v2484 = vmul.f32 %v2396, 1.442695
      %v2485 = vpow.pop %v2484
      %v2486 = vmul.f32 %v2397, 1.442695
      %v2487 = vpow.pop %v2486
      %v2488 = vmul.f32 %v2398, 1.442695
      %v2489 = vpow.pop %v2488
      %v2490 = vmul.f32 %v2399, 1.442695
      %v2491 = vpow.pop %v2490
      %v2492 = vmul.f32 %v2400, 1.442695
      %v2493 = vpow.pop %v2492
      %v2494 = vmul.f32 %v2401, 1.442695
      %v2495 = vpow.pop %v2494
      %v2496 = vmul.f32 %v2402, 1.442695
      %v2497 = vpow.pop %v2496
      %v2498 = vmul.f32 %v2403, 1.442695
      %v2499 = vpow.pop %v2498
      %v2500 = vmul.f32 %v2404, 1.442695
      %v2501 = vpow.pop %v2500
      %v2502 = vmul.f32 %v2405, 1.442695
      %v2503 = vpow.pop %v2502
      %v2504 = vmul.f32 %v2406, 1.442695
      %v2505 = vpow.pop %v2504
      %v2506 = vmul.f32 %v2407, 1.442695
      %v2507 = vpow.pop %v2506
      %v2508 = vmul.f32 %v2408, 1.442695
      %v2509 = vpow.pop %v2508
      %v2510 = vmul.f32 %v2409, 1.442695
      %v2511 = vpow.pop %v2510
      %v2512 = vmul.f32 %v2410, 1.442695
      %v2513 = vpow.pop %v2512
      %v2514 = vmul.f32 %v2411, 1.442695
      %v2515 = vpow.pop %v2514
      %v2516 = vmul.f32 %v2412, 1.442695
      %v2517 = vpow.pop %v2516
      %v2518 = vmul.f32 %v2413, 1.442695
      %v2519 = vpow.pop %v2518
      %v2520 = vmul.f32 %v2414, 1.442695
      %v2521 = vpow.pop %v2520
      %v2522 = vmul.f32 %v2415, 1.442695
      %v2523 = vpow.pop %v2522
      %v2524 = vmul.f32 %v2416, 1.442695
      %v2525 = vpow.pop %v2524
      %v2526 = vmul.f32 %v2417, 1.442695
      %v2527 = vpow.pop %v2526
      %v2528 = vmul.f32 %v2418, 1.442695
      %v2529 = vpow.pop %v2528
      %v2530 = vmul.f32 %v2419, 1.442695
      %v2531 = vpow.pop %v2530
      %v2532 = vmul.f32 %v2420, 1.442695
      %v2533 = vpow.pop %v2532
      %v2534 = vmul.f32 %v2421, 1.442695
      %v2535 = vpow.pop %v2534
      %v2536 = vmul.f32 %v2422, 1.442695
      %v2537 = vpow.pop %v2536
      %v2538 = vmul.f32 %v2423, 1.442695
      %v2539 = vpow.pop %v2538
      %v2540 = vmul.f32 %v2424, 1.442695
      %v2541 = vpow.pop %v2540
      %v2542 = vmul.f32 %v2425, 1.442695
      %v2543 = vpow.pop %v2542
      %v2544 = vmul.f32 %v2426, 1.442695
      %v2545 = vpow.pop %v2544
      %v2546 = vmul.f32 %v2427, 1.442695
      %v2547 = vpow.pop %v2546
      %v2548 = vmul.f32 %v2428, 1.442695
      %v2549 = vpow.pop %v2548
      %v2550 = vmul.f32 %v2429, 1.442695
      %v2551 = vpow.pop %v2550
      %v2552 = vmul.f32 %v2430, 1.442695
      %v2553 = vpow.pop %v2552
      %v2554 = vmul.f32 %v2431, 1.442695
      %v2555 = vpow.pop %v2554
      %v2556 = vmul.f32 %v2432, 1.442695
      %v2557 = vpow.pop %v2556
      %v2558 = vmul.f32 %v2433, 1.442695
      %v2559 = vpow.pop %v2558
      %v2560 = vmul.f32 %v2434, 1.442695
      %v2561 = vpow.pop %v2560
      %v2562 = vmul.f32 %v2435, 1.442695
      %v2563 = vpow.pop %v2562
      %v2564 = vadd.f32 %v2437, 1.0
      %v2565 = vlog2.pop %v2564
      %v2566 = vmul.f32 %v2565, 0.6931472
      %v2567 = vmul.f32 -0.5, %v2437
      %v2568 = vadd.f32 %v2567, 1.0
      %v2569 = vmul.f32 %v2568, %v2437
      %v2570 = vand.u32 2147483647, %v2437
      %vm2571 = vcmp.lt.f32.partialorder %v2570, 0.0004427343
      %v2572 = vsel %vm2571, %v2569, %v2566
      %v2573 = vadd.f32 %v2439, 1.0
      %v2574 = vlog2.pop %v2573
      %v2575 = vmul.f32 %v2574, 0.6931472
      %v2576 = vmul.f32 -0.5, %v2439
      %v2577 = vadd.f32 %v2576, 1.0
      %v2578 = vmul.f32 %v2577, %v2439
      %v2579 = vand.u32 2147483647, %v2439
      %vm2580 = vcmp.lt.f32.partialorder %v2579, 0.0004427343
      %v2581 = vsel %vm2580, %v2578, %v2575
      %v2582 = vadd.f32 %v2441, 1.0
      %v2583 = vlog2.pop %v2582
      %v2584 = vmul.f32 %v2583, 0.6931472
      %v2585 = vmul.f32 -0.5, %v2441
      %v2586 = vadd.f32 %v2585, 1.0
      %v2587 = vmul.f32 %v2586, %v2441
      %v2588 = vand.u32 2147483647, %v2441
      %vm2589 = vcmp.lt.f32.partialorder %v2588, 0.0004427343
      %v2590 = vsel %vm2589, %v2587, %v2584
      %v2591 = vadd.f32 %v2443, 1.0
      %v2592 = vlog2.pop %v2591
      %v2593 = vmul.f32 %v2592, 0.6931472
      %v2594 = vmul.f32 -0.5, %v2443
      %v2595 = vadd.f32 %v2594, 1.0
      %v2596 = vmul.f32 %v2595, %v2443
      %v2597 = vand.u32 2147483647, %v2443
      %vm2598 = vcmp.lt.f32.partialorder %v2597, 0.0004427343
      %v2599 = vsel %vm2598, %v2596, %v2593
      %v2600 = vadd.f32 %v2445, 1.0
      %v2601 = vlog2.pop %v2600
      %v2602 = vmul.f32 %v2601, 0.6931472
      %v2603 = vmul.f32 -0.5, %v2445
      %v2604 = vadd.f32 %v2603, 1.0
      %v2605 = vmul.f32 %v2604, %v2445
      %v2606 = vand.u32 2147483647, %v2445
      %vm2607 = vcmp.lt.f32.partialorder %v2606, 0.0004427343
      %v2608 = vsel %vm2607, %v2605, %v2602
      %v2609 = vadd.f32 %v2447, 1.0
      %v2610 = vlog2.pop %v2609
      %v2611 = vmul.f32 %v2610, 0.6931472
      %v2612 = vmul.f32 -0.5, %v2447
      %v2613 = vadd.f32 %v2612, 1.0
      %v2614 = vmul.f32 %v2613, %v2447
      %v2615 = vand.u32 2147483647, %v2447
      %vm2616 = vcmp.lt.f32.partialorder %v2615, 0.0004427343
      %v2617 = vsel %vm2616, %v2614, %v2611
      %v2618 = vadd.f32 %v2449, 1.0
      %v2619 = vlog2.pop %v2618
      %v2620 = vmul.f32 %v2619, 0.6931472
      %v2621 = vmul.f32 -0.5, %v2449
      %v2622 = vadd.f32 %v2621, 1.0
      %v2623 = vmul.f32 %v2622, %v2449
      %v2624 = vand.u32 2147483647, %v2449
      %vm2625 = vcmp.lt.f32.partialorder %v2624, 0.0004427343
      %v2626 = vsel %vm2625, %v2623, %v2620
      %v2627 = vadd.f32 %v2451, 1.0
      %v2628 = vlog2.pop %v2627
      %v2629 = vmul.f32 %v2628, 0.6931472
      %v2630 = vmul.f32 -0.5, %v2451
      %v2631 = vadd.f32 %v2630, 1.0
      %v2632 = vmul.f32 %v2631, %v2451
      %v2633 = vand.u32 2147483647, %v2451
      %vm2634 = vcmp.lt.f32.partialorder %v2633, 0.0004427343
      %v2635 = vsel %vm2634, %v2632, %v2629
      %v2636 = vadd.f32 %v2453, 1.0
      %v2637 = vlog2.pop %v2636
      %v2638 = vmul.f32 %v2637, 0.6931472
      %v2639 = vmul.f32 -0.5, %v2453
      %v2640 = vadd.f32 %v2639, 1.0
      %v2641 = vmul.f32 %v2640, %v2453
      %v2642 = vand.u32 2147483647, %v2453
      %vm2643 = vcmp.lt.f32.partialorder %v2642, 0.0004427343
      %v2644 = vsel %vm2643, %v2641, %v2638
      %v2645 = vadd.f32 %v2455, 1.0
      %v2646 = vlog2.pop %v2645
      %v2647 = vmul.f32 %v2646, 0.6931472
      %v2648 = vmul.f32 -0.5, %v2455
      %v2649 = vadd.f32 %v2648, 1.0
      %v2650 = vmul.f32 %v2649, %v2455
      %v2651 = vand.u32 2147483647, %v2455
      %vm2652 = vcmp.lt.f32.partialorder %v2651, 0.0004427343
      %v2653 = vsel %vm2652, %v2650, %v2647
      %v2654 = vadd.f32 %v2457, 1.0
      %v2655 = vlog2.pop %v2654
      %v2656 = vmul.f32 %v2655, 0.6931472
      %v2657 = vmul.f32 -0.5, %v2457
      %v2658 = vadd.f32 %v2657, 1.0
      %v2659 = vmul.f32 %v2658, %v2457
      %v2660 = vand.u32 2147483647, %v2457
      %vm2661 = vcmp.lt.f32.partialorder %v2660, 0.0004427343
      %v2662 = vsel %vm2661, %v2659, %v2656
      %v2663 = vadd.f32 %v2459, 1.0
      %v2664 = vlog2.pop %v2663
      %v2665 = vmul.f32 %v2664, 0.6931472
      %v2666 = vmul.f32 -0.5, %v2459
      %v2667 = vadd.f32 %v2666, 1.0
      %v2668 = vmul.f32 %v2667, %v2459
      %v2669 = vand.u32 2147483647, %v2459
      %vm2670 = vcmp.lt.f32.partialorder %v2669, 0.0004427343
      %v2671 = vsel %vm2670, %v2668, %v2665
      %v2672 = vadd.f32 %v2461, 1.0
      %v2673 = vlog2.pop %v2672
      %v2674 = vmul.f32 %v2673, 0.6931472
      %v2675 = vmul.f32 -0.5, %v2461
      %v2676 = vadd.f32 %v2675, 1.0
      %v2677 = vmul.f32 %v2676, %v2461
      %v2678 = vand.u32 2147483647, %v2461
      %vm2679 = vcmp.lt.f32.partialorder %v2678, 0.0004427343
      %v2680 = vsel %vm2679, %v2677, %v2674
      %v2681 = vadd.f32 %v2463, 1.0
      %v2682 = vlog2.pop %v2681
      %v2683 = vmul.f32 %v2682, 0.6931472
      %v2684 = vmul.f32 -0.5, %v2463
      %v2685 = vadd.f32 %v2684, 1.0
      %v2686 = vmul.f32 %v2685, %v2463
      %v2687 = vand.u32 2147483647, %v2463
      %vm2688 = vcmp.lt.f32.partialorder %v2687, 0.0004427343
      %v2689 = vsel %vm2688, %v2686, %v2683
      %v2690 = vadd.f32 %v2465, 1.0
      %v2691 = vlog2.pop %v2690
      %v2692 = vmul.f32 %v2691, 0.6931472
      %v2693 = vmul.f32 -0.5, %v2465
      %v2694 = vadd.f32 %v2693, 1.0
      %v2695 = vmul.f32 %v2694, %v2465
      %v2696 = vand.u32 2147483647, %v2465
      %vm2697 = vcmp.lt.f32.partialorder %v2696, 0.0004427343
      %v2698 = vsel %vm2697, %v2695, %v2692
      %v2699 = vadd.f32 %v2467, 1.0
      %v2700 = vlog2.pop %v2699
      %v2701 = vmul.f32 %v2700, 0.6931472
      %v2702 = vmul.f32 -0.5, %v2467
      %v2703 = vadd.f32 %v2702, 1.0
      %v2704 = vmul.f32 %v2703, %v2467
      %v2705 = vand.u32 2147483647, %v2467
      %vm2706 = vcmp.lt.f32.partialorder %v2705, 0.0004427343
      %v2707 = vsel %vm2706, %v2704, %v2701
      %v2708 = vadd.f32 %v2469, 1.0
      %v2709 = vlog2.pop %v2708
      %v2710 = vmul.f32 %v2709, 0.6931472
      %v2711 = vmul.f32 -0.5, %v2469
      %v2712 = vadd.f32 %v2711, 1.0
      %v2713 = vmul.f32 %v2712, %v2469
      %v2714 = vand.u32 2147483647, %v2469
      %vm2715 = vcmp.lt.f32.partialorder %v2714, 0.0004427343
      %v2716 = vsel %vm2715, %v2713, %v2710
      %v2717 = vadd.f32 %v2471, 1.0
      %v2718 = vlog2.pop %v2717
      %v2719 = vmul.f32 %v2718, 0.6931472
      %v2720 = vmul.f32 -0.5, %v2471
      %v2721 = vadd.f32 %v2720, 1.0
      %v2722 = vmul.f32 %v2721, %v2471
      %v2723 = vand.u32 2147483647, %v2471
      %vm2724 = vcmp.lt.f32.partialorder %v2723, 0.0004427343
      %v2725 = vsel %vm2724, %v2722, %v2719
      %v2726 = vadd.f32 %v2473, 1.0
      %v2727 = vlog2.pop %v2726
      %v2728 = vmul.f32 %v2727, 0.6931472
      %v2729 = vmul.f32 -0.5, %v2473
      %v2730 = vadd.f32 %v2729, 1.0
      %v2731 = vmul.f32 %v2730, %v2473
      %v2732 = vand.u32 2147483647, %v2473
      %vm2733 = vcmp.lt.f32.partialorder %v2732, 0.0004427343
      %v2734 = vsel %vm2733, %v2731, %v2728
      %v2735 = vadd.f32 %v2475, 1.0
      %v2736 = vlog2.pop %v2735
      %v2737 = vmul.f32 %v2736, 0.6931472
      %v2738 = vmul.f32 -0.5, %v2475
      %v2739 = vadd.f32 %v2738, 1.0
      %v2740 = vmul.f32 %v2739, %v2475
      %v2741 = vand.u32 2147483647, %v2475
      %vm2742 = vcmp.lt.f32.partialorder %v2741, 0.0004427343
      %v2743 = vsel %vm2742, %v2740, %v2737
      %v2744 = vadd.f32 %v2477, 1.0
      %v2745 = vlog2.pop %v2744
      %v2746 = vmul.f32 %v2745, 0.6931472
      %v2747 = vmul.f32 -0.5, %v2477
      %v2748 = vadd.f32 %v2747, 1.0
      %v2749 = vmul.f32 %v2748, %v2477
      %v2750 = vand.u32 2147483647, %v2477
      %vm2751 = vcmp.lt.f32.partialorder %v2750, 0.0004427343
      %v2752 = vsel %vm2751, %v2749, %v2746
      %v2753 = vadd.f32 %v2479, 1.0
      %v2754 = vlog2.pop %v2753
      %v2755 = vmul.f32 %v2754, 0.6931472
      %v2756 = vmul.f32 -0.5, %v2479
      %v2757 = vadd.f32 %v2756, 1.0
      %v2758 = vmul.f32 %v2757, %v2479
      %v2759 = vand.u32 2147483647, %v2479
      %vm2760 = vcmp.lt.f32.partialorder %v2759, 0.0004427343
      %v2761 = vsel %vm2760, %v2758, %v2755
      %v2762 = vadd.f32 %v2481, 1.0
      %v2763 = vlog2.pop %v2762
      %v2764 = vmul.f32 %v2763, 0.6931472
      %v2765 = vmul.f32 -0.5, %v2481
      %v2766 = vadd.f32 %v2765, 1.0
      %v2767 = vmul.f32 %v2766, %v2481
      %v2768 = vand.u32 2147483647, %v2481
      %vm2769 = vcmp.lt.f32.partialorder %v2768, 0.0004427343
      %v2770 = vsel %vm2769, %v2767, %v2764
      %v2771 = vadd.f32 %v2483, 1.0
      %v2772 = vlog2.pop %v2771
      %v2773 = vmul.f32 %v2772, 0.6931472
      %v2774 = vmul.f32 -0.5, %v2483
      %v2775 = vadd.f32 %v2774, 1.0
      %v2776 = vmul.f32 %v2775, %v2483
      %v2777 = vand.u32 2147483647, %v2483
      %vm2778 = vcmp.lt.f32.partialorder %v2777, 0.0004427343
      %v2779 = vsel %vm2778, %v2776, %v2773
      %v2780 = vadd.f32 %v2485, 1.0
      %v2781 = vlog2.pop %v2780
      %v2782 = vmul.f32 %v2781, 0.6931472
      %v2783 = vmul.f32 -0.5, %v2485
      %v2784 = vadd.f32 %v2783, 1.0
      %v2785 = vmul.f32 %v2784, %v2485
      %v2786 = vand.u32 2147483647, %v2485
      %vm2787 = vcmp.lt.f32.partialorder %v2786, 0.0004427343
      %v2788 = vsel %vm2787, %v2785, %v2782
      %v2789 = vadd.f32 %v2487, 1.0
      %v2790 = vlog2.pop %v2789
      %v2791 = vmul.f32 %v2790, 0.6931472
      %v2792 = vmul.f32 -0.5, %v2487
      %v2793 = vadd.f32 %v2792, 1.0
      %v2794 = vmul.f32 %v2793, %v2487
      %v2795 = vand.u32 2147483647, %v2487
      %vm2796 = vcmp.lt.f32.partialorder %v2795, 0.0004427343
      %v2797 = vsel %vm2796, %v2794, %v2791
      %v2798 = vadd.f32 %v2489, 1.0
      %v2799 = vlog2.pop %v2798
      %v2800 = vmul.f32 %v2799, 0.6931472
      %v2801 = vmul.f32 -0.5, %v2489
      %v2802 = vadd.f32 %v2801, 1.0
      %v2803 = vmul.f32 %v2802, %v2489
      %v2804 = vand.u32 2147483647, %v2489
      %vm2805 = vcmp.lt.f32.partialorder %v2804, 0.0004427343
      %v2806 = vsel %vm2805, %v2803, %v2800
      %v2807 = vadd.f32 %v2491, 1.0
      %v2808 = vlog2.pop %v2807
      %v2809 = vmul.f32 %v2808, 0.6931472
      %v2810 = vmul.f32 -0.5, %v2491
      %v2811 = vadd.f32 %v2810, 1.0
      %v2812 = vmul.f32 %v2811, %v2491
      %v2813 = vand.u32 2147483647, %v2491
      %vm2814 = vcmp.lt.f32.partialorder %v2813, 0.0004427343
      %v2815 = vsel %vm2814, %v2812, %v2809
      %v2816 = vadd.f32 %v2493, 1.0
      %v2817 = vlog2.pop %v2816
      %v2818 = vmul.f32 %v2817, 0.6931472
      %v2819 = vmul.f32 -0.5, %v2493
      %v2820 = vadd.f32 %v2819, 1.0
      %v2821 = vmul.f32 %v2820, %v2493
      %v2822 = vand.u32 2147483647, %v2493
      %vm2823 = vcmp.lt.f32.partialorder %v2822, 0.0004427343
      %v2824 = vsel %vm2823, %v2821, %v2818
      %v2825 = vadd.f32 %v2495, 1.0
      %v2826 = vlog2.pop %v2825
      %v2827 = vmul.f32 %v2826, 0.6931472
      %v2828 = vmul.f32 -0.5, %v2495
      %v2829 = vadd.f32 %v2828, 1.0
      %v2830 = vmul.f32 %v2829, %v2495
      %v2831 = vand.u32 2147483647, %v2495
      %vm2832 = vcmp.lt.f32.partialorder %v2831, 0.0004427343
      %v2833 = vsel %vm2832, %v2830, %v2827
      %v2834 = vadd.f32 %v2497, 1.0
      %v2835 = vlog2.pop %v2834
      %v2836 = vmul.f32 %v2835, 0.6931472
      %v2837 = vmul.f32 -0.5, %v2497
      %v2838 = vadd.f32 %v2837, 1.0
      %v2839 = vmul.f32 %v2838, %v2497
      %v2840 = vand.u32 2147483647, %v2497
      %vm2841 = vcmp.lt.f32.partialorder %v2840, 0.0004427343
      %v2842 = vsel %vm2841, %v2839, %v2836
      %v2843 = vadd.f32 %v2499, 1.0
      %v2844 = vlog2.pop %v2843
      %v2845 = vmul.f32 %v2844, 0.6931472
      %v2846 = vmul.f32 -0.5, %v2499
      %v2847 = vadd.f32 %v2846, 1.0
      %v2848 = vmul.f32 %v2847, %v2499
      %v2849 = vand.u32 2147483647, %v2499
      %vm2850 = vcmp.lt.f32.partialorder %v2849, 0.0004427343
      %v2851 = vsel %vm2850, %v2848, %v2845
      %v2852 = vadd.f32 %v2501, 1.0
      %v2853 = vlog2.pop %v2852
      %v2854 = vmul.f32 %v2853, 0.6931472
      %v2855 = vmul.f32 -0.5, %v2501
      %v2856 = vadd.f32 %v2855, 1.0
      %v2857 = vmul.f32 %v2856, %v2501
      %v2858 = vand.u32 2147483647, %v2501
      %vm2859 = vcmp.lt.f32.partialorder %v2858, 0.0004427343
      %v2860 = vsel %vm2859, %v2857, %v2854
      %v2861 = vadd.f32 %v2503, 1.0
      %v2862 = vlog2.pop %v2861
      %v2863 = vmul.f32 %v2862, 0.6931472
      %v2864 = vmul.f32 -0.5, %v2503
      %v2865 = vadd.f32 %v2864, 1.0
      %v2866 = vmul.f32 %v2865, %v2503
      %v2867 = vand.u32 2147483647, %v2503
      %vm2868 = vcmp.lt.f32.partialorder %v2867, 0.0004427343
      %v2869 = vsel %vm2868, %v2866, %v2863
      %v2870 = vadd.f32 %v2505, 1.0
      %v2871 = vlog2.pop %v2870
      %v2872 = vmul.f32 %v2871, 0.6931472
      %v2873 = vmul.f32 -0.5, %v2505
      %v2874 = vadd.f32 %v2873, 1.0
      %v2875 = vmul.f32 %v2874, %v2505
      %v2876 = vand.u32 2147483647, %v2505
      %vm2877 = vcmp.lt.f32.partialorder %v2876, 0.0004427343
      %v2878 = vsel %vm2877, %v2875, %v2872
      %v2879 = vadd.f32 %v2507, 1.0
      %v2880 = vlog2.pop %v2879
      %v2881 = vmul.f32 %v2880, 0.6931472
      %v2882 = vmul.f32 -0.5, %v2507
      %v2883 = vadd.f32 %v2882, 1.0
      %v2884 = vmul.f32 %v2883, %v2507
      %v2885 = vand.u32 2147483647, %v2507
      %vm2886 = vcmp.lt.f32.partialorder %v2885, 0.0004427343
      %v2887 = vsel %vm2886, %v2884, %v2881
      %v2888 = vadd.f32 %v2509, 1.0
      %v2889 = vlog2.pop %v2888
      %v2890 = vmul.f32 %v2889, 0.6931472
      %v2891 = vmul.f32 -0.5, %v2509
      %v2892 = vadd.f32 %v2891, 1.0
      %v2893 = vmul.f32 %v2892, %v2509
      %v2894 = vand.u32 2147483647, %v2509
      %vm2895 = vcmp.lt.f32.partialorder %v2894, 0.0004427343
      %v2896 = vsel %vm2895, %v2893, %v2890
      %v2897 = vadd.f32 %v2511, 1.0
      %v2898 = vlog2.pop %v2897
      %v2899 = vmul.f32 %v2898, 0.6931472
      %v2900 = vmul.f32 -0.5, %v2511
      %v2901 = vadd.f32 %v2900, 1.0
      %v2902 = vmul.f32 %v2901, %v2511
      %v2903 = vand.u32 2147483647, %v2511
      %vm2904 = vcmp.lt.f32.partialorder %v2903, 0.0004427343
      %v2905 = vsel %vm2904, %v2902, %v2899
      %v2906 = vadd.f32 %v2513, 1.0
      %v2907 = vlog2.pop %v2906
      %v2908 = vmul.f32 %v2907, 0.6931472
      %v2909 = vmul.f32 -0.5, %v2513
      %v2910 = vadd.f32 %v2909, 1.0
      %v2911 = vmul.f32 %v2910, %v2513
      %v2912 = vand.u32 2147483647, %v2513
      %vm2913 = vcmp.lt.f32.partialorder %v2912, 0.0004427343
      %v2914 = vsel %vm2913, %v2911, %v2908
      %v2915 = vadd.f32 %v2515, 1.0
      %v2916 = vlog2.pop %v2915
      %v2917 = vmul.f32 %v2916, 0.6931472
      %v2918 = vmul.f32 -0.5, %v2515
      %v2919 = vadd.f32 %v2918, 1.0
      %v2920 = vmul.f32 %v2919, %v2515
      %v2921 = vand.u32 2147483647, %v2515
      %vm2922 = vcmp.lt.f32.partialorder %v2921, 0.0004427343
      %v2923 = vsel %vm2922, %v2920, %v2917
      %v2924 = vadd.f32 %v2517, 1.0
      %v2925 = vlog2.pop %v2924
      %v2926 = vmul.f32 %v2925, 0.6931472
      %v2927 = vmul.f32 -0.5, %v2517
      %v2928 = vadd.f32 %v2927, 1.0
      %v2929 = vmul.f32 %v2928, %v2517
      %v2930 = vand.u32 2147483647, %v2517
      %vm2931 = vcmp.lt.f32.partialorder %v2930, 0.0004427343
      %v2932 = vsel %vm2931, %v2929, %v2926
      %v2933 = vadd.f32 %v2519, 1.0
      %v2934 = vlog2.pop %v2933
      %v2935 = vmul.f32 %v2934, 0.6931472
      %v2936 = vmul.f32 -0.5, %v2519
      %v2937 = vadd.f32 %v2936, 1.0
      %v2938 = vmul.f32 %v2937, %v2519
      %v2939 = vand.u32 2147483647, %v2519
      %vm2940 = vcmp.lt.f32.partialorder %v2939, 0.0004427343
      %v2941 = vsel %vm2940, %v2938, %v2935
      %v2942 = vadd.f32 %v2521, 1.0
      %v2943 = vlog2.pop %v2942
      %v2944 = vmul.f32 %v2943, 0.6931472
      %v2945 = vmul.f32 -0.5, %v2521
      %v2946 = vadd.f32 %v2945, 1.0
      %v2947 = vmul.f32 %v2946, %v2521
      %v2948 = vand.u32 2147483647, %v2521
      %vm2949 = vcmp.lt.f32.partialorder %v2948, 0.0004427343
      %v2950 = vsel %vm2949, %v2947, %v2944
      %v2951 = vadd.f32 %v2523, 1.0
      %v2952 = vlog2.pop %v2951
      %v2953 = vmul.f32 %v2952, 0.6931472
      %v2954 = vmul.f32 -0.5, %v2523
      %v2955 = vadd.f32 %v2954, 1.0
      %v2956 = vmul.f32 %v2955, %v2523
      %v2957 = vand.u32 2147483647, %v2523
      %vm2958 = vcmp.lt.f32.partialorder %v2957, 0.0004427343
      %v2959 = vsel %vm2958, %v2956, %v2953
      %v2960 = vadd.f32 %v2525, 1.0
      %v2961 = vlog2.pop %v2960
      %v2962 = vmul.f32 %v2961, 0.6931472
      %v2963 = vmul.f32 -0.5, %v2525
      %v2964 = vadd.f32 %v2963, 1.0
      %v2965 = vmul.f32 %v2964, %v2525
      %v2966 = vand.u32 2147483647, %v2525
      %vm2967 = vcmp.lt.f32.partialorder %v2966, 0.0004427343
      %v2968 = vsel %vm2967, %v2965, %v2962
      %v2969 = vadd.f32 %v2527, 1.0
      %v2970 = vlog2.pop %v2969
      %v2971 = vmul.f32 %v2970, 0.6931472
      %v2972 = vmul.f32 -0.5, %v2527
      %v2973 = vadd.f32 %v2972, 1.0
      %v2974 = vmul.f32 %v2973, %v2527
      %v2975 = vand.u32 2147483647, %v2527
      %vm2976 = vcmp.lt.f32.partialorder %v2975, 0.0004427343
      %v2977 = vsel %vm2976, %v2974, %v2971
      %v2978 = vadd.f32 %v2529, 1.0
      %v2979 = vlog2.pop %v2978
      %v2980 = vmul.f32 %v2979, 0.6931472
      %v2981 = vmul.f32 -0.5, %v2529
      %v2982 = vadd.f32 %v2981, 1.0
      %v2983 = vmul.f32 %v2982, %v2529
      %v2984 = vand.u32 2147483647, %v2529
      %vm2985 = vcmp.lt.f32.partialorder %v2984, 0.0004427343
      %v2986 = vsel %vm2985, %v2983, %v2980
      %v2987 = vadd.f32 %v2531, 1.0
      %v2988 = vlog2.pop %v2987
      %v2989 = vmul.f32 %v2988, 0.6931472
      %v2990 = vmul.f32 -0.5, %v2531
      %v2991 = vadd.f32 %v2990, 1.0
      %v2992 = vmul.f32 %v2991, %v2531
      %v2993 = vand.u32 2147483647, %v2531
      %vm2994 = vcmp.lt.f32.partialorder %v2993, 0.0004427343
      %v2995 = vsel %vm2994, %v2992, %v2989
      %v2996 = vadd.f32 %v2533, 1.0
      %v2997 = vlog2.pop %v2996
      %v2998 = vmul.f32 %v2997, 0.6931472
      %v2999 = vmul.f32 -0.5, %v2533
      %v3000 = vadd.f32 %v2999, 1.0
      %v3001 = vmul.f32 %v3000, %v2533
      %v3002 = vand.u32 2147483647, %v2533
      %vm3003 = vcmp.lt.f32.partialorder %v3002, 0.0004427343
      %v3004 = vsel %vm3003, %v3001, %v2998
      %v3005 = vadd.f32 %v2535, 1.0
      %v3006 = vlog2.pop %v3005
      %v3007 = vmul.f32 %v3006, 0.6931472
      %v3008 = vmul.f32 -0.5, %v2535
      %v3009 = vadd.f32 %v3008, 1.0
      %v3010 = vmul.f32 %v3009, %v2535
      %v3011 = vand.u32 2147483647, %v2535
      %vm3012 = vcmp.lt.f32.partialorder %v3011, 0.0004427343
      %v3013 = vsel %vm3012, %v3010, %v3007
      %v3014 = vadd.f32 %v2537, 1.0
      %v3015 = vlog2.pop %v3014
      %v3016 = vmul.f32 %v3015, 0.6931472
      %v3017 = vmul.f32 -0.5, %v2537
      %v3018 = vadd.f32 %v3017, 1.0
      %v3019 = vmul.f32 %v3018, %v2537
      %v3020 = vand.u32 2147483647, %v2537
      %vm3021 = vcmp.lt.f32.partialorder %v3020, 0.0004427343
      %v3022 = vsel %vm3021, %v3019, %v3016
      %v3023 = vadd.f32 %v2539, 1.0
      %v3024 = vlog2.pop %v3023
      %v3025 = vmul.f32 %v3024, 0.6931472
      %v3026 = vmul.f32 -0.5, %v2539
      %v3027 = vadd.f32 %v3026, 1.0
      %v3028 = vmul.f32 %v3027, %v2539
      %v3029 = vand.u32 2147483647, %v2539
      %vm3030 = vcmp.lt.f32.partialorder %v3029, 0.0004427343
      %v3031 = vsel %vm3030, %v3028, %v3025
      %v3032 = vadd.f32 %v2541, 1.0
      %v3033 = vlog2.pop %v3032
      %v3034 = vmul.f32 %v3033, 0.6931472
      %v3035 = vmul.f32 -0.5, %v2541
      %v3036 = vadd.f32 %v3035, 1.0
      %v3037 = vmul.f32 %v3036, %v2541
      %v3038 = vand.u32 2147483647, %v2541
      %vm3039 = vcmp.lt.f32.partialorder %v3038, 0.0004427343
      %v3040 = vsel %vm3039, %v3037, %v3034
      %v3041 = vadd.f32 %v2543, 1.0
      %v3042 = vlog2.pop %v3041
      %v3043 = vmul.f32 %v3042, 0.6931472
      %v3044 = vmul.f32 -0.5, %v2543
      %v3045 = vadd.f32 %v3044, 1.0
      %v3046 = vmul.f32 %v3045, %v2543
      %v3047 = vand.u32 2147483647, %v2543
      %vm3048 = vcmp.lt.f32.partialorder %v3047, 0.0004427343
      %v3049 = vsel %vm3048, %v3046, %v3043
      %v3050 = vadd.f32 %v2545, 1.0
      %v3051 = vlog2.pop %v3050
      %v3052 = vmul.f32 %v3051, 0.6931472
      %v3053 = vmul.f32 -0.5, %v2545
      %v3054 = vadd.f32 %v3053, 1.0
      %v3055 = vmul.f32 %v3054, %v2545
      %v3056 = vand.u32 2147483647, %v2545
      %vm3057 = vcmp.lt.f32.partialorder %v3056, 0.0004427343
      %v3058 = vsel %vm3057, %v3055, %v3052
      %v3059 = vadd.f32 %v2547, 1.0
      %v3060 = vlog2.pop %v3059
      %v3061 = vmul.f32 %v3060, 0.6931472
      %v3062 = vmul.f32 -0.5, %v2547
      %v3063 = vadd.f32 %v3062, 1.0
      %v3064 = vmul.f32 %v3063, %v2547
      %v3065 = vand.u32 2147483647, %v2547
      %vm3066 = vcmp.lt.f32.partialorder %v3065, 0.0004427343
      %v3067 = vsel %vm3066, %v3064, %v3061
      %v3068 = vadd.f32 %v2549, 1.0
      %v3069 = vlog2.pop %v3068
      %v3070 = vmul.f32 %v3069, 0.6931472
      %v3071 = vmul.f32 -0.5, %v2549
      %v3072 = vadd.f32 %v3071, 1.0
      %v3073 = vmul.f32 %v3072, %v2549
      %v3074 = vand.u32 2147483647, %v2549
      %vm3075 = vcmp.lt.f32.partialorder %v3074, 0.0004427343
      %v3076 = vsel %vm3075, %v3073, %v3070
      %v3077 = vadd.f32 %v2551, 1.0
      %v3078 = vlog2.pop %v3077
      %v3079 = vmul.f32 %v3078, 0.6931472
      %v3080 = vmul.f32 -0.5, %v2551
      %v3081 = vadd.f32 %v3080, 1.0
      %v3082 = vmul.f32 %v3081, %v2551
      %v3083 = vand.u32 2147483647, %v2551
      %vm3084 = vcmp.lt.f32.partialorder %v3083, 0.0004427343
      %v3085 = vsel %vm3084, %v3082, %v3079
      %v3086 = vadd.f32 %v2553, 1.0
      %v3087 = vlog2.pop %v3086
      %v3088 = vmul.f32 %v3087, 0.6931472
      %v3089 = vmul.f32 -0.5, %v2553
      %v3090 = vadd.f32 %v3089, 1.0
      %v3091 = vmul.f32 %v3090, %v2553
      %v3092 = vand.u32 2147483647, %v2553
      %vm3093 = vcmp.lt.f32.partialorder %v3092, 0.0004427343
      %v3094 = vsel %vm3093, %v3091, %v3088
      %v3095 = vadd.f32 %v2555, 1.0
      %v3096 = vlog2.pop %v3095
      %v3097 = vmul.f32 %v3096, 0.6931472
      %v3098 = vmul.f32 -0.5, %v2555
      %v3099 = vadd.f32 %v3098, 1.0
      %v3100 = vmul.f32 %v3099, %v2555
      %v3101 = vand.u32 2147483647, %v2555
      %vm3102 = vcmp.lt.f32.partialorder %v3101, 0.0004427343
      %v3103 = vsel %vm3102, %v3100, %v3097
      %v3104 = vadd.f32 %v2557, 1.0
      %v3105 = vlog2.pop %v3104
      %v3106 = vmul.f32 %v3105, 0.6931472
      %v3107 = vmul.f32 -0.5, %v2557
      %v3108 = vadd.f32 %v3107, 1.0
      %v3109 = vmul.f32 %v3108, %v2557
      %v3110 = vand.u32 2147483647, %v2557
      %vm3111 = vcmp.lt.f32.partialorder %v3110, 0.0004427343
      %v3112 = vsel %vm3111, %v3109, %v3106
      %v3113 = vadd.f32 %v2559, 1.0
      %v3114 = vlog2.pop %v3113
      %v3115 = vmul.f32 %v3114, 0.6931472
      %v3116 = vmul.f32 -0.5, %v2559
      %v3117 = vadd.f32 %v3116, 1.0
      %v3118 = vmul.f32 %v3117, %v2559
      %v3119 = vand.u32 2147483647, %v2559
      %vm3120 = vcmp.lt.f32.partialorder %v3119, 0.0004427343
      %v3121 = vsel %vm3120, %v3118, %v3115
      %v3122 = vadd.f32 %v2561, 1.0
      %v3123 = vlog2.pop %v3122
      %v3124 = vmul.f32 %v3123, 0.6931472
      %v3125 = vmul.f32 -0.5, %v2561
      %v3126 = vadd.f32 %v3125, 1.0
      %v3127 = vmul.f32 %v3126, %v2561
      %v3128 = vand.u32 2147483647, %v2561
      %vm3129 = vcmp.lt.f32.partialorder %v3128, 0.0004427343
      %v3130 = vsel %vm3129, %v3127, %v3124
      %v3131 = vadd.f32 %v2563, 1.0
      %v3132 = vlog2.pop %v3131
      %v3133 = vmul.f32 %v3132, 0.6931472
      %v3134 = vmul.f32 -0.5, %v2563
      %v3135 = vadd.f32 %v3134, 1.0
      %v3136 = vmul.f32 %v3135, %v2563
      %v3137 = vand.u32 2147483647, %v2563
      %vm3138 = vcmp.lt.f32.partialorder %v3137, 0.0004427343
      %v3139 = vsel %vm3138, %v3136, %v3133
      %v3140 = vmul.f32 %v2572, %v1846
      %v3141 = vmul.f32 %v2581, %v1846
      %v3142 = vmul.f32 %v2590, %v1846
      %v3143 = vmul.f32 %v2599, %v1846
      %v3144 = vmul.f32 %v2608, %v1846
      %v3145 = vmul.f32 %v2617, %v1846
      %v3146 = vmul.f32 %v2626, %v1846
      %v3147 = vmul.f32 %v2635, %v1846
      %v3148 = vmul.f32 %v2644, %v1846
      %v3149 = vmul.f32 %v2653, %v1846
      %v3150 = vmul.f32 %v2662, %v1846
      %v3151 = vmul.f32 %v2671, %v1846
      %v3152 = vmul.f32 %v2680, %v1846
      %v3153 = vmul.f32 %v2689, %v1846
      %v3154 = vmul.f32 %v2698, %v1846
      %v3155 = vmul.f32 %v2707, %v1846
      %v3156 = vmul.f32 %v2716, %v1846
      %v3157 = vmul.f32 %v2725, %v1846
      %v3158 = vmul.f32 %v2734, %v1846
      %v3159 = vmul.f32 %v2743, %v1846
      %v3160 = vmul.f32 %v2752, %v1846
      %v3161 = vmul.f32 %v2761, %v1846
      %v3162 = vmul.f32 %v2770, %v1846
      %v3163 = vmul.f32 %v2779, %v1846
      %v3164 = vmul.f32 %v2788, %v1846
      %v3165 = vmul.f32 %v2797, %v1846
      %v3166 = vmul.f32 %v2806, %v1846
      %v3167 = vmul.f32 %v2815, %v1846
      %v3168 = vmul.f32 %v2824, %v1846
      %v3169 = vmul.f32 %v2833, %v1846
      %v3170 = vmul.f32 %v2842, %v1846
      %v3171 = vmul.f32 %v2851, %v1846
      %v3172 = vmul.f32 %v2860, %v1846
      %v3173 = vmul.f32 %v2869, %v1846
      %v3174 = vmul.f32 %v2878, %v1846
      %v3175 = vmul.f32 %v2887, %v1846
      %v3176 = vmul.f32 %v2896, %v1846
      %v3177 = vmul.f32 %v2905, %v1846
      %v3178 = vmul.f32 %v2914, %v1846
      %v3179 = vmul.f32 %v2923, %v1846
      %v3180 = vmul.f32 %v2932, %v1846
      %v3181 = vmul.f32 %v2941, %v1846
      %v3182 = vmul.f32 %v2950, %v1846
      %v3183 = vmul.f32 %v2959, %v1846
      %v3184 = vmul.f32 %v2968, %v1846
      %v3185 = vmul.f32 %v2977, %v1846
      %v3186 = vmul.f32 %v2986, %v1846
      %v3187 = vmul.f32 %v2995, %v1846
      %v3188 = vmul.f32 %v3004, %v1846
      %v3189 = vmul.f32 %v3013, %v1846
      %v3190 = vmul.f32 %v3022, %v1846
      %v3191 = vmul.f32 %v3031, %v1846
      %v3192 = vmul.f32 %v3040, %v1846
      %v3193 = vmul.f32 %v3049, %v1846
      %v3194 = vmul.f32 %v3058, %v1846
      %v3195 = vmul.f32 %v3067, %v1846
      %v3196 = vmul.f32 %v3076, %v1846
      %v3197 = vmul.f32 %v3085, %v1846
      %v3198 = vmul.f32 %v3094, %v1846
      %v3199 = vmul.f32 %v3103, %v1846
      %v3200 = vmul.f32 %v3112, %v1846
      %v3201 = vmul.f32 %v3121, %v1846
      %v3202 = vmul.f32 %v3130, %v1846
      %v3203 = vmul.f32 %v3139, %v1846
      %v3204 = vsel %vm2308, %v2085, %v3140
      %v3205 = vsel %vm2309, %v2087, %v3141
      %v3206 = vsel %vm2310, %v2090, %v3142
      %v3207 = vsel %vm2311, %v2092, %v3143
      %v3208 = vsel %vm2312, %v2095, %v3144
      %v3209 = vsel %vm2313, %v2097, %v3145
      %v3210 = vsel %vm2314, %v2100, %v3146
      %v3211 = vsel %vm2315, %v2102, %v3147
      %v3212 = vsel %vm2316, %v2105, %v3148
      %v3213 = vsel %vm2317, %v2107, %v3149
      %v3214 = vsel %vm2318, %v2110, %v3150
      %v3215 = vsel %vm2319, %v2112, %v3151
      %v3216 = vsel %vm2320, %v2115, %v3152
      %v3217 = vsel %vm2321, %v2117, %v3153
      %v3218 = vsel %vm2322, %v2120, %v3154
      %v3219 = vsel %vm2323, %v2122, %v3155
      %v3220 = vsel %vm2324, %v2125, %v3156
      %v3221 = vsel %vm2325, %v2127, %v3157
      %v3222 = vsel %vm2326, %v2130, %v3158
      %v3223 = vsel %vm2327, %v2132, %v3159
      %v3224 = vsel %vm2328, %v2135, %v3160
      %v3225 = vsel %vm2329, %v2137, %v3161
      %v3226 = vsel %vm2330, %v2140, %v3162
      %v3227 = vsel %vm2331, %v2142, %v3163
      %v3228 = vsel %vm2332, %v2145, %v3164
      %v3229 = vsel %vm2333, %v2147, %v3165
      %v3230 = vsel %vm2334, %v2150, %v3166
      %v3231 = vsel %vm2335, %v2152, %v3167
      %v3232 = vsel %vm2336, %v2155, %v3168
      %v3233 = vsel %vm2337, %v2157, %v3169
      %v3234 = vsel %vm2338, %v2160, %v3170
      %v3235 = vsel %vm2339, %v2162, %v3171
      %v3236 = vsel %vm2340, %v2165, %v3172
      %v3237 = vsel %vm2341, %v2167, %v3173
      %v3238 = vsel %vm2342, %v2170, %v3174
      %v3239 = vsel %vm2343, %v2172, %v3175
      %v3240 = vsel %vm2344, %v2175, %v3176
      %v3241 = vsel %vm2345, %v2177, %v3177
      %v3242 = vsel %vm2346, %v2180, %v3178
      %v3243 = vsel %vm2347, %v2182, %v3179
      %v3244 = vsel %vm2348, %v2185, %v3180
      %v3245 = vsel %vm2349, %v2187, %v3181
      %v3246 = vsel %vm2350, %v2190, %v3182
      %v3247 = vsel %vm2351, %v2192, %v3183
      %v3248 = vsel %vm2352, %v2195, %v3184
      %v3249 = vsel %vm2353, %v2197, %v3185
      %v3250 = vsel %vm2354, %v2200, %v3186
      %v3251 = vsel %vm2355, %v2202, %v3187
      %v3252 = vsel %vm2356, %v2205, %v3188
      %v3253 = vsel %vm2357, %v2207, %v3189
      %v3254 = vsel %vm2358, %v2210, %v3190
      %v3255 = vsel %vm2359, %v2212, %v3191
      %v3256 = vsel %vm2360, %v2215, %v3192
      %v3257 = vsel %vm2361, %v2217, %v3193
      %v3258 = vsel %vm2362, %v2220, %v3194
      %v3259 = vsel %vm2363, %v2222, %v3195
      %v3260 = vsel %vm2364, %v2225, %v3196
      %v3261 = vsel %vm2365, %v2227, %v3197
      %v3262 = vsel %vm2366, %v2230, %v3198
      %v3263 = vsel %vm2367, %v2232, %v3199
      %v3264 = vsel %vm2368, %v2235, %v3200
      %v3265 = vsel %vm2369, %v2237, %v3201
      %v3266 = vsel %vm2370, %v2240, %v3202
      %v3267 = vsel %vm2371, %v2242, %v3203
      %v3268 = vpack.c.bf16 %v3205, %v3204
      %v3269 = vpack.c.bf16 %v3207, %v3206
      %v3270 = vpack.c.bf16 %v3209, %v3208
      %v3271 = vpack.c.bf16 %v3211, %v3210
      %v3272 = vpack.c.bf16 %v3213, %v3212
      %v3273 = vpack.c.bf16 %v3215, %v3214
      %v3274 = vpack.c.bf16 %v3217, %v3216
      %v3275 = vpack.c.bf16 %v3219, %v3218
      %v3276 = vpack.c.bf16 %v3221, %v3220
      %v3277 = vpack.c.bf16 %v3223, %v3222
      %v3278 = vpack.c.bf16 %v3225, %v3224
      %v3279 = vpack.c.bf16 %v3227, %v3226
      %v3280 = vpack.c.bf16 %v3229, %v3228
      %v3281 = vpack.c.bf16 %v3231, %v3230
      %v3282 = vpack.c.bf16 %v3233, %v3232
      %v3283 = vpack.c.bf16 %v3235, %v3234
      %v3284 = vpack.c.bf16 %v3237, %v3236
      %v3285 = vpack.c.bf16 %v3239, %v3238
      %v3286 = vpack.c.bf16 %v3241, %v3240
      %v3287 = vpack.c.bf16 %v3243, %v3242
      %v3288 = vpack.c.bf16 %v3245, %v3244
      %v3289 = vpack.c.bf16 %v3247, %v3246
      %v3290 = vpack.c.bf16 %v3249, %v3248
      %v3291 = vpack.c.bf16 %v3251, %v3250
      %v3292 = vpack.c.bf16 %v3253, %v3252
      %v3293 = vpack.c.bf16 %v3255, %v3254
      %v3294 = vpack.c.bf16 %v3257, %v3256
      %v3295 = vpack.c.bf16 %v3259, %v3258
      %v3296 = vpack.c.bf16 %v3261, %v3260
      %v3297 = vpack.c.bf16 %v3263, %v3262
      %v3298 = vpack.c.bf16 %v3265, %v3264
      %v3299 = vpack.c.bf16 %v3267, %v3266
      %v3300 = vld [vmem:[%s5] sm:$0xf]
      %v3301 = vld [vmem:[%s5 + $0x4] sm:$0xf]
      %v3302 = vld [vmem:[%s5 + $0x8] sm:$0xf]
      %v3303 = vld [vmem:[%s5 + $0xc] sm:$0xf]
      %v3304 = vld [vmem:[%s5 + $0x10] sm:$0xf]
      %v3305 = vld [vmem:[%s5 + $0x14] sm:$0xf]
      %v3306 = vld [vmem:[%s5 + $0x18] sm:$0xf]
      %v3307 = vld [vmem:[%s5 + $0x1c] sm:$0xf]
      %v3308 = vld [vmem:[%s5 + $0x20] sm:$0xf]
      %v3309 = vld [vmem:[%s5 + $0x24] sm:$0xf]
      %v3310 = vld [vmem:[%s5 + $0x28] sm:$0xf]
      %v3311 = vld [vmem:[%s5 + $0x2c] sm:$0xf]
      %v3312 = vld [vmem:[%s5 + $0x30] sm:$0xf]
      %v3313 = vld [vmem:[%s5 + $0x34] sm:$0xf]
      %v3314 = vld [vmem:[%s5 + $0x38] sm:$0xf]
      %v3315 = vld [vmem:[%s5 + $0x3c] sm:$0xf]
      %v3316 = vld [vmem:[%s6] sm:$0xf]
      %v3317 = vld [vmem:[%s6 + $0x4] sm:$0xf]
      %v3318 = vld [vmem:[%s6 + $0x8] sm:$0xf]
      %v3319 = vld [vmem:[%s6 + $0xc] sm:$0xf]
      %v3320 = vld [vmem:[%s6 + $0x10] sm:$0xf]
      %v3321 = vld [vmem:[%s6 + $0x14] sm:$0xf]
      %v3322 = vld [vmem:[%s6 + $0x18] sm:$0xf]
      %v3323 = vld [vmem:[%s6 + $0x1c] sm:$0xf]
      %v3332 = vunpack.c.l.b16 %v3316
      %v3333 = vunpack.c.l.b16 %v3317
      %v3334 = vunpack.c.l.b16 %v3318
      %v3335 = vunpack.c.l.b16 %v3319
      %v3336 = vunpack.c.l.b16 %v3320
      %v3337 = vunpack.c.l.b16 %v3321
      %v3338 = vunpack.c.l.b16 %v3322
      %v3339 = vunpack.c.l.b16 %v3323
      %v3340 = vpack.c.b16 %v3333, %v3332
      %v3341 = vpack.c.b16 %v3335, %v3334
      %v3342 = vpack.c.b16 %v3337, %v3336
      %v3343 = vpack.c.b16 %v3339, %v3338
      %3348 = vmatpush.bf16.msra.mxu0 0
      %3349 = vmatpush.bf16.msra.mxu0 0
      %3350 = vmatpush.bf16.msra.mxu0 0
      %3351 = vmatpush.bf16.msra.mxu0 0
      %3352 = vmatpush.bf16.msra.mxu0 %v3343
      %3353 = vmatpush.bf16.msra.mxu0 %v3342
      %3354 = vmatpush.bf16.msra.mxu0 %v3341
      %3355 = vmatpush.bf16.msra.mxu0 %v3340
      %3356 = vmatmul.bf16.gmra.mxu0 %v680
      %v3357 = vpop.f32.mrf.mxu0
      %v3358 = vadd.f32 0.0, %v3357
      %v3359 = vpop.f32.mrf.mxu0
      %v3360 = vadd.f32 0.0, %v3359
      %3361 = vmatmul.bf16.gmra.mxu0 %v683
      %v3362 = vpop.f32.mrf.mxu0
      %v3363 = vadd.f32 0.0, %v3362
      %v3364 = vpop.f32.mrf.mxu0
      %v3365 = vadd.f32 0.0, %v3364
      %3366 = vmatmul.bf16.gmra.mxu0 %v686
      %v3367 = vpop.f32.mrf.mxu0
      %v3368 = vadd.f32 0.0, %v3367
      %v3369 = vpop.f32.mrf.mxu0
      %v3370 = vadd.f32 0.0, %v3369
      %3371 = vmatmul.bf16.gmra.mxu0 %v689
      %v3372 = vpop.f32.mrf.mxu0
      %v3373 = vadd.f32 0.0, %v3372
      %v3374 = vpop.f32.mrf.mxu0
      %v3375 = vadd.f32 0.0, %v3374
      %3376 = vmatmul.bf16.gmra.mxu0 %v692
      %v3377 = vpop.f32.mrf.mxu0
      %v3378 = vadd.f32 0.0, %v3377
      %v3379 = vpop.f32.mrf.mxu0
      %v3380 = vadd.f32 0.0, %v3379
      %3381 = vmatmul.bf16.gmra.mxu0 %v695
      %v3382 = vpop.f32.mrf.mxu0
      %v3383 = vadd.f32 0.0, %v3382
      %v3384 = vpop.f32.mrf.mxu0
      %v3385 = vadd.f32 0.0, %v3384
      %3386 = vmatmul.bf16.gmra.mxu0 %v698
      %v3387 = vpop.f32.mrf.mxu0
      %v3388 = vadd.f32 0.0, %v3387
      %v3389 = vpop.f32.mrf.mxu0
      %v3390 = vadd.f32 0.0, %v3389
      %3391 = vmatmul.bf16.gmra.mxu0 %v701
      %v3392 = vpop.f32.mrf.mxu0
      %v3393 = vadd.f32 0.0, %v3392
      %v3394 = vpop.f32.mrf.mxu0
      %v3395 = vadd.f32 0.0, %v3394
      %3396 = vmatmul.bf16.gmra.mxu0 %v704
      %v3397 = vpop.f32.mrf.mxu0
      %v3398 = vadd.f32 0.0, %v3397
      %v3399 = vpop.f32.mrf.mxu0
      %v3400 = vadd.f32 0.0, %v3399
      %3401 = vmatmul.bf16.gmra.mxu0 %v707
      %v3402 = vpop.f32.mrf.mxu0
      %v3403 = vadd.f32 0.0, %v3402
      %v3404 = vpop.f32.mrf.mxu0
      %v3405 = vadd.f32 0.0, %v3404
      %3406 = vmatmul.bf16.gmra.mxu0 %v710
      %v3407 = vpop.f32.mrf.mxu0
      %v3408 = vadd.f32 0.0, %v3407
      %v3409 = vpop.f32.mrf.mxu0
      %v3410 = vadd.f32 0.0, %v3409
      %3411 = vmatmul.bf16.gmra.mxu0 %v713
      %v3412 = vpop.f32.mrf.mxu0
      %v3413 = vadd.f32 0.0, %v3412
      %v3414 = vpop.f32.mrf.mxu0
      %v3415 = vadd.f32 0.0, %v3414
      %3416 = vmatmul.bf16.gmra.mxu0 %v716
      %v3417 = vpop.f32.mrf.mxu0
      %v3418 = vadd.f32 0.0, %v3417
      %v3419 = vpop.f32.mrf.mxu0
      %v3420 = vadd.f32 0.0, %v3419
      %3421 = vmatmul.bf16.gmra.mxu0 %v719
      %v3422 = vpop.f32.mrf.mxu0
      %v3423 = vadd.f32 0.0, %v3422
      %v3424 = vpop.f32.mrf.mxu0
      %v3425 = vadd.f32 0.0, %v3424
      %3426 = vmatmul.bf16.gmra.mxu0 %v722
      %v3427 = vpop.f32.mrf.mxu0
      %v3428 = vadd.f32 0.0, %v3427
      %v3429 = vpop.f32.mrf.mxu0
      %v3430 = vadd.f32 0.0, %v3429
      %3431 = vmatmul.bf16.gmra.mxu0 %v725
      %v3432 = vpop.f32.mrf.mxu0
      %v3433 = vadd.f32 0.0, %v3432
      %v3434 = vpop.f32.mrf.mxu0
      %v3435 = vadd.f32 0.0, %v3434
      %3436 = vmatmul.bf16.gmra.mxu0 %v728
      %v3437 = vpop.f32.mrf.mxu0
      %v3438 = vadd.f32 0.0, %v3437
      %v3439 = vpop.f32.mrf.mxu0
      %v3440 = vadd.f32 0.0, %v3439
      %3441 = vmatmul.bf16.gmra.mxu0 %v731
      %v3442 = vpop.f32.mrf.mxu0
      %v3443 = vadd.f32 0.0, %v3442
      %v3444 = vpop.f32.mrf.mxu0
      %v3445 = vadd.f32 0.0, %v3444
      %3446 = vmatmul.bf16.gmra.mxu0 %v734
      %v3447 = vpop.f32.mrf.mxu0
      %v3448 = vadd.f32 0.0, %v3447
      %v3449 = vpop.f32.mrf.mxu0
      %v3450 = vadd.f32 0.0, %v3449
      %3451 = vmatmul.bf16.gmra.mxu0 %v737
      %v3452 = vpop.f32.mrf.mxu0
      %v3453 = vadd.f32 0.0, %v3452
      %v3454 = vpop.f32.mrf.mxu0
      %v3455 = vadd.f32 0.0, %v3454
      %3456 = vmatmul.bf16.gmra.mxu0 %v740
      %v3457 = vpop.f32.mrf.mxu0
      %v3458 = vadd.f32 0.0, %v3457
      %v3459 = vpop.f32.mrf.mxu0
      %v3460 = vadd.f32 0.0, %v3459
      %3461 = vmatmul.bf16.gmra.mxu0 %v743
      %v3462 = vpop.f32.mrf.mxu0
      %v3463 = vadd.f32 0.0, %v3462
      %v3464 = vpop.f32.mrf.mxu0
      %v3465 = vadd.f32 0.0, %v3464
      %3466 = vmatmul.bf16.gmra.mxu0 %v746
      %v3467 = vpop.f32.mrf.mxu0
      %v3468 = vadd.f32 0.0, %v3467
      %v3469 = vpop.f32.mrf.mxu0
      %v3470 = vadd.f32 0.0, %v3469
      %3471 = vmatmul.bf16.gmra.mxu0 %v749
      %v3472 = vpop.f32.mrf.mxu0
      %v3473 = vadd.f32 0.0, %v3472
      %v3474 = vpop.f32.mrf.mxu0
      %v3475 = vadd.f32 0.0, %v3474
      %3476 = vmatmul.bf16.gmra.mxu0 %v752
      %v3477 = vpop.f32.mrf.mxu0
      %v3478 = vadd.f32 0.0, %v3477
      %v3479 = vpop.f32.mrf.mxu0
      %v3480 = vadd.f32 0.0, %v3479
      %3481 = vmatmul.bf16.gmra.mxu0 %v755
      %v3482 = vpop.f32.mrf.mxu0
      %v3483 = vadd.f32 0.0, %v3482
      %v3484 = vpop.f32.mrf.mxu0
      %v3485 = vadd.f32 0.0, %v3484
      %3486 = vmatmul.bf16.gmra.mxu0 %v758
      %v3487 = vpop.f32.mrf.mxu0
      %v3488 = vadd.f32 0.0, %v3487
      %v3489 = vpop.f32.mrf.mxu0
      %v3490 = vadd.f32 0.0, %v3489
      %3491 = vmatmul.bf16.gmra.mxu0 %v761
      %v3492 = vpop.f32.mrf.mxu0
      %v3493 = vadd.f32 0.0, %v3492
      %v3494 = vpop.f32.mrf.mxu0
      %v3495 = vadd.f32 0.0, %v3494
      %3496 = vmatmul.bf16.gmra.mxu0 %v764
      %v3497 = vpop.f32.mrf.mxu0
      %v3498 = vadd.f32 0.0, %v3497
      %v3499 = vpop.f32.mrf.mxu0
      %v3500 = vadd.f32 0.0, %v3499
      %3501 = vmatmul.bf16.gmra.mxu0 %v767
      %v3502 = vpop.f32.mrf.mxu0
      %v3503 = vadd.f32 0.0, %v3502
      %v3504 = vpop.f32.mrf.mxu0
      %v3505 = vadd.f32 0.0, %v3504
      %3506 = vmatmul.bf16.gmra.mxu0 %v770
      %v3507 = vpop.f32.mrf.mxu0
      %v3508 = vadd.f32 0.0, %v3507
      %v3509 = vpop.f32.mrf.mxu0
      %v3510 = vadd.f32 0.0, %v3509
      %3511 = vmatmul.bf16.gmra.mxu0 %v773
      %v3512 = vpop.f32.mrf.mxu0
      %v3513 = vadd.f32 0.0, %v3512
      %v3514 = vpop.f32.mrf.mxu0
      %v3515 = vadd.f32 0.0, %v3514
      %3516 = vdwg.mxu0
      %v3533 = vunpack.c.l.b16 %v3300
      %v3534 = vunpack.c.l.b16 %v3301
      %v3535 = vunpack.c.l.b16 %v3302
      %v3536 = vunpack.c.l.b16 %v3303
      %v3537 = vunpack.c.l.b16 %v3304
      %v3538 = vunpack.c.l.b16 %v3305
      %v3539 = vunpack.c.l.b16 %v3306
      %v3540 = vunpack.c.l.b16 %v3307
      %v3541 = vunpack.c.l.b16 %v3308
      %v3542 = vunpack.c.l.b16 %v3309
      %v3543 = vunpack.c.l.b16 %v3310
      %v3544 = vunpack.c.l.b16 %v3311
      %v3545 = vunpack.c.l.b16 %v3312
      %v3546 = vunpack.c.l.b16 %v3313
      %v3547 = vunpack.c.l.b16 %v3314
      %v3548 = vunpack.c.l.b16 %v3315
      %v3549 = vpack.c.b16 %v3534, %v3533
      %v3550 = vpack.c.b16 %v3536, %v3535
      %v3551 = vpack.c.b16 %v3538, %v3537
      %v3552 = vpack.c.b16 %v3540, %v3539
      %v3553 = vpack.c.b16 %v3542, %v3541
      %v3554 = vpack.c.b16 %v3544, %v3543
      %v3555 = vpack.c.b16 %v3546, %v3545
      %v3556 = vpack.c.b16 %v3548, %v3547
      %3565 = vmatpush.bf16.msra.mxu0 %v3556
      %3566 = vmatpush.bf16.msra.mxu0 %v3555
      %3567 = vmatpush.bf16.msra.mxu0 %v3554
      %3568 = vmatpush.bf16.msra.mxu0 %v3553
      %3569 = vmatpush.bf16.msra.mxu0 %v3552
      %3570 = vmatpush.bf16.msra.mxu0 %v3551
      %3571 = vmatpush.bf16.msra.mxu0 %v3550
      %3572 = vmatpush.bf16.msra.mxu0 %v3549
      %3573 = vmatmul.bf16.gmra.mxu0 %v3268
      %v3574 = vpop.f32.mrf.mxu0
      %v3575 = vadd.f32 %v3358, %v3574
      %v3576 = vpop.f32.mrf.mxu0
      %v3577 = vadd.f32 %v3360, %v3576
      %3578 = vmatmul.bf16.gmra.mxu0 %v3269
      %v3579 = vpop.f32.mrf.mxu0
      %v3580 = vadd.f32 %v3363, %v3579
      %v3581 = vpop.f32.mrf.mxu0
      %v3582 = vadd.f32 %v3365, %v3581
      %3583 = vmatmul.bf16.gmra.mxu0 %v3270
      %v3584 = vpop.f32.mrf.mxu0
      %v3585 = vadd.f32 %v3368, %v3584
      %v3586 = vpop.f32.mrf.mxu0
      %v3587 = vadd.f32 %v3370, %v3586
      %3588 = vmatmul.bf16.gmra.mxu0 %v3271
      %v3589 = vpop.f32.mrf.mxu0
      %v3590 = vadd.f32 %v3373, %v3589
      %v3591 = vpop.f32.mrf.mxu0
      %v3592 = vadd.f32 %v3375, %v3591
      %3593 = vmatmul.bf16.gmra.mxu0 %v3272
      %v3594 = vpop.f32.mrf.mxu0
      %v3595 = vadd.f32 %v3378, %v3594
      %v3596 = vpop.f32.mrf.mxu0
      %v3597 = vadd.f32 %v3380, %v3596
      %3598 = vmatmul.bf16.gmra.mxu0 %v3273
      %v3599 = vpop.f32.mrf.mxu0
      %v3600 = vadd.f32 %v3383, %v3599
      %v3601 = vpop.f32.mrf.mxu0
      %v3602 = vadd.f32 %v3385, %v3601
      %3603 = vmatmul.bf16.gmra.mxu0 %v3274
      %v3604 = vpop.f32.mrf.mxu0
      %v3605 = vadd.f32 %v3388, %v3604
      %v3606 = vpop.f32.mrf.mxu0
      %v3607 = vadd.f32 %v3390, %v3606
      %3608 = vmatmul.bf16.gmra.mxu0 %v3275
      %v3609 = vpop.f32.mrf.mxu0
      %v3610 = vadd.f32 %v3393, %v3609
      %v3611 = vpop.f32.mrf.mxu0
      %v3612 = vadd.f32 %v3395, %v3611
      %3613 = vmatmul.bf16.gmra.mxu0 %v3276
      %v3614 = vpop.f32.mrf.mxu0
      %v3615 = vadd.f32 %v3398, %v3614
      %v3616 = vpop.f32.mrf.mxu0
      %v3617 = vadd.f32 %v3400, %v3616
      %3618 = vmatmul.bf16.gmra.mxu0 %v3277
      %v3619 = vpop.f32.mrf.mxu0
      %v3620 = vadd.f32 %v3403, %v3619
      %v3621 = vpop.f32.mrf.mxu0
      %v3622 = vadd.f32 %v3405, %v3621
      %3623 = vmatmul.bf16.gmra.mxu0 %v3278
      %v3624 = vpop.f32.mrf.mxu0
      %v3625 = vadd.f32 %v3408, %v3624
      %v3626 = vpop.f32.mrf.mxu0
      %v3627 = vadd.f32 %v3410, %v3626
      %3628 = vmatmul.bf16.gmra.mxu0 %v3279
      %v3629 = vpop.f32.mrf.mxu0
      %v3630 = vadd.f32 %v3413, %v3629
      %v3631 = vpop.f32.mrf.mxu0
      %v3632 = vadd.f32 %v3415, %v3631
      %3633 = vmatmul.bf16.gmra.mxu0 %v3280
      %v3634 = vpop.f32.mrf.mxu0
      %v3635 = vadd.f32 %v3418, %v3634
      %v3636 = vpop.f32.mrf.mxu0
      %v3637 = vadd.f32 %v3420, %v3636
      %3638 = vmatmul.bf16.gmra.mxu0 %v3281
      %v3639 = vpop.f32.mrf.mxu0
      %v3640 = vadd.f32 %v3423, %v3639
      %v3641 = vpop.f32.mrf.mxu0
      %v3642 = vadd.f32 %v3425, %v3641
      %3643 = vmatmul.bf16.gmra.mxu0 %v3282
      %v3644 = vpop.f32.mrf.mxu0
      %v3645 = vadd.f32 %v3428, %v3644
      %v3646 = vpop.f32.mrf.mxu0
      %v3647 = vadd.f32 %v3430, %v3646
      %3648 = vmatmul.bf16.gmra.mxu0 %v3283
      %v3649 = vpop.f32.mrf.mxu0
      %v3650 = vadd.f32 %v3433, %v3649
      %v3651 = vpop.f32.mrf.mxu0
      %v3652 = vadd.f32 %v3435, %v3651
      %3653 = vmatmul.bf16.gmra.mxu0 %v3284
      %v3654 = vpop.f32.mrf.mxu0
      %v3655 = vadd.f32 %v3438, %v3654
      %v3656 = vpop.f32.mrf.mxu0
      %v3657 = vadd.f32 %v3440, %v3656
      %3658 = vmatmul.bf16.gmra.mxu0 %v3285
      %v3659 = vpop.f32.mrf.mxu0
      %v3660 = vadd.f32 %v3443, %v3659
      %v3661 = vpop.f32.mrf.mxu0
      %v3662 = vadd.f32 %v3445, %v3661
      %3663 = vmatmul.bf16.gmra.mxu0 %v3286
      %v3664 = vpop.f32.mrf.mxu0
      %v3665 = vadd.f32 %v3448, %v3664
      %v3666 = vpop.f32.mrf.mxu0
      %v3667 = vadd.f32 %v3450, %v3666
      %3668 = vmatmul.bf16.gmra.mxu0 %v3287
      %v3669 = vpop.f32.mrf.mxu0
      %v3670 = vadd.f32 %v3453, %v3669
      %v3671 = vpop.f32.mrf.mxu0
      %v3672 = vadd.f32 %v3455, %v3671
      %3673 = vmatmul.bf16.gmra.mxu0 %v3288
      %v3674 = vpop.f32.mrf.mxu0
      %v3675 = vadd.f32 %v3458, %v3674
      %v3676 = vpop.f32.mrf.mxu0
      %v3677 = vadd.f32 %v3460, %v3676
      %3678 = vmatmul.bf16.gmra.mxu0 %v3289
      %v3679 = vpop.f32.mrf.mxu0
      %v3680 = vadd.f32 %v3463, %v3679
      %v3681 = vpop.f32.mrf.mxu0
      %v3682 = vadd.f32 %v3465, %v3681
      %3683 = vmatmul.bf16.gmra.mxu0 %v3290
      %v3684 = vpop.f32.mrf.mxu0
      %v3685 = vadd.f32 %v3468, %v3684
      %v3686 = vpop.f32.mrf.mxu0
      %v3687 = vadd.f32 %v3470, %v3686
      %3688 = vmatmul.bf16.gmra.mxu0 %v3291
      %v3689 = vpop.f32.mrf.mxu0
      %v3690 = vadd.f32 %v3473, %v3689
      %v3691 = vpop.f32.mrf.mxu0
      %v3692 = vadd.f32 %v3475, %v3691
      %3693 = vmatmul.bf16.gmra.mxu0 %v3292
      %v3694 = vpop.f32.mrf.mxu0
      %v3695 = vadd.f32 %v3478, %v3694
      %v3696 = vpop.f32.mrf.mxu0
      %v3697 = vadd.f32 %v3480, %v3696
      %3698 = vmatmul.bf16.gmra.mxu0 %v3293
      %v3699 = vpop.f32.mrf.mxu0
      %v3700 = vadd.f32 %v3483, %v3699
      %v3701 = vpop.f32.mrf.mxu0
      %v3702 = vadd.f32 %v3485, %v3701
      %3703 = vmatmul.bf16.gmra.mxu0 %v3294
      %v3704 = vpop.f32.mrf.mxu0
      %v3705 = vadd.f32 %v3488, %v3704
      %v3706 = vpop.f32.mrf.mxu0
      %v3707 = vadd.f32 %v3490, %v3706
      %3708 = vmatmul.bf16.gmra.mxu0 %v3295
      %v3709 = vpop.f32.mrf.mxu0
      %v3710 = vadd.f32 %v3493, %v3709
      %v3711 = vpop.f32.mrf.mxu0
      %v3712 = vadd.f32 %v3495, %v3711
      %3713 = vmatmul.bf16.gmra.mxu0 %v3296
      %v3714 = vpop.f32.mrf.mxu0
      %v3715 = vadd.f32 %v3498, %v3714
      %v3716 = vpop.f32.mrf.mxu0
      %v3717 = vadd.f32 %v3500, %v3716
      %3718 = vmatmul.bf16.gmra.mxu0 %v3297
      %v3719 = vpop.f32.mrf.mxu0
      %v3720 = vadd.f32 %v3503, %v3719
      %v3721 = vpop.f32.mrf.mxu0
      %v3722 = vadd.f32 %v3505, %v3721
      %3723 = vmatmul.bf16.gmra.mxu0 %v3298
      %v3724 = vpop.f32.mrf.mxu0
      %v3725 = vadd.f32 %v3508, %v3724
      %v3726 = vpop.f32.mrf.mxu0
      %v3727 = vadd.f32 %v3510, %v3726
      %3728 = vmatmul.bf16.gmra.mxu0 %v3299
      %v3729 = vpop.f32.mrf.mxu0
      %v3730 = vadd.f32 %v3513, %v3729
      %v3731 = vpop.f32.mrf.mxu0
      %v3732 = vadd.f32 %v3515, %v3731
      %3733 = vdwg.mxu0
      %v3734 = vmul.f32 %v3575, 0.70710677
      %v3735 = vmul.f32 %v3577, 0.70710677
      %v3736 = vmul.f32 %v3580, 0.70710677
      %v3737 = vmul.f32 %v3582, 0.70710677
      %v3738 = vmul.f32 %v3585, 0.70710677
      %v3739 = vmul.f32 %v3587, 0.70710677
      %v3740 = vmul.f32 %v3590, 0.70710677
      %v3741 = vmul.f32 %v3592, 0.70710677
      %v3742 = vmul.f32 %v3595, 0.70710677
      %v3743 = vmul.f32 %v3597, 0.70710677
      %v3744 = vmul.f32 %v3600, 0.70710677
      %v3745 = vmul.f32 %v3602, 0.70710677
      %v3746 = vmul.f32 %v3605, 0.70710677
      %v3747 = vmul.f32 %v3607, 0.70710677
      %v3748 = vmul.f32 %v3610, 0.70710677
      %v3749 = vmul.f32 %v3612, 0.70710677
      %v3750 = vmul.f32 %v3615, 0.70710677
      %v3751 = vmul.f32 %v3617, 0.70710677
      %v3752 = vmul.f32 %v3620, 0.70710677
      %v3753 = vmul.f32 %v3622, 0.70710677
      %v3754 = vmul.f32 %v3625, 0.70710677
      %v3755 = vmul.f32 %v3627, 0.70710677
      %v3756 = vmul.f32 %v3630, 0.70710677
      %v3757 = vmul.f32 %v3632, 0.70710677
      %v3758 = vmul.f32 %v3635, 0.70710677
      %v3759 = vmul.f32 %v3637, 0.70710677
      %v3760 = vmul.f32 %v3640, 0.70710677
      %v3761 = vmul.f32 %v3642, 0.70710677
      %v3762 = vmul.f32 %v3645, 0.70710677
      %v3763 = vmul.f32 %v3647, 0.70710677
      %v3764 = vmul.f32 %v3650, 0.70710677
      %v3765 = vmul.f32 %v3652, 0.70710677
      %v3766 = vmul.f32 %v3655, 0.70710677
      %v3767 = vmul.f32 %v3657, 0.70710677
      %v3768 = vmul.f32 %v3660, 0.70710677
      %v3769 = vmul.f32 %v3662, 0.70710677
      %v3770 = vmul.f32 %v3665, 0.70710677
      %v3771 = vmul.f32 %v3667, 0.70710677
      %v3772 = vmul.f32 %v3670, 0.70710677
      %v3773 = vmul.f32 %v3672, 0.70710677
      %v3774 = vmul.f32 %v3675, 0.70710677
      %v3775 = vmul.f32 %v3677, 0.70710677
      %v3776 = vmul.f32 %v3680, 0.70710677
      %v3777 = vmul.f32 %v3682, 0.70710677
      %v3778 = vmul.f32 %v3685, 0.70710677
      %v3779 = vmul.f32 %v3687, 0.70710677
      %v3780 = vmul.f32 %v3690, 0.70710677
      %v3781 = vmul.f32 %v3692, 0.70710677
      %v3782 = vmul.f32 %v3695, 0.70710677
      %v3783 = vmul.f32 %v3697, 0.70710677
      %v3784 = vmul.f32 %v3700, 0.70710677
      %v3785 = vmul.f32 %v3702, 0.70710677
      %v3786 = vmul.f32 %v3705, 0.70710677
      %v3787 = vmul.f32 %v3707, 0.70710677
      %v3788 = vmul.f32 %v3710, 0.70710677
      %v3789 = vmul.f32 %v3712, 0.70710677
      %v3790 = vmul.f32 %v3715, 0.70710677
      %v3791 = vmul.f32 %v3717, 0.70710677
      %v3792 = vmul.f32 %v3720, 0.70710677
      %v3793 = vmul.f32 %v3722, 0.70710677
      %v3794 = vmul.f32 %v3725, 0.70710677
      %v3795 = vmul.f32 %v3727, 0.70710677
      %v3796 = vmul.f32 %v3730, 0.70710677
      %v3797 = vmul.f32 %v3732, 0.70710677
      %v3798 = vld [vmem:[%s7] sm:$0x1]
      %v3800 = vperm.slane %v3798, 0
      %v3802 = vadd.f32 %v3734, %v3800
      %v3803 = vadd.f32 %v3735, %v3800
      %v3804 = vadd.f32 %v3736, %v3800
      %v3805 = vadd.f32 %v3737, %v3800
      %v3806 = vadd.f32 %v3738, %v3800
      %v3807 = vadd.f32 %v3739, %v3800
      %v3808 = vadd.f32 %v3740, %v3800
      %v3809 = vadd.f32 %v3741, %v3800
      %v3810 = vadd.f32 %v3742, %v3800
      %v3811 = vadd.f32 %v3743, %v3800
      %v3812 = vadd.f32 %v3744, %v3800
      %v3813 = vadd.f32 %v3745, %v3800
      %v3814 = vadd.f32 %v3746, %v3800
      %v3815 = vadd.f32 %v3747, %v3800
      %v3816 = vadd.f32 %v3748, %v3800
      %v3817 = vadd.f32 %v3749, %v3800
      %v3818 = vadd.f32 %v3750, %v3800
      %v3819 = vadd.f32 %v3751, %v3800
      %v3820 = vadd.f32 %v3752, %v3800
      %v3821 = vadd.f32 %v3753, %v3800
      %v3822 = vadd.f32 %v3754, %v3800
      %v3823 = vadd.f32 %v3755, %v3800
      %v3824 = vadd.f32 %v3756, %v3800
      %v3825 = vadd.f32 %v3757, %v3800
      %v3826 = vadd.f32 %v3758, %v3800
      %v3827 = vadd.f32 %v3759, %v3800
      %v3828 = vadd.f32 %v3760, %v3800
      %v3829 = vadd.f32 %v3761, %v3800
      %v3830 = vadd.f32 %v3762, %v3800
      %v3831 = vadd.f32 %v3763, %v3800
      %v3832 = vadd.f32 %v3764, %v3800
      %v3833 = vadd.f32 %v3765, %v3800
      %v3834 = vadd.f32 %v3766, %v3800
      %v3835 = vadd.f32 %v3767, %v3800
      %v3836 = vadd.f32 %v3768, %v3800
      %v3837 = vadd.f32 %v3769, %v3800
      %v3838 = vadd.f32 %v3770, %v3800
      %v3839 = vadd.f32 %v3771, %v3800
      %v3840 = vadd.f32 %v3772, %v3800
      %v3841 = vadd.f32 %v3773, %v3800
      %v3842 = vadd.f32 %v3774, %v3800
      %v3843 = vadd.f32 %v3775, %v3800
      %v3844 = vadd.f32 %v3776, %v3800
      %v3845 = vadd.f32 %v3777, %v3800
      %v3846 = vadd.f32 %v3778, %v3800
      %v3847 = vadd.f32 %v3779, %v3800
      %v3848 = vadd.f32 %v3780, %v3800
      %v3849 = vadd.f32 %v3781, %v3800
      %v3850 = vadd.f32 %v3782, %v3800
      %v3851 = vadd.f32 %v3783, %v3800
      %v3852 = vadd.f32 %v3784, %v3800
      %v3853 = vadd.f32 %v3785, %v3800
      %v3854 = vadd.f32 %v3786, %v3800
      %v3855 = vadd.f32 %v3787, %v3800
      %v3856 = vadd.f32 %v3788, %v3800
      %v3857 = vadd.f32 %v3789, %v3800
      %v3858 = vadd.f32 %v3790, %v3800
      %v3859 = vadd.f32 %v3791, %v3800
      %v3860 = vadd.f32 %v3792, %v3800
      %v3861 = vadd.f32 %v3793, %v3800
      %v3862 = vadd.f32 %v3794, %v3800
      %v3863 = vadd.f32 %v3795, %v3800
      %v3864 = vadd.f32 %v3796, %v3800
      %v3865 = vadd.f32 %v3797, %v3800
      %v3866 = vmul.f32 %v3802, 100.0
      %v3867 = vmul.f32 %v3803, 100.0
      %v3868 = vmul.f32 %v3804, 100.0
      %v3869 = vmul.f32 %v3805, 100.0
      %v3870 = vmul.f32 %v3806, 100.0
      %v3871 = vmul.f32 %v3807, 100.0
      %v3872 = vmul.f32 %v3808, 100.0
      %v3873 = vmul.f32 %v3809, 100.0
      %v3874 = vmul.f32 %v3810, 100.0
      %v3875 = vmul.f32 %v3811, 100.0
      %v3876 = vmul.f32 %v3812, 100.0
      %v3877 = vmul.f32 %v3813, 100.0
      %v3878 = vmul.f32 %v3814, 100.0
      %v3879 = vmul.f32 %v3815, 100.0
      %v3880 = vmul.f32 %v3816, 100.0
      %v3881 = vmul.f32 %v3817, 100.0
      %v3882 = vmul.f32 %v3818, 100.0
      %v3883 = vmul.f32 %v3819, 100.0
      %v3884 = vmul.f32 %v3820, 100.0
      %v3885 = vmul.f32 %v3821, 100.0
      %v3886 = vmul.f32 %v3822, 100.0
      %v3887 = vmul.f32 %v3823, 100.0
      %v3888 = vmul.f32 %v3824, 100.0
      %v3889 = vmul.f32 %v3825, 100.0
      %v3890 = vmul.f32 %v3826, 100.0
      %v3891 = vmul.f32 %v3827, 100.0
      %v3892 = vmul.f32 %v3828, 100.0
      %v3893 = vmul.f32 %v3829, 100.0
      %v3894 = vmul.f32 %v3830, 100.0
      %v3895 = vmul.f32 %v3831, 100.0
      %v3896 = vmul.f32 %v3832, 100.0
      %v3897 = vmul.f32 %v3833, 100.0
      %v3898 = vmul.f32 %v3834, 100.0
      %v3899 = vmul.f32 %v3835, 100.0
      %v3900 = vmul.f32 %v3836, 100.0
      %v3901 = vmul.f32 %v3837, 100.0
      %v3902 = vmul.f32 %v3838, 100.0
      %v3903 = vmul.f32 %v3839, 100.0
      %v3904 = vmul.f32 %v3840, 100.0
      %v3905 = vmul.f32 %v3841, 100.0
      %v3906 = vmul.f32 %v3842, 100.0
      %v3907 = vmul.f32 %v3843, 100.0
      %v3908 = vmul.f32 %v3844, 100.0
      %v3909 = vmul.f32 %v3845, 100.0
      %v3910 = vmul.f32 %v3846, 100.0
      %v3911 = vmul.f32 %v3847, 100.0
      %v3912 = vmul.f32 %v3848, 100.0
      %v3913 = vmul.f32 %v3849, 100.0
      %v3914 = vmul.f32 %v3850, 100.0
      %v3915 = vmul.f32 %v3851, 100.0
      %v3916 = vmul.f32 %v3852, 100.0
      %v3917 = vmul.f32 %v3853, 100.0
      %v3918 = vmul.f32 %v3854, 100.0
      %v3919 = vmul.f32 %v3855, 100.0
      %v3920 = vmul.f32 %v3856, 100.0
      %v3921 = vmul.f32 %v3857, 100.0
      %v3922 = vmul.f32 %v3858, 100.0
      %v3923 = vmul.f32 %v3859, 100.0
      %v3924 = vmul.f32 %v3860, 100.0
      %v3925 = vmul.f32 %v3861, 100.0
      %v3926 = vmul.f32 %v3862, 100.0
      %v3927 = vmul.f32 %v3863, 100.0
      %v3928 = vmul.f32 %v3864, 100.0
      %v3929 = vmul.f32 %v3865, 100.0
      %vm3930 = vcmp.gt.f32.partialorder %v3866, 20.0
      %vm3931 = vcmp.gt.f32.partialorder %v3867, 20.0
      %vm3932 = vcmp.gt.f32.partialorder %v3868, 20.0
      %vm3933 = vcmp.gt.f32.partialorder %v3869, 20.0
      %vm3934 = vcmp.gt.f32.partialorder %v3870, 20.0
      %vm3935 = vcmp.gt.f32.partialorder %v3871, 20.0
      %vm3936 = vcmp.gt.f32.partialorder %v3872, 20.0
      %vm3937 = vcmp.gt.f32.partialorder %v3873, 20.0
      %vm3938 = vcmp.gt.f32.partialorder %v3874, 20.0
      %vm3939 = vcmp.gt.f32.partialorder %v3875, 20.0
      %vm3940 = vcmp.gt.f32.partialorder %v3876, 20.0
      %vm3941 = vcmp.gt.f32.partialorder %v3877, 20.0
      %vm3942 = vcmp.gt.f32.partialorder %v3878, 20.0
      %vm3943 = vcmp.gt.f32.partialorder %v3879, 20.0
      %vm3944 = vcmp.gt.f32.partialorder %v3880, 20.0
      %vm3945 = vcmp.gt.f32.partialorder %v3881, 20.0
      %vm3946 = vcmp.gt.f32.partialorder %v3882, 20.0
      %vm3947 = vcmp.gt.f32.partialorder %v3883, 20.0
      %vm3948 = vcmp.gt.f32.partialorder %v3884, 20.0
      %vm3949 = vcmp.gt.f32.partialorder %v3885, 20.0
      %vm3950 = vcmp.gt.f32.partialorder %v3886, 20.0
      %vm3951 = vcmp.gt.f32.partialorder %v3887, 20.0
      %vm3952 = vcmp.gt.f32.partialorder %v3888, 20.0
      %vm3953 = vcmp.gt.f32.partialorder %v3889, 20.0
      %vm3954 = vcmp.gt.f32.partialorder %v3890, 20.0
      %vm3955 = vcmp.gt.f32.partialorder %v3891, 20.0
      %vm3956 = vcmp.gt.f32.partialorder %v3892, 20.0
      %vm3957 = vcmp.gt.f32.partialorder %v3893, 20.0
      %vm3958 = vcmp.gt.f32.partialorder %v3894, 20.0
      %vm3959 = vcmp.gt.f32.partialorder %v3895, 20.0
      %vm3960 = vcmp.gt.f32.partialorder %v3896, 20.0
      %vm3961 = vcmp.gt.f32.partialorder %v3897, 20.0
      %vm3962 = vcmp.gt.f32.partialorder %v3898, 20.0
      %vm3963 = vcmp.gt.f32.partialorder %v3899, 20.0
      %vm3964 = vcmp.gt.f32.partialorder %v3900, 20.0
      %vm3965 = vcmp.gt.f32.partialorder %v3901, 20.0
      %vm3966 = vcmp.gt.f32.partialorder %v3902, 20.0
      %vm3967 = vcmp.gt.f32.partialorder %v3903, 20.0
      %vm3968 = vcmp.gt.f32.partialorder %v3904, 20.0
      %vm3969 = vcmp.gt.f32.partialorder %v3905, 20.0
      %vm3970 = vcmp.gt.f32.partialorder %v3906, 20.0
      %vm3971 = vcmp.gt.f32.partialorder %v3907, 20.0
      %vm3972 = vcmp.gt.f32.partialorder %v3908, 20.0
      %vm3973 = vcmp.gt.f32.partialorder %v3909, 20.0
      %vm3974 = vcmp.gt.f32.partialorder %v3910, 20.0
      %vm3975 = vcmp.gt.f32.partialorder %v3911, 20.0
      %vm3976 = vcmp.gt.f32.partialorder %v3912, 20.0
      %vm3977 = vcmp.gt.f32.partialorder %v3913, 20.0
      %vm3978 = vcmp.gt.f32.partialorder %v3914, 20.0
      %vm3979 = vcmp.gt.f32.partialorder %v3915, 20.0
      %vm3980 = vcmp.gt.f32.partialorder %v3916, 20.0
      %vm3981 = vcmp.gt.f32.partialorder %v3917, 20.0
      %vm3982 = vcmp.gt.f32.partialorder %v3918, 20.0
      %vm3983 = vcmp.gt.f32.partialorder %v3919, 20.0
      %vm3984 = vcmp.gt.f32.partialorder %v3920, 20.0
      %vm3985 = vcmp.gt.f32.partialorder %v3921, 20.0
      %vm3986 = vcmp.gt.f32.partialorder %v3922, 20.0
      %vm3987 = vcmp.gt.f32.partialorder %v3923, 20.0
      %vm3988 = vcmp.gt.f32.partialorder %v3924, 20.0
      %vm3989 = vcmp.gt.f32.partialorder %v3925, 20.0
      %vm3990 = vcmp.gt.f32.partialorder %v3926, 20.0
      %vm3991 = vcmp.gt.f32.partialorder %v3927, 20.0
      %vm3992 = vcmp.gt.f32.partialorder %v3928, 20.0
      %vm3993 = vcmp.gt.f32.partialorder %v3929, 20.0
      %v3994 = vmin.f32 %v3866, 20.0
      %v3995 = vmin.f32 %v3867, 20.0
      %v3996 = vmin.f32 %v3868, 20.0
      %v3997 = vmin.f32 %v3869, 20.0
      %v3998 = vmin.f32 %v3870, 20.0
      %v3999 = vmin.f32 %v3871, 20.0
      %v4000 = vmin.f32 %v3872, 20.0
      %v4001 = vmin.f32 %v3873, 20.0
      %v4002 = vmin.f32 %v3874, 20.0
      %v4003 = vmin.f32 %v3875, 20.0
      %v4004 = vmin.f32 %v3876, 20.0
      %v4005 = vmin.f32 %v3877, 20.0
      %v4006 = vmin.f32 %v3878, 20.0
      %v4007 = vmin.f32 %v3879, 20.0
      %v4008 = vmin.f32 %v3880, 20.0
      %v4009 = vmin.f32 %v3881, 20.0
      %v4010 = vmin.f32 %v3882, 20.0
      %v4011 = vmin.f32 %v3883, 20.0
      %v4012 = vmin.f32 %v3884, 20.0
      %v4013 = vmin.f32 %v3885, 20.0
      %v4014 = vmin.f32 %v3886, 20.0
      %v4015 = vmin.f32 %v3887, 20.0
      %v4016 = vmin.f32 %v3888, 20.0
      %v4017 = vmin.f32 %v3889, 20.0
      %v4018 = vmin.f32 %v3890, 20.0
      %v4019 = vmin.f32 %v3891, 20.0
      %v4020 = vmin.f32 %v3892, 20.0
      %v4021 = vmin.f32 %v3893, 20.0
      %v4022 = vmin.f32 %v3894, 20.0
      %v4023 = vmin.f32 %v3895, 20.0
      %v4024 = vmin.f32 %v3896, 20.0
      %v4025 = vmin.f32 %v3897, 20.0
      %v4026 = vmin.f32 %v3898, 20.0
      %v4027 = vmin.f32 %v3899, 20.0
      %v4028 = vmin.f32 %v3900, 20.0
      %v4029 = vmin.f32 %v3901, 20.0
      %v4030 = vmin.f32 %v3902, 20.0
      %v4031 = vmin.f32 %v3903, 20.0
      %v4032 = vmin.f32 %v3904, 20.0
      %v4033 = vmin.f32 %v3905, 20.0
      %v4034 = vmin.f32 %v3906, 20.0
      %v4035 = vmin.f32 %v3907, 20.0
      %v4036 = vmin.f32 %v3908, 20.0
      %v4037 = vmin.f32 %v3909, 20.0
      %v4038 = vmin.f32 %v3910, 20.0
      %v4039 = vmin.f32 %v3911, 20.0
      %v4040 = vmin.f32 %v3912, 20.0
      %v4041 = vmin.f32 %v3913, 20.0
      %v4042 = vmin.f32 %v3914, 20.0
      %v4043 = vmin.f32 %v3915, 20.0
      %v4044 = vmin.f32 %v3916, 20.0
      %v4045 = vmin.f32 %v3917, 20.0
      %v4046 = vmin.f32 %v3918, 20.0
      %v4047 = vmin.f32 %v3919, 20.0
      %v4048 = vmin.f32 %v3920, 20.0
      %v4049 = vmin.f32 %v3921, 20.0
      %v4050 = vmin.f32 %v3922, 20.0
      %v4051 = vmin.f32 %v3923, 20.0
      %v4052 = vmin.f32 %v3924, 20.0
      %v4053 = vmin.f32 %v3925, 20.0
      %v4054 = vmin.f32 %v3926, 20.0
      %v4055 = vmin.f32 %v3927, 20.0
      %v4056 = vmin.f32 %v3928, 20.0
      %v4057 = vmin.f32 %v3929, 20.0
      %v4058 = vmul.f32 %v3994, 1.442695
      %v4059 = vpow.pop %v4058
      %v4060 = vmul.f32 %v3995, 1.442695
      %v4061 = vpow.pop %v4060
      %v4062 = vmul.f32 %v3996, 1.442695
      %v4063 = vpow.pop %v4062
      %v4064 = vmul.f32 %v3997, 1.442695
      %v4065 = vpow.pop %v4064
      %v4066 = vmul.f32 %v3998, 1.442695
      %v4067 = vpow.pop %v4066
      %v4068 = vmul.f32 %v3999, 1.442695
      %v4069 = vpow.pop %v4068
      %v4070 = vmul.f32 %v4000, 1.442695
      %v4071 = vpow.pop %v4070
      %v4072 = vmul.f32 %v4001, 1.442695
      %v4073 = vpow.pop %v4072
      %v4074 = vmul.f32 %v4002, 1.442695
      %v4075 = vpow.pop %v4074
      %v4076 = vmul.f32 %v4003, 1.442695
      %v4077 = vpow.pop %v4076
      %v4078 = vmul.f32 %v4004, 1.442695
      %v4079 = vpow.pop %v4078
      %v4080 = vmul.f32 %v4005, 1.442695
      %v4081 = vpow.pop %v4080
      %v4082 = vmul.f32 %v4006, 1.442695
      %v4083 = vpow.pop %v4082
      %v4084 = vmul.f32 %v4007, 1.442695
      %v4085 = vpow.pop %v4084
      %v4086 = vmul.f32 %v4008, 1.442695
      %v4087 = vpow.pop %v4086
      %v4088 = vmul.f32 %v4009, 1.442695
      %v4089 = vpow.pop %v4088
      %v4090 = vmul.f32 %v4010, 1.442695
      %v4091 = vpow.pop %v4090
      %v4092 = vmul.f32 %v4011, 1.442695
      %v4093 = vpow.pop %v4092
      %v4094 = vmul.f32 %v4012, 1.442695
      %v4095 = vpow.pop %v4094
      %v4096 = vmul.f32 %v4013, 1.442695
      %v4097 = vpow.pop %v4096
      %v4098 = vmul.f32 %v4014, 1.442695
      %v4099 = vpow.pop %v4098
      %v4100 = vmul.f32 %v4015, 1.442695
      %v4101 = vpow.pop %v4100
      %v4102 = vmul.f32 %v4016, 1.442695
      %v4103 = vpow.pop %v4102
      %v4104 = vmul.f32 %v4017, 1.442695
      %v4105 = vpow.pop %v4104
      %v4106 = vmul.f32 %v4018, 1.442695
      %v4107 = vpow.pop %v4106
      %v4108 = vmul.f32 %v4019, 1.442695
      %v4109 = vpow.pop %v4108
      %v4110 = vmul.f32 %v4020, 1.442695
      %v4111 = vpow.pop %v4110
      %v4112 = vmul.f32 %v4021, 1.442695
      %v4113 = vpow.pop %v4112
      %v4114 = vmul.f32 %v4022, 1.442695
      %v4115 = vpow.pop %v4114
      %v4116 = vmul.f32 %v4023, 1.442695
      %v4117 = vpow.pop %v4116
      %v4118 = vmul.f32 %v4024, 1.442695
      %v4119 = vpow.pop %v4118
      %v4120 = vmul.f32 %v4025, 1.442695
      %v4121 = vpow.pop %v4120
      %v4122 = vmul.f32 %v4026, 1.442695
      %v4123 = vpow.pop %v4122
      %v4124 = vmul.f32 %v4027, 1.442695
      %v4125 = vpow.pop %v4124
      %v4126 = vmul.f32 %v4028, 1.442695
      %v4127 = vpow.pop %v4126
      %v4128 = vmul.f32 %v4029, 1.442695
      %v4129 = vpow.pop %v4128
      %v4130 = vmul.f32 %v4030, 1.442695
      %v4131 = vpow.pop %v4130
      %v4132 = vmul.f32 %v4031, 1.442695
      %v4133 = vpow.pop %v4132
      %v4134 = vmul.f32 %v4032, 1.442695
      %v4135 = vpow.pop %v4134
      %v4136 = vmul.f32 %v4033, 1.442695
      %v4137 = vpow.pop %v4136
      %v4138 = vmul.f32 %v4034, 1.442695
      %v4139 = vpow.pop %v4138
      %v4140 = vmul.f32 %v4035, 1.442695
      %v4141 = vpow.pop %v4140
      %v4142 = vmul.f32 %v4036, 1.442695
      %v4143 = vpow.pop %v4142
      %v4144 = vmul.f32 %v4037, 1.442695
      %v4145 = vpow.pop %v4144
      %v4146 = vmul.f32 %v4038, 1.442695
      %v4147 = vpow.pop %v4146
      %v4148 = vmul.f32 %v4039, 1.442695
      %v4149 = vpow.pop %v4148
      %v4150 = vmul.f32 %v4040, 1.442695
      %v4151 = vpow.pop %v4150
      %v4152 = vmul.f32 %v4041, 1.442695
      %v4153 = vpow.pop %v4152
      %v4154 = vmul.f32 %v4042, 1.442695
      %v4155 = vpow.pop %v4154
      %v4156 = vmul.f32 %v4043, 1.442695
      %v4157 = vpow.pop %v4156
      %v4158 = vmul.f32 %v4044, 1.442695
      %v4159 = vpow.pop %v4158
      %v4160 = vmul.f32 %v4045, 1.442695
      %v4161 = vpow.pop %v4160
      %v4162 = vmul.f32 %v4046, 1.442695
      %v4163 = vpow.pop %v4162
      %v4164 = vmul.f32 %v4047, 1.442695
      %v4165 = vpow.pop %v4164
      %v4166 = vmul.f32 %v4048, 1.442695
      %v4167 = vpow.pop %v4166
      %v4168 = vmul.f32 %v4049, 1.442695
      %v4169 = vpow.pop %v4168
      %v4170 = vmul.f32 %v4050, 1.442695
      %v4171 = vpow.pop %v4170
      %v4172 = vmul.f32 %v4051, 1.442695
      %v4173 = vpow.pop %v4172
      %v4174 = vmul.f32 %v4052, 1.442695
      %v4175 = vpow.pop %v4174
      %v4176 = vmul.f32 %v4053, 1.442695
      %v4177 = vpow.pop %v4176
      %v4178 = vmul.f32 %v4054, 1.442695
      %v4179 = vpow.pop %v4178
      %v4180 = vmul.f32 %v4055, 1.442695
      %v4181 = vpow.pop %v4180
      %v4182 = vmul.f32 %v4056, 1.442695
      %v4183 = vpow.pop %v4182
      %v4184 = vmul.f32 %v4057, 1.442695
      %v4185 = vpow.pop %v4184
      %v4186 = vadd.f32 %v4059, 1.0
      %v4187 = vlog2.pop %v4186
      %v4188 = vmul.f32 %v4187, 0.6931472
      %v4189 = vmul.f32 -0.5, %v4059
      %v4190 = vadd.f32 %v4189, 1.0
      %v4191 = vmul.f32 %v4190, %v4059
      %v4192 = vand.u32 2147483647, %v4059
      %vm4193 = vcmp.lt.f32.partialorder %v4192, 0.0004427343
      %v4194 = vsel %vm4193, %v4191, %v4188
      %v4195 = vadd.f32 %v4061, 1.0
      %v4196 = vlog2.pop %v4195
      %v4197 = vmul.f32 %v4196, 0.6931472
      %v4198 = vmul.f32 -0.5, %v4061
      %v4199 = vadd.f32 %v4198, 1.0
      %v4200 = vmul.f32 %v4199, %v4061
      %v4201 = vand.u32 2147483647, %v4061
      %vm4202 = vcmp.lt.f32.partialorder %v4201, 0.0004427343
      %v4203 = vsel %vm4202, %v4200, %v4197
      %v4204 = vadd.f32 %v4063, 1.0
      %v4205 = vlog2.pop %v4204
      %v4206 = vmul.f32 %v4205, 0.6931472
      %v4207 = vmul.f32 -0.5, %v4063
      %v4208 = vadd.f32 %v4207, 1.0
      %v4209 = vmul.f32 %v4208, %v4063
      %v4210 = vand.u32 2147483647, %v4063
      %vm4211 = vcmp.lt.f32.partialorder %v4210, 0.0004427343
      %v4212 = vsel %vm4211, %v4209, %v4206
      %v4213 = vadd.f32 %v4065, 1.0
      %v4214 = vlog2.pop %v4213
      %v4215 = vmul.f32 %v4214, 0.6931472
      %v4216 = vmul.f32 -0.5, %v4065
      %v4217 = vadd.f32 %v4216, 1.0
      %v4218 = vmul.f32 %v4217, %v4065
      %v4219 = vand.u32 2147483647, %v4065
      %vm4220 = vcmp.lt.f32.partialorder %v4219, 0.0004427343
      %v4221 = vsel %vm4220, %v4218, %v4215
      %v4222 = vadd.f32 %v4067, 1.0
      %v4223 = vlog2.pop %v4222
      %v4224 = vmul.f32 %v4223, 0.6931472
      %v4225 = vmul.f32 -0.5, %v4067
      %v4226 = vadd.f32 %v4225, 1.0
      %v4227 = vmul.f32 %v4226, %v4067
      %v4228 = vand.u32 2147483647, %v4067
      %vm4229 = vcmp.lt.f32.partialorder %v4228, 0.0004427343
      %v4230 = vsel %vm4229, %v4227, %v4224
      %v4231 = vadd.f32 %v4069, 1.0
      %v4232 = vlog2.pop %v4231
      %v4233 = vmul.f32 %v4232, 0.6931472
      %v4234 = vmul.f32 -0.5, %v4069
      %v4235 = vadd.f32 %v4234, 1.0
      %v4236 = vmul.f32 %v4235, %v4069
      %v4237 = vand.u32 2147483647, %v4069
      %vm4238 = vcmp.lt.f32.partialorder %v4237, 0.0004427343
      %v4239 = vsel %vm4238, %v4236, %v4233
      %v4240 = vadd.f32 %v4071, 1.0
      %v4241 = vlog2.pop %v4240
      %v4242 = vmul.f32 %v4241, 0.6931472
      %v4243 = vmul.f32 -0.5, %v4071
      %v4244 = vadd.f32 %v4243, 1.0
      %v4245 = vmul.f32 %v4244, %v4071
      %v4246 = vand.u32 2147483647, %v4071
      %vm4247 = vcmp.lt.f32.partialorder %v4246, 0.0004427343
      %v4248 = vsel %vm4247, %v4245, %v4242
      %v4249 = vadd.f32 %v4073, 1.0
      %v4250 = vlog2.pop %v4249
      %v4251 = vmul.f32 %v4250, 0.6931472
      %v4252 = vmul.f32 -0.5, %v4073
      %v4253 = vadd.f32 %v4252, 1.0
      %v4254 = vmul.f32 %v4253, %v4073
      %v4255 = vand.u32 2147483647, %v4073
      %vm4256 = vcmp.lt.f32.partialorder %v4255, 0.0004427343
      %v4257 = vsel %vm4256, %v4254, %v4251
      %v4258 = vadd.f32 %v4075, 1.0
      %v4259 = vlog2.pop %v4258
      %v4260 = vmul.f32 %v4259, 0.6931472
      %v4261 = vmul.f32 -0.5, %v4075
      %v4262 = vadd.f32 %v4261, 1.0
      %v4263 = vmul.f32 %v4262, %v4075
      %v4264 = vand.u32 2147483647, %v4075
      %vm4265 = vcmp.lt.f32.partialorder %v4264, 0.0004427343
      %v4266 = vsel %vm4265, %v4263, %v4260
      %v4267 = vadd.f32 %v4077, 1.0
      %v4268 = vlog2.pop %v4267
      %v4269 = vmul.f32 %v4268, 0.6931472
      %v4270 = vmul.f32 -0.5, %v4077
      %v4271 = vadd.f32 %v4270, 1.0
      %v4272 = vmul.f32 %v4271, %v4077
      %v4273 = vand.u32 2147483647, %v4077
      %vm4274 = vcmp.lt.f32.partialorder %v4273, 0.0004427343
      %v4275 = vsel %vm4274, %v4272, %v4269
      %v4276 = vadd.f32 %v4079, 1.0
      %v4277 = vlog2.pop %v4276
      %v4278 = vmul.f32 %v4277, 0.6931472
      %v4279 = vmul.f32 -0.5, %v4079
      %v4280 = vadd.f32 %v4279, 1.0
      %v4281 = vmul.f32 %v4280, %v4079
      %v4282 = vand.u32 2147483647, %v4079
      %vm4283 = vcmp.lt.f32.partialorder %v4282, 0.0004427343
      %v4284 = vsel %vm4283, %v4281, %v4278
      %v4285 = vadd.f32 %v4081, 1.0
      %v4286 = vlog2.pop %v4285
      %v4287 = vmul.f32 %v4286, 0.6931472
      %v4288 = vmul.f32 -0.5, %v4081
      %v4289 = vadd.f32 %v4288, 1.0
      %v4290 = vmul.f32 %v4289, %v4081
      %v4291 = vand.u32 2147483647, %v4081
      %vm4292 = vcmp.lt.f32.partialorder %v4291, 0.0004427343
      %v4293 = vsel %vm4292, %v4290, %v4287
      %v4294 = vadd.f32 %v4083, 1.0
      %v4295 = vlog2.pop %v4294
      %v4296 = vmul.f32 %v4295, 0.6931472
      %v4297 = vmul.f32 -0.5, %v4083
      %v4298 = vadd.f32 %v4297, 1.0
      %v4299 = vmul.f32 %v4298, %v4083
      %v4300 = vand.u32 2147483647, %v4083
      %vm4301 = vcmp.lt.f32.partialorder %v4300, 0.0004427343
      %v4302 = vsel %vm4301, %v4299, %v4296
      %v4303 = vadd.f32 %v4085, 1.0
      %v4304 = vlog2.pop %v4303
      %v4305 = vmul.f32 %v4304, 0.6931472
      %v4306 = vmul.f32 -0.5, %v4085
      %v4307 = vadd.f32 %v4306, 1.0
      %v4308 = vmul.f32 %v4307, %v4085
      %v4309 = vand.u32 2147483647, %v4085
      %vm4310 = vcmp.lt.f32.partialorder %v4309, 0.0004427343
      %v4311 = vsel %vm4310, %v4308, %v4305
      %v4312 = vadd.f32 %v4087, 1.0
      %v4313 = vlog2.pop %v4312
      %v4314 = vmul.f32 %v4313, 0.6931472
      %v4315 = vmul.f32 -0.5, %v4087
      %v4316 = vadd.f32 %v4315, 1.0
      %v4317 = vmul.f32 %v4316, %v4087
      %v4318 = vand.u32 2147483647, %v4087
      %vm4319 = vcmp.lt.f32.partialorder %v4318, 0.0004427343
      %v4320 = vsel %vm4319, %v4317, %v4314
      %v4321 = vadd.f32 %v4089, 1.0
      %v4322 = vlog2.pop %v4321
      %v4323 = vmul.f32 %v4322, 0.6931472
      %v4324 = vmul.f32 -0.5, %v4089
      %v4325 = vadd.f32 %v4324, 1.0
      %v4326 = vmul.f32 %v4325, %v4089
      %v4327 = vand.u32 2147483647, %v4089
      %vm4328 = vcmp.lt.f32.partialorder %v4327, 0.0004427343
      %v4329 = vsel %vm4328, %v4326, %v4323
      %v4330 = vadd.f32 %v4091, 1.0
      %v4331 = vlog2.pop %v4330
      %v4332 = vmul.f32 %v4331, 0.6931472
      %v4333 = vmul.f32 -0.5, %v4091
      %v4334 = vadd.f32 %v4333, 1.0
      %v4335 = vmul.f32 %v4334, %v4091
      %v4336 = vand.u32 2147483647, %v4091
      %vm4337 = vcmp.lt.f32.partialorder %v4336, 0.0004427343
      %v4338 = vsel %vm4337, %v4335, %v4332
      %v4339 = vadd.f32 %v4093, 1.0
      %v4340 = vlog2.pop %v4339
      %v4341 = vmul.f32 %v4340, 0.6931472
      %v4342 = vmul.f32 -0.5, %v4093
      %v4343 = vadd.f32 %v4342, 1.0
      %v4344 = vmul.f32 %v4343, %v4093
      %v4345 = vand.u32 2147483647, %v4093
      %vm4346 = vcmp.lt.f32.partialorder %v4345, 0.0004427343
      %v4347 = vsel %vm4346, %v4344, %v4341
      %v4348 = vadd.f32 %v4095, 1.0
      %v4349 = vlog2.pop %v4348
      %v4350 = vmul.f32 %v4349, 0.6931472
      %v4351 = vmul.f32 -0.5, %v4095
      %v4352 = vadd.f32 %v4351, 1.0
      %v4353 = vmul.f32 %v4352, %v4095
      %v4354 = vand.u32 2147483647, %v4095
      %vm4355 = vcmp.lt.f32.partialorder %v4354, 0.0004427343
      %v4356 = vsel %vm4355, %v4353, %v4350
      %v4357 = vadd.f32 %v4097, 1.0
      %v4358 = vlog2.pop %v4357
      %v4359 = vmul.f32 %v4358, 0.6931472
      %v4360 = vmul.f32 -0.5, %v4097
      %v4361 = vadd.f32 %v4360, 1.0
      %v4362 = vmul.f32 %v4361, %v4097
      %v4363 = vand.u32 2147483647, %v4097
      %vm4364 = vcmp.lt.f32.partialorder %v4363, 0.0004427343
      %v4365 = vsel %vm4364, %v4362, %v4359
      %v4366 = vadd.f32 %v4099, 1.0
      %v4367 = vlog2.pop %v4366
      %v4368 = vmul.f32 %v4367, 0.6931472
      %v4369 = vmul.f32 -0.5, %v4099
      %v4370 = vadd.f32 %v4369, 1.0
      %v4371 = vmul.f32 %v4370, %v4099
      %v4372 = vand.u32 2147483647, %v4099
      %vm4373 = vcmp.lt.f32.partialorder %v4372, 0.0004427343
      %v4374 = vsel %vm4373, %v4371, %v4368
      %v4375 = vadd.f32 %v4101, 1.0
      %v4376 = vlog2.pop %v4375
      %v4377 = vmul.f32 %v4376, 0.6931472
      %v4378 = vmul.f32 -0.5, %v4101
      %v4379 = vadd.f32 %v4378, 1.0
      %v4380 = vmul.f32 %v4379, %v4101
      %v4381 = vand.u32 2147483647, %v4101
      %vm4382 = vcmp.lt.f32.partialorder %v4381, 0.0004427343
      %v4383 = vsel %vm4382, %v4380, %v4377
      %v4384 = vadd.f32 %v4103, 1.0
      %v4385 = vlog2.pop %v4384
      %v4386 = vmul.f32 %v4385, 0.6931472
      %v4387 = vmul.f32 -0.5, %v4103
      %v4388 = vadd.f32 %v4387, 1.0
      %v4389 = vmul.f32 %v4388, %v4103
      %v4390 = vand.u32 2147483647, %v4103
      %vm4391 = vcmp.lt.f32.partialorder %v4390, 0.0004427343
      %v4392 = vsel %vm4391, %v4389, %v4386
      %v4393 = vadd.f32 %v4105, 1.0
      %v4394 = vlog2.pop %v4393
      %v4395 = vmul.f32 %v4394, 0.6931472
      %v4396 = vmul.f32 -0.5, %v4105
      %v4397 = vadd.f32 %v4396, 1.0
      %v4398 = vmul.f32 %v4397, %v4105
      %v4399 = vand.u32 2147483647, %v4105
      %vm4400 = vcmp.lt.f32.partialorder %v4399, 0.0004427343
      %v4401 = vsel %vm4400, %v4398, %v4395
      %v4402 = vadd.f32 %v4107, 1.0
      %v4403 = vlog2.pop %v4402
      %v4404 = vmul.f32 %v4403, 0.6931472
      %v4405 = vmul.f32 -0.5, %v4107
      %v4406 = vadd.f32 %v4405, 1.0
      %v4407 = vmul.f32 %v4406, %v4107
      %v4408 = vand.u32 2147483647, %v4107
      %vm4409 = vcmp.lt.f32.partialorder %v4408, 0.0004427343
      %v4410 = vsel %vm4409, %v4407, %v4404
      %v4411 = vadd.f32 %v4109, 1.0
      %v4412 = vlog2.pop %v4411
      %v4413 = vmul.f32 %v4412, 0.6931472
      %v4414 = vmul.f32 -0.5, %v4109
      %v4415 = vadd.f32 %v4414, 1.0
      %v4416 = vmul.f32 %v4415, %v4109
      %v4417 = vand.u32 2147483647, %v4109
      %vm4418 = vcmp.lt.f32.partialorder %v4417, 0.0004427343
      %v4419 = vsel %vm4418, %v4416, %v4413
      %v4420 = vadd.f32 %v4111, 1.0
      %v4421 = vlog2.pop %v4420
      %v4422 = vmul.f32 %v4421, 0.6931472
      %v4423 = vmul.f32 -0.5, %v4111
      %v4424 = vadd.f32 %v4423, 1.0
      %v4425 = vmul.f32 %v4424, %v4111
      %v4426 = vand.u32 2147483647, %v4111
      %vm4427 = vcmp.lt.f32.partialorder %v4426, 0.0004427343
      %v4428 = vsel %vm4427, %v4425, %v4422
      %v4429 = vadd.f32 %v4113, 1.0
      %v4430 = vlog2.pop %v4429
      %v4431 = vmul.f32 %v4430, 0.6931472
      %v4432 = vmul.f32 -0.5, %v4113
      %v4433 = vadd.f32 %v4432, 1.0
      %v4434 = vmul.f32 %v4433, %v4113
      %v4435 = vand.u32 2147483647, %v4113
      %vm4436 = vcmp.lt.f32.partialorder %v4435, 0.0004427343
      %v4437 = vsel %vm4436, %v4434, %v4431
      %v4438 = vadd.f32 %v4115, 1.0
      %v4439 = vlog2.pop %v4438
      %v4440 = vmul.f32 %v4439, 0.6931472
      %v4441 = vmul.f32 -0.5, %v4115
      %v4442 = vadd.f32 %v4441, 1.0
      %v4443 = vmul.f32 %v4442, %v4115
      %v4444 = vand.u32 2147483647, %v4115
      %vm4445 = vcmp.lt.f32.partialorder %v4444, 0.0004427343
      %v4446 = vsel %vm4445, %v4443, %v4440
      %v4447 = vadd.f32 %v4117, 1.0
      %v4448 = vlog2.pop %v4447
      %v4449 = vmul.f32 %v4448, 0.6931472
      %v4450 = vmul.f32 -0.5, %v4117
      %v4451 = vadd.f32 %v4450, 1.0
      %v4452 = vmul.f32 %v4451, %v4117
      %v4453 = vand.u32 2147483647, %v4117
      %vm4454 = vcmp.lt.f32.partialorder %v4453, 0.0004427343
      %v4455 = vsel %vm4454, %v4452, %v4449
      %v4456 = vadd.f32 %v4119, 1.0
      %v4457 = vlog2.pop %v4456
      %v4458 = vmul.f32 %v4457, 0.6931472
      %v4459 = vmul.f32 -0.5, %v4119
      %v4460 = vadd.f32 %v4459, 1.0
      %v4461 = vmul.f32 %v4460, %v4119
      %v4462 = vand.u32 2147483647, %v4119
      %vm4463 = vcmp.lt.f32.partialorder %v4462, 0.0004427343
      %v4464 = vsel %vm4463, %v4461, %v4458
      %v4465 = vadd.f32 %v4121, 1.0
      %v4466 = vlog2.pop %v4465
      %v4467 = vmul.f32 %v4466, 0.6931472
      %v4468 = vmul.f32 -0.5, %v4121
      %v4469 = vadd.f32 %v4468, 1.0
      %v4470 = vmul.f32 %v4469, %v4121
      %v4471 = vand.u32 2147483647, %v4121
      %vm4472 = vcmp.lt.f32.partialorder %v4471, 0.0004427343
      %v4473 = vsel %vm4472, %v4470, %v4467
      %v4474 = vadd.f32 %v4123, 1.0
      %v4475 = vlog2.pop %v4474
      %v4476 = vmul.f32 %v4475, 0.6931472
      %v4477 = vmul.f32 -0.5, %v4123
      %v4478 = vadd.f32 %v4477, 1.0
      %v4479 = vmul.f32 %v4478, %v4123
      %v4480 = vand.u32 2147483647, %v4123
      %vm4481 = vcmp.lt.f32.partialorder %v4480, 0.0004427343
      %v4482 = vsel %vm4481, %v4479, %v4476
      %v4483 = vadd.f32 %v4125, 1.0
      %v4484 = vlog2.pop %v4483
      %v4485 = vmul.f32 %v4484, 0.6931472
      %v4486 = vmul.f32 -0.5, %v4125
      %v4487 = vadd.f32 %v4486, 1.0
      %v4488 = vmul.f32 %v4487, %v4125
      %v4489 = vand.u32 2147483647, %v4125
      %vm4490 = vcmp.lt.f32.partialorder %v4489, 0.0004427343
      %v4491 = vsel %vm4490, %v4488, %v4485
      %v4492 = vadd.f32 %v4127, 1.0
      %v4493 = vlog2.pop %v4492
      %v4494 = vmul.f32 %v4493, 0.6931472
      %v4495 = vmul.f32 -0.5, %v4127
      %v4496 = vadd.f32 %v4495, 1.0
      %v4497 = vmul.f32 %v4496, %v4127
      %v4498 = vand.u32 2147483647, %v4127
      %vm4499 = vcmp.lt.f32.partialorder %v4498, 0.0004427343
      %v4500 = vsel %vm4499, %v4497, %v4494
      %v4501 = vadd.f32 %v4129, 1.0
      %v4502 = vlog2.pop %v4501
      %v4503 = vmul.f32 %v4502, 0.6931472
      %v4504 = vmul.f32 -0.5, %v4129
      %v4505 = vadd.f32 %v4504, 1.0
      %v4506 = vmul.f32 %v4505, %v4129
      %v4507 = vand.u32 2147483647, %v4129
      %vm4508 = vcmp.lt.f32.partialorder %v4507, 0.0004427343
      %v4509 = vsel %vm4508, %v4506, %v4503
      %v4510 = vadd.f32 %v4131, 1.0
      %v4511 = vlog2.pop %v4510
      %v4512 = vmul.f32 %v4511, 0.6931472
      %v4513 = vmul.f32 -0.5, %v4131
      %v4514 = vadd.f32 %v4513, 1.0
      %v4515 = vmul.f32 %v4514, %v4131
      %v4516 = vand.u32 2147483647, %v4131
      %vm4517 = vcmp.lt.f32.partialorder %v4516, 0.0004427343
      %v4518 = vsel %vm4517, %v4515, %v4512
      %v4519 = vadd.f32 %v4133, 1.0
      %v4520 = vlog2.pop %v4519
      %v4521 = vmul.f32 %v4520, 0.6931472
      %v4522 = vmul.f32 -0.5, %v4133
      %v4523 = vadd.f32 %v4522, 1.0
      %v4524 = vmul.f32 %v4523, %v4133
      %v4525 = vand.u32 2147483647, %v4133
      %vm4526 = vcmp.lt.f32.partialorder %v4525, 0.0004427343
      %v4527 = vsel %vm4526, %v4524, %v4521
      %v4528 = vadd.f32 %v4135, 1.0
      %v4529 = vlog2.pop %v4528
      %v4530 = vmul.f32 %v4529, 0.6931472
      %v4531 = vmul.f32 -0.5, %v4135
      %v4532 = vadd.f32 %v4531, 1.0
      %v4533 = vmul.f32 %v4532, %v4135
      %v4534 = vand.u32 2147483647, %v4135
      %vm4535 = vcmp.lt.f32.partialorder %v4534, 0.0004427343
      %v4536 = vsel %vm4535, %v4533, %v4530
      %v4537 = vadd.f32 %v4137, 1.0
      %v4538 = vlog2.pop %v4537
      %v4539 = vmul.f32 %v4538, 0.6931472
      %v4540 = vmul.f32 -0.5, %v4137
      %v4541 = vadd.f32 %v4540, 1.0
      %v4542 = vmul.f32 %v4541, %v4137
      %v4543 = vand.u32 2147483647, %v4137
      %vm4544 = vcmp.lt.f32.partialorder %v4543, 0.0004427343
      %v4545 = vsel %vm4544, %v4542, %v4539
      %v4546 = vadd.f32 %v4139, 1.0
      %v4547 = vlog2.pop %v4546
      %v4548 = vmul.f32 %v4547, 0.6931472
      %v4549 = vmul.f32 -0.5, %v4139
      %v4550 = vadd.f32 %v4549, 1.0
      %v4551 = vmul.f32 %v4550, %v4139
      %v4552 = vand.u32 2147483647, %v4139
      %vm4553 = vcmp.lt.f32.partialorder %v4552, 0.0004427343
      %v4554 = vsel %vm4553, %v4551, %v4548
      %v4555 = vadd.f32 %v4141, 1.0
      %v4556 = vlog2.pop %v4555
      %v4557 = vmul.f32 %v4556, 0.6931472
      %v4558 = vmul.f32 -0.5, %v4141
      %v4559 = vadd.f32 %v4558, 1.0
      %v4560 = vmul.f32 %v4559, %v4141
      %v4561 = vand.u32 2147483647, %v4141
      %vm4562 = vcmp.lt.f32.partialorder %v4561, 0.0004427343
      %v4563 = vsel %vm4562, %v4560, %v4557
      %v4564 = vadd.f32 %v4143, 1.0
      %v4565 = vlog2.pop %v4564
      %v4566 = vmul.f32 %v4565, 0.6931472
      %v4567 = vmul.f32 -0.5, %v4143
      %v4568 = vadd.f32 %v4567, 1.0
      %v4569 = vmul.f32 %v4568, %v4143
      %v4570 = vand.u32 2147483647, %v4143
      %vm4571 = vcmp.lt.f32.partialorder %v4570, 0.0004427343
      %v4572 = vsel %vm4571, %v4569, %v4566
      %v4573 = vadd.f32 %v4145, 1.0
      %v4574 = vlog2.pop %v4573
      %v4575 = vmul.f32 %v4574, 0.6931472
      %v4576 = vmul.f32 -0.5, %v4145
      %v4577 = vadd.f32 %v4576, 1.0
      %v4578 = vmul.f32 %v4577, %v4145
      %v4579 = vand.u32 2147483647, %v4145
      %vm4580 = vcmp.lt.f32.partialorder %v4579, 0.0004427343
      %v4581 = vsel %vm4580, %v4578, %v4575
      %v4582 = vadd.f32 %v4147, 1.0
      %v4583 = vlog2.pop %v4582
      %v4584 = vmul.f32 %v4583, 0.6931472
      %v4585 = vmul.f32 -0.5, %v4147
      %v4586 = vadd.f32 %v4585, 1.0
      %v4587 = vmul.f32 %v4586, %v4147
      %v4588 = vand.u32 2147483647, %v4147
      %vm4589 = vcmp.lt.f32.partialorder %v4588, 0.0004427343
      %v4590 = vsel %vm4589, %v4587, %v4584
      %v4591 = vadd.f32 %v4149, 1.0
      %v4592 = vlog2.pop %v4591
      %v4593 = vmul.f32 %v4592, 0.6931472
      %v4594 = vmul.f32 -0.5, %v4149
      %v4595 = vadd.f32 %v4594, 1.0
      %v4596 = vmul.f32 %v4595, %v4149
      %v4597 = vand.u32 2147483647, %v4149
      %vm4598 = vcmp.lt.f32.partialorder %v4597, 0.0004427343
      %v4599 = vsel %vm4598, %v4596, %v4593
      %v4600 = vadd.f32 %v4151, 1.0
      %v4601 = vlog2.pop %v4600
      %v4602 = vmul.f32 %v4601, 0.6931472
      %v4603 = vmul.f32 -0.5, %v4151
      %v4604 = vadd.f32 %v4603, 1.0
      %v4605 = vmul.f32 %v4604, %v4151
      %v4606 = vand.u32 2147483647, %v4151
      %vm4607 = vcmp.lt.f32.partialorder %v4606, 0.0004427343
      %v4608 = vsel %vm4607, %v4605, %v4602
      %v4609 = vadd.f32 %v4153, 1.0
      %v4610 = vlog2.pop %v4609
      %v4611 = vmul.f32 %v4610, 0.6931472
      %v4612 = vmul.f32 -0.5, %v4153
      %v4613 = vadd.f32 %v4612, 1.0
      %v4614 = vmul.f32 %v4613, %v4153
      %v4615 = vand.u32 2147483647, %v4153
      %vm4616 = vcmp.lt.f32.partialorder %v4615, 0.0004427343
      %v4617 = vsel %vm4616, %v4614, %v4611
      %v4618 = vadd.f32 %v4155, 1.0
      %v4619 = vlog2.pop %v4618
      %v4620 = vmul.f32 %v4619, 0.6931472
      %v4621 = vmul.f32 -0.5, %v4155
      %v4622 = vadd.f32 %v4621, 1.0
      %v4623 = vmul.f32 %v4622, %v4155
      %v4624 = vand.u32 2147483647, %v4155
      %vm4625 = vcmp.lt.f32.partialorder %v4624, 0.0004427343
      %v4626 = vsel %vm4625, %v4623, %v4620
      %v4627 = vadd.f32 %v4157, 1.0
      %v4628 = vlog2.pop %v4627
      %v4629 = vmul.f32 %v4628, 0.6931472
      %v4630 = vmul.f32 -0.5, %v4157
      %v4631 = vadd.f32 %v4630, 1.0
      %v4632 = vmul.f32 %v4631, %v4157
      %v4633 = vand.u32 2147483647, %v4157
      %vm4634 = vcmp.lt.f32.partialorder %v4633, 0.0004427343
      %v4635 = vsel %vm4634, %v4632, %v4629
      %v4636 = vadd.f32 %v4159, 1.0
      %v4637 = vlog2.pop %v4636
      %v4638 = vmul.f32 %v4637, 0.6931472
      %v4639 = vmul.f32 -0.5, %v4159
      %v4640 = vadd.f32 %v4639, 1.0
      %v4641 = vmul.f32 %v4640, %v4159
      %v4642 = vand.u32 2147483647, %v4159
      %vm4643 = vcmp.lt.f32.partialorder %v4642, 0.0004427343
      %v4644 = vsel %vm4643, %v4641, %v4638
      %v4645 = vadd.f32 %v4161, 1.0
      %v4646 = vlog2.pop %v4645
      %v4647 = vmul.f32 %v4646, 0.6931472
      %v4648 = vmul.f32 -0.5, %v4161
      %v4649 = vadd.f32 %v4648, 1.0
      %v4650 = vmul.f32 %v4649, %v4161
      %v4651 = vand.u32 2147483647, %v4161
      %vm4652 = vcmp.lt.f32.partialorder %v4651, 0.0004427343
      %v4653 = vsel %vm4652, %v4650, %v4647
      %v4654 = vadd.f32 %v4163, 1.0
      %v4655 = vlog2.pop %v4654
      %v4656 = vmul.f32 %v4655, 0.6931472
      %v4657 = vmul.f32 -0.5, %v4163
      %v4658 = vadd.f32 %v4657, 1.0
      %v4659 = vmul.f32 %v4658, %v4163
      %v4660 = vand.u32 2147483647, %v4163
      %vm4661 = vcmp.lt.f32.partialorder %v4660, 0.0004427343
      %v4662 = vsel %vm4661, %v4659, %v4656
      %v4663 = vadd.f32 %v4165, 1.0
      %v4664 = vlog2.pop %v4663
      %v4665 = vmul.f32 %v4664, 0.6931472
      %v4666 = vmul.f32 -0.5, %v4165
      %v4667 = vadd.f32 %v4666, 1.0
      %v4668 = vmul.f32 %v4667, %v4165
      %v4669 = vand.u32 2147483647, %v4165
      %vm4670 = vcmp.lt.f32.partialorder %v4669, 0.0004427343
      %v4671 = vsel %vm4670, %v4668, %v4665
      %v4672 = vadd.f32 %v4167, 1.0
      %v4673 = vlog2.pop %v4672
      %v4674 = vmul.f32 %v4673, 0.6931472
      %v4675 = vmul.f32 -0.5, %v4167
      %v4676 = vadd.f32 %v4675, 1.0
      %v4677 = vmul.f32 %v4676, %v4167
      %v4678 = vand.u32 2147483647, %v4167
      %vm4679 = vcmp.lt.f32.partialorder %v4678, 0.0004427343
      %v4680 = vsel %vm4679, %v4677, %v4674
      %v4681 = vadd.f32 %v4169, 1.0
      %v4682 = vlog2.pop %v4681
      %v4683 = vmul.f32 %v4682, 0.6931472
      %v4684 = vmul.f32 -0.5, %v4169
      %v4685 = vadd.f32 %v4684, 1.0
      %v4686 = vmul.f32 %v4685, %v4169
      %v4687 = vand.u32 2147483647, %v4169
      %vm4688 = vcmp.lt.f32.partialorder %v4687, 0.0004427343
      %v4689 = vsel %vm4688, %v4686, %v4683
      %v4690 = vadd.f32 %v4171, 1.0
      %v4691 = vlog2.pop %v4690
      %v4692 = vmul.f32 %v4691, 0.6931472
      %v4693 = vmul.f32 -0.5, %v4171
      %v4694 = vadd.f32 %v4693, 1.0
      %v4695 = vmul.f32 %v4694, %v4171
      %v4696 = vand.u32 2147483647, %v4171
      %vm4697 = vcmp.lt.f32.partialorder %v4696, 0.0004427343
      %v4698 = vsel %vm4697, %v4695, %v4692
      %v4699 = vadd.f32 %v4173, 1.0
      %v4700 = vlog2.pop %v4699
      %v4701 = vmul.f32 %v4700, 0.6931472
      %v4702 = vmul.f32 -0.5, %v4173
      %v4703 = vadd.f32 %v4702, 1.0
      %v4704 = vmul.f32 %v4703, %v4173
      %v4705 = vand.u32 2147483647, %v4173
      %vm4706 = vcmp.lt.f32.partialorder %v4705, 0.0004427343
      %v4707 = vsel %vm4706, %v4704, %v4701
      %v4708 = vadd.f32 %v4175, 1.0
      %v4709 = vlog2.pop %v4708
      %v4710 = vmul.f32 %v4709, 0.6931472
      %v4711 = vmul.f32 -0.5, %v4175
      %v4712 = vadd.f32 %v4711, 1.0
      %v4713 = vmul.f32 %v4712, %v4175
      %v4714 = vand.u32 2147483647, %v4175
      %vm4715 = vcmp.lt.f32.partialorder %v4714, 0.0004427343
      %v4716 = vsel %vm4715, %v4713, %v4710
      %v4717 = vadd.f32 %v4177, 1.0
      %v4718 = vlog2.pop %v4717
      %v4719 = vmul.f32 %v4718, 0.6931472
      %v4720 = vmul.f32 -0.5, %v4177
      %v4721 = vadd.f32 %v4720, 1.0
      %v4722 = vmul.f32 %v4721, %v4177
      %v4723 = vand.u32 2147483647, %v4177
      %vm4724 = vcmp.lt.f32.partialorder %v4723, 0.0004427343
      %v4725 = vsel %vm4724, %v4722, %v4719
      %v4726 = vadd.f32 %v4179, 1.0
      %v4727 = vlog2.pop %v4726
      %v4728 = vmul.f32 %v4727, 0.6931472
      %v4729 = vmul.f32 -0.5, %v4179
      %v4730 = vadd.f32 %v4729, 1.0
      %v4731 = vmul.f32 %v4730, %v4179
      %v4732 = vand.u32 2147483647, %v4179
      %vm4733 = vcmp.lt.f32.partialorder %v4732, 0.0004427343
      %v4734 = vsel %vm4733, %v4731, %v4728
      %v4735 = vadd.f32 %v4181, 1.0
      %v4736 = vlog2.pop %v4735
      %v4737 = vmul.f32 %v4736, 0.6931472
      %v4738 = vmul.f32 -0.5, %v4181
      %v4739 = vadd.f32 %v4738, 1.0
      %v4740 = vmul.f32 %v4739, %v4181
      %v4741 = vand.u32 2147483647, %v4181
      %vm4742 = vcmp.lt.f32.partialorder %v4741, 0.0004427343
      %v4743 = vsel %vm4742, %v4740, %v4737
      %v4744 = vadd.f32 %v4183, 1.0
      %v4745 = vlog2.pop %v4744
      %v4746 = vmul.f32 %v4745, 0.6931472
      %v4747 = vmul.f32 -0.5, %v4183
      %v4748 = vadd.f32 %v4747, 1.0
      %v4749 = vmul.f32 %v4748, %v4183
      %v4750 = vand.u32 2147483647, %v4183
      %vm4751 = vcmp.lt.f32.partialorder %v4750, 0.0004427343
      %v4752 = vsel %vm4751, %v4749, %v4746
      %v4753 = vadd.f32 %v4185, 1.0
      %v4754 = vlog2.pop %v4753
      %v4755 = vmul.f32 %v4754, 0.6931472
      %v4756 = vmul.f32 -0.5, %v4185
      %v4757 = vadd.f32 %v4756, 1.0
      %v4758 = vmul.f32 %v4757, %v4185
      %v4759 = vand.u32 2147483647, %v4185
      %vm4760 = vcmp.lt.f32.partialorder %v4759, 0.0004427343
      %v4761 = vsel %vm4760, %v4758, %v4755
      %v4762 = vmul.f32 %v4194, %v1846
      %v4763 = vmul.f32 %v4203, %v1846
      %v4764 = vmul.f32 %v4212, %v1846
      %v4765 = vmul.f32 %v4221, %v1846
      %v4766 = vmul.f32 %v4230, %v1846
      %v4767 = vmul.f32 %v4239, %v1846
      %v4768 = vmul.f32 %v4248, %v1846
      %v4769 = vmul.f32 %v4257, %v1846
      %v4770 = vmul.f32 %v4266, %v1846
      %v4771 = vmul.f32 %v4275, %v1846
      %v4772 = vmul.f32 %v4284, %v1846
      %v4773 = vmul.f32 %v4293, %v1846
      %v4774 = vmul.f32 %v4302, %v1846
      %v4775 = vmul.f32 %v4311, %v1846
      %v4776 = vmul.f32 %v4320, %v1846
      %v4777 = vmul.f32 %v4329, %v1846
      %v4778 = vmul.f32 %v4338, %v1846
      %v4779 = vmul.f32 %v4347, %v1846
      %v4780 = vmul.f32 %v4356, %v1846
      %v4781 = vmul.f32 %v4365, %v1846
      %v4782 = vmul.f32 %v4374, %v1846
      %v4783 = vmul.f32 %v4383, %v1846
      %v4784 = vmul.f32 %v4392, %v1846
      %v4785 = vmul.f32 %v4401, %v1846
      %v4786 = vmul.f32 %v4410, %v1846
      %v4787 = vmul.f32 %v4419, %v1846
      %v4788 = vmul.f32 %v4428, %v1846
      %v4789 = vmul.f32 %v4437, %v1846
      %v4790 = vmul.f32 %v4446, %v1846
      %v4791 = vmul.f32 %v4455, %v1846
      %v4792 = vmul.f32 %v4464, %v1846
      %v4793 = vmul.f32 %v4473, %v1846
      %v4794 = vmul.f32 %v4482, %v1846
      %v4795 = vmul.f32 %v4491, %v1846
      %v4796 = vmul.f32 %v4500, %v1846
      %v4797 = vmul.f32 %v4509, %v1846
      %v4798 = vmul.f32 %v4518, %v1846
      %v4799 = vmul.f32 %v4527, %v1846
      %v4800 = vmul.f32 %v4536, %v1846
      %v4801 = vmul.f32 %v4545, %v1846
      %v4802 = vmul.f32 %v4554, %v1846
      %v4803 = vmul.f32 %v4563, %v1846
      %v4804 = vmul.f32 %v4572, %v1846
      %v4805 = vmul.f32 %v4581, %v1846
      %v4806 = vmul.f32 %v4590, %v1846
      %v4807 = vmul.f32 %v4599, %v1846
      %v4808 = vmul.f32 %v4608, %v1846
      %v4809 = vmul.f32 %v4617, %v1846
      %v4810 = vmul.f32 %v4626, %v1846
      %v4811 = vmul.f32 %v4635, %v1846
      %v4812 = vmul.f32 %v4644, %v1846
      %v4813 = vmul.f32 %v4653, %v1846
      %v4814 = vmul.f32 %v4662, %v1846
      %v4815 = vmul.f32 %v4671, %v1846
      %v4816 = vmul.f32 %v4680, %v1846
      %v4817 = vmul.f32 %v4689, %v1846
      %v4818 = vmul.f32 %v4698, %v1846
      %v4819 = vmul.f32 %v4707, %v1846
      %v4820 = vmul.f32 %v4716, %v1846
      %v4821 = vmul.f32 %v4725, %v1846
      %v4822 = vmul.f32 %v4734, %v1846
      %v4823 = vmul.f32 %v4743, %v1846
      %v4824 = vmul.f32 %v4752, %v1846
      %v4825 = vmul.f32 %v4761, %v1846
      %v4826 = vsel %vm3930, %v3802, %v4762
      %v4827 = vsel %vm3931, %v3803, %v4763
      %v4828 = vsel %vm3932, %v3804, %v4764
      %v4829 = vsel %vm3933, %v3805, %v4765
      %v4830 = vsel %vm3934, %v3806, %v4766
      %v4831 = vsel %vm3935, %v3807, %v4767
      %v4832 = vsel %vm3936, %v3808, %v4768
      %v4833 = vsel %vm3937, %v3809, %v4769
      %v4834 = vsel %vm3938, %v3810, %v4770
      %v4835 = vsel %vm3939, %v3811, %v4771
      %v4836 = vsel %vm3940, %v3812, %v4772
      %v4837 = vsel %vm3941, %v3813, %v4773
      %v4838 = vsel %vm3942, %v3814, %v4774
      %v4839 = vsel %vm3943, %v3815, %v4775
      %v4840 = vsel %vm3944, %v3816, %v4776
      %v4841 = vsel %vm3945, %v3817, %v4777
      %v4842 = vsel %vm3946, %v3818, %v4778
      %v4843 = vsel %vm3947, %v3819, %v4779
      %v4844 = vsel %vm3948, %v3820, %v4780
      %v4845 = vsel %vm3949, %v3821, %v4781
      %v4846 = vsel %vm3950, %v3822, %v4782
      %v4847 = vsel %vm3951, %v3823, %v4783
      %v4848 = vsel %vm3952, %v3824, %v4784
      %v4849 = vsel %vm3953, %v3825, %v4785
      %v4850 = vsel %vm3954, %v3826, %v4786
      %v4851 = vsel %vm3955, %v3827, %v4787
      %v4852 = vsel %vm3956, %v3828, %v4788
      %v4853 = vsel %vm3957, %v3829, %v4789
      %v4854 = vsel %vm3958, %v3830, %v4790
      %v4855 = vsel %vm3959, %v3831, %v4791
      %v4856 = vsel %vm3960, %v3832, %v4792
      %v4857 = vsel %vm3961, %v3833, %v4793
      %v4858 = vsel %vm3962, %v3834, %v4794
      %v4859 = vsel %vm3963, %v3835, %v4795
      %v4860 = vsel %vm3964, %v3836, %v4796
      %v4861 = vsel %vm3965, %v3837, %v4797
      %v4862 = vsel %vm3966, %v3838, %v4798
      %v4863 = vsel %vm3967, %v3839, %v4799
      %v4864 = vsel %vm3968, %v3840, %v4800
      %v4865 = vsel %vm3969, %v3841, %v4801
      %v4866 = vsel %vm3970, %v3842, %v4802
      %v4867 = vsel %vm3971, %v3843, %v4803
      %v4868 = vsel %vm3972, %v3844, %v4804
      %v4869 = vsel %vm3973, %v3845, %v4805
      %v4870 = vsel %vm3974, %v3846, %v4806
      %v4871 = vsel %vm3975, %v3847, %v4807
      %v4872 = vsel %vm3976, %v3848, %v4808
      %v4873 = vsel %vm3977, %v3849, %v4809
      %v4874 = vsel %vm3978, %v3850, %v4810
      %v4875 = vsel %vm3979, %v3851, %v4811
      %v4876 = vsel %vm3980, %v3852, %v4812
      %v4877 = vsel %vm3981, %v3853, %v4813
      %v4878 = vsel %vm3982, %v3854, %v4814
      %v4879 = vsel %vm3983, %v3855, %v4815
      %v4880 = vsel %vm3984, %v3856, %v4816
      %v4881 = vsel %vm3985, %v3857, %v4817
      %v4882 = vsel %vm3986, %v3858, %v4818
      %v4883 = vsel %vm3987, %v3859, %v4819
      %v4884 = vsel %vm3988, %v3860, %v4820
      %v4885 = vsel %vm3989, %v3861, %v4821
      %v4886 = vsel %vm3990, %v3862, %v4822
      %v4887 = vsel %vm3991, %v3863, %v4823
      %v4888 = vsel %vm3992, %v3864, %v4824
      %v4889 = vsel %vm3993, %v3865, %v4825
      %v4890 = vpack.c.bf16 %v4827, %v4826
      %v4891 = vpack.c.bf16 %v4829, %v4828
      %v4892 = vpack.c.bf16 %v4831, %v4830
      %v4893 = vpack.c.bf16 %v4833, %v4832
      %v4894 = vpack.c.bf16 %v4835, %v4834
      %v4895 = vpack.c.bf16 %v4837, %v4836
      %v4896 = vpack.c.bf16 %v4839, %v4838
      %v4897 = vpack.c.bf16 %v4841, %v4840
      %v4898 = vpack.c.bf16 %v4843, %v4842
      %v4899 = vpack.c.bf16 %v4845, %v4844
      %v4900 = vpack.c.bf16 %v4847, %v4846
      %v4901 = vpack.c.bf16 %v4849, %v4848
      %v4902 = vpack.c.bf16 %v4851, %v4850
      %v4903 = vpack.c.bf16 %v4853, %v4852
      %v4904 = vpack.c.bf16 %v4855, %v4854
      %v4905 = vpack.c.bf16 %v4857, %v4856
      %v4906 = vpack.c.bf16 %v4859, %v4858
      %v4907 = vpack.c.bf16 %v4861, %v4860
      %v4908 = vpack.c.bf16 %v4863, %v4862
      %v4909 = vpack.c.bf16 %v4865, %v4864
      %v4910 = vpack.c.bf16 %v4867, %v4866
      %v4911 = vpack.c.bf16 %v4869, %v4868
      %v4912 = vpack.c.bf16 %v4871, %v4870
      %v4913 = vpack.c.bf16 %v4873, %v4872
      %v4914 = vpack.c.bf16 %v4875, %v4874
      %v4915 = vpack.c.bf16 %v4877, %v4876
      %v4916 = vpack.c.bf16 %v4879, %v4878
      %v4917 = vpack.c.bf16 %v4881, %v4880
      %v4918 = vpack.c.bf16 %v4883, %v4882
      %v4919 = vpack.c.bf16 %v4885, %v4884
      %v4920 = vpack.c.bf16 %v4887, %v4886
      %v4921 = vpack.c.bf16 %v4889, %v4888
      %v4922 = vld [vmem:[%s8] sm:$0xf]
      %v4923 = vld [vmem:[%s8 + $0x4] sm:$0xf]
      %v4924 = vld [vmem:[%s8 + $0x8] sm:$0xf]
      %v4925 = vld [vmem:[%s8 + $0xc] sm:$0xf]
      %v4926 = vld [vmem:[%s8 + $0x10] sm:$0xf]
      %v4927 = vld [vmem:[%s8 + $0x14] sm:$0xf]
      %v4928 = vld [vmem:[%s8 + $0x18] sm:$0xf]
      %v4929 = vld [vmem:[%s8 + $0x1c] sm:$0xf]
      %v4930 = vld [vmem:[%s8 + $0x20] sm:$0xf]
      %v4931 = vld [vmem:[%s8 + $0x24] sm:$0xf]
      %v4932 = vld [vmem:[%s8 + $0x28] sm:$0xf]
      %v4933 = vld [vmem:[%s8 + $0x2c] sm:$0xf]
      %v4934 = vld [vmem:[%s8 + $0x30] sm:$0xf]
      %v4935 = vld [vmem:[%s8 + $0x34] sm:$0xf]
      %v4936 = vld [vmem:[%s8 + $0x38] sm:$0xf]
      %v4937 = vld [vmem:[%s8 + $0x3c] sm:$0xf]
      %v4938 = vld [vmem:[%s9] sm:$0x1]
      %v4940 = vperm.slane %v4938, 0
      %v4958 = vunpack.c.l.b16 %v4922
      %v4959 = vunpack.c.l.b16 %v4923
      %v4960 = vunpack.c.l.b16 %v4924
      %v4961 = vunpack.c.l.b16 %v4925
      %v4962 = vunpack.c.l.b16 %v4926
      %v4963 = vunpack.c.l.b16 %v4927
      %v4964 = vunpack.c.l.b16 %v4928
      %v4965 = vunpack.c.l.b16 %v4929
      %v4966 = vunpack.c.l.b16 %v4930
      %v4967 = vunpack.c.l.b16 %v4931
      %v4968 = vunpack.c.l.b16 %v4932
      %v4969 = vunpack.c.l.b16 %v4933
      %v4970 = vunpack.c.l.b16 %v4934
      %v4971 = vunpack.c.l.b16 %v4935
      %v4972 = vunpack.c.l.b16 %v4936
      %v4973 = vunpack.c.l.b16 %v4937
      %v4974 = vpack.c.b16 %v4959, %v4958
      %v4975 = vpack.c.b16 %v4961, %v4960
      %v4976 = vpack.c.b16 %v4963, %v4962
      %v4977 = vpack.c.b16 %v4965, %v4964
      %v4978 = vpack.c.b16 %v4967, %v4966
      %v4979 = vpack.c.b16 %v4969, %v4968
      %v4980 = vpack.c.b16 %v4971, %v4970
      %v4981 = vpack.c.b16 %v4973, %v4972
      %4990 = vmatpush.bf16.msra.mxu0 %v4981
      %4991 = vmatpush.bf16.msra.mxu0 %v4980
      %4992 = vmatpush.bf16.msra.mxu0 %v4979
      %4993 = vmatpush.bf16.msra.mxu0 %v4978
      %4994 = vmatpush.bf16.msra.mxu0 %v4977
      %4995 = vmatpush.bf16.msra.mxu0 %v4976
      %4996 = vmatpush.bf16.msra.mxu0 %v4975
      %4997 = vmatpush.bf16.msra.mxu0 %v4974
      %4998 = vmatmul.bf16.gmra.mxu0 %v4890
      %v4999 = vpop.f32.mrf.mxu0
      %v5000 = vadd.f32 %v4940, %v4999
      %v5001 = vpop.f32.mrf.mxu0
      %v5002 = vadd.f32 %v4940, %v5001
      %5003 = vmatmul.bf16.gmra.mxu0 %v4891
      %v5004 = vpop.f32.mrf.mxu0
      %v5005 = vadd.f32 %v4940, %v5004
      %v5006 = vpop.f32.mrf.mxu0
      %v5007 = vadd.f32 %v4940, %v5006
      %5008 = vmatmul.bf16.gmra.mxu0 %v4892
      %v5009 = vpop.f32.mrf.mxu0
      %v5010 = vadd.f32 %v4940, %v5009
      %v5011 = vpop.f32.mrf.mxu0
      %v5012 = vadd.f32 %v4940, %v5011
      %5013 = vmatmul.bf16.gmra.mxu0 %v4893
      %v5014 = vpop.f32.mrf.mxu0
      %v5015 = vadd.f32 %v4940, %v5014
      %v5016 = vpop.f32.mrf.mxu0
      %v5017 = vadd.f32 %v4940, %v5016
      %5018 = vmatmul.bf16.gmra.mxu0 %v4894
      %v5019 = vpop.f32.mrf.mxu0
      %v5020 = vadd.f32 %v4940, %v5019
      %v5021 = vpop.f32.mrf.mxu0
      %v5022 = vadd.f32 %v4940, %v5021
      %5023 = vmatmul.bf16.gmra.mxu0 %v4895
      %v5024 = vpop.f32.mrf.mxu0
      %v5025 = vadd.f32 %v4940, %v5024
      %v5026 = vpop.f32.mrf.mxu0
      %v5027 = vadd.f32 %v4940, %v5026
      %5028 = vmatmul.bf16.gmra.mxu0 %v4896
      %v5029 = vpop.f32.mrf.mxu0
      %v5030 = vadd.f32 %v4940, %v5029
      %v5031 = vpop.f32.mrf.mxu0
      %v5032 = vadd.f32 %v4940, %v5031
      %5033 = vmatmul.bf16.gmra.mxu0 %v4897
      %v5034 = vpop.f32.mrf.mxu0
      %v5035 = vadd.f32 %v4940, %v5034
      %v5036 = vpop.f32.mrf.mxu0
      %v5037 = vadd.f32 %v4940, %v5036
      %5038 = vmatmul.bf16.gmra.mxu0 %v4898
      %v5039 = vpop.f32.mrf.mxu0
      %v5040 = vadd.f32 %v4940, %v5039
      %v5041 = vpop.f32.mrf.mxu0
      %v5042 = vadd.f32 %v4940, %v5041
      %5043 = vmatmul.bf16.gmra.mxu0 %v4899
      %v5044 = vpop.f32.mrf.mxu0
      %v5045 = vadd.f32 %v4940, %v5044
      %v5046 = vpop.f32.mrf.mxu0
      %v5047 = vadd.f32 %v4940, %v5046
      %5048 = vmatmul.bf16.gmra.mxu0 %v4900
      %v5049 = vpop.f32.mrf.mxu0
      %v5050 = vadd.f32 %v4940, %v5049
      %v5051 = vpop.f32.mrf.mxu0
      %v5052 = vadd.f32 %v4940, %v5051
      %5053 = vmatmul.bf16.gmra.mxu0 %v4901
      %v5054 = vpop.f32.mrf.mxu0
      %v5055 = vadd.f32 %v4940, %v5054
      %v5056 = vpop.f32.mrf.mxu0
      %v5057 = vadd.f32 %v4940, %v5056
      %5058 = vmatmul.bf16.gmra.mxu0 %v4902
      %v5059 = vpop.f32.mrf.mxu0
      %v5060 = vadd.f32 %v4940, %v5059
      %v5061 = vpop.f32.mrf.mxu0
      %v5062 = vadd.f32 %v4940, %v5061
      %5063 = vmatmul.bf16.gmra.mxu0 %v4903
      %v5064 = vpop.f32.mrf.mxu0
      %v5065 = vadd.f32 %v4940, %v5064
      %v5066 = vpop.f32.mrf.mxu0
      %v5067 = vadd.f32 %v4940, %v5066
      %5068 = vmatmul.bf16.gmra.mxu0 %v4904
      %v5069 = vpop.f32.mrf.mxu0
      %v5070 = vadd.f32 %v4940, %v5069
      %v5071 = vpop.f32.mrf.mxu0
      %v5072 = vadd.f32 %v4940, %v5071
      %5073 = vmatmul.bf16.gmra.mxu0 %v4905
      %v5074 = vpop.f32.mrf.mxu0
      %v5075 = vadd.f32 %v4940, %v5074
      %v5076 = vpop.f32.mrf.mxu0
      %v5077 = vadd.f32 %v4940, %v5076
      %5078 = vmatmul.bf16.gmra.mxu0 %v4906
      %v5079 = vpop.f32.mrf.mxu0
      %v5080 = vadd.f32 %v4940, %v5079
      %v5081 = vpop.f32.mrf.mxu0
      %v5082 = vadd.f32 %v4940, %v5081
      %5083 = vmatmul.bf16.gmra.mxu0 %v4907
      %v5084 = vpop.f32.mrf.mxu0
      %v5085 = vadd.f32 %v4940, %v5084
      %v5086 = vpop.f32.mrf.mxu0
      %v5087 = vadd.f32 %v4940, %v5086
      %5088 = vmatmul.bf16.gmra.mxu0 %v4908
      %v5089 = vpop.f32.mrf.mxu0
      %v5090 = vadd.f32 %v4940, %v5089
      %v5091 = vpop.f32.mrf.mxu0
      %v5092 = vadd.f32 %v4940, %v5091
      %5093 = vmatmul.bf16.gmra.mxu0 %v4909
      %v5094 = vpop.f32.mrf.mxu0
      %v5095 = vadd.f32 %v4940, %v5094
      %v5096 = vpop.f32.mrf.mxu0
      %v5097 = vadd.f32 %v4940, %v5096
      %5098 = vmatmul.bf16.gmra.mxu0 %v4910
      %v5099 = vpop.f32.mrf.mxu0
      %v5100 = vadd.f32 %v4940, %v5099
      %v5101 = vpop.f32.mrf.mxu0
      %v5102 = vadd.f32 %v4940, %v5101
      %5103 = vmatmul.bf16.gmra.mxu0 %v4911
      %v5104 = vpop.f32.mrf.mxu0
      %v5105 = vadd.f32 %v4940, %v5104
      %v5106 = vpop.f32.mrf.mxu0
      %v5107 = vadd.f32 %v4940, %v5106
      %5108 = vmatmul.bf16.gmra.mxu0 %v4912
      %v5109 = vpop.f32.mrf.mxu0
      %v5110 = vadd.f32 %v4940, %v5109
      %v5111 = vpop.f32.mrf.mxu0
      %v5112 = vadd.f32 %v4940, %v5111
      %5113 = vmatmul.bf16.gmra.mxu0 %v4913
      %v5114 = vpop.f32.mrf.mxu0
      %v5115 = vadd.f32 %v4940, %v5114
      %v5116 = vpop.f32.mrf.mxu0
      %v5117 = vadd.f32 %v4940, %v5116
      %5118 = vmatmul.bf16.gmra.mxu0 %v4914
      %v5119 = vpop.f32.mrf.mxu0
      %v5120 = vadd.f32 %v4940, %v5119
      %v5121 = vpop.f32.mrf.mxu0
      %v5122 = vadd.f32 %v4940, %v5121
      %5123 = vmatmul.bf16.gmra.mxu0 %v4915
      %v5124 = vpop.f32.mrf.mxu0
      %v5125 = vadd.f32 %v4940, %v5124
      %v5126 = vpop.f32.mrf.mxu0
      %v5127 = vadd.f32 %v4940, %v5126
      %5128 = vmatmul.bf16.gmra.mxu0 %v4916
      %v5129 = vpop.f32.mrf.mxu0
      %v5130 = vadd.f32 %v4940, %v5129
      %v5131 = vpop.f32.mrf.mxu0
      %v5132 = vadd.f32 %v4940, %v5131
      %5133 = vmatmul.bf16.gmra.mxu0 %v4917
      %v5134 = vpop.f32.mrf.mxu0
      %v5135 = vadd.f32 %v4940, %v5134
      %v5136 = vpop.f32.mrf.mxu0
      %v5137 = vadd.f32 %v4940, %v5136
      %5138 = vmatmul.bf16.gmra.mxu0 %v4918
      %v5139 = vpop.f32.mrf.mxu0
      %v5140 = vadd.f32 %v4940, %v5139
      %v5141 = vpop.f32.mrf.mxu0
      %v5142 = vadd.f32 %v4940, %v5141
      %5143 = vmatmul.bf16.gmra.mxu0 %v4919
      %v5144 = vpop.f32.mrf.mxu0
      %v5145 = vadd.f32 %v4940, %v5144
      %v5146 = vpop.f32.mrf.mxu0
      %v5147 = vadd.f32 %v4940, %v5146
      %5148 = vmatmul.bf16.gmra.mxu0 %v4920
      %v5149 = vpop.f32.mrf.mxu0
      %v5150 = vadd.f32 %v4940, %v5149
      %v5151 = vpop.f32.mrf.mxu0
      %v5152 = vadd.f32 %v4940, %v5151
      %5153 = vmatmul.bf16.gmra.mxu0 %v4921
      %v5154 = vpop.f32.mrf.mxu0
      %v5155 = vadd.f32 %v4940, %v5154
      %v5156 = vpop.f32.mrf.mxu0
      %v5157 = vadd.f32 %v4940, %v5156
      %5158 = vdwg.mxu0
      %v5159 = vmul.f32 %v5000, 100.0
      %v5160 = vmul.f32 %v5002, 100.0
      %v5161 = vmul.f32 %v5005, 100.0
      %v5162 = vmul.f32 %v5007, 100.0
      %v5163 = vmul.f32 %v5010, 100.0
      %v5164 = vmul.f32 %v5012, 100.0
      %v5165 = vmul.f32 %v5015, 100.0
      %v5166 = vmul.f32 %v5017, 100.0
      %v5167 = vmul.f32 %v5020, 100.0
      %v5168 = vmul.f32 %v5022, 100.0
      %v5169 = vmul.f32 %v5025, 100.0
      %v5170 = vmul.f32 %v5027, 100.0
      %v5171 = vmul.f32 %v5030, 100.0
      %v5172 = vmul.f32 %v5032, 100.0
      %v5173 = vmul.f32 %v5035, 100.0
      %v5174 = vmul.f32 %v5037, 100.0
      %v5175 = vmul.f32 %v5040, 100.0
      %v5176 = vmul.f32 %v5042, 100.0
      %v5177 = vmul.f32 %v5045, 100.0
      %v5178 = vmul.f32 %v5047, 100.0
      %v5179 = vmul.f32 %v5050, 100.0
      %v5180 = vmul.f32 %v5052, 100.0
      %v5181 = vmul.f32 %v5055, 100.0
      %v5182 = vmul.f32 %v5057, 100.0
      %v5183 = vmul.f32 %v5060, 100.0
      %v5184 = vmul.f32 %v5062, 100.0
      %v5185 = vmul.f32 %v5065, 100.0
      %v5186 = vmul.f32 %v5067, 100.0
      %v5187 = vmul.f32 %v5070, 100.0
      %v5188 = vmul.f32 %v5072, 100.0
      %v5189 = vmul.f32 %v5075, 100.0
      %v5190 = vmul.f32 %v5077, 100.0
      %v5191 = vmul.f32 %v5080, 100.0
      %v5192 = vmul.f32 %v5082, 100.0
      %v5193 = vmul.f32 %v5085, 100.0
      %v5194 = vmul.f32 %v5087, 100.0
      %v5195 = vmul.f32 %v5090, 100.0
      %v5196 = vmul.f32 %v5092, 100.0
      %v5197 = vmul.f32 %v5095, 100.0
      %v5198 = vmul.f32 %v5097, 100.0
      %v5199 = vmul.f32 %v5100, 100.0
      %v5200 = vmul.f32 %v5102, 100.0
      %v5201 = vmul.f32 %v5105, 100.0
      %v5202 = vmul.f32 %v5107, 100.0
      %v5203 = vmul.f32 %v5110, 100.0
      %v5204 = vmul.f32 %v5112, 100.0
      %v5205 = vmul.f32 %v5115, 100.0
      %v5206 = vmul.f32 %v5117, 100.0
      %v5207 = vmul.f32 %v5120, 100.0
      %v5208 = vmul.f32 %v5122, 100.0
      %v5209 = vmul.f32 %v5125, 100.0
      %v5210 = vmul.f32 %v5127, 100.0
      %v5211 = vmul.f32 %v5130, 100.0
      %v5212 = vmul.f32 %v5132, 100.0
      %v5213 = vmul.f32 %v5135, 100.0
      %v5214 = vmul.f32 %v5137, 100.0
      %v5215 = vmul.f32 %v5140, 100.0
      %v5216 = vmul.f32 %v5142, 100.0
      %v5217 = vmul.f32 %v5145, 100.0
      %v5218 = vmul.f32 %v5147, 100.0
      %v5219 = vmul.f32 %v5150, 100.0
      %v5220 = vmul.f32 %v5152, 100.0
      %v5221 = vmul.f32 %v5155, 100.0
      %v5222 = vmul.f32 %v5157, 100.0
      %vm5223 = vcmp.gt.f32.partialorder %v5159, 20.0
      %vm5224 = vcmp.gt.f32.partialorder %v5160, 20.0
      %vm5225 = vcmp.gt.f32.partialorder %v5161, 20.0
      %vm5226 = vcmp.gt.f32.partialorder %v5162, 20.0
      %vm5227 = vcmp.gt.f32.partialorder %v5163, 20.0
      %vm5228 = vcmp.gt.f32.partialorder %v5164, 20.0
      %vm5229 = vcmp.gt.f32.partialorder %v5165, 20.0
      %vm5230 = vcmp.gt.f32.partialorder %v5166, 20.0
      %vm5231 = vcmp.gt.f32.partialorder %v5167, 20.0
      %vm5232 = vcmp.gt.f32.partialorder %v5168, 20.0
      %vm5233 = vcmp.gt.f32.partialorder %v5169, 20.0
      %vm5234 = vcmp.gt.f32.partialorder %v5170, 20.0
      %vm5235 = vcmp.gt.f32.partialorder %v5171, 20.0
      %vm5236 = vcmp.gt.f32.partialorder %v5172, 20.0
      %vm5237 = vcmp.gt.f32.partialorder %v5173, 20.0
      %vm5238 = vcmp.gt.f32.partialorder %v5174, 20.0
      %vm5239 = vcmp.gt.f32.partialorder %v5175, 20.0
      %vm5240 = vcmp.gt.f32.partialorder %v5176, 20.0
      %vm5241 = vcmp.gt.f32.partialorder %v5177, 20.0
      %vm5242 = vcmp.gt.f32.partialorder %v5178, 20.0
      %vm5243 = vcmp.gt.f32.partialorder %v5179, 20.0
      %vm5244 = vcmp.gt.f32.partialorder %v5180, 20.0
      %vm5245 = vcmp.gt.f32.partialorder %v5181, 20.0
      %vm5246 = vcmp.gt.f32.partialorder %v5182, 20.0
      %vm5247 = vcmp.gt.f32.partialorder %v5183, 20.0
      %vm5248 = vcmp.gt.f32.partialorder %v5184, 20.0
      %vm5249 = vcmp.gt.f32.partialorder %v5185, 20.0
      %vm5250 = vcmp.gt.f32.partialorder %v5186, 20.0
      %vm5251 = vcmp.gt.f32.partialorder %v5187, 20.0
      %vm5252 = vcmp.gt.f32.partialorder %v5188, 20.0
      %vm5253 = vcmp.gt.f32.partialorder %v5189, 20.0
      %vm5254 = vcmp.gt.f32.partialorder %v5190, 20.0
      %vm5255 = vcmp.gt.f32.partialorder %v5191, 20.0
      %vm5256 = vcmp.gt.f32.partialorder %v5192, 20.0
      %vm5257 = vcmp.gt.f32.partialorder %v5193, 20.0
      %vm5258 = vcmp.gt.f32.partialorder %v5194, 20.0
      %vm5259 = vcmp.gt.f32.partialorder %v5195, 20.0
      %vm5260 = vcmp.gt.f32.partialorder %v5196, 20.0
      %vm5261 = vcmp.gt.f32.partialorder %v5197, 20.0
      %vm5262 = vcmp.gt.f32.partialorder %v5198, 20.0
      %vm5263 = vcmp.gt.f32.partialorder %v5199, 20.0
      %vm5264 = vcmp.gt.f32.partialorder %v5200, 20.0
      %vm5265 = vcmp.gt.f32.partialorder %v5201, 20.0
      %vm5266 = vcmp.gt.f32.partialorder %v5202, 20.0
      %vm5267 = vcmp.gt.f32.partialorder %v5203, 20.0
      %vm5268 = vcmp.gt.f32.partialorder %v5204, 20.0
      %vm5269 = vcmp.gt.f32.partialorder %v5205, 20.0
      %vm5270 = vcmp.gt.f32.partialorder %v5206, 20.0
      %vm5271 = vcmp.gt.f32.partialorder %v5207, 20.0
      %vm5272 = vcmp.gt.f32.partialorder %v5208, 20.0
      %vm5273 = vcmp.gt.f32.partialorder %v5209, 20.0
      %vm5274 = vcmp.gt.f32.partialorder %v5210, 20.0
      %vm5275 = vcmp.gt.f32.partialorder %v5211, 20.0
      %vm5276 = vcmp.gt.f32.partialorder %v5212, 20.0
      %vm5277 = vcmp.gt.f32.partialorder %v5213, 20.0
      %vm5278 = vcmp.gt.f32.partialorder %v5214, 20.0
      %vm5279 = vcmp.gt.f32.partialorder %v5215, 20.0
      %vm5280 = vcmp.gt.f32.partialorder %v5216, 20.0
      %vm5281 = vcmp.gt.f32.partialorder %v5217, 20.0
      %vm5282 = vcmp.gt.f32.partialorder %v5218, 20.0
      %vm5283 = vcmp.gt.f32.partialorder %v5219, 20.0
      %vm5284 = vcmp.gt.f32.partialorder %v5220, 20.0
      %vm5285 = vcmp.gt.f32.partialorder %v5221, 20.0
      %vm5286 = vcmp.gt.f32.partialorder %v5222, 20.0
      %v5287 = vmin.f32 %v5159, 20.0
      %v5288 = vmin.f32 %v5160, 20.0
      %v5289 = vmin.f32 %v5161, 20.0
      %v5290 = vmin.f32 %v5162, 20.0
      %v5291 = vmin.f32 %v5163, 20.0
      %v5292 = vmin.f32 %v5164, 20.0
      %v5293 = vmin.f32 %v5165, 20.0
      %v5294 = vmin.f32 %v5166, 20.0
      %v5295 = vmin.f32 %v5167, 20.0
      %v5296 = vmin.f32 %v5168, 20.0
      %v5297 = vmin.f32 %v5169, 20.0
      %v5298 = vmin.f32 %v5170, 20.0
      %v5299 = vmin.f32 %v5171, 20.0
      %v5300 = vmin.f32 %v5172, 20.0
      %v5301 = vmin.f32 %v5173, 20.0
      %v5302 = vmin.f32 %v5174, 20.0
      %v5303 = vmin.f32 %v5175, 20.0
      %v5304 = vmin.f32 %v5176, 20.0
      %v5305 = vmin.f32 %v5177, 20.0
      %v5306 = vmin.f32 %v5178, 20.0
      %v5307 = vmin.f32 %v5179, 20.0
      %v5308 = vmin.f32 %v5180, 20.0
      %v5309 = vmin.f32 %v5181, 20.0
      %v5310 = vmin.f32 %v5182, 20.0
      %v5311 = vmin.f32 %v5183, 20.0
      %v5312 = vmin.f32 %v5184, 20.0
      %v5313 = vmin.f32 %v5185, 20.0
      %v5314 = vmin.f32 %v5186, 20.0
      %v5315 = vmin.f32 %v5187, 20.0
      %v5316 = vmin.f32 %v5188, 20.0
      %v5317 = vmin.f32 %v5189, 20.0
      %v5318 = vmin.f32 %v5190, 20.0
      %v5319 = vmin.f32 %v5191, 20.0
      %v5320 = vmin.f32 %v5192, 20.0
      %v5321 = vmin.f32 %v5193, 20.0
      %v5322 = vmin.f32 %v5194, 20.0
      %v5323 = vmin.f32 %v5195, 20.0
      %v5324 = vmin.f32 %v5196, 20.0
      %v5325 = vmin.f32 %v5197, 20.0
      %v5326 = vmin.f32 %v5198, 20.0
      %v5327 = vmin.f32 %v5199, 20.0
      %v5328 = vmin.f32 %v5200, 20.0
      %v5329 = vmin.f32 %v5201, 20.0
      %v5330 = vmin.f32 %v5202, 20.0
      %v5331 = vmin.f32 %v5203, 20.0
      %v5332 = vmin.f32 %v5204, 20.0
      %v5333 = vmin.f32 %v5205, 20.0
      %v5334 = vmin.f32 %v5206, 20.0
      %v5335 = vmin.f32 %v5207, 20.0
      %v5336 = vmin.f32 %v5208, 20.0
      %v5337 = vmin.f32 %v5209, 20.0
      %v5338 = vmin.f32 %v5210, 20.0
      %v5339 = vmin.f32 %v5211, 20.0
      %v5340 = vmin.f32 %v5212, 20.0
      %v5341 = vmin.f32 %v5213, 20.0
      %v5342 = vmin.f32 %v5214, 20.0
      %v5343 = vmin.f32 %v5215, 20.0
      %v5344 = vmin.f32 %v5216, 20.0
      %v5345 = vmin.f32 %v5217, 20.0
      %v5346 = vmin.f32 %v5218, 20.0
      %v5347 = vmin.f32 %v5219, 20.0
      %v5348 = vmin.f32 %v5220, 20.0
      %v5349 = vmin.f32 %v5221, 20.0
      %v5350 = vmin.f32 %v5222, 20.0
      %v5351 = vmul.f32 %v5287, 1.442695
      %v5352 = vpow.pop %v5351
      %v5353 = vmul.f32 %v5288, 1.442695
      %v5354 = vpow.pop %v5353
      %v5355 = vmul.f32 %v5289, 1.442695
      %v5356 = vpow.pop %v5355
      %v5357 = vmul.f32 %v5290, 1.442695
      %v5358 = vpow.pop %v5357
      %v5359 = vmul.f32 %v5291, 1.442695
      %v5360 = vpow.pop %v5359
      %v5361 = vmul.f32 %v5292, 1.442695
      %v5362 = vpow.pop %v5361
      %v5363 = vmul.f32 %v5293, 1.442695
      %v5364 = vpow.pop %v5363
      %v5365 = vmul.f32 %v5294, 1.442695
      %v5366 = vpow.pop %v5365
      %v5367 = vmul.f32 %v5295, 1.442695
      %v5368 = vpow.pop %v5367
      %v5369 = vmul.f32 %v5296, 1.442695
      %v5370 = vpow.pop %v5369
      %v5371 = vmul.f32 %v5297, 1.442695
      %v5372 = vpow.pop %v5371
      %v5373 = vmul.f32 %v5298, 1.442695
      %v5374 = vpow.pop %v5373
      %v5375 = vmul.f32 %v5299, 1.442695
      %v5376 = vpow.pop %v5375
      %v5377 = vmul.f32 %v5300, 1.442695
      %v5378 = vpow.pop %v5377
      %v5379 = vmul.f32 %v5301, 1.442695
      %v5380 = vpow.pop %v5379
      %v5381 = vmul.f32 %v5302, 1.442695
      %v5382 = vpow.pop %v5381
      %v5383 = vmul.f32 %v5303, 1.442695
      %v5384 = vpow.pop %v5383
      %v5385 = vmul.f32 %v5304, 1.442695
      %v5386 = vpow.pop %v5385
      %v5387 = vmul.f32 %v5305, 1.442695
      %v5388 = vpow.pop %v5387
      %v5389 = vmul.f32 %v5306, 1.442695
      %v5390 = vpow.pop %v5389
      %v5391 = vmul.f32 %v5307, 1.442695
      %v5392 = vpow.pop %v5391
      %v5393 = vmul.f32 %v5308, 1.442695
      %v5394 = vpow.pop %v5393
      %v5395 = vmul.f32 %v5309, 1.442695
      %v5396 = vpow.pop %v5395
      %v5397 = vmul.f32 %v5310, 1.442695
      %v5398 = vpow.pop %v5397
      %v5399 = vmul.f32 %v5311, 1.442695
      %v5400 = vpow.pop %v5399
      %v5401 = vmul.f32 %v5312, 1.442695
      %v5402 = vpow.pop %v5401
      %v5403 = vmul.f32 %v5313, 1.442695
      %v5404 = vpow.pop %v5403
      %v5405 = vmul.f32 %v5314, 1.442695
      %v5406 = vpow.pop %v5405
      %v5407 = vmul.f32 %v5315, 1.442695
      %v5408 = vpow.pop %v5407
      %v5409 = vmul.f32 %v5316, 1.442695
      %v5410 = vpow.pop %v5409
      %v5411 = vmul.f32 %v5317, 1.442695
      %v5412 = vpow.pop %v5411
      %v5413 = vmul.f32 %v5318, 1.442695
      %v5414 = vpow.pop %v5413
      %v5415 = vmul.f32 %v5319, 1.442695
      %v5416 = vpow.pop %v5415
      %v5417 = vmul.f32 %v5320, 1.442695
      %v5418 = vpow.pop %v5417
      %v5419 = vmul.f32 %v5321, 1.442695
      %v5420 = vpow.pop %v5419
      %v5421 = vmul.f32 %v5322, 1.442695
      %v5422 = vpow.pop %v5421
      %v5423 = vmul.f32 %v5323, 1.442695
      %v5424 = vpow.pop %v5423
      %v5425 = vmul.f32 %v5324, 1.442695
      %v5426 = vpow.pop %v5425
      %v5427 = vmul.f32 %v5325, 1.442695
      %v5428 = vpow.pop %v5427
      %v5429 = vmul.f32 %v5326, 1.442695
      %v5430 = vpow.pop %v5429
      %v5431 = vmul.f32 %v5327, 1.442695
      %v5432 = vpow.pop %v5431
      %v5433 = vmul.f32 %v5328, 1.442695
      %v5434 = vpow.pop %v5433
      %v5435 = vmul.f32 %v5329, 1.442695
      %v5436 = vpow.pop %v5435
      %v5437 = vmul.f32 %v5330, 1.442695
      %v5438 = vpow.pop %v5437
      %v5439 = vmul.f32 %v5331, 1.442695
      %v5440 = vpow.pop %v5439
      %v5441 = vmul.f32 %v5332, 1.442695
      %v5442 = vpow.pop %v5441
      %v5443 = vmul.f32 %v5333, 1.442695
      %v5444 = vpow.pop %v5443
      %v5445 = vmul.f32 %v5334, 1.442695
      %v5446 = vpow.pop %v5445
      %v5447 = vmul.f32 %v5335, 1.442695
      %v5448 = vpow.pop %v5447
      %v5449 = vmul.f32 %v5336, 1.442695
      %v5450 = vpow.pop %v5449
      %v5451 = vmul.f32 %v5337, 1.442695
      %v5452 = vpow.pop %v5451
      %v5453 = vmul.f32 %v5338, 1.442695
      %v5454 = vpow.pop %v5453
      %v5455 = vmul.f32 %v5339, 1.442695
      %v5456 = vpow.pop %v5455
      %v5457 = vmul.f32 %v5340, 1.442695
      %v5458 = vpow.pop %v5457
      %v5459 = vmul.f32 %v5341, 1.442695
      %v5460 = vpow.pop %v5459
      %v5461 = vmul.f32 %v5342, 1.442695
      %v5462 = vpow.pop %v5461
      %v5463 = vmul.f32 %v5343, 1.442695
      %v5464 = vpow.pop %v5463
      %v5465 = vmul.f32 %v5344, 1.442695
      %v5466 = vpow.pop %v5465
      %v5467 = vmul.f32 %v5345, 1.442695
      %v5468 = vpow.pop %v5467
      %v5469 = vmul.f32 %v5346, 1.442695
      %v5470 = vpow.pop %v5469
      %v5471 = vmul.f32 %v5347, 1.442695
      %v5472 = vpow.pop %v5471
      %v5473 = vmul.f32 %v5348, 1.442695
      %v5474 = vpow.pop %v5473
      %v5475 = vmul.f32 %v5349, 1.442695
      %v5476 = vpow.pop %v5475
      %v5477 = vmul.f32 %v5350, 1.442695
      %v5478 = vpow.pop %v5477
      %v5479 = vadd.f32 %v5352, 1.0
      %v5480 = vlog2.pop %v5479
      %v5481 = vmul.f32 %v5480, 0.6931472
      %v5482 = vmul.f32 -0.5, %v5352
      %v5483 = vadd.f32 %v5482, 1.0
      %v5484 = vmul.f32 %v5483, %v5352
      %v5485 = vand.u32 2147483647, %v5352
      %vm5486 = vcmp.lt.f32.partialorder %v5485, 0.0004427343
      %v5487 = vsel %vm5486, %v5484, %v5481
      %v5488 = vadd.f32 %v5354, 1.0
      %v5489 = vlog2.pop %v5488
      %v5490 = vmul.f32 %v5489, 0.6931472
      %v5491 = vmul.f32 -0.5, %v5354
      %v5492 = vadd.f32 %v5491, 1.0
      %v5493 = vmul.f32 %v5492, %v5354
      %v5494 = vand.u32 2147483647, %v5354
      %vm5495 = vcmp.lt.f32.partialorder %v5494, 0.0004427343
      %v5496 = vsel %vm5495, %v5493, %v5490
      %v5497 = vadd.f32 %v5356, 1.0
      %v5498 = vlog2.pop %v5497
      %v5499 = vmul.f32 %v5498, 0.6931472
      %v5500 = vmul.f32 -0.5, %v5356
      %v5501 = vadd.f32 %v5500, 1.0
      %v5502 = vmul.f32 %v5501, %v5356
      %v5503 = vand.u32 2147483647, %v5356
      %vm5504 = vcmp.lt.f32.partialorder %v5503, 0.0004427343
      %v5505 = vsel %vm5504, %v5502, %v5499
      %v5506 = vadd.f32 %v5358, 1.0
      %v5507 = vlog2.pop %v5506
      %v5508 = vmul.f32 %v5507, 0.6931472
      %v5509 = vmul.f32 -0.5, %v5358
      %v5510 = vadd.f32 %v5509, 1.0
      %v5511 = vmul.f32 %v5510, %v5358
      %v5512 = vand.u32 2147483647, %v5358
      %vm5513 = vcmp.lt.f32.partialorder %v5512, 0.0004427343
      %v5514 = vsel %vm5513, %v5511, %v5508
      %v5515 = vadd.f32 %v5360, 1.0
      %v5516 = vlog2.pop %v5515
      %v5517 = vmul.f32 %v5516, 0.6931472
      %v5518 = vmul.f32 -0.5, %v5360
      %v5519 = vadd.f32 %v5518, 1.0
      %v5520 = vmul.f32 %v5519, %v5360
      %v5521 = vand.u32 2147483647, %v5360
      %vm5522 = vcmp.lt.f32.partialorder %v5521, 0.0004427343
      %v5523 = vsel %vm5522, %v5520, %v5517
      %v5524 = vadd.f32 %v5362, 1.0
      %v5525 = vlog2.pop %v5524
      %v5526 = vmul.f32 %v5525, 0.6931472
      %v5527 = vmul.f32 -0.5, %v5362
      %v5528 = vadd.f32 %v5527, 1.0
      %v5529 = vmul.f32 %v5528, %v5362
      %v5530 = vand.u32 2147483647, %v5362
      %vm5531 = vcmp.lt.f32.partialorder %v5530, 0.0004427343
      %v5532 = vsel %vm5531, %v5529, %v5526
      %v5533 = vadd.f32 %v5364, 1.0
      %v5534 = vlog2.pop %v5533
      %v5535 = vmul.f32 %v5534, 0.6931472
      %v5536 = vmul.f32 -0.5, %v5364
      %v5537 = vadd.f32 %v5536, 1.0
      %v5538 = vmul.f32 %v5537, %v5364
      %v5539 = vand.u32 2147483647, %v5364
      %vm5540 = vcmp.lt.f32.partialorder %v5539, 0.0004427343
      %v5541 = vsel %vm5540, %v5538, %v5535
      %v5542 = vadd.f32 %v5366, 1.0
      %v5543 = vlog2.pop %v5542
      %v5544 = vmul.f32 %v5543, 0.6931472
      %v5545 = vmul.f32 -0.5, %v5366
      %v5546 = vadd.f32 %v5545, 1.0
      %v5547 = vmul.f32 %v5546, %v5366
      %v5548 = vand.u32 2147483647, %v5366
      %vm5549 = vcmp.lt.f32.partialorder %v5548, 0.0004427343
      %v5550 = vsel %vm5549, %v5547, %v5544
      %v5551 = vadd.f32 %v5368, 1.0
      %v5552 = vlog2.pop %v5551
      %v5553 = vmul.f32 %v5552, 0.6931472
      %v5554 = vmul.f32 -0.5, %v5368
      %v5555 = vadd.f32 %v5554, 1.0
      %v5556 = vmul.f32 %v5555, %v5368
      %v5557 = vand.u32 2147483647, %v5368
      %vm5558 = vcmp.lt.f32.partialorder %v5557, 0.0004427343
      %v5559 = vsel %vm5558, %v5556, %v5553
      %v5560 = vadd.f32 %v5370, 1.0
      %v5561 = vlog2.pop %v5560
      %v5562 = vmul.f32 %v5561, 0.6931472
      %v5563 = vmul.f32 -0.5, %v5370
      %v5564 = vadd.f32 %v5563, 1.0
      %v5565 = vmul.f32 %v5564, %v5370
      %v5566 = vand.u32 2147483647, %v5370
      %vm5567 = vcmp.lt.f32.partialorder %v5566, 0.0004427343
      %v5568 = vsel %vm5567, %v5565, %v5562
      %v5569 = vadd.f32 %v5372, 1.0
      %v5570 = vlog2.pop %v5569
      %v5571 = vmul.f32 %v5570, 0.6931472
      %v5572 = vmul.f32 -0.5, %v5372
      %v5573 = vadd.f32 %v5572, 1.0
      %v5574 = vmul.f32 %v5573, %v5372
      %v5575 = vand.u32 2147483647, %v5372
      %vm5576 = vcmp.lt.f32.partialorder %v5575, 0.0004427343
      %v5577 = vsel %vm5576, %v5574, %v5571
      %v5578 = vadd.f32 %v5374, 1.0
      %v5579 = vlog2.pop %v5578
      %v5580 = vmul.f32 %v5579, 0.6931472
      %v5581 = vmul.f32 -0.5, %v5374
      %v5582 = vadd.f32 %v5581, 1.0
      %v5583 = vmul.f32 %v5582, %v5374
      %v5584 = vand.u32 2147483647, %v5374
      %vm5585 = vcmp.lt.f32.partialorder %v5584, 0.0004427343
      %v5586 = vsel %vm5585, %v5583, %v5580
      %v5587 = vadd.f32 %v5376, 1.0
      %v5588 = vlog2.pop %v5587
      %v5589 = vmul.f32 %v5588, 0.6931472
      %v5590 = vmul.f32 -0.5, %v5376
      %v5591 = vadd.f32 %v5590, 1.0
      %v5592 = vmul.f32 %v5591, %v5376
      %v5593 = vand.u32 2147483647, %v5376
      %vm5594 = vcmp.lt.f32.partialorder %v5593, 0.0004427343
      %v5595 = vsel %vm5594, %v5592, %v5589
      %v5596 = vadd.f32 %v5378, 1.0
      %v5597 = vlog2.pop %v5596
      %v5598 = vmul.f32 %v5597, 0.6931472
      %v5599 = vmul.f32 -0.5, %v5378
      %v5600 = vadd.f32 %v5599, 1.0
      %v5601 = vmul.f32 %v5600, %v5378
      %v5602 = vand.u32 2147483647, %v5378
      %vm5603 = vcmp.lt.f32.partialorder %v5602, 0.0004427343
      %v5604 = vsel %vm5603, %v5601, %v5598
      %v5605 = vadd.f32 %v5380, 1.0
      %v5606 = vlog2.pop %v5605
      %v5607 = vmul.f32 %v5606, 0.6931472
      %v5608 = vmul.f32 -0.5, %v5380
      %v5609 = vadd.f32 %v5608, 1.0
      %v5610 = vmul.f32 %v5609, %v5380
      %v5611 = vand.u32 2147483647, %v5380
      %vm5612 = vcmp.lt.f32.partialorder %v5611, 0.0004427343
      %v5613 = vsel %vm5612, %v5610, %v5607
      %v5614 = vadd.f32 %v5382, 1.0
      %v5615 = vlog2.pop %v5614
      %v5616 = vmul.f32 %v5615, 0.6931472
      %v5617 = vmul.f32 -0.5, %v5382
      %v5618 = vadd.f32 %v5617, 1.0
      %v5619 = vmul.f32 %v5618, %v5382
      %v5620 = vand.u32 2147483647, %v5382
      %vm5621 = vcmp.lt.f32.partialorder %v5620, 0.0004427343
      %v5622 = vsel %vm5621, %v5619, %v5616
      %v5623 = vadd.f32 %v5384, 1.0
      %v5624 = vlog2.pop %v5623
      %v5625 = vmul.f32 %v5624, 0.6931472
      %v5626 = vmul.f32 -0.5, %v5384
      %v5627 = vadd.f32 %v5626, 1.0
      %v5628 = vmul.f32 %v5627, %v5384
      %v5629 = vand.u32 2147483647, %v5384
      %vm5630 = vcmp.lt.f32.partialorder %v5629, 0.0004427343
      %v5631 = vsel %vm5630, %v5628, %v5625
      %v5632 = vadd.f32 %v5386, 1.0
      %v5633 = vlog2.pop %v5632
      %v5634 = vmul.f32 %v5633, 0.6931472
      %v5635 = vmul.f32 -0.5, %v5386
      %v5636 = vadd.f32 %v5635, 1.0
      %v5637 = vmul.f32 %v5636, %v5386
      %v5638 = vand.u32 2147483647, %v5386
      %vm5639 = vcmp.lt.f32.partialorder %v5638, 0.0004427343
      %v5640 = vsel %vm5639, %v5637, %v5634
      %v5641 = vadd.f32 %v5388, 1.0
      %v5642 = vlog2.pop %v5641
      %v5643 = vmul.f32 %v5642, 0.6931472
      %v5644 = vmul.f32 -0.5, %v5388
      %v5645 = vadd.f32 %v5644, 1.0
      %v5646 = vmul.f32 %v5645, %v5388
      %v5647 = vand.u32 2147483647, %v5388
      %vm5648 = vcmp.lt.f32.partialorder %v5647, 0.0004427343
      %v5649 = vsel %vm5648, %v5646, %v5643
      %v5650 = vadd.f32 %v5390, 1.0
      %v5651 = vlog2.pop %v5650
      %v5652 = vmul.f32 %v5651, 0.6931472
      %v5653 = vmul.f32 -0.5, %v5390
      %v5654 = vadd.f32 %v5653, 1.0
      %v5655 = vmul.f32 %v5654, %v5390
      %v5656 = vand.u32 2147483647, %v5390
      %vm5657 = vcmp.lt.f32.partialorder %v5656, 0.0004427343
      %v5658 = vsel %vm5657, %v5655, %v5652
      %v5659 = vadd.f32 %v5392, 1.0
      %v5660 = vlog2.pop %v5659
      %v5661 = vmul.f32 %v5660, 0.6931472
      %v5662 = vmul.f32 -0.5, %v5392
      %v5663 = vadd.f32 %v5662, 1.0
      %v5664 = vmul.f32 %v5663, %v5392
      %v5665 = vand.u32 2147483647, %v5392
      %vm5666 = vcmp.lt.f32.partialorder %v5665, 0.0004427343
      %v5667 = vsel %vm5666, %v5664, %v5661
      %v5668 = vadd.f32 %v5394, 1.0
      %v5669 = vlog2.pop %v5668
      %v5670 = vmul.f32 %v5669, 0.6931472
      %v5671 = vmul.f32 -0.5, %v5394
      %v5672 = vadd.f32 %v5671, 1.0
      %v5673 = vmul.f32 %v5672, %v5394
      %v5674 = vand.u32 2147483647, %v5394
      %vm5675 = vcmp.lt.f32.partialorder %v5674, 0.0004427343
      %v5676 = vsel %vm5675, %v5673, %v5670
      %v5677 = vadd.f32 %v5396, 1.0
      %v5678 = vlog2.pop %v5677
      %v5679 = vmul.f32 %v5678, 0.6931472
      %v5680 = vmul.f32 -0.5, %v5396
      %v5681 = vadd.f32 %v5680, 1.0
      %v5682 = vmul.f32 %v5681, %v5396
      %v5683 = vand.u32 2147483647, %v5396
      %vm5684 = vcmp.lt.f32.partialorder %v5683, 0.0004427343
      %v5685 = vsel %vm5684, %v5682, %v5679
      %v5686 = vadd.f32 %v5398, 1.0
      %v5687 = vlog2.pop %v5686
      %v5688 = vmul.f32 %v5687, 0.6931472
      %v5689 = vmul.f32 -0.5, %v5398
      %v5690 = vadd.f32 %v5689, 1.0
      %v5691 = vmul.f32 %v5690, %v5398
      %v5692 = vand.u32 2147483647, %v5398
      %vm5693 = vcmp.lt.f32.partialorder %v5692, 0.0004427343
      %v5694 = vsel %vm5693, %v5691, %v5688
      %v5695 = vadd.f32 %v5400, 1.0
      %v5696 = vlog2.pop %v5695
      %v5697 = vmul.f32 %v5696, 0.6931472
      %v5698 = vmul.f32 -0.5, %v5400
      %v5699 = vadd.f32 %v5698, 1.0
      %v5700 = vmul.f32 %v5699, %v5400
      %v5701 = vand.u32 2147483647, %v5400
      %vm5702 = vcmp.lt.f32.partialorder %v5701, 0.0004427343
      %v5703 = vsel %vm5702, %v5700, %v5697
      %v5704 = vadd.f32 %v5402, 1.0
      %v5705 = vlog2.pop %v5704
      %v5706 = vmul.f32 %v5705, 0.6931472
      %v5707 = vmul.f32 -0.5, %v5402
      %v5708 = vadd.f32 %v5707, 1.0
      %v5709 = vmul.f32 %v5708, %v5402
      %v5710 = vand.u32 2147483647, %v5402
      %vm5711 = vcmp.lt.f32.partialorder %v5710, 0.0004427343
      %v5712 = vsel %vm5711, %v5709, %v5706
      %v5713 = vadd.f32 %v5404, 1.0
      %v5714 = vlog2.pop %v5713
      %v5715 = vmul.f32 %v5714, 0.6931472
      %v5716 = vmul.f32 -0.5, %v5404
      %v5717 = vadd.f32 %v5716, 1.0
      %v5718 = vmul.f32 %v5717, %v5404
      %v5719 = vand.u32 2147483647, %v5404
      %vm5720 = vcmp.lt.f32.partialorder %v5719, 0.0004427343
      %v5721 = vsel %vm5720, %v5718, %v5715
      %v5722 = vadd.f32 %v5406, 1.0
      %v5723 = vlog2.pop %v5722
      %v5724 = vmul.f32 %v5723, 0.6931472
      %v5725 = vmul.f32 -0.5, %v5406
      %v5726 = vadd.f32 %v5725, 1.0
      %v5727 = vmul.f32 %v5726, %v5406
      %v5728 = vand.u32 2147483647, %v5406
      %vm5729 = vcmp.lt.f32.partialorder %v5728, 0.0004427343
      %v5730 = vsel %vm5729, %v5727, %v5724
      %v5731 = vadd.f32 %v5408, 1.0
      %v5732 = vlog2.pop %v5731
      %v5733 = vmul.f32 %v5732, 0.6931472
      %v5734 = vmul.f32 -0.5, %v5408
      %v5735 = vadd.f32 %v5734, 1.0
      %v5736 = vmul.f32 %v5735, %v5408
      %v5737 = vand.u32 2147483647, %v5408
      %vm5738 = vcmp.lt.f32.partialorder %v5737, 0.0004427343
      %v5739 = vsel %vm5738, %v5736, %v5733
      %v5740 = vadd.f32 %v5410, 1.0
      %v5741 = vlog2.pop %v5740
      %v5742 = vmul.f32 %v5741, 0.6931472
      %v5743 = vmul.f32 -0.5, %v5410
      %v5744 = vadd.f32 %v5743, 1.0
      %v5745 = vmul.f32 %v5744, %v5410
      %v5746 = vand.u32 2147483647, %v5410
      %vm5747 = vcmp.lt.f32.partialorder %v5746, 0.0004427343
      %v5748 = vsel %vm5747, %v5745, %v5742
      %v5749 = vadd.f32 %v5412, 1.0
      %v5750 = vlog2.pop %v5749
      %v5751 = vmul.f32 %v5750, 0.6931472
      %v5752 = vmul.f32 -0.5, %v5412
      %v5753 = vadd.f32 %v5752, 1.0
      %v5754 = vmul.f32 %v5753, %v5412
      %v5755 = vand.u32 2147483647, %v5412
      %vm5756 = vcmp.lt.f32.partialorder %v5755, 0.0004427343
      %v5757 = vsel %vm5756, %v5754, %v5751
      %v5758 = vadd.f32 %v5414, 1.0
      %v5759 = vlog2.pop %v5758
      %v5760 = vmul.f32 %v5759, 0.6931472
      %v5761 = vmul.f32 -0.5, %v5414
      %v5762 = vadd.f32 %v5761, 1.0
      %v5763 = vmul.f32 %v5762, %v5414
      %v5764 = vand.u32 2147483647, %v5414
      %vm5765 = vcmp.lt.f32.partialorder %v5764, 0.0004427343
      %v5766 = vsel %vm5765, %v5763, %v5760
      %v5767 = vadd.f32 %v5416, 1.0
      %v5768 = vlog2.pop %v5767
      %v5769 = vmul.f32 %v5768, 0.6931472
      %v5770 = vmul.f32 -0.5, %v5416
      %v5771 = vadd.f32 %v5770, 1.0
      %v5772 = vmul.f32 %v5771, %v5416
      %v5773 = vand.u32 2147483647, %v5416
      %vm5774 = vcmp.lt.f32.partialorder %v5773, 0.0004427343
      %v5775 = vsel %vm5774, %v5772, %v5769
      %v5776 = vadd.f32 %v5418, 1.0
      %v5777 = vlog2.pop %v5776
      %v5778 = vmul.f32 %v5777, 0.6931472
      %v5779 = vmul.f32 -0.5, %v5418
      %v5780 = vadd.f32 %v5779, 1.0
      %v5781 = vmul.f32 %v5780, %v5418
      %v5782 = vand.u32 2147483647, %v5418
      %vm5783 = vcmp.lt.f32.partialorder %v5782, 0.0004427343
      %v5784 = vsel %vm5783, %v5781, %v5778
      %v5785 = vadd.f32 %v5420, 1.0
      %v5786 = vlog2.pop %v5785
      %v5787 = vmul.f32 %v5786, 0.6931472
      %v5788 = vmul.f32 -0.5, %v5420
      %v5789 = vadd.f32 %v5788, 1.0
      %v5790 = vmul.f32 %v5789, %v5420
      %v5791 = vand.u32 2147483647, %v5420
      %vm5792 = vcmp.lt.f32.partialorder %v5791, 0.0004427343
      %v5793 = vsel %vm5792, %v5790, %v5787
      %v5794 = vadd.f32 %v5422, 1.0
      %v5795 = vlog2.pop %v5794
      %v5796 = vmul.f32 %v5795, 0.6931472
      %v5797 = vmul.f32 -0.5, %v5422
      %v5798 = vadd.f32 %v5797, 1.0
      %v5799 = vmul.f32 %v5798, %v5422
      %v5800 = vand.u32 2147483647, %v5422
      %vm5801 = vcmp.lt.f32.partialorder %v5800, 0.0004427343
      %v5802 = vsel %vm5801, %v5799, %v5796
      %v5803 = vadd.f32 %v5424, 1.0
      %v5804 = vlog2.pop %v5803
      %v5805 = vmul.f32 %v5804, 0.6931472
      %v5806 = vmul.f32 -0.5, %v5424
      %v5807 = vadd.f32 %v5806, 1.0
      %v5808 = vmul.f32 %v5807, %v5424
      %v5809 = vand.u32 2147483647, %v5424
      %vm5810 = vcmp.lt.f32.partialorder %v5809, 0.0004427343
      %v5811 = vsel %vm5810, %v5808, %v5805
      %v5812 = vadd.f32 %v5426, 1.0
      %v5813 = vlog2.pop %v5812
      %v5814 = vmul.f32 %v5813, 0.6931472
      %v5815 = vmul.f32 -0.5, %v5426
      %v5816 = vadd.f32 %v5815, 1.0
      %v5817 = vmul.f32 %v5816, %v5426
      %v5818 = vand.u32 2147483647, %v5426
      %vm5819 = vcmp.lt.f32.partialorder %v5818, 0.0004427343
      %v5820 = vsel %vm5819, %v5817, %v5814
      %v5821 = vadd.f32 %v5428, 1.0
      %v5822 = vlog2.pop %v5821
      %v5823 = vmul.f32 %v5822, 0.6931472
      %v5824 = vmul.f32 -0.5, %v5428
      %v5825 = vadd.f32 %v5824, 1.0
      %v5826 = vmul.f32 %v5825, %v5428
      %v5827 = vand.u32 2147483647, %v5428
      %vm5828 = vcmp.lt.f32.partialorder %v5827, 0.0004427343
      %v5829 = vsel %vm5828, %v5826, %v5823
      %v5830 = vadd.f32 %v5430, 1.0
      %v5831 = vlog2.pop %v5830
      %v5832 = vmul.f32 %v5831, 0.6931472
      %v5833 = vmul.f32 -0.5, %v5430
      %v5834 = vadd.f32 %v5833, 1.0
      %v5835 = vmul.f32 %v5834, %v5430
      %v5836 = vand.u32 2147483647, %v5430
      %vm5837 = vcmp.lt.f32.partialorder %v5836, 0.0004427343
      %v5838 = vsel %vm5837, %v5835, %v5832
      %v5839 = vadd.f32 %v5432, 1.0
      %v5840 = vlog2.pop %v5839
      %v5841 = vmul.f32 %v5840, 0.6931472
      %v5842 = vmul.f32 -0.5, %v5432
      %v5843 = vadd.f32 %v5842, 1.0
      %v5844 = vmul.f32 %v5843, %v5432
      %v5845 = vand.u32 2147483647, %v5432
      %vm5846 = vcmp.lt.f32.partialorder %v5845, 0.0004427343
      %v5847 = vsel %vm5846, %v5844, %v5841
      %v5848 = vadd.f32 %v5434, 1.0
      %v5849 = vlog2.pop %v5848
      %v5850 = vmul.f32 %v5849, 0.6931472
      %v5851 = vmul.f32 -0.5, %v5434
      %v5852 = vadd.f32 %v5851, 1.0
      %v5853 = vmul.f32 %v5852, %v5434
      %v5854 = vand.u32 2147483647, %v5434
      %vm5855 = vcmp.lt.f32.partialorder %v5854, 0.0004427343
      %v5856 = vsel %vm5855, %v5853, %v5850
      %v5857 = vadd.f32 %v5436, 1.0
      %v5858 = vlog2.pop %v5857
      %v5859 = vmul.f32 %v5858, 0.6931472
      %v5860 = vmul.f32 -0.5, %v5436
      %v5861 = vadd.f32 %v5860, 1.0
      %v5862 = vmul.f32 %v5861, %v5436
      %v5863 = vand.u32 2147483647, %v5436
      %vm5864 = vcmp.lt.f32.partialorder %v5863, 0.0004427343
      %v5865 = vsel %vm5864, %v5862, %v5859
      %v5866 = vadd.f32 %v5438, 1.0
      %v5867 = vlog2.pop %v5866
      %v5868 = vmul.f32 %v5867, 0.6931472
      %v5869 = vmul.f32 -0.5, %v5438
      %v5870 = vadd.f32 %v5869, 1.0
      %v5871 = vmul.f32 %v5870, %v5438
      %v5872 = vand.u32 2147483647, %v5438
      %vm5873 = vcmp.lt.f32.partialorder %v5872, 0.0004427343
      %v5874 = vsel %vm5873, %v5871, %v5868
      %v5875 = vadd.f32 %v5440, 1.0
      %v5876 = vlog2.pop %v5875
      %v5877 = vmul.f32 %v5876, 0.6931472
      %v5878 = vmul.f32 -0.5, %v5440
      %v5879 = vadd.f32 %v5878, 1.0
      %v5880 = vmul.f32 %v5879, %v5440
      %v5881 = vand.u32 2147483647, %v5440
      %vm5882 = vcmp.lt.f32.partialorder %v5881, 0.0004427343
      %v5883 = vsel %vm5882, %v5880, %v5877
      %v5884 = vadd.f32 %v5442, 1.0
      %v5885 = vlog2.pop %v5884
      %v5886 = vmul.f32 %v5885, 0.6931472
      %v5887 = vmul.f32 -0.5, %v5442
      %v5888 = vadd.f32 %v5887, 1.0
      %v5889 = vmul.f32 %v5888, %v5442
      %v5890 = vand.u32 2147483647, %v5442
      %vm5891 = vcmp.lt.f32.partialorder %v5890, 0.0004427343
      %v5892 = vsel %vm5891, %v5889, %v5886
      %v5893 = vadd.f32 %v5444, 1.0
      %v5894 = vlog2.pop %v5893
      %v5895 = vmul.f32 %v5894, 0.6931472
      %v5896 = vmul.f32 -0.5, %v5444
      %v5897 = vadd.f32 %v5896, 1.0
      %v5898 = vmul.f32 %v5897, %v5444
      %v5899 = vand.u32 2147483647, %v5444
      %vm5900 = vcmp.lt.f32.partialorder %v5899, 0.0004427343
      %v5901 = vsel %vm5900, %v5898, %v5895
      %v5902 = vadd.f32 %v5446, 1.0
      %v5903 = vlog2.pop %v5902
      %v5904 = vmul.f32 %v5903, 0.6931472
      %v5905 = vmul.f32 -0.5, %v5446
      %v5906 = vadd.f32 %v5905, 1.0
      %v5907 = vmul.f32 %v5906, %v5446
      %v5908 = vand.u32 2147483647, %v5446
      %vm5909 = vcmp.lt.f32.partialorder %v5908, 0.0004427343
      %v5910 = vsel %vm5909, %v5907, %v5904
      %v5911 = vadd.f32 %v5448, 1.0
      %v5912 = vlog2.pop %v5911
      %v5913 = vmul.f32 %v5912, 0.6931472
      %v5914 = vmul.f32 -0.5, %v5448
      %v5915 = vadd.f32 %v5914, 1.0
      %v5916 = vmul.f32 %v5915, %v5448
      %v5917 = vand.u32 2147483647, %v5448
      %vm5918 = vcmp.lt.f32.partialorder %v5917, 0.0004427343
      %v5919 = vsel %vm5918, %v5916, %v5913
      %v5920 = vadd.f32 %v5450, 1.0
      %v5921 = vlog2.pop %v5920
      %v5922 = vmul.f32 %v5921, 0.6931472
      %v5923 = vmul.f32 -0.5, %v5450
      %v5924 = vadd.f32 %v5923, 1.0
      %v5925 = vmul.f32 %v5924, %v5450
      %v5926 = vand.u32 2147483647, %v5450
      %vm5927 = vcmp.lt.f32.partialorder %v5926, 0.0004427343
      %v5928 = vsel %vm5927, %v5925, %v5922
      %v5929 = vadd.f32 %v5452, 1.0
      %v5930 = vlog2.pop %v5929
      %v5931 = vmul.f32 %v5930, 0.6931472
      %v5932 = vmul.f32 -0.5, %v5452
      %v5933 = vadd.f32 %v5932, 1.0
      %v5934 = vmul.f32 %v5933, %v5452
      %v5935 = vand.u32 2147483647, %v5452
      %vm5936 = vcmp.lt.f32.partialorder %v5935, 0.0004427343
      %v5937 = vsel %vm5936, %v5934, %v5931
      %v5938 = vadd.f32 %v5454, 1.0
      %v5939 = vlog2.pop %v5938
      %v5940 = vmul.f32 %v5939, 0.6931472
      %v5941 = vmul.f32 -0.5, %v5454
      %v5942 = vadd.f32 %v5941, 1.0
      %v5943 = vmul.f32 %v5942, %v5454
      %v5944 = vand.u32 2147483647, %v5454
      %vm5945 = vcmp.lt.f32.partialorder %v5944, 0.0004427343
      %v5946 = vsel %vm5945, %v5943, %v5940
      %v5947 = vadd.f32 %v5456, 1.0
      %v5948 = vlog2.pop %v5947
      %v5949 = vmul.f32 %v5948, 0.6931472
      %v5950 = vmul.f32 -0.5, %v5456
      %v5951 = vadd.f32 %v5950, 1.0
      %v5952 = vmul.f32 %v5951, %v5456
      %v5953 = vand.u32 2147483647, %v5456
      %vm5954 = vcmp.lt.f32.partialorder %v5953, 0.0004427343
      %v5955 = vsel %vm5954, %v5952, %v5949
      %v5956 = vadd.f32 %v5458, 1.0
      %v5957 = vlog2.pop %v5956
      %v5958 = vmul.f32 %v5957, 0.6931472
      %v5959 = vmul.f32 -0.5, %v5458
      %v5960 = vadd.f32 %v5959, 1.0
      %v5961 = vmul.f32 %v5960, %v5458
      %v5962 = vand.u32 2147483647, %v5458
      %vm5963 = vcmp.lt.f32.partialorder %v5962, 0.0004427343
      %v5964 = vsel %vm5963, %v5961, %v5958
      %v5965 = vadd.f32 %v5460, 1.0
      %v5966 = vlog2.pop %v5965
      %v5967 = vmul.f32 %v5966, 0.6931472
      %v5968 = vmul.f32 -0.5, %v5460
      %v5969 = vadd.f32 %v5968, 1.0
      %v5970 = vmul.f32 %v5969, %v5460
      %v5971 = vand.u32 2147483647, %v5460
      %vm5972 = vcmp.lt.f32.partialorder %v5971, 0.0004427343
      %v5973 = vsel %vm5972, %v5970, %v5967
      %v5974 = vadd.f32 %v5462, 1.0
      %v5975 = vlog2.pop %v5974
      %v5976 = vmul.f32 %v5975, 0.6931472
      %v5977 = vmul.f32 -0.5, %v5462
      %v5978 = vadd.f32 %v5977, 1.0
      %v5979 = vmul.f32 %v5978, %v5462
      %v5980 = vand.u32 2147483647, %v5462
      %vm5981 = vcmp.lt.f32.partialorder %v5980, 0.0004427343
      %v5982 = vsel %vm5981, %v5979, %v5976
      %v5983 = vadd.f32 %v5464, 1.0
      %v5984 = vlog2.pop %v5983
      %v5985 = vmul.f32 %v5984, 0.6931472
      %v5986 = vmul.f32 -0.5, %v5464
      %v5987 = vadd.f32 %v5986, 1.0
      %v5988 = vmul.f32 %v5987, %v5464
      %v5989 = vand.u32 2147483647, %v5464
      %vm5990 = vcmp.lt.f32.partialorder %v5989, 0.0004427343
      %v5991 = vsel %vm5990, %v5988, %v5985
      %v5992 = vadd.f32 %v5466, 1.0
      %v5993 = vlog2.pop %v5992
      %v5994 = vmul.f32 %v5993, 0.6931472
      %v5995 = vmul.f32 -0.5, %v5466
      %v5996 = vadd.f32 %v5995, 1.0
      %v5997 = vmul.f32 %v5996, %v5466
      %v5998 = vand.u32 2147483647, %v5466
      %vm5999 = vcmp.lt.f32.partialorder %v5998, 0.0004427343
      %v6000 = vsel %vm5999, %v5997, %v5994
      %v6001 = vadd.f32 %v5468, 1.0
      %v6002 = vlog2.pop %v6001
      %v6003 = vmul.f32 %v6002, 0.6931472
      %v6004 = vmul.f32 -0.5, %v5468
      %v6005 = vadd.f32 %v6004, 1.0
      %v6006 = vmul.f32 %v6005, %v5468
      %v6007 = vand.u32 2147483647, %v5468
      %vm6008 = vcmp.lt.f32.partialorder %v6007, 0.0004427343
      %v6009 = vsel %vm6008, %v6006, %v6003
      %v6010 = vadd.f32 %v5470, 1.0
      %v6011 = vlog2.pop %v6010
      %v6012 = vmul.f32 %v6011, 0.6931472
      %v6013 = vmul.f32 -0.5, %v5470
      %v6014 = vadd.f32 %v6013, 1.0
      %v6015 = vmul.f32 %v6014, %v5470
      %v6016 = vand.u32 2147483647, %v5470
      %vm6017 = vcmp.lt.f32.partialorder %v6016, 0.0004427343
      %v6018 = vsel %vm6017, %v6015, %v6012
      %v6019 = vadd.f32 %v5472, 1.0
      %v6020 = vlog2.pop %v6019
      %v6021 = vmul.f32 %v6020, 0.6931472
      %v6022 = vmul.f32 -0.5, %v5472
      %v6023 = vadd.f32 %v6022, 1.0
      %v6024 = vmul.f32 %v6023, %v5472
      %v6025 = vand.u32 2147483647, %v5472
      %vm6026 = vcmp.lt.f32.partialorder %v6025, 0.0004427343
      %v6027 = vsel %vm6026, %v6024, %v6021
      %v6028 = vadd.f32 %v5474, 1.0
      %v6029 = vlog2.pop %v6028
      %v6030 = vmul.f32 %v6029, 0.6931472
      %v6031 = vmul.f32 -0.5, %v5474
      %v6032 = vadd.f32 %v6031, 1.0
      %v6033 = vmul.f32 %v6032, %v5474
      %v6034 = vand.u32 2147483647, %v5474
      %vm6035 = vcmp.lt.f32.partialorder %v6034, 0.0004427343
      %v6036 = vsel %vm6035, %v6033, %v6030
      %v6037 = vadd.f32 %v5476, 1.0
      %v6038 = vlog2.pop %v6037
      %v6039 = vmul.f32 %v6038, 0.6931472
      %v6040 = vmul.f32 -0.5, %v5476
      %v6041 = vadd.f32 %v6040, 1.0
      %v6042 = vmul.f32 %v6041, %v5476
      %v6043 = vand.u32 2147483647, %v5476
      %vm6044 = vcmp.lt.f32.partialorder %v6043, 0.0004427343
      %v6045 = vsel %vm6044, %v6042, %v6039
      %v6046 = vadd.f32 %v5478, 1.0
      %v6047 = vlog2.pop %v6046
      %v6048 = vmul.f32 %v6047, 0.6931472
      %v6049 = vmul.f32 -0.5, %v5478
      %v6050 = vadd.f32 %v6049, 1.0
      %v6051 = vmul.f32 %v6050, %v5478
      %v6052 = vand.u32 2147483647, %v5478
      %vm6053 = vcmp.lt.f32.partialorder %v6052, 0.0004427343
      %v6054 = vsel %vm6053, %v6051, %v6048
      %v6055 = vmul.f32 %v5487, %v1846
      %v6056 = vmul.f32 %v5496, %v1846
      %v6057 = vmul.f32 %v5505, %v1846
      %v6058 = vmul.f32 %v5514, %v1846
      %v6059 = vmul.f32 %v5523, %v1846
      %v6060 = vmul.f32 %v5532, %v1846
      %v6061 = vmul.f32 %v5541, %v1846
      %v6062 = vmul.f32 %v5550, %v1846
      %v6063 = vmul.f32 %v5559, %v1846
      %v6064 = vmul.f32 %v5568, %v1846
      %v6065 = vmul.f32 %v5577, %v1846
      %v6066 = vmul.f32 %v5586, %v1846
      %v6067 = vmul.f32 %v5595, %v1846
      %v6068 = vmul.f32 %v5604, %v1846
      %v6069 = vmul.f32 %v5613, %v1846
      %v6070 = vmul.f32 %v5622, %v1846
      %v6071 = vmul.f32 %v5631, %v1846
      %v6072 = vmul.f32 %v5640, %v1846
      %v6073 = vmul.f32 %v5649, %v1846
      %v6074 = vmul.f32 %v5658, %v1846
      %v6075 = vmul.f32 %v5667, %v1846
      %v6076 = vmul.f32 %v5676, %v1846
      %v6077 = vmul.f32 %v5685, %v1846
      %v6078 = vmul.f32 %v5694, %v1846
      %v6079 = vmul.f32 %v5703, %v1846
      %v6080 = vmul.f32 %v5712, %v1846
      %v6081 = vmul.f32 %v5721, %v1846
      %v6082 = vmul.f32 %v5730, %v1846
      %v6083 = vmul.f32 %v5739, %v1846
      %v6084 = vmul.f32 %v5748, %v1846
      %v6085 = vmul.f32 %v5757, %v1846
      %v6086 = vmul.f32 %v5766, %v1846
      %v6087 = vmul.f32 %v5775, %v1846
      %v6088 = vmul.f32 %v5784, %v1846
      %v6089 = vmul.f32 %v5793, %v1846
      %v6090 = vmul.f32 %v5802, %v1846
      %v6091 = vmul.f32 %v5811, %v1846
      %v6092 = vmul.f32 %v5820, %v1846
      %v6093 = vmul.f32 %v5829, %v1846
      %v6094 = vmul.f32 %v5838, %v1846
      %v6095 = vmul.f32 %v5847, %v1846
      %v6096 = vmul.f32 %v5856, %v1846
      %v6097 = vmul.f32 %v5865, %v1846
      %v6098 = vmul.f32 %v5874, %v1846
      %v6099 = vmul.f32 %v5883, %v1846
      %v6100 = vmul.f32 %v5892, %v1846
      %v6101 = vmul.f32 %v5901, %v1846
      %v6102 = vmul.f32 %v5910, %v1846
      %v6103 = vmul.f32 %v5919, %v1846
      %v6104 = vmul.f32 %v5928, %v1846
      %v6105 = vmul.f32 %v5937, %v1846
      %v6106 = vmul.f32 %v5946, %v1846
      %v6107 = vmul.f32 %v5955, %v1846
      %v6108 = vmul.f32 %v5964, %v1846
      %v6109 = vmul.f32 %v5973, %v1846
      %v6110 = vmul.f32 %v5982, %v1846
      %v6111 = vmul.f32 %v5991, %v1846
      %v6112 = vmul.f32 %v6000, %v1846
      %v6113 = vmul.f32 %v6009, %v1846
      %v6114 = vmul.f32 %v6018, %v1846
      %v6115 = vmul.f32 %v6027, %v1846
      %v6116 = vmul.f32 %v6036, %v1846
      %v6117 = vmul.f32 %v6045, %v1846
      %v6118 = vmul.f32 %v6054, %v1846
      %v6119 = vsel %vm5223, %v5000, %v6055
      %v6120 = vsel %vm5224, %v5002, %v6056
      %v6121 = vsel %vm5225, %v5005, %v6057
      %v6122 = vsel %vm5226, %v5007, %v6058
      %v6123 = vsel %vm5227, %v5010, %v6059
      %v6124 = vsel %vm5228, %v5012, %v6060
      %v6125 = vsel %vm5229, %v5015, %v6061
      %v6126 = vsel %vm5230, %v5017, %v6062
      %v6127 = vsel %vm5231, %v5020, %v6063
      %v6128 = vsel %vm5232, %v5022, %v6064
      %v6129 = vsel %vm5233, %v5025, %v6065
      %v6130 = vsel %vm5234, %v5027, %v6066
      %v6131 = vsel %vm5235, %v5030, %v6067
      %v6132 = vsel %vm5236, %v5032, %v6068
      %v6133 = vsel %vm5237, %v5035, %v6069
      %v6134 = vsel %vm5238, %v5037, %v6070
      %v6135 = vsel %vm5239, %v5040, %v6071
      %v6136 = vsel %vm5240, %v5042, %v6072
      %v6137 = vsel %vm5241, %v5045, %v6073
      %v6138 = vsel %vm5242, %v5047, %v6074
      %v6139 = vsel %vm5243, %v5050, %v6075
      %v6140 = vsel %vm5244, %v5052, %v6076
      %v6141 = vsel %vm5245, %v5055, %v6077
      %v6142 = vsel %vm5246, %v5057, %v6078
      %v6143 = vsel %vm5247, %v5060, %v6079
      %v6144 = vsel %vm5248, %v5062, %v6080
      %v6145 = vsel %vm5249, %v5065, %v6081
      %v6146 = vsel %vm5250, %v5067, %v6082
      %v6147 = vsel %vm5251, %v5070, %v6083
      %v6148 = vsel %vm5252, %v5072, %v6084
      %v6149 = vsel %vm5253, %v5075, %v6085
      %v6150 = vsel %vm5254, %v5077, %v6086
      %v6151 = vsel %vm5255, %v5080, %v6087
      %v6152 = vsel %vm5256, %v5082, %v6088
      %v6153 = vsel %vm5257, %v5085, %v6089
      %v6154 = vsel %vm5258, %v5087, %v6090
      %v6155 = vsel %vm5259, %v5090, %v6091
      %v6156 = vsel %vm5260, %v5092, %v6092
      %v6157 = vsel %vm5261, %v5095, %v6093
      %v6158 = vsel %vm5262, %v5097, %v6094
      %v6159 = vsel %vm5263, %v5100, %v6095
      %v6160 = vsel %vm5264, %v5102, %v6096
      %v6161 = vsel %vm5265, %v5105, %v6097
      %v6162 = vsel %vm5266, %v5107, %v6098
      %v6163 = vsel %vm5267, %v5110, %v6099
      %v6164 = vsel %vm5268, %v5112, %v6100
      %v6165 = vsel %vm5269, %v5115, %v6101
      %v6166 = vsel %vm5270, %v5117, %v6102
      %v6167 = vsel %vm5271, %v5120, %v6103
      %v6168 = vsel %vm5272, %v5122, %v6104
      %v6169 = vsel %vm5273, %v5125, %v6105
      %v6170 = vsel %vm5274, %v5127, %v6106
      %v6171 = vsel %vm5275, %v5130, %v6107
      %v6172 = vsel %vm5276, %v5132, %v6108
      %v6173 = vsel %vm5277, %v5135, %v6109
      %v6174 = vsel %vm5278, %v5137, %v6110
      %v6175 = vsel %vm5279, %v5140, %v6111
      %v6176 = vsel %vm5280, %v5142, %v6112
      %v6177 = vsel %vm5281, %v5145, %v6113
      %v6178 = vsel %vm5282, %v5147, %v6114
      %v6179 = vsel %vm5283, %v5150, %v6115
      %v6180 = vsel %vm5284, %v5152, %v6116
      %v6181 = vsel %vm5285, %v5155, %v6117
      %v6182 = vsel %vm5286, %v5157, %v6118
      %v6183 = vpack.c.bf16 %v6120, %v6119
      %v6184 = vpack.c.bf16 %v6122, %v6121
      %v6185 = vpack.c.bf16 %v6124, %v6123
      %v6186 = vpack.c.bf16 %v6126, %v6125
      %v6187 = vpack.c.bf16 %v6128, %v6127
      %v6188 = vpack.c.bf16 %v6130, %v6129
      %v6189 = vpack.c.bf16 %v6132, %v6131
      %v6190 = vpack.c.bf16 %v6134, %v6133
      %v6191 = vpack.c.bf16 %v6136, %v6135
      %v6192 = vpack.c.bf16 %v6138, %v6137
      %v6193 = vpack.c.bf16 %v6140, %v6139
      %v6194 = vpack.c.bf16 %v6142, %v6141
      %v6195 = vpack.c.bf16 %v6144, %v6143
      %v6196 = vpack.c.bf16 %v6146, %v6145
      %v6197 = vpack.c.bf16 %v6148, %v6147
      %v6198 = vpack.c.bf16 %v6150, %v6149
      %v6199 = vpack.c.bf16 %v6152, %v6151
      %v6200 = vpack.c.bf16 %v6154, %v6153
      %v6201 = vpack.c.bf16 %v6156, %v6155
      %v6202 = vpack.c.bf16 %v6158, %v6157
      %v6203 = vpack.c.bf16 %v6160, %v6159
      %v6204 = vpack.c.bf16 %v6162, %v6161
      %v6205 = vpack.c.bf16 %v6164, %v6163
      %v6206 = vpack.c.bf16 %v6166, %v6165
      %v6207 = vpack.c.bf16 %v6168, %v6167
      %v6208 = vpack.c.bf16 %v6170, %v6169
      %v6209 = vpack.c.bf16 %v6172, %v6171
      %v6210 = vpack.c.bf16 %v6174, %v6173
      %v6211 = vpack.c.bf16 %v6176, %v6175
      %v6212 = vpack.c.bf16 %v6178, %v6177
      %v6213 = vpack.c.bf16 %v6180, %v6179
      %v6214 = vpack.c.bf16 %v6182, %v6181
      %v6215 = vld [vmem:[%s10] sm:$0xf]
      %v6216 = vld [vmem:[%s10 + $0x4] sm:$0xf]
      %v6217 = vld [vmem:[%s10 + $0x8] sm:$0xf]
      %v6218 = vld [vmem:[%s10 + $0xc] sm:$0xf]
      %v6219 = vld [vmem:[%s10 + $0x10] sm:$0xf]
      %v6220 = vld [vmem:[%s10 + $0x14] sm:$0xf]
      %v6221 = vld [vmem:[%s10 + $0x18] sm:$0xf]
      %v6222 = vld [vmem:[%s10 + $0x1c] sm:$0xf]
      %v6223 = vld [vmem:[%s10 + $0x20] sm:$0xf]
      %v6224 = vld [vmem:[%s10 + $0x24] sm:$0xf]
      %v6225 = vld [vmem:[%s10 + $0x28] sm:$0xf]
      %v6226 = vld [vmem:[%s10 + $0x2c] sm:$0xf]
      %v6227 = vld [vmem:[%s10 + $0x30] sm:$0xf]
      %v6228 = vld [vmem:[%s10 + $0x34] sm:$0xf]
      %v6229 = vld [vmem:[%s10 + $0x38] sm:$0xf]
      %v6230 = vld [vmem:[%s10 + $0x3c] sm:$0xf]
      %v6231 = vld [vmem:[%s11] sm:$0x1]
      %v6233 = vperm.slane %v6231, 0
      %v6251 = vunpack.c.l.b16 %v6215
      %v6252 = vunpack.c.l.b16 %v6216
      %v6253 = vunpack.c.l.b16 %v6217
      %v6254 = vunpack.c.l.b16 %v6218
      %v6255 = vunpack.c.l.b16 %v6219
      %v6256 = vunpack.c.l.b16 %v6220
      %v6257 = vunpack.c.l.b16 %v6221
      %v6258 = vunpack.c.l.b16 %v6222
      %v6259 = vunpack.c.l.b16 %v6223
      %v6260 = vunpack.c.l.b16 %v6224
      %v6261 = vunpack.c.l.b16 %v6225
      %v6262 = vunpack.c.l.b16 %v6226
      %v6263 = vunpack.c.l.b16 %v6227
      %v6264 = vunpack.c.l.b16 %v6228
      %v6265 = vunpack.c.l.b16 %v6229
      %v6266 = vunpack.c.l.b16 %v6230
      %v6267 = vpack.c.b16 %v6252, %v6251
      %v6268 = vpack.c.b16 %v6254, %v6253
      %v6269 = vpack.c.b16 %v6256, %v6255
      %v6270 = vpack.c.b16 %v6258, %v6257
      %v6271 = vpack.c.b16 %v6260, %v6259
      %v6272 = vpack.c.b16 %v6262, %v6261
      %v6273 = vpack.c.b16 %v6264, %v6263
      %v6274 = vpack.c.b16 %v6266, %v6265
      %6283 = vmatpush.bf16.msra.mxu0 %v6274
      %6284 = vmatpush.bf16.msra.mxu0 %v6273
      %6285 = vmatpush.bf16.msra.mxu0 %v6272
      %6286 = vmatpush.bf16.msra.mxu0 %v6271
      %6287 = vmatpush.bf16.msra.mxu0 %v6270
      %6288 = vmatpush.bf16.msra.mxu0 %v6269
      %6289 = vmatpush.bf16.msra.mxu0 %v6268
      %6290 = vmatpush.bf16.msra.mxu0 %v6267
      %6291 = vmatmul.bf16.gmra.mxu0 %v6183
      %v6292 = vpop.f32.mrf.mxu0
      %v6293 = vadd.f32 %v6233, %v6292
      %v6294 = vpop.f32.mrf.mxu0
      %v6295 = vadd.f32 %v6233, %v6294
      %6296 = vmatmul.bf16.gmra.mxu0 %v6184
      %v6297 = vpop.f32.mrf.mxu0
      %v6298 = vadd.f32 %v6233, %v6297
      %v6299 = vpop.f32.mrf.mxu0
      %v6300 = vadd.f32 %v6233, %v6299
      %6301 = vmatmul.bf16.gmra.mxu0 %v6185
      %v6302 = vpop.f32.mrf.mxu0
      %v6303 = vadd.f32 %v6233, %v6302
      %v6304 = vpop.f32.mrf.mxu0
      %v6305 = vadd.f32 %v6233, %v6304
      %6306 = vmatmul.bf16.gmra.mxu0 %v6186
      %v6307 = vpop.f32.mrf.mxu0
      %v6308 = vadd.f32 %v6233, %v6307
      %v6309 = vpop.f32.mrf.mxu0
      %v6310 = vadd.f32 %v6233, %v6309
      %6311 = vmatmul.bf16.gmra.mxu0 %v6187
      %v6312 = vpop.f32.mrf.mxu0
      %v6313 = vadd.f32 %v6233, %v6312
      %v6314 = vpop.f32.mrf.mxu0
      %v6315 = vadd.f32 %v6233, %v6314
      %6316 = vmatmul.bf16.gmra.mxu0 %v6188
      %v6317 = vpop.f32.mrf.mxu0
      %v6318 = vadd.f32 %v6233, %v6317
      %v6319 = vpop.f32.mrf.mxu0
      %v6320 = vadd.f32 %v6233, %v6319
      %6321 = vmatmul.bf16.gmra.mxu0 %v6189
      %v6322 = vpop.f32.mrf.mxu0
      %v6323 = vadd.f32 %v6233, %v6322
      %v6324 = vpop.f32.mrf.mxu0
      %v6325 = vadd.f32 %v6233, %v6324
      %6326 = vmatmul.bf16.gmra.mxu0 %v6190
      %v6327 = vpop.f32.mrf.mxu0
      %v6328 = vadd.f32 %v6233, %v6327
      %v6329 = vpop.f32.mrf.mxu0
      %v6330 = vadd.f32 %v6233, %v6329
      %6331 = vmatmul.bf16.gmra.mxu0 %v6191
      %v6332 = vpop.f32.mrf.mxu0
      %v6333 = vadd.f32 %v6233, %v6332
      %v6334 = vpop.f32.mrf.mxu0
      %v6335 = vadd.f32 %v6233, %v6334
      %6336 = vmatmul.bf16.gmra.mxu0 %v6192
      %v6337 = vpop.f32.mrf.mxu0
      %v6338 = vadd.f32 %v6233, %v6337
      %v6339 = vpop.f32.mrf.mxu0
      %v6340 = vadd.f32 %v6233, %v6339
      %6341 = vmatmul.bf16.gmra.mxu0 %v6193
      %v6342 = vpop.f32.mrf.mxu0
      %v6343 = vadd.f32 %v6233, %v6342
      %v6344 = vpop.f32.mrf.mxu0
      %v6345 = vadd.f32 %v6233, %v6344
      %6346 = vmatmul.bf16.gmra.mxu0 %v6194
      %v6347 = vpop.f32.mrf.mxu0
      %v6348 = vadd.f32 %v6233, %v6347
      %v6349 = vpop.f32.mrf.mxu0
      %v6350 = vadd.f32 %v6233, %v6349
      %6351 = vmatmul.bf16.gmra.mxu0 %v6195
      %v6352 = vpop.f32.mrf.mxu0
      %v6353 = vadd.f32 %v6233, %v6352
      %v6354 = vpop.f32.mrf.mxu0
      %v6355 = vadd.f32 %v6233, %v6354
      %6356 = vmatmul.bf16.gmra.mxu0 %v6196
      %v6357 = vpop.f32.mrf.mxu0
      %v6358 = vadd.f32 %v6233, %v6357
      %v6359 = vpop.f32.mrf.mxu0
      %v6360 = vadd.f32 %v6233, %v6359
      %6361 = vmatmul.bf16.gmra.mxu0 %v6197
      %v6362 = vpop.f32.mrf.mxu0
      %v6363 = vadd.f32 %v6233, %v6362
      %v6364 = vpop.f32.mrf.mxu0
      %v6365 = vadd.f32 %v6233, %v6364
      %6366 = vmatmul.bf16.gmra.mxu0 %v6198
      %v6367 = vpop.f32.mrf.mxu0
      %v6368 = vadd.f32 %v6233, %v6367
      %v6369 = vpop.f32.mrf.mxu0
      %v6370 = vadd.f32 %v6233, %v6369
      %6371 = vmatmul.bf16.gmra.mxu0 %v6199
      %v6372 = vpop.f32.mrf.mxu0
      %v6373 = vadd.f32 %v6233, %v6372
      %v6374 = vpop.f32.mrf.mxu0
      %v6375 = vadd.f32 %v6233, %v6374
      %6376 = vmatmul.bf16.gmra.mxu0 %v6200
      %v6377 = vpop.f32.mrf.mxu0
      %v6378 = vadd.f32 %v6233, %v6377
      %v6379 = vpop.f32.mrf.mxu0
      %v6380 = vadd.f32 %v6233, %v6379
      %6381 = vmatmul.bf16.gmra.mxu0 %v6201
      %v6382 = vpop.f32.mrf.mxu0
      %v6383 = vadd.f32 %v6233, %v6382
      %v6384 = vpop.f32.mrf.mxu0
      %v6385 = vadd.f32 %v6233, %v6384
      %6386 = vmatmul.bf16.gmra.mxu0 %v6202
      %v6387 = vpop.f32.mrf.mxu0
      %v6388 = vadd.f32 %v6233, %v6387
      %v6389 = vpop.f32.mrf.mxu0
      %v6390 = vadd.f32 %v6233, %v6389
      %6391 = vmatmul.bf16.gmra.mxu0 %v6203
      %v6392 = vpop.f32.mrf.mxu0
      %v6393 = vadd.f32 %v6233, %v6392
      %v6394 = vpop.f32.mrf.mxu0
      %v6395 = vadd.f32 %v6233, %v6394
      %6396 = vmatmul.bf16.gmra.mxu0 %v6204
      %v6397 = vpop.f32.mrf.mxu0
      %v6398 = vadd.f32 %v6233, %v6397
      %v6399 = vpop.f32.mrf.mxu0
      %v6400 = vadd.f32 %v6233, %v6399
      %6401 = vmatmul.bf16.gmra.mxu0 %v6205
      %v6402 = vpop.f32.mrf.mxu0
      %v6403 = vadd.f32 %v6233, %v6402
      %v6404 = vpop.f32.mrf.mxu0
      %v6405 = vadd.f32 %v6233, %v6404
      %6406 = vmatmul.bf16.gmra.mxu0 %v6206
      %v6407 = vpop.f32.mrf.mxu0
      %v6408 = vadd.f32 %v6233, %v6407
      %v6409 = vpop.f32.mrf.mxu0
      %v6410 = vadd.f32 %v6233, %v6409
      %6411 = vmatmul.bf16.gmra.mxu0 %v6207
      %v6412 = vpop.f32.mrf.mxu0
      %v6413 = vadd.f32 %v6233, %v6412
      %v6414 = vpop.f32.mrf.mxu0
      %v6415 = vadd.f32 %v6233, %v6414
      %6416 = vmatmul.bf16.gmra.mxu0 %v6208
      %v6417 = vpop.f32.mrf.mxu0
      %v6418 = vadd.f32 %v6233, %v6417
      %v6419 = vpop.f32.mrf.mxu0
      %v6420 = vadd.f32 %v6233, %v6419
      %6421 = vmatmul.bf16.gmra.mxu0 %v6209
      %v6422 = vpop.f32.mrf.mxu0
      %v6423 = vadd.f32 %v6233, %v6422
      %v6424 = vpop.f32.mrf.mxu0
      %v6425 = vadd.f32 %v6233, %v6424
      %6426 = vmatmul.bf16.gmra.mxu0 %v6210
      %v6427 = vpop.f32.mrf.mxu0
      %v6428 = vadd.f32 %v6233, %v6427
      %v6429 = vpop.f32.mrf.mxu0
      %v6430 = vadd.f32 %v6233, %v6429
      %6431 = vmatmul.bf16.gmra.mxu0 %v6211
      %v6432 = vpop.f32.mrf.mxu0
      %v6433 = vadd.f32 %v6233, %v6432
      %v6434 = vpop.f32.mrf.mxu0
      %v6435 = vadd.f32 %v6233, %v6434
      %6436 = vmatmul.bf16.gmra.mxu0 %v6212
      %v6437 = vpop.f32.mrf.mxu0
      %v6438 = vadd.f32 %v6233, %v6437
      %v6439 = vpop.f32.mrf.mxu0
      %v6440 = vadd.f32 %v6233, %v6439
      %6441 = vmatmul.bf16.gmra.mxu0 %v6213
      %v6442 = vpop.f32.mrf.mxu0
      %v6443 = vadd.f32 %v6233, %v6442
      %v6444 = vpop.f32.mrf.mxu0
      %v6445 = vadd.f32 %v6233, %v6444
      %6446 = vmatmul.bf16.gmra.mxu0 %v6214
      %v6447 = vpop.f32.mrf.mxu0
      %v6448 = vadd.f32 %v6233, %v6447
      %v6449 = vpop.f32.mrf.mxu0
      %v6450 = vadd.f32 %v6233, %v6449
      %6451 = vdwg.mxu0
      %v6452 = vlaneseq
      %v6453 = vand.u32 %v6452, 127
      %vm6454 = vcmp.eq.s32.totalorder %v6453, 0
      %v6455 = vmul.f32 %v6293, 10.0
      %v6456 = vmul.f32 %v6295, 10.0
      %v6457 = vmul.f32 %v6298, 10.0
      %v6458 = vmul.f32 %v6300, 10.0
      %v6459 = vmul.f32 %v6303, 10.0
      %v6460 = vmul.f32 %v6305, 10.0
      %v6461 = vmul.f32 %v6308, 10.0
      %v6462 = vmul.f32 %v6310, 10.0
      %v6463 = vmul.f32 %v6313, 10.0
      %v6464 = vmul.f32 %v6315, 10.0
      %v6465 = vmul.f32 %v6318, 10.0
      %v6466 = vmul.f32 %v6320, 10.0
      %v6467 = vmul.f32 %v6323, 10.0
      %v6468 = vmul.f32 %v6325, 10.0
      %v6469 = vmul.f32 %v6328, 10.0
      %v6470 = vmul.f32 %v6330, 10.0
      %v6471 = vmul.f32 %v6333, 10.0
      %v6472 = vmul.f32 %v6335, 10.0
      %v6473 = vmul.f32 %v6338, 10.0
      %v6474 = vmul.f32 %v6340, 10.0
      %v6475 = vmul.f32 %v6343, 10.0
      %v6476 = vmul.f32 %v6345, 10.0
      %v6477 = vmul.f32 %v6348, 10.0
      %v6478 = vmul.f32 %v6350, 10.0
      %v6479 = vmul.f32 %v6353, 10.0
      %v6480 = vmul.f32 %v6355, 10.0
      %v6481 = vmul.f32 %v6358, 10.0
      %v6482 = vmul.f32 %v6360, 10.0
      %v6483 = vmul.f32 %v6363, 10.0
      %v6484 = vmul.f32 %v6365, 10.0
      %v6485 = vmul.f32 %v6368, 10.0
      %v6486 = vmul.f32 %v6370, 10.0
      %v6487 = vmul.f32 %v6373, 10.0
      %v6488 = vmul.f32 %v6375, 10.0
      %v6489 = vmul.f32 %v6378, 10.0
      %v6490 = vmul.f32 %v6380, 10.0
      %v6491 = vmul.f32 %v6383, 10.0
      %v6492 = vmul.f32 %v6385, 10.0
      %v6493 = vmul.f32 %v6388, 10.0
      %v6494 = vmul.f32 %v6390, 10.0
      %v6495 = vmul.f32 %v6393, 10.0
      %v6496 = vmul.f32 %v6395, 10.0
      %v6497 = vmul.f32 %v6398, 10.0
      %v6498 = vmul.f32 %v6400, 10.0
      %v6499 = vmul.f32 %v6403, 10.0
      %v6500 = vmul.f32 %v6405, 10.0
      %v6501 = vmul.f32 %v6408, 10.0
      %v6502 = vmul.f32 %v6410, 10.0
      %v6503 = vmul.f32 %v6413, 10.0
      %v6504 = vmul.f32 %v6415, 10.0
      %v6505 = vmul.f32 %v6418, 10.0
      %v6506 = vmul.f32 %v6420, 10.0
      %v6507 = vmul.f32 %v6423, 10.0
      %v6508 = vmul.f32 %v6425, 10.0
      %v6509 = vmul.f32 %v6428, 10.0
      %v6510 = vmul.f32 %v6430, 10.0
      %v6511 = vmul.f32 %v6433, 10.0
      %v6512 = vmul.f32 %v6435, 10.0
      %v6513 = vmul.f32 %v6438, 10.0
      %v6514 = vmul.f32 %v6440, 10.0
      %v6515 = vmul.f32 %v6443, 10.0
      %v6516 = vmul.f32 %v6445, 10.0
      %v6517 = vmul.f32 %v6448, 10.0
      %v6518 = vmul.f32 %v6450, 10.0
      %v6519 = vmul.f32 %v6455, 1.442695
      %v6520 = vpow.pop %v6519
      %v6521 = vmul.f32 %v6456, 1.442695
      %v6522 = vpow.pop %v6521
      %v6523 = vmul.f32 %v6457, 1.442695
      %v6524 = vpow.pop %v6523
      %v6525 = vmul.f32 %v6458, 1.442695
      %v6526 = vpow.pop %v6525
      %v6527 = vmul.f32 %v6459, 1.442695
      %v6528 = vpow.pop %v6527
      %v6529 = vmul.f32 %v6460, 1.442695
      %v6530 = vpow.pop %v6529
      %v6531 = vmul.f32 %v6461, 1.442695
      %v6532 = vpow.pop %v6531
      %v6533 = vmul.f32 %v6462, 1.442695
      %v6534 = vpow.pop %v6533
      %v6535 = vmul.f32 %v6463, 1.442695
      %v6536 = vpow.pop %v6535
      %v6537 = vmul.f32 %v6464, 1.442695
      %v6538 = vpow.pop %v6537
      %v6539 = vmul.f32 %v6465, 1.442695
      %v6540 = vpow.pop %v6539
      %v6541 = vmul.f32 %v6466, 1.442695
      %v6542 = vpow.pop %v6541
      %v6543 = vmul.f32 %v6467, 1.442695
      %v6544 = vpow.pop %v6543
      %v6545 = vmul.f32 %v6468, 1.442695
      %v6546 = vpow.pop %v6545
      %v6547 = vmul.f32 %v6469, 1.442695
      %v6548 = vpow.pop %v6547
      %v6549 = vmul.f32 %v6470, 1.442695
      %v6550 = vpow.pop %v6549
      %v6551 = vmul.f32 %v6471, 1.442695
      %v6552 = vpow.pop %v6551
      %v6553 = vmul.f32 %v6472, 1.442695
      %v6554 = vpow.pop %v6553
      %v6555 = vmul.f32 %v6473, 1.442695
      %v6556 = vpow.pop %v6555
      %v6557 = vmul.f32 %v6474, 1.442695
      %v6558 = vpow.pop %v6557
      %v6559 = vmul.f32 %v6475, 1.442695
      %v6560 = vpow.pop %v6559
      %v6561 = vmul.f32 %v6476, 1.442695
      %v6562 = vpow.pop %v6561
      %v6563 = vmul.f32 %v6477, 1.442695
      %v6564 = vpow.pop %v6563
      %v6565 = vmul.f32 %v6478, 1.442695
      %v6566 = vpow.pop %v6565
      %v6567 = vmul.f32 %v6479, 1.442695
      %v6568 = vpow.pop %v6567
      %v6569 = vmul.f32 %v6480, 1.442695
      %v6570 = vpow.pop %v6569
      %v6571 = vmul.f32 %v6481, 1.442695
      %v6572 = vpow.pop %v6571
      %v6573 = vmul.f32 %v6482, 1.442695
      %v6574 = vpow.pop %v6573
      %v6575 = vmul.f32 %v6483, 1.442695
      %v6576 = vpow.pop %v6575
      %v6577 = vmul.f32 %v6484, 1.442695
      %v6578 = vpow.pop %v6577
      %v6579 = vmul.f32 %v6485, 1.442695
      %v6580 = vpow.pop %v6579
      %v6581 = vmul.f32 %v6486, 1.442695
      %v6582 = vpow.pop %v6581
      %v6583 = vmul.f32 %v6487, 1.442695
      %v6584 = vpow.pop %v6583
      %v6585 = vmul.f32 %v6488, 1.442695
      %v6586 = vpow.pop %v6585
      %v6587 = vmul.f32 %v6489, 1.442695
      %v6588 = vpow.pop %v6587
      %v6589 = vmul.f32 %v6490, 1.442695
      %v6590 = vpow.pop %v6589
      %v6591 = vmul.f32 %v6491, 1.442695
      %v6592 = vpow.pop %v6591
      %v6593 = vmul.f32 %v6492, 1.442695
      %v6594 = vpow.pop %v6593
      %v6595 = vmul.f32 %v6493, 1.442695
      %v6596 = vpow.pop %v6595
      %v6597 = vmul.f32 %v6494, 1.442695
      %v6598 = vpow.pop %v6597
      %v6599 = vmul.f32 %v6495, 1.442695
      %v6600 = vpow.pop %v6599
      %v6601 = vmul.f32 %v6496, 1.442695
      %v6602 = vpow.pop %v6601
      %v6603 = vmul.f32 %v6497, 1.442695
      %v6604 = vpow.pop %v6603
      %v6605 = vmul.f32 %v6498, 1.442695
      %v6606 = vpow.pop %v6605
      %v6607 = vmul.f32 %v6499, 1.442695
      %v6608 = vpow.pop %v6607
      %v6609 = vmul.f32 %v6500, 1.442695
      %v6610 = vpow.pop %v6609
      %v6611 = vmul.f32 %v6501, 1.442695
      %v6612 = vpow.pop %v6611
      %v6613 = vmul.f32 %v6502, 1.442695
      %v6614 = vpow.pop %v6613
      %v6615 = vmul.f32 %v6503, 1.442695
      %v6616 = vpow.pop %v6615
      %v6617 = vmul.f32 %v6504, 1.442695
      %v6618 = vpow.pop %v6617
      %v6619 = vmul.f32 %v6505, 1.442695
      %v6620 = vpow.pop %v6619
      %v6621 = vmul.f32 %v6506, 1.442695
      %v6622 = vpow.pop %v6621
      %v6623 = vmul.f32 %v6507, 1.442695
      %v6624 = vpow.pop %v6623
      %v6625 = vmul.f32 %v6508, 1.442695
      %v6626 = vpow.pop %v6625
      %v6627 = vmul.f32 %v6509, 1.442695
      %v6628 = vpow.pop %v6627
      %v6629 = vmul.f32 %v6510, 1.442695
      %v6630 = vpow.pop %v6629
      %v6631 = vmul.f32 %v6511, 1.442695
      %v6632 = vpow.pop %v6631
      %v6633 = vmul.f32 %v6512, 1.442695
      %v6634 = vpow.pop %v6633
      %v6635 = vmul.f32 %v6513, 1.442695
      %v6636 = vpow.pop %v6635
      %v6637 = vmul.f32 %v6514, 1.442695
      %v6638 = vpow.pop %v6637
      %v6639 = vmul.f32 %v6515, 1.442695
      %v6640 = vpow.pop %v6639
      %v6641 = vmul.f32 %v6516, 1.442695
      %v6642 = vpow.pop %v6641
      %v6643 = vmul.f32 %v6517, 1.442695
      %v6644 = vpow.pop %v6643
      %v6645 = vmul.f32 %v6518, 1.442695
      %v6646 = vpow.pop %v6645
      %v6647 = vadd.f32 %v6520, 1.0
      %v6648 = vadd.f32 %v6522, 1.0
      %v6649 = vadd.f32 %v6524, 1.0
      %v6650 = vadd.f32 %v6526, 1.0
      %v6651 = vadd.f32 %v6528, 1.0
      %v6652 = vadd.f32 %v6530, 1.0
      %v6653 = vadd.f32 %v6532, 1.0
      %v6654 = vadd.f32 %v6534, 1.0
      %v6655 = vadd.f32 %v6536, 1.0
      %v6656 = vadd.f32 %v6538, 1.0
      %v6657 = vadd.f32 %v6540, 1.0
      %v6658 = vadd.f32 %v6542, 1.0
      %v6659 = vadd.f32 %v6544, 1.0
      %v6660 = vadd.f32 %v6546, 1.0
      %v6661 = vadd.f32 %v6548, 1.0
      %v6662 = vadd.f32 %v6550, 1.0
      %v6663 = vadd.f32 %v6552, 1.0
      %v6664 = vadd.f32 %v6554, 1.0
      %v6665 = vadd.f32 %v6556, 1.0
      %v6666 = vadd.f32 %v6558, 1.0
      %v6667 = vadd.f32 %v6560, 1.0
      %v6668 = vadd.f32 %v6562, 1.0
      %v6669 = vadd.f32 %v6564, 1.0
      %v6670 = vadd.f32 %v6566, 1.0
      %v6671 = vadd.f32 %v6568, 1.0
      %v6672 = vadd.f32 %v6570, 1.0
      %v6673 = vadd.f32 %v6572, 1.0
      %v6674 = vadd.f32 %v6574, 1.0
      %v6675 = vadd.f32 %v6576, 1.0
      %v6676 = vadd.f32 %v6578, 1.0
      %v6677 = vadd.f32 %v6580, 1.0
      %v6678 = vadd.f32 %v6582, 1.0
      %v6679 = vadd.f32 %v6584, 1.0
      %v6680 = vadd.f32 %v6586, 1.0
      %v6681 = vadd.f32 %v6588, 1.0
      %v6682 = vadd.f32 %v6590, 1.0
      %v6683 = vadd.f32 %v6592, 1.0
      %v6684 = vadd.f32 %v6594, 1.0
      %v6685 = vadd.f32 %v6596, 1.0
      %v6686 = vadd.f32 %v6598, 1.0
      %v6687 = vadd.f32 %v6600, 1.0
      %v6688 = vadd.f32 %v6602, 1.0
      %v6689 = vadd.f32 %v6604, 1.0
      %v6690 = vadd.f32 %v6606, 1.0
      %v6691 = vadd.f32 %v6608, 1.0
      %v6692 = vadd.f32 %v6610, 1.0
      %v6693 = vadd.f32 %v6612, 1.0
      %v6694 = vadd.f32 %v6614, 1.0
      %v6695 = vadd.f32 %v6616, 1.0
      %v6696 = vadd.f32 %v6618, 1.0
      %v6697 = vadd.f32 %v6620, 1.0
      %v6698 = vadd.f32 %v6622, 1.0
      %v6699 = vadd.f32 %v6624, 1.0
      %v6700 = vadd.f32 %v6626, 1.0
      %v6701 = vadd.f32 %v6628, 1.0
      %v6702 = vadd.f32 %v6630, 1.0
      %v6703 = vadd.f32 %v6632, 1.0
      %v6704 = vadd.f32 %v6634, 1.0
      %v6705 = vadd.f32 %v6636, 1.0
      %v6706 = vadd.f32 %v6638, 1.0
      %v6707 = vadd.f32 %v6640, 1.0
      %v6708 = vadd.f32 %v6642, 1.0
      %v6709 = vadd.f32 %v6644, 1.0
      %v6710 = vadd.f32 %v6646, 1.0
      %v6711 = vrcp.pop %v6647
      %v6712 = vmul.f32 %v6647, %v6711
      %v6713 = vsub.f32 1.0, %v6712
      %v6714 = vmul.f32 %v6711, %v6713
      %v6715 = vadd.f32 %v6711, %v6714
      %vm6716 = vweird.f32 %v6647
      %vm6717 = vweird.f32 %v6711
      %vm6718 = vmor %vm6716, %vm6717
      %v6719 = vsel %vm6718, %v6711, %v6715
      %v6720 = vand.u32 2147483647, %v6647
      %vm6721 = vcmp.eq.f32.partialorder %v6720, 8.507059e+37
      %v6722 = vand.u32 %v6647, 2147483648
      %v6723 = vor.u32 1.1754944e-38, %v6722
      %v6724 = vsel %vm6721, %v6723, %v6719
      %v6725 = vmul.f32 1.0, %v6724
      %v6726 = vrcp.pop %v6648
      %v6727 = vmul.f32 %v6648, %v6726
      %v6728 = vsub.f32 1.0, %v6727
      %v6729 = vmul.f32 %v6726, %v6728
      %v6730 = vadd.f32 %v6726, %v6729
      %vm6731 = vweird.f32 %v6648
      %vm6732 = vweird.f32 %v6726
      %vm6733 = vmor %vm6731, %vm6732
      %v6734 = vsel %vm6733, %v6726, %v6730
      %v6735 = vand.u32 2147483647, %v6648
      %vm6736 = vcmp.eq.f32.partialorder %v6735, 8.507059e+37
      %v6737 = vand.u32 %v6648, 2147483648
      %v6738 = vor.u32 1.1754944e-38, %v6737
      %v6739 = vsel %vm6736, %v6738, %v6734
      %v6740 = vmul.f32 1.0, %v6739
      %v6741 = vrcp.pop %v6649
      %v6742 = vmul.f32 %v6649, %v6741
      %v6743 = vsub.f32 1.0, %v6742
      %v6744 = vmul.f32 %v6741, %v6743
      %v6745 = vadd.f32 %v6741, %v6744
      %vm6746 = vweird.f32 %v6649
      %vm6747 = vweird.f32 %v6741
      %vm6748 = vmor %vm6746, %vm6747
      %v6749 = vsel %vm6748, %v6741, %v6745
      %v6750 = vand.u32 2147483647, %v6649
      %vm6751 = vcmp.eq.f32.partialorder %v6750, 8.507059e+37
      %v6752 = vand.u32 %v6649, 2147483648
      %v6753 = vor.u32 1.1754944e-38, %v6752
      %v6754 = vsel %vm6751, %v6753, %v6749
      %v6755 = vmul.f32 1.0, %v6754
      %v6756 = vrcp.pop %v6650
      %v6757 = vmul.f32 %v6650, %v6756
      %v6758 = vsub.f32 1.0, %v6757
      %v6759 = vmul.f32 %v6756, %v6758
      %v6760 = vadd.f32 %v6756, %v6759
      %vm6761 = vweird.f32 %v6650
      %vm6762 = vweird.f32 %v6756
      %vm6763 = vmor %vm6761, %vm6762
      %v6764 = vsel %vm6763, %v6756, %v6760
      %v6765 = vand.u32 2147483647, %v6650
      %vm6766 = vcmp.eq.f32.partialorder %v6765, 8.507059e+37
      %v6767 = vand.u32 %v6650, 2147483648
      %v6768 = vor.u32 1.1754944e-38, %v6767
      %v6769 = vsel %vm6766, %v6768, %v6764
      %v6770 = vmul.f32 1.0, %v6769
      %v6771 = vrcp.pop %v6651
      %v6772 = vmul.f32 %v6651, %v6771
      %v6773 = vsub.f32 1.0, %v6772
      %v6774 = vmul.f32 %v6771, %v6773
      %v6775 = vadd.f32 %v6771, %v6774
      %vm6776 = vweird.f32 %v6651
      %vm6777 = vweird.f32 %v6771
      %vm6778 = vmor %vm6776, %vm6777
      %v6779 = vsel %vm6778, %v6771, %v6775
      %v6780 = vand.u32 2147483647, %v6651
      %vm6781 = vcmp.eq.f32.partialorder %v6780, 8.507059e+37
      %v6782 = vand.u32 %v6651, 2147483648
      %v6783 = vor.u32 1.1754944e-38, %v6782
      %v6784 = vsel %vm6781, %v6783, %v6779
      %v6785 = vmul.f32 1.0, %v6784
      %v6786 = vrcp.pop %v6652
      %v6787 = vmul.f32 %v6652, %v6786
      %v6788 = vsub.f32 1.0, %v6787
      %v6789 = vmul.f32 %v6786, %v6788
      %v6790 = vadd.f32 %v6786, %v6789
      %vm6791 = vweird.f32 %v6652
      %vm6792 = vweird.f32 %v6786
      %vm6793 = vmor %vm6791, %vm6792
      %v6794 = vsel %vm6793, %v6786, %v6790
      %v6795 = vand.u32 2147483647, %v6652
      %vm6796 = vcmp.eq.f32.partialorder %v6795, 8.507059e+37
      %v6797 = vand.u32 %v6652, 2147483648
      %v6798 = vor.u32 1.1754944e-38, %v6797
      %v6799 = vsel %vm6796, %v6798, %v6794
      %v6800 = vmul.f32 1.0, %v6799
      %v6801 = vrcp.pop %v6653
      %v6802 = vmul.f32 %v6653, %v6801
      %v6803 = vsub.f32 1.0, %v6802
      %v6804 = vmul.f32 %v6801, %v6803
      %v6805 = vadd.f32 %v6801, %v6804
      %vm6806 = vweird.f32 %v6653
      %vm6807 = vweird.f32 %v6801
      %vm6808 = vmor %vm6806, %vm6807
      %v6809 = vsel %vm6808, %v6801, %v6805
      %v6810 = vand.u32 2147483647, %v6653
      %vm6811 = vcmp.eq.f32.partialorder %v6810, 8.507059e+37
      %v6812 = vand.u32 %v6653, 2147483648
      %v6813 = vor.u32 1.1754944e-38, %v6812
      %v6814 = vsel %vm6811, %v6813, %v6809
      %v6815 = vmul.f32 1.0, %v6814
      %v6816 = vrcp.pop %v6654
      %v6817 = vmul.f32 %v6654, %v6816
      %v6818 = vsub.f32 1.0, %v6817
      %v6819 = vmul.f32 %v6816, %v6818
      %v6820 = vadd.f32 %v6816, %v6819
      %vm6821 = vweird.f32 %v6654
      %vm6822 = vweird.f32 %v6816
      %vm6823 = vmor %vm6821, %vm6822
      %v6824 = vsel %vm6823, %v6816, %v6820
      %v6825 = vand.u32 2147483647, %v6654
      %vm6826 = vcmp.eq.f32.partialorder %v6825, 8.507059e+37
      %v6827 = vand.u32 %v6654, 2147483648
      %v6828 = vor.u32 1.1754944e-38, %v6827
      %v6829 = vsel %vm6826, %v6828, %v6824
      %v6830 = vmul.f32 1.0, %v6829
      %v6831 = vrcp.pop %v6655
      %v6832 = vmul.f32 %v6655, %v6831
      %v6833 = vsub.f32 1.0, %v6832
      %v6834 = vmul.f32 %v6831, %v6833
      %v6835 = vadd.f32 %v6831, %v6834
      %vm6836 = vweird.f32 %v6655
      %vm6837 = vweird.f32 %v6831
      %vm6838 = vmor %vm6836, %vm6837
      %v6839 = vsel %vm6838, %v6831, %v6835
      %v6840 = vand.u32 2147483647, %v6655
      %vm6841 = vcmp.eq.f32.partialorder %v6840, 8.507059e+37
      %v6842 = vand.u32 %v6655, 2147483648
      %v6843 = vor.u32 1.1754944e-38, %v6842
      %v6844 = vsel %vm6841, %v6843, %v6839
      %v6845 = vmul.f32 1.0, %v6844
      %v6846 = vrcp.pop %v6656
      %v6847 = vmul.f32 %v6656, %v6846
      %v6848 = vsub.f32 1.0, %v6847
      %v6849 = vmul.f32 %v6846, %v6848
      %v6850 = vadd.f32 %v6846, %v6849
      %vm6851 = vweird.f32 %v6656
      %vm6852 = vweird.f32 %v6846
      %vm6853 = vmor %vm6851, %vm6852
      %v6854 = vsel %vm6853, %v6846, %v6850
      %v6855 = vand.u32 2147483647, %v6656
      %vm6856 = vcmp.eq.f32.partialorder %v6855, 8.507059e+37
      %v6857 = vand.u32 %v6656, 2147483648
      %v6858 = vor.u32 1.1754944e-38, %v6857
      %v6859 = vsel %vm6856, %v6858, %v6854
      %v6860 = vmul.f32 1.0, %v6859
      %v6861 = vrcp.pop %v6657
      %v6862 = vmul.f32 %v6657, %v6861
      %v6863 = vsub.f32 1.0, %v6862
      %v6864 = vmul.f32 %v6861, %v6863
      %v6865 = vadd.f32 %v6861, %v6864
      %vm6866 = vweird.f32 %v6657
      %vm6867 = vweird.f32 %v6861
      %vm6868 = vmor %vm6866, %vm6867
      %v6869 = vsel %vm6868, %v6861, %v6865
      %v6870 = vand.u32 2147483647, %v6657
      %vm6871 = vcmp.eq.f32.partialorder %v6870, 8.507059e+37
      %v6872 = vand.u32 %v6657, 2147483648
      %v6873 = vor.u32 1.1754944e-38, %v6872
      %v6874 = vsel %vm6871, %v6873, %v6869
      %v6875 = vmul.f32 1.0, %v6874
      %v6876 = vrcp.pop %v6658
      %v6877 = vmul.f32 %v6658, %v6876
      %v6878 = vsub.f32 1.0, %v6877
      %v6879 = vmul.f32 %v6876, %v6878
      %v6880 = vadd.f32 %v6876, %v6879
      %vm6881 = vweird.f32 %v6658
      %vm6882 = vweird.f32 %v6876
      %vm6883 = vmor %vm6881, %vm6882
      %v6884 = vsel %vm6883, %v6876, %v6880
      %v6885 = vand.u32 2147483647, %v6658
      %vm6886 = vcmp.eq.f32.partialorder %v6885, 8.507059e+37
      %v6887 = vand.u32 %v6658, 2147483648
      %v6888 = vor.u32 1.1754944e-38, %v6887
      %v6889 = vsel %vm6886, %v6888, %v6884
      %v6890 = vmul.f32 1.0, %v6889
      %v6891 = vrcp.pop %v6659
      %v6892 = vmul.f32 %v6659, %v6891
      %v6893 = vsub.f32 1.0, %v6892
      %v6894 = vmul.f32 %v6891, %v6893
      %v6895 = vadd.f32 %v6891, %v6894
      %vm6896 = vweird.f32 %v6659
      %vm6897 = vweird.f32 %v6891
      %vm6898 = vmor %vm6896, %vm6897
      %v6899 = vsel %vm6898, %v6891, %v6895
      %v6900 = vand.u32 2147483647, %v6659
      %vm6901 = vcmp.eq.f32.partialorder %v6900, 8.507059e+37
      %v6902 = vand.u32 %v6659, 2147483648
      %v6903 = vor.u32 1.1754944e-38, %v6902
      %v6904 = vsel %vm6901, %v6903, %v6899
      %v6905 = vmul.f32 1.0, %v6904
      %v6906 = vrcp.pop %v6660
      %v6907 = vmul.f32 %v6660, %v6906
      %v6908 = vsub.f32 1.0, %v6907
      %v6909 = vmul.f32 %v6906, %v6908
      %v6910 = vadd.f32 %v6906, %v6909
      %vm6911 = vweird.f32 %v6660
      %vm6912 = vweird.f32 %v6906
      %vm6913 = vmor %vm6911, %vm6912
      %v6914 = vsel %vm6913, %v6906, %v6910
      %v6915 = vand.u32 2147483647, %v6660
      %vm6916 = vcmp.eq.f32.partialorder %v6915, 8.507059e+37
      %v6917 = vand.u32 %v6660, 2147483648
      %v6918 = vor.u32 1.1754944e-38, %v6917
      %v6919 = vsel %vm6916, %v6918, %v6914
      %v6920 = vmul.f32 1.0, %v6919
      %v6921 = vrcp.pop %v6661
      %v6922 = vmul.f32 %v6661, %v6921
      %v6923 = vsub.f32 1.0, %v6922
      %v6924 = vmul.f32 %v6921, %v6923
      %v6925 = vadd.f32 %v6921, %v6924
      %vm6926 = vweird.f32 %v6661
      %vm6927 = vweird.f32 %v6921
      %vm6928 = vmor %vm6926, %vm6927
      %v6929 = vsel %vm6928, %v6921, %v6925
      %v6930 = vand.u32 2147483647, %v6661
      %vm6931 = vcmp.eq.f32.partialorder %v6930, 8.507059e+37
      %v6932 = vand.u32 %v6661, 2147483648
      %v6933 = vor.u32 1.1754944e-38, %v6932
      %v6934 = vsel %vm6931, %v6933, %v6929
      %v6935 = vmul.f32 1.0, %v6934
      %v6936 = vrcp.pop %v6662
      %v6937 = vmul.f32 %v6662, %v6936
      %v6938 = vsub.f32 1.0, %v6937
      %v6939 = vmul.f32 %v6936, %v6938
      %v6940 = vadd.f32 %v6936, %v6939
      %vm6941 = vweird.f32 %v6662
      %vm6942 = vweird.f32 %v6936
      %vm6943 = vmor %vm6941, %vm6942
      %v6944 = vsel %vm6943, %v6936, %v6940
      %v6945 = vand.u32 2147483647, %v6662
      %vm6946 = vcmp.eq.f32.partialorder %v6945, 8.507059e+37
      %v6947 = vand.u32 %v6662, 2147483648
      %v6948 = vor.u32 1.1754944e-38, %v6947
      %v6949 = vsel %vm6946, %v6948, %v6944
      %v6950 = vmul.f32 1.0, %v6949
      %v6951 = vrcp.pop %v6663
      %v6952 = vmul.f32 %v6663, %v6951
      %v6953 = vsub.f32 1.0, %v6952
      %v6954 = vmul.f32 %v6951, %v6953
      %v6955 = vadd.f32 %v6951, %v6954
      %vm6956 = vweird.f32 %v6663
      %vm6957 = vweird.f32 %v6951
      %vm6958 = vmor %vm6956, %vm6957
      %v6959 = vsel %vm6958, %v6951, %v6955
      %v6960 = vand.u32 2147483647, %v6663
      %vm6961 = vcmp.eq.f32.partialorder %v6960, 8.507059e+37
      %v6962 = vand.u32 %v6663, 2147483648
      %v6963 = vor.u32 1.1754944e-38, %v6962
      %v6964 = vsel %vm6961, %v6963, %v6959
      %v6965 = vmul.f32 1.0, %v6964
      %v6966 = vrcp.pop %v6664
      %v6967 = vmul.f32 %v6664, %v6966
      %v6968 = vsub.f32 1.0, %v6967
      %v6969 = vmul.f32 %v6966, %v6968
      %v6970 = vadd.f32 %v6966, %v6969
      %vm6971 = vweird.f32 %v6664
      %vm6972 = vweird.f32 %v6966
      %vm6973 = vmor %vm6971, %vm6972
      %v6974 = vsel %vm6973, %v6966, %v6970
      %v6975 = vand.u32 2147483647, %v6664
      %vm6976 = vcmp.eq.f32.partialorder %v6975, 8.507059e+37
      %v6977 = vand.u32 %v6664, 2147483648
      %v6978 = vor.u32 1.1754944e-38, %v6977
      %v6979 = vsel %vm6976, %v6978, %v6974
      %v6980 = vmul.f32 1.0, %v6979
      %v6981 = vrcp.pop %v6665
      %v6982 = vmul.f32 %v6665, %v6981
      %v6983 = vsub.f32 1.0, %v6982
      %v6984 = vmul.f32 %v6981, %v6983
      %v6985 = vadd.f32 %v6981, %v6984
      %vm6986 = vweird.f32 %v6665
      %vm6987 = vweird.f32 %v6981
      %vm6988 = vmor %vm6986, %vm6987
      %v6989 = vsel %vm6988, %v6981, %v6985
      %v6990 = vand.u32 2147483647, %v6665
      %vm6991 = vcmp.eq.f32.partialorder %v6990, 8.507059e+37
      %v6992 = vand.u32 %v6665, 2147483648
      %v6993 = vor.u32 1.1754944e-38, %v6992
      %v6994 = vsel %vm6991, %v6993, %v6989
      %v6995 = vmul.f32 1.0, %v6994
      %v6996 = vrcp.pop %v6666
      %v6997 = vmul.f32 %v6666, %v6996
      %v6998 = vsub.f32 1.0, %v6997
      %v6999 = vmul.f32 %v6996, %v6998
      %v7000 = vadd.f32 %v6996, %v6999
      %vm7001 = vweird.f32 %v6666
      %vm7002 = vweird.f32 %v6996
      %vm7003 = vmor %vm7001, %vm7002
      %v7004 = vsel %vm7003, %v6996, %v7000
      %v7005 = vand.u32 2147483647, %v6666
      %vm7006 = vcmp.eq.f32.partialorder %v7005, 8.507059e+37
      %v7007 = vand.u32 %v6666, 2147483648
      %v7008 = vor.u32 1.1754944e-38, %v7007
      %v7009 = vsel %vm7006, %v7008, %v7004
      %v7010 = vmul.f32 1.0, %v7009
      %v7011 = vrcp.pop %v6667
      %v7012 = vmul.f32 %v6667, %v7011
      %v7013 = vsub.f32 1.0, %v7012
      %v7014 = vmul.f32 %v7011, %v7013
      %v7015 = vadd.f32 %v7011, %v7014
      %vm7016 = vweird.f32 %v6667
      %vm7017 = vweird.f32 %v7011
      %vm7018 = vmor %vm7016, %vm7017
      %v7019 = vsel %vm7018, %v7011, %v7015
      %v7020 = vand.u32 2147483647, %v6667
      %vm7021 = vcmp.eq.f32.partialorder %v7020, 8.507059e+37
      %v7022 = vand.u32 %v6667, 2147483648
      %v7023 = vor.u32 1.1754944e-38, %v7022
      %v7024 = vsel %vm7021, %v7023, %v7019
      %v7025 = vmul.f32 1.0, %v7024
      %v7026 = vrcp.pop %v6668
      %v7027 = vmul.f32 %v6668, %v7026
      %v7028 = vsub.f32 1.0, %v7027
      %v7029 = vmul.f32 %v7026, %v7028
      %v7030 = vadd.f32 %v7026, %v7029
      %vm7031 = vweird.f32 %v6668
      %vm7032 = vweird.f32 %v7026
      %vm7033 = vmor %vm7031, %vm7032
      %v7034 = vsel %vm7033, %v7026, %v7030
      %v7035 = vand.u32 2147483647, %v6668
      %vm7036 = vcmp.eq.f32.partialorder %v7035, 8.507059e+37
      %v7037 = vand.u32 %v6668, 2147483648
      %v7038 = vor.u32 1.1754944e-38, %v7037
      %v7039 = vsel %vm7036, %v7038, %v7034
      %v7040 = vmul.f32 1.0, %v7039
      %v7041 = vrcp.pop %v6669
      %v7042 = vmul.f32 %v6669, %v7041
      %v7043 = vsub.f32 1.0, %v7042
      %v7044 = vmul.f32 %v7041, %v7043
      %v7045 = vadd.f32 %v7041, %v7044
      %vm7046 = vweird.f32 %v6669
      %vm7047 = vweird.f32 %v7041
      %vm7048 = vmor %vm7046, %vm7047
      %v7049 = vsel %vm7048, %v7041, %v7045
      %v7050 = vand.u32 2147483647, %v6669
      %vm7051 = vcmp.eq.f32.partialorder %v7050, 8.507059e+37
      %v7052 = vand.u32 %v6669, 2147483648
      %v7053 = vor.u32 1.1754944e-38, %v7052
      %v7054 = vsel %vm7051, %v7053, %v7049
      %v7055 = vmul.f32 1.0, %v7054
      %v7056 = vrcp.pop %v6670
      %v7057 = vmul.f32 %v6670, %v7056
      %v7058 = vsub.f32 1.0, %v7057
      %v7059 = vmul.f32 %v7056, %v7058
      %v7060 = vadd.f32 %v7056, %v7059
      %vm7061 = vweird.f32 %v6670
      %vm7062 = vweird.f32 %v7056
      %vm7063 = vmor %vm7061, %vm7062
      %v7064 = vsel %vm7063, %v7056, %v7060
      %v7065 = vand.u32 2147483647, %v6670
      %vm7066 = vcmp.eq.f32.partialorder %v7065, 8.507059e+37
      %v7067 = vand.u32 %v6670, 2147483648
      %v7068 = vor.u32 1.1754944e-38, %v7067
      %v7069 = vsel %vm7066, %v7068, %v7064
      %v7070 = vmul.f32 1.0, %v7069
      %v7071 = vrcp.pop %v6671
      %v7072 = vmul.f32 %v6671, %v7071
      %v7073 = vsub.f32 1.0, %v7072
      %v7074 = vmul.f32 %v7071, %v7073
      %v7075 = vadd.f32 %v7071, %v7074
      %vm7076 = vweird.f32 %v6671
      %vm7077 = vweird.f32 %v7071
      %vm7078 = vmor %vm7076, %vm7077
      %v7079 = vsel %vm7078, %v7071, %v7075
      %v7080 = vand.u32 2147483647, %v6671
      %vm7081 = vcmp.eq.f32.partialorder %v7080, 8.507059e+37
      %v7082 = vand.u32 %v6671, 2147483648
      %v7083 = vor.u32 1.1754944e-38, %v7082
      %v7084 = vsel %vm7081, %v7083, %v7079
      %v7085 = vmul.f32 1.0, %v7084
      %v7086 = vrcp.pop %v6672
      %v7087 = vmul.f32 %v6672, %v7086
      %v7088 = vsub.f32 1.0, %v7087
      %v7089 = vmul.f32 %v7086, %v7088
      %v7090 = vadd.f32 %v7086, %v7089
      %vm7091 = vweird.f32 %v6672
      %vm7092 = vweird.f32 %v7086
      %vm7093 = vmor %vm7091, %vm7092
      %v7094 = vsel %vm7093, %v7086, %v7090
      %v7095 = vand.u32 2147483647, %v6672
      %vm7096 = vcmp.eq.f32.partialorder %v7095, 8.507059e+37
      %v7097 = vand.u32 %v6672, 2147483648
      %v7098 = vor.u32 1.1754944e-38, %v7097
      %v7099 = vsel %vm7096, %v7098, %v7094
      %v7100 = vmul.f32 1.0, %v7099
      %v7101 = vrcp.pop %v6673
      %v7102 = vmul.f32 %v6673, %v7101
      %v7103 = vsub.f32 1.0, %v7102
      %v7104 = vmul.f32 %v7101, %v7103
      %v7105 = vadd.f32 %v7101, %v7104
      %vm7106 = vweird.f32 %v6673
      %vm7107 = vweird.f32 %v7101
      %vm7108 = vmor %vm7106, %vm7107
      %v7109 = vsel %vm7108, %v7101, %v7105
      %v7110 = vand.u32 2147483647, %v6673
      %vm7111 = vcmp.eq.f32.partialorder %v7110, 8.507059e+37
      %v7112 = vand.u32 %v6673, 2147483648
      %v7113 = vor.u32 1.1754944e-38, %v7112
      %v7114 = vsel %vm7111, %v7113, %v7109
      %v7115 = vmul.f32 1.0, %v7114
      %v7116 = vrcp.pop %v6674
      %v7117 = vmul.f32 %v6674, %v7116
      %v7118 = vsub.f32 1.0, %v7117
      %v7119 = vmul.f32 %v7116, %v7118
      %v7120 = vadd.f32 %v7116, %v7119
      %vm7121 = vweird.f32 %v6674
      %vm7122 = vweird.f32 %v7116
      %vm7123 = vmor %vm7121, %vm7122
      %v7124 = vsel %vm7123, %v7116, %v7120
      %v7125 = vand.u32 2147483647, %v6674
      %vm7126 = vcmp.eq.f32.partialorder %v7125, 8.507059e+37
      %v7127 = vand.u32 %v6674, 2147483648
      %v7128 = vor.u32 1.1754944e-38, %v7127
      %v7129 = vsel %vm7126, %v7128, %v7124
      %v7130 = vmul.f32 1.0, %v7129
      %v7131 = vrcp.pop %v6675
      %v7132 = vmul.f32 %v6675, %v7131
      %v7133 = vsub.f32 1.0, %v7132
      %v7134 = vmul.f32 %v7131, %v7133
      %v7135 = vadd.f32 %v7131, %v7134
      %vm7136 = vweird.f32 %v6675
      %vm7137 = vweird.f32 %v7131
      %vm7138 = vmor %vm7136, %vm7137
      %v7139 = vsel %vm7138, %v7131, %v7135
      %v7140 = vand.u32 2147483647, %v6675
      %vm7141 = vcmp.eq.f32.partialorder %v7140, 8.507059e+37
      %v7142 = vand.u32 %v6675, 2147483648
      %v7143 = vor.u32 1.1754944e-38, %v7142
      %v7144 = vsel %vm7141, %v7143, %v7139
      %v7145 = vmul.f32 1.0, %v7144
      %v7146 = vrcp.pop %v6676
      %v7147 = vmul.f32 %v6676, %v7146
      %v7148 = vsub.f32 1.0, %v7147
      %v7149 = vmul.f32 %v7146, %v7148
      %v7150 = vadd.f32 %v7146, %v7149
      %vm7151 = vweird.f32 %v6676
      %vm7152 = vweird.f32 %v7146
      %vm7153 = vmor %vm7151, %vm7152
      %v7154 = vsel %vm7153, %v7146, %v7150
      %v7155 = vand.u32 2147483647, %v6676
      %vm7156 = vcmp.eq.f32.partialorder %v7155, 8.507059e+37
      %v7157 = vand.u32 %v6676, 2147483648
      %v7158 = vor.u32 1.1754944e-38, %v7157
      %v7159 = vsel %vm7156, %v7158, %v7154
      %v7160 = vmul.f32 1.0, %v7159
      %v7161 = vrcp.pop %v6677
      %v7162 = vmul.f32 %v6677, %v7161
      %v7163 = vsub.f32 1.0, %v7162
      %v7164 = vmul.f32 %v7161, %v7163
      %v7165 = vadd.f32 %v7161, %v7164
      %vm7166 = vweird.f32 %v6677
      %vm7167 = vweird.f32 %v7161
      %vm7168 = vmor %vm7166, %vm7167
      %v7169 = vsel %vm7168, %v7161, %v7165
      %v7170 = vand.u32 2147483647, %v6677
      %vm7171 = vcmp.eq.f32.partialorder %v7170, 8.507059e+37
      %v7172 = vand.u32 %v6677, 2147483648
      %v7173 = vor.u32 1.1754944e-38, %v7172
      %v7174 = vsel %vm7171, %v7173, %v7169
      %v7175 = vmul.f32 1.0, %v7174
      %v7176 = vrcp.pop %v6678
      %v7177 = vmul.f32 %v6678, %v7176
      %v7178 = vsub.f32 1.0, %v7177
      %v7179 = vmul.f32 %v7176, %v7178
      %v7180 = vadd.f32 %v7176, %v7179
      %vm7181 = vweird.f32 %v6678
      %vm7182 = vweird.f32 %v7176
      %vm7183 = vmor %vm7181, %vm7182
      %v7184 = vsel %vm7183, %v7176, %v7180
      %v7185 = vand.u32 2147483647, %v6678
      %vm7186 = vcmp.eq.f32.partialorder %v7185, 8.507059e+37
      %v7187 = vand.u32 %v6678, 2147483648
      %v7188 = vor.u32 1.1754944e-38, %v7187
      %v7189 = vsel %vm7186, %v7188, %v7184
      %v7190 = vmul.f32 1.0, %v7189
      %v7191 = vrcp.pop %v6679
      %v7192 = vmul.f32 %v6679, %v7191
      %v7193 = vsub.f32 1.0, %v7192
      %v7194 = vmul.f32 %v7191, %v7193
      %v7195 = vadd.f32 %v7191, %v7194
      %vm7196 = vweird.f32 %v6679
      %vm7197 = vweird.f32 %v7191
      %vm7198 = vmor %vm7196, %vm7197
      %v7199 = vsel %vm7198, %v7191, %v7195
      %v7200 = vand.u32 2147483647, %v6679
      %vm7201 = vcmp.eq.f32.partialorder %v7200, 8.507059e+37
      %v7202 = vand.u32 %v6679, 2147483648
      %v7203 = vor.u32 1.1754944e-38, %v7202
      %v7204 = vsel %vm7201, %v7203, %v7199
      %v7205 = vmul.f32 1.0, %v7204
      %v7206 = vrcp.pop %v6680
      %v7207 = vmul.f32 %v6680, %v7206
      %v7208 = vsub.f32 1.0, %v7207
      %v7209 = vmul.f32 %v7206, %v7208
      %v7210 = vadd.f32 %v7206, %v7209
      %vm7211 = vweird.f32 %v6680
      %vm7212 = vweird.f32 %v7206
      %vm7213 = vmor %vm7211, %vm7212
      %v7214 = vsel %vm7213, %v7206, %v7210
      %v7215 = vand.u32 2147483647, %v6680
      %vm7216 = vcmp.eq.f32.partialorder %v7215, 8.507059e+37
      %v7217 = vand.u32 %v6680, 2147483648
      %v7218 = vor.u32 1.1754944e-38, %v7217
      %v7219 = vsel %vm7216, %v7218, %v7214
      %v7220 = vmul.f32 1.0, %v7219
      %v7221 = vrcp.pop %v6681
      %v7222 = vmul.f32 %v6681, %v7221
      %v7223 = vsub.f32 1.0, %v7222
      %v7224 = vmul.f32 %v7221, %v7223
      %v7225 = vadd.f32 %v7221, %v7224
      %vm7226 = vweird.f32 %v6681
      %vm7227 = vweird.f32 %v7221
      %vm7228 = vmor %vm7226, %vm7227
      %v7229 = vsel %vm7228, %v7221, %v7225
      %v7230 = vand.u32 2147483647, %v6681
      %vm7231 = vcmp.eq.f32.partialorder %v7230, 8.507059e+37
      %v7232 = vand.u32 %v6681, 2147483648
      %v7233 = vor.u32 1.1754944e-38, %v7232
      %v7234 = vsel %vm7231, %v7233, %v7229
      %v7235 = vmul.f32 1.0, %v7234
      %v7236 = vrcp.pop %v6682
      %v7237 = vmul.f32 %v6682, %v7236
      %v7238 = vsub.f32 1.0, %v7237
      %v7239 = vmul.f32 %v7236, %v7238
      %v7240 = vadd.f32 %v7236, %v7239
      %vm7241 = vweird.f32 %v6682
      %vm7242 = vweird.f32 %v7236
      %vm7243 = vmor %vm7241, %vm7242
      %v7244 = vsel %vm7243, %v7236, %v7240
      %v7245 = vand.u32 2147483647, %v6682
      %vm7246 = vcmp.eq.f32.partialorder %v7245, 8.507059e+37
      %v7247 = vand.u32 %v6682, 2147483648
      %v7248 = vor.u32 1.1754944e-38, %v7247
      %v7249 = vsel %vm7246, %v7248, %v7244
      %v7250 = vmul.f32 1.0, %v7249
      %v7251 = vrcp.pop %v6683
      %v7252 = vmul.f32 %v6683, %v7251
      %v7253 = vsub.f32 1.0, %v7252
      %v7254 = vmul.f32 %v7251, %v7253
      %v7255 = vadd.f32 %v7251, %v7254
      %vm7256 = vweird.f32 %v6683
      %vm7257 = vweird.f32 %v7251
      %vm7258 = vmor %vm7256, %vm7257
      %v7259 = vsel %vm7258, %v7251, %v7255
      %v7260 = vand.u32 2147483647, %v6683
      %vm7261 = vcmp.eq.f32.partialorder %v7260, 8.507059e+37
      %v7262 = vand.u32 %v6683, 2147483648
      %v7263 = vor.u32 1.1754944e-38, %v7262
      %v7264 = vsel %vm7261, %v7263, %v7259
      %v7265 = vmul.f32 1.0, %v7264
      %v7266 = vrcp.pop %v6684
      %v7267 = vmul.f32 %v6684, %v7266
      %v7268 = vsub.f32 1.0, %v7267
      %v7269 = vmul.f32 %v7266, %v7268
      %v7270 = vadd.f32 %v7266, %v7269
      %vm7271 = vweird.f32 %v6684
      %vm7272 = vweird.f32 %v7266
      %vm7273 = vmor %vm7271, %vm7272
      %v7274 = vsel %vm7273, %v7266, %v7270
      %v7275 = vand.u32 2147483647, %v6684
      %vm7276 = vcmp.eq.f32.partialorder %v7275, 8.507059e+37
      %v7277 = vand.u32 %v6684, 2147483648
      %v7278 = vor.u32 1.1754944e-38, %v7277
      %v7279 = vsel %vm7276, %v7278, %v7274
      %v7280 = vmul.f32 1.0, %v7279
      %v7281 = vrcp.pop %v6685
      %v7282 = vmul.f32 %v6685, %v7281
      %v7283 = vsub.f32 1.0, %v7282
      %v7284 = vmul.f32 %v7281, %v7283
      %v7285 = vadd.f32 %v7281, %v7284
      %vm7286 = vweird.f32 %v6685
      %vm7287 = vweird.f32 %v7281
      %vm7288 = vmor %vm7286, %vm7287
      %v7289 = vsel %vm7288, %v7281, %v7285
      %v7290 = vand.u32 2147483647, %v6685
      %vm7291 = vcmp.eq.f32.partialorder %v7290, 8.507059e+37
      %v7292 = vand.u32 %v6685, 2147483648
      %v7293 = vor.u32 1.1754944e-38, %v7292
      %v7294 = vsel %vm7291, %v7293, %v7289
      %v7295 = vmul.f32 1.0, %v7294
      %v7296 = vrcp.pop %v6686
      %v7297 = vmul.f32 %v6686, %v7296
      %v7298 = vsub.f32 1.0, %v7297
      %v7299 = vmul.f32 %v7296, %v7298
      %v7300 = vadd.f32 %v7296, %v7299
      %vm7301 = vweird.f32 %v6686
      %vm7302 = vweird.f32 %v7296
      %vm7303 = vmor %vm7301, %vm7302
      %v7304 = vsel %vm7303, %v7296, %v7300
      %v7305 = vand.u32 2147483647, %v6686
      %vm7306 = vcmp.eq.f32.partialorder %v7305, 8.507059e+37
      %v7307 = vand.u32 %v6686, 2147483648
      %v7308 = vor.u32 1.1754944e-38, %v7307
      %v7309 = vsel %vm7306, %v7308, %v7304
      %v7310 = vmul.f32 1.0, %v7309
      %v7311 = vrcp.pop %v6687
      %v7312 = vmul.f32 %v6687, %v7311
      %v7313 = vsub.f32 1.0, %v7312
      %v7314 = vmul.f32 %v7311, %v7313
      %v7315 = vadd.f32 %v7311, %v7314
      %vm7316 = vweird.f32 %v6687
      %vm7317 = vweird.f32 %v7311
      %vm7318 = vmor %vm7316, %vm7317
      %v7319 = vsel %vm7318, %v7311, %v7315
      %v7320 = vand.u32 2147483647, %v6687
      %vm7321 = vcmp.eq.f32.partialorder %v7320, 8.507059e+37
      %v7322 = vand.u32 %v6687, 2147483648
      %v7323 = vor.u32 1.1754944e-38, %v7322
      %v7324 = vsel %vm7321, %v7323, %v7319
      %v7325 = vmul.f32 1.0, %v7324
      %v7326 = vrcp.pop %v6688
      %v7327 = vmul.f32 %v6688, %v7326
      %v7328 = vsub.f32 1.0, %v7327
      %v7329 = vmul.f32 %v7326, %v7328
      %v7330 = vadd.f32 %v7326, %v7329
      %vm7331 = vweird.f32 %v6688
      %vm7332 = vweird.f32 %v7326
      %vm7333 = vmor %vm7331, %vm7332
      %v7334 = vsel %vm7333, %v7326, %v7330
      %v7335 = vand.u32 2147483647, %v6688
      %vm7336 = vcmp.eq.f32.partialorder %v7335, 8.507059e+37
      %v7337 = vand.u32 %v6688, 2147483648
      %v7338 = vor.u32 1.1754944e-38, %v7337
      %v7339 = vsel %vm7336, %v7338, %v7334
      %v7340 = vmul.f32 1.0, %v7339
      %v7341 = vrcp.pop %v6689
      %v7342 = vmul.f32 %v6689, %v7341
      %v7343 = vsub.f32 1.0, %v7342
      %v7344 = vmul.f32 %v7341, %v7343
      %v7345 = vadd.f32 %v7341, %v7344
      %vm7346 = vweird.f32 %v6689
      %vm7347 = vweird.f32 %v7341
      %vm7348 = vmor %vm7346, %vm7347
      %v7349 = vsel %vm7348, %v7341, %v7345
      %v7350 = vand.u32 2147483647, %v6689
      %vm7351 = vcmp.eq.f32.partialorder %v7350, 8.507059e+37
      %v7352 = vand.u32 %v6689, 2147483648
      %v7353 = vor.u32 1.1754944e-38, %v7352
      %v7354 = vsel %vm7351, %v7353, %v7349
      %v7355 = vmul.f32 1.0, %v7354
      %v7356 = vrcp.pop %v6690
      %v7357 = vmul.f32 %v6690, %v7356
      %v7358 = vsub.f32 1.0, %v7357
      %v7359 = vmul.f32 %v7356, %v7358
      %v7360 = vadd.f32 %v7356, %v7359
      %vm7361 = vweird.f32 %v6690
      %vm7362 = vweird.f32 %v7356
      %vm7363 = vmor %vm7361, %vm7362
      %v7364 = vsel %vm7363, %v7356, %v7360
      %v7365 = vand.u32 2147483647, %v6690
      %vm7366 = vcmp.eq.f32.partialorder %v7365, 8.507059e+37
      %v7367 = vand.u32 %v6690, 2147483648
      %v7368 = vor.u32 1.1754944e-38, %v7367
      %v7369 = vsel %vm7366, %v7368, %v7364
      %v7370 = vmul.f32 1.0, %v7369
      %v7371 = vrcp.pop %v6691
      %v7372 = vmul.f32 %v6691, %v7371
      %v7373 = vsub.f32 1.0, %v7372
      %v7374 = vmul.f32 %v7371, %v7373
      %v7375 = vadd.f32 %v7371, %v7374
      %vm7376 = vweird.f32 %v6691
      %vm7377 = vweird.f32 %v7371
      %vm7378 = vmor %vm7376, %vm7377
      %v7379 = vsel %vm7378, %v7371, %v7375
      %v7380 = vand.u32 2147483647, %v6691
      %vm7381 = vcmp.eq.f32.partialorder %v7380, 8.507059e+37
      %v7382 = vand.u32 %v6691, 2147483648
      %v7383 = vor.u32 1.1754944e-38, %v7382
      %v7384 = vsel %vm7381, %v7383, %v7379
      %v7385 = vmul.f32 1.0, %v7384
      %v7386 = vrcp.pop %v6692
      %v7387 = vmul.f32 %v6692, %v7386
      %v7388 = vsub.f32 1.0, %v7387
      %v7389 = vmul.f32 %v7386, %v7388
      %v7390 = vadd.f32 %v7386, %v7389
      %vm7391 = vweird.f32 %v6692
      %vm7392 = vweird.f32 %v7386
      %vm7393 = vmor %vm7391, %vm7392
      %v7394 = vsel %vm7393, %v7386, %v7390
      %v7395 = vand.u32 2147483647, %v6692
      %vm7396 = vcmp.eq.f32.partialorder %v7395, 8.507059e+37
      %v7397 = vand.u32 %v6692, 2147483648
      %v7398 = vor.u32 1.1754944e-38, %v7397
      %v7399 = vsel %vm7396, %v7398, %v7394
      %v7400 = vmul.f32 1.0, %v7399
      %v7401 = vrcp.pop %v6693
      %v7402 = vmul.f32 %v6693, %v7401
      %v7403 = vsub.f32 1.0, %v7402
      %v7404 = vmul.f32 %v7401, %v7403
      %v7405 = vadd.f32 %v7401, %v7404
      %vm7406 = vweird.f32 %v6693
      %vm7407 = vweird.f32 %v7401
      %vm7408 = vmor %vm7406, %vm7407
      %v7409 = vsel %vm7408, %v7401, %v7405
      %v7410 = vand.u32 2147483647, %v6693
      %vm7411 = vcmp.eq.f32.partialorder %v7410, 8.507059e+37
      %v7412 = vand.u32 %v6693, 2147483648
      %v7413 = vor.u32 1.1754944e-38, %v7412
      %v7414 = vsel %vm7411, %v7413, %v7409
      %v7415 = vmul.f32 1.0, %v7414
      %v7416 = vrcp.pop %v6694
      %v7417 = vmul.f32 %v6694, %v7416
      %v7418 = vsub.f32 1.0, %v7417
      %v7419 = vmul.f32 %v7416, %v7418
      %v7420 = vadd.f32 %v7416, %v7419
      %vm7421 = vweird.f32 %v6694
      %vm7422 = vweird.f32 %v7416
      %vm7423 = vmor %vm7421, %vm7422
      %v7424 = vsel %vm7423, %v7416, %v7420
      %v7425 = vand.u32 2147483647, %v6694
      %vm7426 = vcmp.eq.f32.partialorder %v7425, 8.507059e+37
      %v7427 = vand.u32 %v6694, 2147483648
      %v7428 = vor.u32 1.1754944e-38, %v7427
      %v7429 = vsel %vm7426, %v7428, %v7424
      %v7430 = vmul.f32 1.0, %v7429
      %v7431 = vrcp.pop %v6695
      %v7432 = vmul.f32 %v6695, %v7431
      %v7433 = vsub.f32 1.0, %v7432
      %v7434 = vmul.f32 %v7431, %v7433
      %v7435 = vadd.f32 %v7431, %v7434
      %vm7436 = vweird.f32 %v6695
      %vm7437 = vweird.f32 %v7431
      %vm7438 = vmor %vm7436, %vm7437
      %v7439 = vsel %vm7438, %v7431, %v7435
      %v7440 = vand.u32 2147483647, %v6695
      %vm7441 = vcmp.eq.f32.partialorder %v7440, 8.507059e+37
      %v7442 = vand.u32 %v6695, 2147483648
      %v7443 = vor.u32 1.1754944e-38, %v7442
      %v7444 = vsel %vm7441, %v7443, %v7439
      %v7445 = vmul.f32 1.0, %v7444
      %v7446 = vrcp.pop %v6696
      %v7447 = vmul.f32 %v6696, %v7446
      %v7448 = vsub.f32 1.0, %v7447
      %v7449 = vmul.f32 %v7446, %v7448
      %v7450 = vadd.f32 %v7446, %v7449
      %vm7451 = vweird.f32 %v6696
      %vm7452 = vweird.f32 %v7446
      %vm7453 = vmor %vm7451, %vm7452
      %v7454 = vsel %vm7453, %v7446, %v7450
      %v7455 = vand.u32 2147483647, %v6696
      %vm7456 = vcmp.eq.f32.partialorder %v7455, 8.507059e+37
      %v7457 = vand.u32 %v6696, 2147483648
      %v7458 = vor.u32 1.1754944e-38, %v7457
      %v7459 = vsel %vm7456, %v7458, %v7454
      %v7460 = vmul.f32 1.0, %v7459
      %v7461 = vrcp.pop %v6697
      %v7462 = vmul.f32 %v6697, %v7461
      %v7463 = vsub.f32 1.0, %v7462
      %v7464 = vmul.f32 %v7461, %v7463
      %v7465 = vadd.f32 %v7461, %v7464
      %vm7466 = vweird.f32 %v6697
      %vm7467 = vweird.f32 %v7461
      %vm7468 = vmor %vm7466, %vm7467
      %v7469 = vsel %vm7468, %v7461, %v7465
      %v7470 = vand.u32 2147483647, %v6697
      %vm7471 = vcmp.eq.f32.partialorder %v7470, 8.507059e+37
      %v7472 = vand.u32 %v6697, 2147483648
      %v7473 = vor.u32 1.1754944e-38, %v7472
      %v7474 = vsel %vm7471, %v7473, %v7469
      %v7475 = vmul.f32 1.0, %v7474
      %v7476 = vrcp.pop %v6698
      %v7477 = vmul.f32 %v6698, %v7476
      %v7478 = vsub.f32 1.0, %v7477
      %v7479 = vmul.f32 %v7476, %v7478
      %v7480 = vadd.f32 %v7476, %v7479
      %vm7481 = vweird.f32 %v6698
      %vm7482 = vweird.f32 %v7476
      %vm7483 = vmor %vm7481, %vm7482
      %v7484 = vsel %vm7483, %v7476, %v7480
      %v7485 = vand.u32 2147483647, %v6698
      %vm7486 = vcmp.eq.f32.partialorder %v7485, 8.507059e+37
      %v7487 = vand.u32 %v6698, 2147483648
      %v7488 = vor.u32 1.1754944e-38, %v7487
      %v7489 = vsel %vm7486, %v7488, %v7484
      %v7490 = vmul.f32 1.0, %v7489
      %v7491 = vrcp.pop %v6699
      %v7492 = vmul.f32 %v6699, %v7491
      %v7493 = vsub.f32 1.0, %v7492
      %v7494 = vmul.f32 %v7491, %v7493
      %v7495 = vadd.f32 %v7491, %v7494
      %vm7496 = vweird.f32 %v6699
      %vm7497 = vweird.f32 %v7491
      %vm7498 = vmor %vm7496, %vm7497
      %v7499 = vsel %vm7498, %v7491, %v7495
      %v7500 = vand.u32 2147483647, %v6699
      %vm7501 = vcmp.eq.f32.partialorder %v7500, 8.507059e+37
      %v7502 = vand.u32 %v6699, 2147483648
      %v7503 = vor.u32 1.1754944e-38, %v7502
      %v7504 = vsel %vm7501, %v7503, %v7499
      %v7505 = vmul.f32 1.0, %v7504
      %v7506 = vrcp.pop %v6700
      %v7507 = vmul.f32 %v6700, %v7506
      %v7508 = vsub.f32 1.0, %v7507
      %v7509 = vmul.f32 %v7506, %v7508
      %v7510 = vadd.f32 %v7506, %v7509
      %vm7511 = vweird.f32 %v6700
      %vm7512 = vweird.f32 %v7506
      %vm7513 = vmor %vm7511, %vm7512
      %v7514 = vsel %vm7513, %v7506, %v7510
      %v7515 = vand.u32 2147483647, %v6700
      %vm7516 = vcmp.eq.f32.partialorder %v7515, 8.507059e+37
      %v7517 = vand.u32 %v6700, 2147483648
      %v7518 = vor.u32 1.1754944e-38, %v7517
      %v7519 = vsel %vm7516, %v7518, %v7514
      %v7520 = vmul.f32 1.0, %v7519
      %v7521 = vrcp.pop %v6701
      %v7522 = vmul.f32 %v6701, %v7521
      %v7523 = vsub.f32 1.0, %v7522
      %v7524 = vmul.f32 %v7521, %v7523
      %v7525 = vadd.f32 %v7521, %v7524
      %vm7526 = vweird.f32 %v6701
      %vm7527 = vweird.f32 %v7521
      %vm7528 = vmor %vm7526, %vm7527
      %v7529 = vsel %vm7528, %v7521, %v7525
      %v7530 = vand.u32 2147483647, %v6701
      %vm7531 = vcmp.eq.f32.partialorder %v7530, 8.507059e+37
      %v7532 = vand.u32 %v6701, 2147483648
      %v7533 = vor.u32 1.1754944e-38, %v7532
      %v7534 = vsel %vm7531, %v7533, %v7529
      %v7535 = vmul.f32 1.0, %v7534
      %v7536 = vrcp.pop %v6702
      %v7537 = vmul.f32 %v6702, %v7536
      %v7538 = vsub.f32 1.0, %v7537
      %v7539 = vmul.f32 %v7536, %v7538
      %v7540 = vadd.f32 %v7536, %v7539
      %vm7541 = vweird.f32 %v6702
      %vm7542 = vweird.f32 %v7536
      %vm7543 = vmor %vm7541, %vm7542
      %v7544 = vsel %vm7543, %v7536, %v7540
      %v7545 = vand.u32 2147483647, %v6702
      %vm7546 = vcmp.eq.f32.partialorder %v7545, 8.507059e+37
      %v7547 = vand.u32 %v6702, 2147483648
      %v7548 = vor.u32 1.1754944e-38, %v7547
      %v7549 = vsel %vm7546, %v7548, %v7544
      %v7550 = vmul.f32 1.0, %v7549
      %v7551 = vrcp.pop %v6703
      %v7552 = vmul.f32 %v6703, %v7551
      %v7553 = vsub.f32 1.0, %v7552
      %v7554 = vmul.f32 %v7551, %v7553
      %v7555 = vadd.f32 %v7551, %v7554
      %vm7556 = vweird.f32 %v6703
      %vm7557 = vweird.f32 %v7551
      %vm7558 = vmor %vm7556, %vm7557
      %v7559 = vsel %vm7558, %v7551, %v7555
      %v7560 = vand.u32 2147483647, %v6703
      %vm7561 = vcmp.eq.f32.partialorder %v7560, 8.507059e+37
      %v7562 = vand.u32 %v6703, 2147483648
      %v7563 = vor.u32 1.1754944e-38, %v7562
      %v7564 = vsel %vm7561, %v7563, %v7559
      %v7565 = vmul.f32 1.0, %v7564
      %v7566 = vrcp.pop %v6704
      %v7567 = vmul.f32 %v6704, %v7566
      %v7568 = vsub.f32 1.0, %v7567
      %v7569 = vmul.f32 %v7566, %v7568
      %v7570 = vadd.f32 %v7566, %v7569
      %vm7571 = vweird.f32 %v6704
      %vm7572 = vweird.f32 %v7566
      %vm7573 = vmor %vm7571, %vm7572
      %v7574 = vsel %vm7573, %v7566, %v7570
      %v7575 = vand.u32 2147483647, %v6704
      %vm7576 = vcmp.eq.f32.partialorder %v7575, 8.507059e+37
      %v7577 = vand.u32 %v6704, 2147483648
      %v7578 = vor.u32 1.1754944e-38, %v7577
      %v7579 = vsel %vm7576, %v7578, %v7574
      %v7580 = vmul.f32 1.0, %v7579
      %v7581 = vrcp.pop %v6705
      %v7582 = vmul.f32 %v6705, %v7581
      %v7583 = vsub.f32 1.0, %v7582
      %v7584 = vmul.f32 %v7581, %v7583
      %v7585 = vadd.f32 %v7581, %v7584
      %vm7586 = vweird.f32 %v6705
      %vm7587 = vweird.f32 %v7581
      %vm7588 = vmor %vm7586, %vm7587
      %v7589 = vsel %vm7588, %v7581, %v7585
      %v7590 = vand.u32 2147483647, %v6705
      %vm7591 = vcmp.eq.f32.partialorder %v7590, 8.507059e+37
      %v7592 = vand.u32 %v6705, 2147483648
      %v7593 = vor.u32 1.1754944e-38, %v7592
      %v7594 = vsel %vm7591, %v7593, %v7589
      %v7595 = vmul.f32 1.0, %v7594
      %v7596 = vrcp.pop %v6706
      %v7597 = vmul.f32 %v6706, %v7596
      %v7598 = vsub.f32 1.0, %v7597
      %v7599 = vmul.f32 %v7596, %v7598
      %v7600 = vadd.f32 %v7596, %v7599
      %vm7601 = vweird.f32 %v6706
      %vm7602 = vweird.f32 %v7596
      %vm7603 = vmor %vm7601, %vm7602
      %v7604 = vsel %vm7603, %v7596, %v7600
      %v7605 = vand.u32 2147483647, %v6706
      %vm7606 = vcmp.eq.f32.partialorder %v7605, 8.507059e+37
      %v7607 = vand.u32 %v6706, 2147483648
      %v7608 = vor.u32 1.1754944e-38, %v7607
      %v7609 = vsel %vm7606, %v7608, %v7604
      %v7610 = vmul.f32 1.0, %v7609
      %v7611 = vrcp.pop %v6707
      %v7612 = vmul.f32 %v6707, %v7611
      %v7613 = vsub.f32 1.0, %v7612
      %v7614 = vmul.f32 %v7611, %v7613
      %v7615 = vadd.f32 %v7611, %v7614
      %vm7616 = vweird.f32 %v6707
      %vm7617 = vweird.f32 %v7611
      %vm7618 = vmor %vm7616, %vm7617
      %v7619 = vsel %vm7618, %v7611, %v7615
      %v7620 = vand.u32 2147483647, %v6707
      %vm7621 = vcmp.eq.f32.partialorder %v7620, 8.507059e+37
      %v7622 = vand.u32 %v6707, 2147483648
      %v7623 = vor.u32 1.1754944e-38, %v7622
      %v7624 = vsel %vm7621, %v7623, %v7619
      %v7625 = vmul.f32 1.0, %v7624
      %v7626 = vrcp.pop %v6708
      %v7627 = vmul.f32 %v6708, %v7626
      %v7628 = vsub.f32 1.0, %v7627
      %v7629 = vmul.f32 %v7626, %v7628
      %v7630 = vadd.f32 %v7626, %v7629
      %vm7631 = vweird.f32 %v6708
      %vm7632 = vweird.f32 %v7626
      %vm7633 = vmor %vm7631, %vm7632
      %v7634 = vsel %vm7633, %v7626, %v7630
      %v7635 = vand.u32 2147483647, %v6708
      %vm7636 = vcmp.eq.f32.partialorder %v7635, 8.507059e+37
      %v7637 = vand.u32 %v6708, 2147483648
      %v7638 = vor.u32 1.1754944e-38, %v7637
      %v7639 = vsel %vm7636, %v7638, %v7634
      %v7640 = vmul.f32 1.0, %v7639
      %v7641 = vrcp.pop %v6709
      %v7642 = vmul.f32 %v6709, %v7641
      %v7643 = vsub.f32 1.0, %v7642
      %v7644 = vmul.f32 %v7641, %v7643
      %v7645 = vadd.f32 %v7641, %v7644
      %vm7646 = vweird.f32 %v6709
      %vm7647 = vweird.f32 %v7641
      %vm7648 = vmor %vm7646, %vm7647
      %v7649 = vsel %vm7648, %v7641, %v7645
      %v7650 = vand.u32 2147483647, %v6709
      %vm7651 = vcmp.eq.f32.partialorder %v7650, 8.507059e+37
      %v7652 = vand.u32 %v6709, 2147483648
      %v7653 = vor.u32 1.1754944e-38, %v7652
      %v7654 = vsel %vm7651, %v7653, %v7649
      %v7655 = vmul.f32 1.0, %v7654
      %v7656 = vrcp.pop %v6710
      %v7657 = vmul.f32 %v6710, %v7656
      %v7658 = vsub.f32 1.0, %v7657
      %v7659 = vmul.f32 %v7656, %v7658
      %v7660 = vadd.f32 %v7656, %v7659
      %vm7661 = vweird.f32 %v6710
      %vm7662 = vweird.f32 %v7656
      %vm7663 = vmor %vm7661, %vm7662
      %v7664 = vsel %vm7663, %v7656, %v7660
      %v7665 = vand.u32 2147483647, %v6710
      %vm7666 = vcmp.eq.f32.partialorder %v7665, 8.507059e+37
      %v7667 = vand.u32 %v6710, 2147483648
      %v7668 = vor.u32 1.1754944e-38, %v7667
      %v7669 = vsel %vm7666, %v7668, %v7664
      %v7670 = vmul.f32 1.0, %v7669
      %v7671 = vsel %vm6454, %v6725, %v6293
      %v7672 = vsel %vm6454, %v6740, %v6295
      %v7673 = vsel %vm6454, %v6755, %v6298
      %v7674 = vsel %vm6454, %v6770, %v6300
      %v7675 = vsel %vm6454, %v6785, %v6303
      %v7676 = vsel %vm6454, %v6800, %v6305
      %v7677 = vsel %vm6454, %v6815, %v6308
      %v7678 = vsel %vm6454, %v6830, %v6310
      %v7679 = vsel %vm6454, %v6845, %v6313
      %v7680 = vsel %vm6454, %v6860, %v6315
      %v7681 = vsel %vm6454, %v6875, %v6318
      %v7682 = vsel %vm6454, %v6890, %v6320
      %v7683 = vsel %vm6454, %v6905, %v6323
      %v7684 = vsel %vm6454, %v6920, %v6325
      %v7685 = vsel %vm6454, %v6935, %v6328
      %v7686 = vsel %vm6454, %v6950, %v6330
      %v7687 = vsel %vm6454, %v6965, %v6333
      %v7688 = vsel %vm6454, %v6980, %v6335
      %v7689 = vsel %vm6454, %v6995, %v6338
      %v7690 = vsel %vm6454, %v7010, %v6340
      %v7691 = vsel %vm6454, %v7025, %v6343
      %v7692 = vsel %vm6454, %v7040, %v6345
      %v7693 = vsel %vm6454, %v7055, %v6348
      %v7694 = vsel %vm6454, %v7070, %v6350
      %v7695 = vsel %vm6454, %v7085, %v6353
      %v7696 = vsel %vm6454, %v7100, %v6355
      %v7697 = vsel %vm6454, %v7115, %v6358
      %v7698 = vsel %vm6454, %v7130, %v6360
      %v7699 = vsel %vm6454, %v7145, %v6363
      %v7700 = vsel %vm6454, %v7160, %v6365
      %v7701 = vsel %vm6454, %v7175, %v6368
      %v7702 = vsel %vm6454, %v7190, %v6370
      %v7703 = vsel %vm6454, %v7205, %v6373
      %v7704 = vsel %vm6454, %v7220, %v6375
      %v7705 = vsel %vm6454, %v7235, %v6378
      %v7706 = vsel %vm6454, %v7250, %v6380
      %v7707 = vsel %vm6454, %v7265, %v6383
      %v7708 = vsel %vm6454, %v7280, %v6385
      %v7709 = vsel %vm6454, %v7295, %v6388
      %v7710 = vsel %vm6454, %v7310, %v6390
      %v7711 = vsel %vm6454, %v7325, %v6393
      %v7712 = vsel %vm6454, %v7340, %v6395
      %v7713 = vsel %vm6454, %v7355, %v6398
      %v7714 = vsel %vm6454, %v7370, %v6400
      %v7715 = vsel %vm6454, %v7385, %v6403
      %v7716 = vsel %vm6454, %v7400, %v6405
      %v7717 = vsel %vm6454, %v7415, %v6408
      %v7718 = vsel %vm6454, %v7430, %v6410
      %v7719 = vsel %vm6454, %v7445, %v6413
      %v7720 = vsel %vm6454, %v7460, %v6415
      %v7721 = vsel %vm6454, %v7475, %v6418
      %v7722 = vsel %vm6454, %v7490, %v6420
      %v7723 = vsel %vm6454, %v7505, %v6423
      %v7724 = vsel %vm6454, %v7520, %v6425
      %v7725 = vsel %vm6454, %v7535, %v6428
      %v7726 = vsel %vm6454, %v7550, %v6430
      %v7727 = vsel %vm6454, %v7565, %v6433
      %v7728 = vsel %vm6454, %v7580, %v6435
      %v7729 = vsel %vm6454, %v7595, %v6438
      %v7730 = vsel %vm6454, %v7610, %v6440
      %v7731 = vsel %vm6454, %v7625, %v6443
      %v7732 = vsel %vm6454, %v7640, %v6445
      %v7733 = vsel %vm6454, %v7655, %v6448
      %v7734 = vsel %vm6454, %v7670, %v6450
      %vm7735 = vcmask 130048
      %7736 = vst.msk [vmem:[%s415] sm:$0xff] %vm7735, %v7671
      %7737 = vst.msk [vmem:[%s415 + $0x8] sm:$0xff] %vm7735, %v7672
      %7738 = vst.msk [vmem:[%s415 + $0x10] sm:$0xff] %vm7735, %v7673
      %7739 = vst.msk [vmem:[%s415 + $0x18] sm:$0xff] %vm7735, %v7674
      %7740 = vst.msk [vmem:[%s415 + $0x20] sm:$0xff] %vm7735, %v7675
      %7741 = vst.msk [vmem:[%s415 + $0x28] sm:$0xff] %vm7735, %v7676
      %7742 = vst.msk [vmem:[%s415 + $0x30] sm:$0xff] %vm7735, %v7677
      %7743 = vst.msk [vmem:[%s415 + $0x38] sm:$0xff] %vm7735, %v7678
      %7744 = vst.msk [vmem:[%s415 + $0x40] sm:$0xff] %vm7735, %v7679
      %7745 = vst.msk [vmem:[%s415 + $0x48] sm:$0xff] %vm7735, %v7680
      %7746 = vst.msk [vmem:[%s415 + $0x50] sm:$0xff] %vm7735, %v7681
      %7747 = vst.msk [vmem:[%s415 + $0x58] sm:$0xff] %vm7735, %v7682
      %7748 = vst.msk [vmem:[%s415 + $0x60] sm:$0xff] %vm7735, %v7683
      %7749 = vst.msk [vmem:[%s415 + $0x68] sm:$0xff] %vm7735, %v7684
      %7750 = vst.msk [vmem:[%s415 + $0x70] sm:$0xff] %vm7735, %v7685
      %7751 = vst.msk [vmem:[%s415 + $0x78] sm:$0xff] %vm7735, %v7686
      %7752 = vst.msk [vmem:[%s415 + $0x80] sm:$0xff] %vm7735, %v7687
      %7753 = vst.msk [vmem:[%s415 + $0x88] sm:$0xff] %vm7735, %v7688
      %7754 = vst.msk [vmem:[%s415 + $0x90] sm:$0xff] %vm7735, %v7689
      %7755 = vst.msk [vmem:[%s415 + $0x98] sm:$0xff] %vm7735, %v7690
      %7756 = vst.msk [vmem:[%s415 + $0xa0] sm:$0xff] %vm7735, %v7691
      %7757 = vst.msk [vmem:[%s415 + $0xa8] sm:$0xff] %vm7735, %v7692
      %7758 = vst.msk [vmem:[%s415 + $0xb0] sm:$0xff] %vm7735, %v7693
      %7759 = vst.msk [vmem:[%s415 + $0xb8] sm:$0xff] %vm7735, %v7694
      %7760 = vst.msk [vmem:[%s415 + $0xc0] sm:$0xff] %vm7735, %v7695
      %7761 = vst.msk [vmem:[%s415 + $0xc8] sm:$0xff] %vm7735, %v7696
      %7762 = vst.msk [vmem:[%s415 + $0xd0] sm:$0xff] %vm7735, %v7697
      %7763 = vst.msk [vmem:[%s415 + $0xd8] sm:$0xff] %vm7735, %v7698
      %7764 = vst.msk [vmem:[%s415 + $0xe0] sm:$0xff] %vm7735, %v7699
      %7765 = vst.msk [vmem:[%s415 + $0xe8] sm:$0xff] %vm7735, %v7700
      %7766 = vst.msk [vmem:[%s415 + $0xf0] sm:$0xff] %vm7735, %v7701
      %7767 = vst.msk [vmem:[%s415 + $0xf8] sm:$0xff] %vm7735, %v7702
      %7768 = vst.msk [vmem:[%s415 + $0x100] sm:$0xff] %vm7735, %v7703
      %7769 = vst.msk [vmem:[%s415 + $0x108] sm:$0xff] %vm7735, %v7704
      %7770 = vst.msk [vmem:[%s415 + $0x110] sm:$0xff] %vm7735, %v7705
      %7771 = vst.msk [vmem:[%s415 + $0x118] sm:$0xff] %vm7735, %v7706
      %7772 = vst.msk [vmem:[%s415 + $0x120] sm:$0xff] %vm7735, %v7707
      %7773 = vst.msk [vmem:[%s415 + $0x128] sm:$0xff] %vm7735, %v7708
      %7774 = vst.msk [vmem:[%s415 + $0x130] sm:$0xff] %vm7735, %v7709
      %7775 = vst.msk [vmem:[%s415 + $0x138] sm:$0xff] %vm7735, %v7710
      %7776 = vst.msk [vmem:[%s415 + $0x140] sm:$0xff] %vm7735, %v7711
      %7777 = vst.msk [vmem:[%s415 + $0x148] sm:$0xff] %vm7735, %v7712
      %7778 = vst.msk [vmem:[%s415 + $0x150] sm:$0xff] %vm7735, %v7713
      %7779 = vst.msk [vmem:[%s415 + $0x158] sm:$0xff] %vm7735, %v7714
      %7780 = vst.msk [vmem:[%s415 + $0x160] sm:$0xff] %vm7735, %v7715
      %7781 = vst.msk [vmem:[%s415 + $0x168] sm:$0xff] %vm7735, %v7716
      %7782 = vst.msk [vmem:[%s415 + $0x170] sm:$0xff] %vm7735, %v7717
      %7783 = vst.msk [vmem:[%s415 + $0x178] sm:$0xff] %vm7735, %v7718
      %7784 = vst.msk [vmem:[%s415 + $0x180] sm:$0xff] %vm7735, %v7719
      %7785 = vst.msk [vmem:[%s415 + $0x188] sm:$0xff] %vm7735, %v7720
      %7786 = vst.msk [vmem:[%s415 + $0x190] sm:$0xff] %vm7735, %v7721
      %7787 = vst.msk [vmem:[%s415 + $0x198] sm:$0xff] %vm7735, %v7722
      %7788 = vst.msk [vmem:[%s415 + $0x1a0] sm:$0xff] %vm7735, %v7723
      %7789 = vst.msk [vmem:[%s415 + $0x1a8] sm:$0xff] %vm7735, %v7724
      %7790 = vst.msk [vmem:[%s415 + $0x1b0] sm:$0xff] %vm7735, %v7725
      %7791 = vst.msk [vmem:[%s415 + $0x1b8] sm:$0xff] %vm7735, %v7726
      %7792 = vst.msk [vmem:[%s415 + $0x1c0] sm:$0xff] %vm7735, %v7727
      %7793 = vst.msk [vmem:[%s415 + $0x1c8] sm:$0xff] %vm7735, %v7728
      %7794 = vst.msk [vmem:[%s415 + $0x1d0] sm:$0xff] %vm7735, %v7729
      %7795 = vst.msk [vmem:[%s415 + $0x1d8] sm:$0xff] %vm7735, %v7730
      %7796 = vst.msk [vmem:[%s415 + $0x1e0] sm:$0xff] %vm7735, %v7731
      %7797 = vst.msk [vmem:[%s415 + $0x1e8] sm:$0xff] %vm7735, %v7732
      %7798 = vst.msk [vmem:[%s415 + $0x1f0] sm:$0xff] %vm7735, %v7733
      %7799 = vst.msk [vmem:[%s415 + $0x1f8] sm:$0xff] %vm7735, %v7734
      %s7800 = smul.u32 64, %s23
      %p7801 = scmp.lt.s32.totalorder %s7800, 127
      %s7802 = scalar_select %p7801, %s7800, 127
      %s7803 = smul.addr %s7802, 8
      %s7804 = scalar_lea.vmem %s12, %s7803
      // Predicated region
      $region69: #{_lambda_.1} parent=67 // pred_check
        %p7805 = pneg %p298
      $region70: #{_lambda_.1} parent=67 // pred_check_branch
        %7807 = sbr.rel (%p7805) target = $region72
      $region71: #{_lambda_.1} parent=67 // pred_region
        %s7808 = smul.u32 64, %s23
      $region72: #{_lambda_.1} parent=67 // pred_fallthru
        _
    $region68: #{_lambda_.1} parent=5 // pred_fallthru
      _
    %p7809 = scmp.le.s32.totalorder 2, %s18
    // Predicated region
    $region73: #{_lambda_.1} parent=5 // pred_check
      %p7810 = pneg %p7809
    $region74: #{_lambda_.1} parent=5 // pred_check_branch
      %7812 = sbr.rel (%p7810) target = $region76
    $region75: #{_lambda_.1} parent=5 // pred_region
      %s7813 = ssub.s32 %s18, 2
      // Predicated region
      $region77: #{_lambda_.1} parent=75 // pred_check
        %p7814 = pneg %p304
      $region78: #{_lambda_.1} parent=75 // pred_check_branch
        %7816 = sbr.rel (%p7814) target = $region80
      $region79: #{_lambda_.1} parent=75 // pred_region
        %s7817 = smul.u32 64, %s24
        %p7818 = scmp.lt.s32.totalorder %s7817, 127
        %s7819 = scalar_select %p7818, %s7817, 127
        %s7820 = smul.addr %s7819, 8
        %s7821 = scalar_lea.vmem %s12, %s7820
      $region80: #{_lambda_.1} parent=75 // pred_fallthru
        _
    $region76: #{_lambda_.1} parent=5 // pred_fallthru
      _
  $region6: #{_lambda_.1} parent=0 // loop_footer
    %s22 = sadd.s32 1, %s18
  $region7: #{_lambda_.1} parent=0 // loop_footer_branch
    %17 = sbr.rel target = $region3
  $region8: #{_lambda_.1} parent=0 // loop_exit
    _

</llo_original>
